<compile_context>
chip_gen: v7x
topology: tpu7x:2x2x1
jax: 0.10.0
libtpu: 0.0.40
codegen_flags: <defaults>
</compile_context>

<pallas_src>
import jax
import jax.numpy as jnp
from jax.experimental import pallas as pl
from jax.experimental.pallas import tpu as pltpu

# Problem sizes (Conv2d 5x5, stride 1, pad 2).
N, H, W = 2, 16, 16
C = 4                       # in_channels
HID = 64                    # hidden channels per sub-net
FHID = 2 * HID              # fused hidden channels (mask | syn) = 128
COUT = 2 * C                # fused conv2 output channels = 8
K = 5                       # conv kernel size
PAD = 2                     # 'same' padding for 5x5
EPS = 1e-5                  # BatchNorm eps (PyTorch default)
LRELU = 0.2                 # LeakyReLU negative slope
NTAPS = K * K               # 25

DP = H + 4 * PAD            # 24: double-padded grid side (conv1 halo + conv2 halo)
BQ = DP * DP                # 576: per-batch column block (pitch-24 flattened)
NCOLS = N * BQ              # 1152 = 9*128: width of im2col / hidden / big buffers
XW = 1280                   # 10*128: width of the double-padded input operand
OUTW = 1024                 # 8*128: width of the merged output slab
NK1 = 104                   # conv1 contraction: 25*C taps + 1 bias row, padded to 104
XSHIFT = 2 * PAD * DP + 2 * PAD   # 100: image (yi,xi) lives at dp col yi*24+xi+100
NVALID = N * H * W          # 512 valid positions for BN statistics


def generator_kernel(xdp_ref, w1t_ref, g_ref, bt_ref, w2s_ref, b2_ref, vm_ref,
                     out_ref, p1s_ref, hbuf_ref, big_ref):
    """Whole fused Generator forward, fully resident in VMEM (single program)."""
    # ---- conv1 im2col built in VMEM from the tiny double-padded input ----------
    # Pitch-24 layout => tap (dy,dx) is a CONSTANT lane offset dy*24+dx.
    # Row 4*t + c of p1s = input channel c shifted by tap t; row 100 = ones (bias
    # folded into w1t); rows 101..103 = zero pad of the contraction dim.
    for dy in range(K):
        for dx in range(K):
            t = dy * K + dx
            o = dy * DP + dx
            p1s_ref[4 * t:4 * t + 4, :] = xdp_ref[:, o:o + NCOLS]
    p1s_ref[NTAPS * C:NTAPS * C + 1, :] = jnp.ones((1, NCOLS), jnp.float32)
    p1s_ref[NTAPS * C + 1:NK1, :] = jnp.zeros((NK1 - NTAPS * C - 1, NCOLS), jnp.float32)

    # ---- conv1 (+bias) for both subnets: one aligned MXU matmul (128,104)@(104,1152)
    h = jnp.dot(w1t_ref[...], p1s_ref[...], preferred_element_type=jnp.float32)

    # ---- BatchNorm2d, training-mode stats over the 512 valid positions (one pass)
    vm = vm_ref[...]                                   # (1, 1152): 1.0 on valid cols
    hm = h * vm
    inv_n = jnp.float32(1.0 / NVALID)
    mean = jnp.sum(hm, axis=1, keepdims=True) * inv_n              # (128, 1)
    ex2 = jnp.sum(hm * h, axis=1, keepdims=True) * inv_n           # E[x^2] over valid
    var = jnp.maximum(ex2 - mean * mean, 0.0)                      # biased, clamped
    scale = g_ref[...] * jax.lax.rsqrt(var + EPS)
    shift = bt_ref[...] - mean * scale
    hn = h * scale + shift
    hn = jnp.where(hn >= 0.0, hn, LRELU * hn)                      # LeakyReLU(0.2)
    # Masking zeroes the conv2 halo + junk columns -> hbuf IS the padded hidden map.
    hbuf_ref[...] = hn * vm                                        # (128, 1152)

    # ---- conv2 (both subnets): ONE aligned matmul into `big`, then 25 shifted
    #      adds on the tiny 8-row result side (lane-dense accumulator).
    big_ref[...] = jnp.dot(w2s_ref[...], hbuf_ref[...],
                           preferred_element_type=jnp.float32)     # (200, 1152)
    acc = jnp.zeros((COUT, OUTW), jnp.float32) + b2_ref[...]       # (8, 1024)
    for dy in range(K):
        for dx in range(K):
            t = dy * K + dx
            o = dy * DP + dx
            acc = acc + big_ref[COUT * t:COUT * t + COUT, o:o + OUTW]

    # ---- heads + blend; merged channel-stacked output (single writeback DMA) ----
    mask = jax.nn.sigmoid(acc[0:C, :])                             # (4, 1024)
    syn = jnp.tanh(acc[C:COUT, :])                                 # (4, 1024)
    xw = xdp_ref[:, XSHIFT:XSHIFT + OUTW]                          # x in output layout
    copied = mask * xw
    wsyn = (1.0 - mask) * syn
    out_ref[0 * C:1 * C, :] = copied + wsyn
    out_ref[1 * C:2 * C, :] = mask
    out_ref[2 * C:3 * C, :] = copied
    out_ref[3 * C:4 * C, :] = syn
    out_ref[4 * C:5 * C, :] = wsyn


def _pack_params(params):
    """Fuse mask/syn parameters into the channel-major kernel operands."""
    (mw1, mb1, mg, mbt, mw2, mb2, sw1, sb1, sg, sbt, sw2, sb2) = params
    # conv1: im2col row k = tap*C + c; fuse out-channels to 128; fold bias in col 100.
    w1 = jnp.concatenate([mw1.reshape(NTAPS * C, HID),
                          sw1.reshape(NTAPS * C, HID)], axis=1)     # (100, 128)
    b1 = jnp.concatenate([mb1, sb1])                                # (128,)
    w1t = (jnp.zeros((FHID, NK1), jnp.float32)
           .at[:, :NTAPS * C].set(w1.T)
           .at[:, NTAPS * C].set(b1))
    g = jnp.concatenate([mg, sg]).reshape(FHID, 1)
    bt = jnp.concatenate([mbt, sbt]).reshape(FHID, 1)
    # conv2: tap-stacked rows t*8 + co, block-diagonal over the two subnets.
    m2 = jnp.transpose(mw2.reshape(NTAPS, HID, C), (0, 2, 1))       # (25, 4, 64)
    s2 = jnp.transpose(sw2.reshape(NTAPS, HID, C), (0, 2, 1))
    w2s = (jnp.zeros((NTAPS, COUT, FHID), jnp.float32)
           .at[:, 0:C, 0:HID].set(m2)
           .at[:, C:COUT, HID:FHID].set(s2)).reshape(NTAPS * COUT, FHID)
    b2 = jnp.concatenate([mb2, sb2]).reshape(COUT, 1)
    return w1t, g, bt, w2s, b2


@jax.jit
def generator_forward(x_nchw, params):
    """Runs the Pallas Generator. x_nchw: (N, C, H, W). Returns 5 NCHW tensors."""
    x_nchw = x_nchw.astype(jnp.float32)
    w1t, g, bt, w2s, b2 = _pack_params(params)

    # Double-padded input, channel-major, pitch-24 flattened (one pad + transpose).
    xdp = jnp.pad(x_nchw, ((0, 0), (0, 0),
                           (2 * PAD, 2 * PAD), (2 * PAD, 2 * PAD)))  # (N, C, 24, 24)
    xdp = jnp.transpose(xdp, (1, 0, 2, 3)).reshape(C, N * BQ)        # (4, 1152)
    xdp = jnp.pad(xdp, ((0, 0), (0, XW - N * BQ)))                   # (4, 1280)

    # Validity mask: interior 16x16 of each 20x20 padded-hidden block (pitch 24).
    vm = (jnp.zeros((N, DP, DP), jnp.float32)
          .at[:, PAD:PAD + H, PAD:PAD + W].set(1.0)).reshape(1, NCOLS)

    vspec = pl.BlockSpec(memory_space=pltpu.MemorySpace.VMEM)
    inputs = (xdp, w1t, g, bt, w2s, b2, vm)

    out = pl.pallas_call(
        generator_kernel,
        out_shape=jax.ShapeDtypeStruct((5 * C, OUTW), jnp.float32),
        in_specs=[vspec] * len(inputs),
        out_specs=vspec,
        scratch_shapes=[pltpu.VMEM((NK1, NCOLS), jnp.float32),        # im2col
                        pltpu.VMEM((FHID, NCOLS), jnp.float32),       # padded hidden
                        pltpu.VMEM((NTAPS * COUT, NCOLS), jnp.float32)],  # conv2 big
    )(*inputs)

    # (20, 1024) channel-stacked wide slab  ->  five (N, C, H, W) tensors.
    o = jnp.pad(out, ((0, 0), (0, N * BQ - OUTW)))                   # (20, 1152)
    o = o.reshape(5, C, N, DP, DP)[:, :, :, :H, :W]                  # (5, 4, 2, 16, 16)
    o = jnp.transpose(o, (0, 2, 1, 3, 4))                            # (5, N, C, H, W)
    return tuple(o[i] for i in range(5))


def init_params(key):
    """Deterministic synthetic parameters (PyTorch-like fan-in scaled uniform)."""
    ks = jax.random.split(key, 8)

    def conv_w(k, cin, cout):
        bound = 1.0 / jnp.sqrt(cin * K * K)
        return jax.random.uniform(k, (K, K, cin, cout), jnp.float32, -bound, bound)

    def conv_b(k, cin, cout):
        bound = 1.0 / jnp.sqrt(cin * K * K)
        return jax.random.uniform(k, (cout,), jnp.float32, -bound, bound)

    def subnet_params(k0, k1, k2, k3):
        w1 = conv_w(k0, C, HID)
        b1 = conv_b(k1, C, HID)
        gamma = jnp.ones((HID,), jnp.float32)      # BN weight init (PyTorch)
        beta = jnp.zeros((HID,), jnp.float32)      # BN bias init
        w2 = conv_w(k2, HID, C)
        b2 = conv_b(k3, HID, C)
        return (w1, b1, gamma, beta, w2, b2)

    mask_p = subnet_params(ks[0], ks[1], ks[2], ks[3])
    syn_p = subnet_params(ks[4], ks[5], ks[6], ks[7])
    return mask_p + syn_p


def reference_forward(x_nchw, params):
    """Pure-JAX reference mirroring the PyTorch module (training-mode BN)."""
    (mw1, mb1, mg, mbt, mw2, mb2, sw1, sb1, sg, sbt, sw2, sb2) = params
    x = jnp.transpose(x_nchw, (0, 2, 3, 1)).astype(jnp.float32)

    def conv(z, w, b):
        y = jax.lax.conv_general_dilated(
            z, w, (1, 1), 'SAME', dimension_numbers=('NHWC', 'HWIO', 'NHWC'))
        return y + b.reshape(1, 1, 1, -1)

    def subnet(w1, b1, gamma, beta, w2, b2, act):
        h = conv(x, w1, b1)
        mean = jnp.mean(h, axis=(0, 1, 2), keepdims=True)
        var = jnp.mean((h - mean) ** 2, axis=(0, 1, 2), keepdims=True)
        h = (h - mean) * jax.lax.rsqrt(var + EPS)
        h = h * gamma.reshape(1, 1, 1, -1) + beta.reshape(1, 1, 1, -1)
        h = jnp.where(h >= 0, h, LRELU * h)
        return act(conv(h, w2, b2))

    mask = subnet(mw1, mb1, mg, mbt, mw2, mb2, jax.nn.sigmoid)
    syn = subnet(sw1, sb1, sg, sbt, sw2, sb2, jnp.tanh)
    copied = mask * x
    wsyn = (1 - mask) * syn
    outs = (copied + wsyn, mask, copied, syn, wsyn)
    return tuple(jnp.transpose(o, (0, 3, 1, 2)) for o in outs)


if __name__ == "__main__":
    key = jax.random.PRNGKey(0)
    kx, kp = jax.random.split(key)

    x = jax.random.normal(kx, (N, C, H, W), jnp.float32)   # PyTorch NCHW input
    params = init_params(kp)

    outs = generator_forward(x, params)
    outs = jax.block_until_ready(outs)

    refs = reference_forward(x, params)
    for got, want in zip(outs, refs):
        assert got.shape == want.shape and got.dtype == want.dtype
        err = float(jnp.max(jnp.abs(got - want)))
        assert err < 2e-3, f"mismatch vs reference: max abs err {err}"

    print("KERNEL_OK")
</pallas_src>

<mosaic_0001>
module attributes {stable_mosaic.version = 11 : i64} {
  func.func @generator_kernel(%arg0: memref<4x1280xf32, #tpu.memory_space<vmem>>, %arg1: memref<128x104xf32, #tpu.memory_space<vmem>>, %arg2: memref<128x1xf32, #tpu.memory_space<vmem>>, %arg3: memref<128x1xf32, #tpu.memory_space<vmem>>, %arg4: memref<200x128xf32, #tpu.memory_space<vmem>>, %arg5: memref<8x1xf32, #tpu.memory_space<vmem>>, %arg6: memref<1x1152xf32, #tpu.memory_space<vmem>>, %arg7: memref<20x1024xf32, #tpu.memory_space<vmem>>, %arg8: memref<104x1152xf32, #tpu.memory_space<vmem>>, %arg9: memref<128x1152xf32, #tpu.memory_space<vmem>>, %arg10: memref<200x1152xf32, #tpu.memory_space<vmem>>) attributes {dimension_semantics = [], scalar_prefetch = 0 : i64, scratch_operands = 3 : i64, tpu.core_type = #tpu.core_type<tc>} {
    %c0 = arith.constant 0 : index
    %c0_0 = arith.constant 0 : index
    %0 = vector.load %arg0[%c0, %c0_0] : memref<4x1280xf32, #tpu.memory_space<vmem>>, vector<4x1152xf32>
    %c0_1 = arith.constant 0 : index
    %c0_2 = arith.constant 0 : index
    %1 = vector.load %arg8[%c0_1, %c0_2] : memref<104x1152xf32, #tpu.memory_space<vmem>>, vector<4x1152xf32>
    tpu.vector_store %arg8[%c0_1, %c0_2], %0 {strides = array<i32>} : memref<104x1152xf32, #tpu.memory_space<vmem>>, vector<4x1152xf32>,
    %c0_3 = arith.constant 0 : index
    %c1 = arith.constant 1 : index
    %2 = vector.load %arg0[%c0_3, %c1] : memref<4x1280xf32, #tpu.memory_space<vmem>>, vector<4x1152xf32>
    %c4 = arith.constant 4 : index
    %c0_4 = arith.constant 0 : index
    %3 = vector.load %arg8[%c4, %c0_4] : memref<104x1152xf32, #tpu.memory_space<vmem>>, vector<4x1152xf32>
    tpu.vector_store %arg8[%c4, %c0_4], %2 {strides = array<i32>} : memref<104x1152xf32, #tpu.memory_space<vmem>>, vector<4x1152xf32>,
    %c0_5 = arith.constant 0 : index
    %c2 = arith.constant 2 : index
    %4 = vector.load %arg0[%c0_5, %c2] : memref<4x1280xf32, #tpu.memory_space<vmem>>, vector<4x1152xf32>
    %c8 = arith.constant 8 : index
    %c0_6 = arith.constant 0 : index
    %5 = vector.load %arg8[%c8, %c0_6] : memref<104x1152xf32, #tpu.memory_space<vmem>>, vector<4x1152xf32>
    tpu.vector_store %arg8[%c8, %c0_6], %4 {strides = array<i32>} : memref<104x1152xf32, #tpu.memory_space<vmem>>, vector<4x1152xf32>,
    %c0_7 = arith.constant 0 : index
    %c3 = arith.constant 3 : index
    %6 = vector.load %arg0[%c0_7, %c3] : memref<4x1280xf32, #tpu.memory_space<vmem>>, vector<4x1152xf32>
    %c12 = arith.constant 12 : index
    %c0_8 = arith.constant 0 : index
    %7 = vector.load %arg8[%c12, %c0_8] : memref<104x1152xf32, #tpu.memory_space<vmem>>, vector<4x1152xf32>
    tpu.vector_store %arg8[%c12, %c0_8], %6 {strides = array<i32>} : memref<104x1152xf32, #tpu.memory_space<vmem>>, vector<4x1152xf32>,
    %c0_9 = arith.constant 0 : index
    %c4_10 = arith.constant 4 : index
    %8 = vector.load %arg0[%c0_9, %c4_10] : memref<4x1280xf32, #tpu.memory_space<vmem>>, vector<4x1152xf32>
    %c16 = arith.constant 16 : index
    %c0_11 = arith.constant 0 : index
    %9 = vector.load %arg8[%c16, %c0_11] : memref<104x1152xf32, #tpu.memory_space<vmem>>, vector<4x1152xf32>
    tpu.vector_store %arg8[%c16, %c0_11], %8 {strides = array<i32>} : memref<104x1152xf32, #tpu.memory_space<vmem>>, vector<4x1152xf32>,
    %c0_12 = arith.constant 0 : index
    %c24 = arith.constant 24 : index
    %10 = vector.load %arg0[%c0_12, %c24] : memref<4x1280xf32, #tpu.memory_space<vmem>>, vector<4x1152xf32>
    %c20 = arith.constant 20 : index
    %c0_13 = arith.constant 0 : index
    %11 = vector.load %arg8[%c20, %c0_13] : memref<104x1152xf32, #tpu.memory_space<vmem>>, vector<4x1152xf32>
    tpu.vector_store %arg8[%c20, %c0_13], %10 {strides = array<i32>} : memref<104x1152xf32, #tpu.memory_space<vmem>>, vector<4x1152xf32>,
    %c0_14 = arith.constant 0 : index
    %c25 = arith.constant 25 : index
    %12 = vector.load %arg0[%c0_14, %c25] : memref<4x1280xf32, #tpu.memory_space<vmem>>, vector<4x1152xf32>
    %c24_15 = arith.constant 24 : index
    %c0_16 = arith.constant 0 : index
    %13 = vector.load %arg8[%c24_15, %c0_16] : memref<104x1152xf32, #tpu.memory_space<vmem>>, vector<4x1152xf32>
    tpu.vector_store %arg8[%c24_15, %c0_16], %12 {strides = array<i32>} : memref<104x1152xf32, #tpu.memory_space<vmem>>, vector<4x1152xf32>,
    %c0_17 = arith.constant 0 : index
    %c26 = arith.constant 26 : index
    %14 = vector.load %arg0[%c0_17, %c26] : memref<4x1280xf32, #tpu.memory_space<vmem>>, vector<4x1152xf32>
    %c28 = arith.constant 28 : index
    %c0_18 = arith.constant 0 : index
    %15 = vector.load %arg8[%c28, %c0_18] : memref<104x1152xf32, #tpu.memory_space<vmem>>, vector<4x1152xf32>
    tpu.vector_store %arg8[%c28, %c0_18], %14 {strides = array<i32>} : memref<104x1152xf32, #tpu.memory_space<vmem>>, vector<4x1152xf32>,
    %c0_19 = arith.constant 0 : index
    %c27 = arith.constant 27 : index
    %16 = vector.load %arg0[%c0_19, %c27] : memref<4x1280xf32, #tpu.memory_space<vmem>>, vector<4x1152xf32>
    %c32 = arith.constant 32 : index
    %c0_20 = arith.constant 0 : index
    %17 = vector.load %arg8[%c32, %c0_20] : memref<104x1152xf32, #tpu.memory_space<vmem>>, vector<4x1152xf32>
    tpu.vector_store %arg8[%c32, %c0_20], %16 {strides = array<i32>} : memref<104x1152xf32, #tpu.memory_space<vmem>>, vector<4x1152xf32>,
    %c0_21 = arith.constant 0 : index
    %c28_22 = arith.constant 28 : index
    %18 = vector.load %arg0[%c0_21, %c28_22] : memref<4x1280xf32, #tpu.memory_space<vmem>>, vector<4x1152xf32>
    %c36 = arith.constant 36 : index
    %c0_23 = arith.constant 0 : index
    %19 = vector.load %arg8[%c36, %c0_23] : memref<104x1152xf32, #tpu.memory_space<vmem>>, vector<4x1152xf32>
    tpu.vector_store %arg8[%c36, %c0_23], %18 {strides = array<i32>} : memref<104x1152xf32, #tpu.memory_space<vmem>>, vector<4x1152xf32>,
    %c0_24 = arith.constant 0 : index
    %c48 = arith.constant 48 : index
    %20 = vector.load %arg0[%c0_24, %c48] : memref<4x1280xf32, #tpu.memory_space<vmem>>, vector<4x1152xf32>
    %c40 = arith.constant 40 : index
    %c0_25 = arith.constant 0 : index
    %21 = vector.load %arg8[%c40, %c0_25] : memref<104x1152xf32, #tpu.memory_space<vmem>>, vector<4x1152xf32>
    tpu.vector_store %arg8[%c40, %c0_25], %20 {strides = array<i32>} : memref<104x1152xf32, #tpu.memory_space<vmem>>, vector<4x1152xf32>,
    %c0_26 = arith.constant 0 : index
    %c49 = arith.constant 49 : index
    %22 = vector.load %arg0[%c0_26, %c49] : memref<4x1280xf32, #tpu.memory_space<vmem>>, vector<4x1152xf32>
    %c44 = arith.constant 44 : index
    %c0_27 = arith.constant 0 : index
    %23 = vector.load %arg8[%c44, %c0_27] : memref<104x1152xf32, #tpu.memory_space<vmem>>, vector<4x1152xf32>
    tpu.vector_store %arg8[%c44, %c0_27], %22 {strides = array<i32>} : memref<104x1152xf32, #tpu.memory_space<vmem>>, vector<4x1152xf32>,
    %c0_28 = arith.constant 0 : index
    %c50 = arith.constant 50 : index
    %24 = vector.load %arg0[%c0_28, %c50] : memref<4x1280xf32, #tpu.memory_space<vmem>>, vector<4x1152xf32>
    %c48_29 = arith.constant 48 : index
    %c0_30 = arith.constant 0 : index
    %25 = vector.load %arg8[%c48_29, %c0_30] : memref<104x1152xf32, #tpu.memory_space<vmem>>, vector<4x1152xf32>
    tpu.vector_store %arg8[%c48_29, %c0_30], %24 {strides = array<i32>} : memref<104x1152xf32, #tpu.memory_space<vmem>>, vector<4x1152xf32>,
    %c0_31 = arith.constant 0 : index
    %c51 = arith.constant 51 : index
    %26 = vector.load %arg0[%c0_31, %c51] : memref<4x1280xf32, #tpu.memory_space<vmem>>, vector<4x1152xf32>
    %c52 = arith.constant 52 : index
    %c0_32 = arith.constant 0 : index
    %27 = vector.load %arg8[%c52, %c0_32] : memref<104x1152xf32, #tpu.memory_space<vmem>>, vector<4x1152xf32>
    tpu.vector_store %arg8[%c52, %c0_32], %26 {strides = array<i32>} : memref<104x1152xf32, #tpu.memory_space<vmem>>, vector<4x1152xf32>,
    %c0_33 = arith.constant 0 : index
    %c52_34 = arith.constant 52 : index
    %28 = vector.load %arg0[%c0_33, %c52_34] : memref<4x1280xf32, #tpu.memory_space<vmem>>, vector<4x1152xf32>
    %c56 = arith.constant 56 : index
    %c0_35 = arith.constant 0 : index
    %29 = vector.load %arg8[%c56, %c0_35] : memref<104x1152xf32, #tpu.memory_space<vmem>>, vector<4x1152xf32>
    tpu.vector_store %arg8[%c56, %c0_35], %28 {strides = array<i32>} : memref<104x1152xf32, #tpu.memory_space<vmem>>, vector<4x1152xf32>,
    %c0_36 = arith.constant 0 : index
    %c72 = arith.constant 72 : index
    %30 = vector.load %arg0[%c0_36, %c72] : memref<4x1280xf32, #tpu.memory_space<vmem>>, vector<4x1152xf32>
    %c60 = arith.constant 60 : index
    %c0_37 = arith.constant 0 : index
    %31 = vector.load %arg8[%c60, %c0_37] : memref<104x1152xf32, #tpu.memory_space<vmem>>, vector<4x1152xf32>
    tpu.vector_store %arg8[%c60, %c0_37], %30 {strides = array<i32>} : memref<104x1152xf32, #tpu.memory_space<vmem>>, vector<4x1152xf32>,
    %c0_38 = arith.constant 0 : index
    %c73 = arith.constant 73 : index
    %32 = vector.load %arg0[%c0_38, %c73] : memref<4x1280xf32, #tpu.memory_space<vmem>>, vector<4x1152xf32>
    %c64 = arith.constant 64 : index
    %c0_39 = arith.constant 0 : index
    %33 = vector.load %arg8[%c64, %c0_39] : memref<104x1152xf32, #tpu.memory_space<vmem>>, vector<4x1152xf32>
    tpu.vector_store %arg8[%c64, %c0_39], %32 {strides = array<i32>} : memref<104x1152xf32, #tpu.memory_space<vmem>>, vector<4x1152xf32>,
    %c0_40 = arith.constant 0 : index
    %c74 = arith.constant 74 : index
    %34 = vector.load %arg0[%c0_40, %c74] : memref<4x1280xf32, #tpu.memory_space<vmem>>, vector<4x1152xf32>
    %c68 = arith.constant 68 : index
    %c0_41 = arith.constant 0 : index
    %35 = vector.load %arg8[%c68, %c0_41] : memref<104x1152xf32, #tpu.memory_space<vmem>>, vector<4x1152xf32>
    tpu.vector_store %arg8[%c68, %c0_41], %34 {strides = array<i32>} : memref<104x1152xf32, #tpu.memory_space<vmem>>, vector<4x1152xf32>,
    %c0_42 = arith.constant 0 : index
    %c75 = arith.constant 75 : index
    %36 = vector.load %arg0[%c0_42, %c75] : memref<4x1280xf32, #tpu.memory_space<vmem>>, vector<4x1152xf32>
    %c72_43 = arith.constant 72 : index
    %c0_44 = arith.constant 0 : index
    %37 = vector.load %arg8[%c72_43, %c0_44] : memref<104x1152xf32, #tpu.memory_space<vmem>>, vector<4x1152xf32>
    tpu.vector_store %arg8[%c72_43, %c0_44], %36 {strides = array<i32>} : memref<104x1152xf32, #tpu.memory_space<vmem>>, vector<4x1152xf32>,
    %c0_45 = arith.constant 0 : index
    %c76 = arith.constant 76 : index
    %38 = vector.load %arg0[%c0_45, %c76] : memref<4x1280xf32, #tpu.memory_space<vmem>>, vector<4x1152xf32>
    %c76_46 = arith.constant 76 : index
    %c0_47 = arith.constant 0 : index
    %39 = vector.load %arg8[%c76_46, %c0_47] : memref<104x1152xf32, #tpu.memory_space<vmem>>, vector<4x1152xf32>
    tpu.vector_store %arg8[%c76_46, %c0_47], %38 {strides = array<i32>} : memref<104x1152xf32, #tpu.memory_space<vmem>>, vector<4x1152xf32>,
    %c0_48 = arith.constant 0 : index
    %c96 = arith.constant 96 : index
    %40 = vector.load %arg0[%c0_48, %c96] : memref<4x1280xf32, #tpu.memory_space<vmem>>, vector<4x1152xf32>
    %c80 = arith.constant 80 : index
    %c0_49 = arith.constant 0 : index
    %41 = vector.load %arg8[%c80, %c0_49] : memref<104x1152xf32, #tpu.memory_space<vmem>>, vector<4x1152xf32>
    tpu.vector_store %arg8[%c80, %c0_49], %40 {strides = array<i32>} : memref<104x1152xf32, #tpu.memory_space<vmem>>, vector<4x1152xf32>,
    %c0_50 = arith.constant 0 : index
    %c97 = arith.constant 97 : index
    %42 = vector.load %arg0[%c0_50, %c97] : memref<4x1280xf32, #tpu.memory_space<vmem>>, vector<4x1152xf32>
    %c84 = arith.constant 84 : index
    %c0_51 = arith.constant 0 : index
    %43 = vector.load %arg8[%c84, %c0_51] : memref<104x1152xf32, #tpu.memory_space<vmem>>, vector<4x1152xf32>
    tpu.vector_store %arg8[%c84, %c0_51], %42 {strides = array<i32>} : memref<104x1152xf32, #tpu.memory_space<vmem>>, vector<4x1152xf32>,
    %c0_52 = arith.constant 0 : index
    %c98 = arith.constant 98 : index
    %44 = vector.load %arg0[%c0_52, %c98] : memref<4x1280xf32, #tpu.memory_space<vmem>>, vector<4x1152xf32>
    %c88 = arith.constant 88 : index
    %c0_53 = arith.constant 0 : index
    %45 = vector.load %arg8[%c88, %c0_53] : memref<104x1152xf32, #tpu.memory_space<vmem>>, vector<4x1152xf32>
    tpu.vector_store %arg8[%c88, %c0_53], %44 {strides = array<i32>} : memref<104x1152xf32, #tpu.memory_space<vmem>>, vector<4x1152xf32>,
    %c0_54 = arith.constant 0 : index
    %c99 = arith.constant 99 : index
    %46 = vector.load %arg0[%c0_54, %c99] : memref<4x1280xf32, #tpu.memory_space<vmem>>, vector<4x1152xf32>
    %c92 = arith.constant 92 : index
    %c0_55 = arith.constant 0 : index
    %47 = vector.load %arg8[%c92, %c0_55] : memref<104x1152xf32, #tpu.memory_space<vmem>>, vector<4x1152xf32>
    tpu.vector_store %arg8[%c92, %c0_55], %46 {strides = array<i32>} : memref<104x1152xf32, #tpu.memory_space<vmem>>, vector<4x1152xf32>,
    %c0_56 = arith.constant 0 : index
    %c100 = arith.constant 100 : index
    %48 = vector.load %arg0[%c0_56, %c100] : memref<4x1280xf32, #tpu.memory_space<vmem>>, vector<4x1152xf32>
    %c96_57 = arith.constant 96 : index
    %c0_58 = arith.constant 0 : index
    %49 = vector.load %arg8[%c96_57, %c0_58] : memref<104x1152xf32, #tpu.memory_space<vmem>>, vector<4x1152xf32>
    tpu.vector_store %arg8[%c96_57, %c0_58], %48 {strides = array<i32>} : memref<104x1152xf32, #tpu.memory_space<vmem>>, vector<4x1152xf32>,
    %cst = arith.constant 1.000000e+00 : f32
    %50 = vector.broadcast %cst : f32 to vector<1x1152xf32>
    %c100_59 = arith.constant 100 : index
    %c0_60 = arith.constant 0 : index
    %51 = vector.load %arg8[%c100_59, %c0_60] : memref<104x1152xf32, #tpu.memory_space<vmem>>, vector<1x1152xf32>
    tpu.vector_store %arg8[%c100_59, %c0_60], %50 {strides = array<i32>} : memref<104x1152xf32, #tpu.memory_space<vmem>>, vector<1x1152xf32>,
    %cst_61 = arith.constant 0.000000e+00 : f32
    %52 = vector.broadcast %cst_61 : f32 to vector<3x1152xf32>
    %c101 = arith.constant 101 : index
    %c0_62 = arith.constant 0 : index
    %53 = vector.load %arg8[%c101, %c0_62] : memref<104x1152xf32, #tpu.memory_space<vmem>>, vector<3x1152xf32>
    tpu.vector_store %arg8[%c101, %c0_62], %52 {strides = array<i32>} : memref<104x1152xf32, #tpu.memory_space<vmem>>, vector<3x1152xf32>,
    %c0_63 = arith.constant 0 : index
    %c0_64 = arith.constant 0 : index
    %54 = vector.load %arg1[%c0_63, %c0_64] : memref<128x104xf32, #tpu.memory_space<vmem>>, vector<128x104xf32>
    %c0_65 = arith.constant 0 : index
    %c0_66 = arith.constant 0 : index
    %55 = vector.load %arg8[%c0_65, %c0_66] : memref<104x1152xf32, #tpu.memory_space<vmem>>, vector<104x1152xf32>
    %cst_67 = arith.constant dense<0.000000e+00> : vector<128x1152xf32>
    %56 = tpu.matmul %54, %55, %cst_67 {dimension_numbers = #tpu.dot_dimension_numbers<[1], [0], [0], [1], [0, 0, 1, 1], [], []>} : vector<128x104xf32>, vector<104x1152xf32>, vector<128x1152xf32> -> vector<128x1152xf32>
    %c0_68 = arith.constant 0 : index
    %c0_69 = arith.constant 0 : index
    %57 = vector.load %arg6[%c0_68, %c0_69] : memref<1x1152xf32, #tpu.memory_space<vmem>>, vector<1x1152xf32>
    %58 = vector.broadcast %57 : vector<1x1152xf32> to vector<128x1152xf32>
    %59 = arith.mulf %56, %58 : vector<128x1152xf32>
    %cst_70 = arith.constant dense<0.000000e+00> : vector<128xf32>
    %60 = vector.multi_reduction <add>, %59, %cst_70 [1] : vector<128x1152xf32> to vector<128xf32>
    %61 = vector.shape_cast %60 : vector<128xf32> to vector<128x1xf32>
    %cst_71 = arith.constant 0.001953125 : f32
    %62 = vector.broadcast %cst_71 : f32 to vector<128x1xf32>
    %63 = arith.mulf %61, %62 : vector<128x1xf32>
    %64 = arith.mulf %59, %56 : vector<128x1152xf32>
    %cst_72 = arith.constant dense<0.000000e+00> : vector<128xf32>
    %65 = vector.multi_reduction <add>, %64, %cst_72 [1] : vector<128x1152xf32> to vector<128xf32>
    %66 = vector.shape_cast %65 : vector<128xf32> to vector<128x1xf32>
    %cst_73 = arith.constant 0.001953125 : f32
    %67 = vector.broadcast %cst_73 : f32 to vector<128x1xf32>
    %68 = arith.mulf %66, %67 : vector<128x1xf32>
    %69 = arith.mulf %63, %63 : vector<128x1xf32>
    %70 = arith.subf %68, %69 : vector<128x1xf32>
    %cst_74 = arith.constant 0.000000e+00 : f32
    %71 = vector.broadcast %cst_74 : f32 to vector<128x1xf32>
    %72 = arith.maximumf %70, %71 : vector<128x1xf32>
    %c0_75 = arith.constant 0 : index
    %c0_76 = arith.constant 0 : index
    %73 = vector.load %arg2[%c0_75, %c0_76] : memref<128x1xf32, #tpu.memory_space<vmem>>, vector<128x1xf32>
    %cst_77 = arith.constant 9.99999974E-6 : f32
    %74 = vector.broadcast %cst_77 : f32 to vector<128x1xf32>
    %75 = arith.addf %72, %74 : vector<128x1xf32>
    %76 = math.rsqrt %75 : vector<128x1xf32>
    %77 = arith.mulf %73, %76 : vector<128x1xf32>
    %c0_78 = arith.constant 0 : index
    %c0_79 = arith.constant 0 : index
    %78 = vector.load %arg3[%c0_78, %c0_79] : memref<128x1xf32, #tpu.memory_space<vmem>>, vector<128x1xf32>
    %79 = arith.mulf %63, %77 : vector<128x1xf32>
    %80 = arith.subf %78, %79 : vector<128x1xf32>
    %81 = vector.broadcast %77 : vector<128x1xf32> to vector<128x1152xf32>
    %82 = arith.mulf %56, %81 : vector<128x1152xf32>
    %83 = vector.broadcast %80 : vector<128x1xf32> to vector<128x1152xf32>
    %84 = arith.addf %82, %83 : vector<128x1152xf32>
    %cst_80 = arith.constant 0.000000e+00 : f32
    %85 = vector.broadcast %cst_80 : f32 to vector<128x1152xf32>
    %86 = arith.cmpf oge, %84, %85 : vector<128x1152xf32>
    %cst_81 = arith.constant 2.000000e-01 : f32
    %87 = vector.broadcast %cst_81 : f32 to vector<128x1152xf32>
    %88 = arith.mulf %87, %84 : vector<128x1152xf32>
    %89 = arith.select %86, %84, %88 : vector<128x1152xi1>, vector<128x1152xf32>
    %90 = vector.broadcast %57 : vector<1x1152xf32> to vector<128x1152xf32>
    %91 = arith.mulf %89, %90 : vector<128x1152xf32>
    %c0_82 = arith.constant 0 : index
    %c0_83 = arith.constant 0 : index
    %92 = vector.load %arg9[%c0_82, %c0_83] : memref<128x1152xf32, #tpu.memory_space<vmem>>, vector<128x1152xf32>
    tpu.vector_store %arg9[%c0_82, %c0_83], %91 {strides = array<i32>} : memref<128x1152xf32, #tpu.memory_space<vmem>>, vector<128x1152xf32>,
    %c0_84 = arith.constant 0 : index
    %c0_85 = arith.constant 0 : index
    %93 = vector.load %arg4[%c0_84, %c0_85] : memref<200x128xf32, #tpu.memory_space<vmem>>, vector<200x128xf32>
    %c0_86 = arith.constant 0 : index
    %c0_87 = arith.constant 0 : index
    %94 = vector.load %arg9[%c0_86, %c0_87] : memref<128x1152xf32, #tpu.memory_space<vmem>>, vector<128x1152xf32>
    %cst_88 = arith.constant dense<0.000000e+00> : vector<200x1152xf32>
    %95 = tpu.matmul %93, %94, %cst_88 {dimension_numbers = #tpu.dot_dimension_numbers<[1], [0], [0], [1], [0, 0, 1, 1], [], []>} : vector<200x128xf32>, vector<128x1152xf32>, vector<200x1152xf32> -> vector<200x1152xf32>
    %c0_89 = arith.constant 0 : index
    %c0_90 = arith.constant 0 : index
    %96 = vector.load %arg10[%c0_89, %c0_90] : memref<200x1152xf32, #tpu.memory_space<vmem>>, vector<200x1152xf32>
    tpu.vector_store %arg10[%c0_89, %c0_90], %95 {strides = array<i32>} : memref<200x1152xf32, #tpu.memory_space<vmem>>, vector<200x1152xf32>,
    %cst_91 = arith.constant 0.000000e+00 : f32
    %97 = vector.broadcast %cst_91 : f32 to vector<8x1024xf32>
    %c0_92 = arith.constant 0 : index
    %c0_93 = arith.constant 0 : index
    %98 = vector.load %arg5[%c0_92, %c0_93] : memref<8x1xf32, #tpu.memory_space<vmem>>, vector<8x1xf32>
    %99 = vector.broadcast %98 : vector<8x1xf32> to vector<8x1024xf32>
    %100 = arith.addf %97, %99 : vector<8x1024xf32>
    %c0_94 = arith.constant 0 : index
    %c0_95 = arith.constant 0 : index
    %101 = vector.load %arg10[%c0_94, %c0_95] : memref<200x1152xf32, #tpu.memory_space<vmem>>, vector<8x1024xf32>
    %102 = arith.addf %100, %101 : vector<8x1024xf32>
    %c8_96 = arith.constant 8 : index
    %c1_97 = arith.constant 1 : index
    %103 = vector.load %arg10[%c8_96, %c1_97] : memref<200x1152xf32, #tpu.memory_space<vmem>>, vector<8x1024xf32>
    %104 = arith.addf %102, %103 : vector<8x1024xf32>
    %c16_98 = arith.constant 16 : index
    %c2_99 = arith.constant 2 : index
    %105 = vector.load %arg10[%c16_98, %c2_99] : memref<200x1152xf32, #tpu.memory_space<vmem>>, vector<8x1024xf32>
    %106 = arith.addf %104, %105 : vector<8x1024xf32>
    %c24_100 = arith.constant 24 : index
    %c3_101 = arith.constant 3 : index
    %107 = vector.load %arg10[%c24_100, %c3_101] : memref<200x1152xf32, #tpu.memory_space<vmem>>, vector<8x1024xf32>
    %108 = arith.addf %106, %107 : vector<8x1024xf32>
    %c32_102 = arith.constant 32 : index
    %c4_103 = arith.constant 4 : index
    %109 = vector.load %arg10[%c32_102, %c4_103] : memref<200x1152xf32, #tpu.memory_space<vmem>>, vector<8x1024xf32>
    %110 = arith.addf %108, %109 : vector<8x1024xf32>
    %c40_104 = arith.constant 40 : index
    %c24_105 = arith.constant 24 : index
    %111 = vector.load %arg10[%c40_104, %c24_105] : memref<200x1152xf32, #tpu.memory_space<vmem>>, vector<8x1024xf32>
    %112 = arith.addf %110, %111 : vector<8x1024xf32>
    %c48_106 = arith.constant 48 : index
    %c25_107 = arith.constant 25 : index
    %113 = vector.load %arg10[%c48_106, %c25_107] : memref<200x1152xf32, #tpu.memory_space<vmem>>, vector<8x1024xf32>
    %114 = arith.addf %112, %113 : vector<8x1024xf32>
    %c56_108 = arith.constant 56 : index
    %c26_109 = arith.constant 26 : index
    %115 = vector.load %arg10[%c56_108, %c26_109] : memref<200x1152xf32, #tpu.memory_space<vmem>>, vector<8x1024xf32>
    %116 = arith.addf %114, %115 : vector<8x1024xf32>
    %c64_110 = arith.constant 64 : index
    %c27_111 = arith.constant 27 : index
    %117 = vector.load %arg10[%c64_110, %c27_111] : memref<200x1152xf32, #tpu.memory_space<vmem>>, vector<8x1024xf32>
    %118 = arith.addf %116, %117 : vector<8x1024xf32>
    %c72_112 = arith.constant 72 : index
    %c28_113 = arith.constant 28 : index
    %119 = vector.load %arg10[%c72_112, %c28_113] : memref<200x1152xf32, #tpu.memory_space<vmem>>, vector<8x1024xf32>
    %120 = arith.addf %118, %119 : vector<8x1024xf32>
    %c80_114 = arith.constant 80 : index
    %c48_115 = arith.constant 48 : index
    %121 = vector.load %arg10[%c80_114, %c48_115] : memref<200x1152xf32, #tpu.memory_space<vmem>>, vector<8x1024xf32>
    %122 = arith.addf %120, %121 : vector<8x1024xf32>
    %c88_116 = arith.constant 88 : index
    %c49_117 = arith.constant 49 : index
    %123 = vector.load %arg10[%c88_116, %c49_117] : memref<200x1152xf32, #tpu.memory_space<vmem>>, vector<8x1024xf32>
    %124 = arith.addf %122, %123 : vector<8x1024xf32>
    %c96_118 = arith.constant 96 : index
    %c50_119 = arith.constant 50 : index
    %125 = vector.load %arg10[%c96_118, %c50_119] : memref<200x1152xf32, #tpu.memory_space<vmem>>, vector<8x1024xf32>
    %126 = arith.addf %124, %125 : vector<8x1024xf32>
    %c104 = arith.constant 104 : index
    %c51_120 = arith.constant 51 : index
    %127 = vector.load %arg10[%c104, %c51_120] : memref<200x1152xf32, #tpu.memory_space<vmem>>, vector<8x1024xf32>
    %128 = arith.addf %126, %127 : vector<8x1024xf32>
    %c112 = arith.constant 112 : index
    %c52_121 = arith.constant 52 : index
    %129 = vector.load %arg10[%c112, %c52_121] : memref<200x1152xf32, #tpu.memory_space<vmem>>, vector<8x1024xf32>
    %130 = arith.addf %128, %129 : vector<8x1024xf32>
    %c120 = arith.constant 120 : index
    %c72_122 = arith.constant 72 : index
    %131 = vector.load %arg10[%c120, %c72_122] : memref<200x1152xf32, #tpu.memory_space<vmem>>, vector<8x1024xf32>
    %132 = arith.addf %130, %131 : vector<8x1024xf32>
    %c128 = arith.constant 128 : index
    %c73_123 = arith.constant 73 : index
    %133 = vector.load %arg10[%c128, %c73_123] : memref<200x1152xf32, #tpu.memory_space<vmem>>, vector<8x1024xf32>
    %134 = arith.addf %132, %133 : vector<8x1024xf32>
    %c136 = arith.constant 136 : index
    %c74_124 = arith.constant 74 : index
    %135 = vector.load %arg10[%c136, %c74_124] : memref<200x1152xf32, #tpu.memory_space<vmem>>, vector<8x1024xf32>
    %136 = arith.addf %134, %135 : vector<8x1024xf32>
    %c144 = arith.constant 144 : index
    %c75_125 = arith.constant 75 : index
    %137 = vector.load %arg10[%c144, %c75_125] : memref<200x1152xf32, #tpu.memory_space<vmem>>, vector<8x1024xf32>
    %138 = arith.addf %136, %137 : vector<8x1024xf32>
    %c152 = arith.constant 152 : index
    %c76_126 = arith.constant 76 : index
    %139 = vector.load %arg10[%c152, %c76_126] : memref<200x1152xf32, #tpu.memory_space<vmem>>, vector<8x1024xf32>
    %140 = arith.addf %138, %139 : vector<8x1024xf32>
    %c160 = arith.constant 160 : index
    %c96_127 = arith.constant 96 : index
    %141 = vector.load %arg10[%c160, %c96_127] : memref<200x1152xf32, #tpu.memory_space<vmem>>, vector<8x1024xf32>
    %142 = arith.addf %140, %141 : vector<8x1024xf32>
    %c168 = arith.constant 168 : index
    %c97_128 = arith.constant 97 : index
    %143 = vector.load %arg10[%c168, %c97_128] : memref<200x1152xf32, #tpu.memory_space<vmem>>, vector<8x1024xf32>
    %144 = arith.addf %142, %143 : vector<8x1024xf32>
    %c176 = arith.constant 176 : index
    %c98_129 = arith.constant 98 : index
    %145 = vector.load %arg10[%c176, %c98_129] : memref<200x1152xf32, #tpu.memory_space<vmem>>, vector<8x1024xf32>
    %146 = arith.addf %144, %145 : vector<8x1024xf32>
    %c184 = arith.constant 184 : index
    %c99_130 = arith.constant 99 : index
    %147 = vector.load %arg10[%c184, %c99_130] : memref<200x1152xf32, #tpu.memory_space<vmem>>, vector<8x1024xf32>
    %148 = arith.addf %146, %147 : vector<8x1024xf32>
    %c192 = arith.constant 192 : index
    %c100_131 = arith.constant 100 : index
    %149 = vector.load %arg10[%c192, %c100_131] : memref<200x1152xf32, #tpu.memory_space<vmem>>, vector<8x1024xf32>
    %150 = arith.addf %148, %149 : vector<8x1024xf32>
    %151 = vector.extract_strided_slice %150 {offsets = [0, 0], sizes = [4, 1024], strides = [1, 1]} : vector<8x1024xf32> to vector<4x1024xf32>
    %152 = arith.negf %151 : vector<4x1024xf32>
    %153 = math.exp %152 : vector<4x1024xf32>
    %cst_132 = arith.constant 1.000000e+00 : f32
    %154 = vector.broadcast %cst_132 : f32 to vector<4x1024xf32>
    %155 = arith.addf %154, %153 : vector<4x1024xf32>
    %156 = arith.divf %154, %155 : vector<4x1024xf32>
    %157 = vector.extract_strided_slice %150 {offsets = [4, 0], sizes = [4, 1024], strides = [1, 1]} : vector<8x1024xf32> to vector<4x1024xf32>
    %158 = math.tanh %157 : vector<4x1024xf32>
    %c0_133 = arith.constant 0 : index
    %c100_134 = arith.constant 100 : index
    %159 = vector.load %arg0[%c0_133, %c100_134] : memref<4x1280xf32, #tpu.memory_space<vmem>>, vector<4x1024xf32>
    %160 = arith.mulf %156, %159 : vector<4x1024xf32>
    %cst_135 = arith.constant 1.000000e+00 : f32
    %161 = vector.broadcast %cst_135 : f32 to vector<4x1024xf32>
    %162 = arith.subf %161, %156 : vector<4x1024xf32>
    %163 = arith.mulf %162, %158 : vector<4x1024xf32>
    %164 = arith.addf %160, %163 : vector<4x1024xf32>
    %c0_136 = arith.constant 0 : index
    %c0_137 = arith.constant 0 : index
    %165 = vector.load %arg7[%c0_136, %c0_137] : memref<20x1024xf32, #tpu.memory_space<vmem>>, vector<4x1024xf32>
    tpu.vector_store %arg7[%c0_136, %c0_137], %164 {strides = array<i32>} : memref<20x1024xf32, #tpu.memory_space<vmem>>, vector<4x1024xf32>,
    %c4_138 = arith.constant 4 : index
    %c0_139 = arith.constant 0 : index
    %166 = vector.load %arg7[%c4_138, %c0_139] : memref<20x1024xf32, #tpu.memory_space<vmem>>, vector<4x1024xf32>
    tpu.vector_store %arg7[%c4_138, %c0_139], %156 {strides = array<i32>} : memref<20x1024xf32, #tpu.memory_space<vmem>>, vector<4x1024xf32>,
    %c8_140 = arith.constant 8 : index
    %c0_141 = arith.constant 0 : index
    %167 = vector.load %arg7[%c8_140, %c0_141] : memref<20x1024xf32, #tpu.memory_space<vmem>>, vector<4x1024xf32>
    tpu.vector_store %arg7[%c8_140, %c0_141], %160 {strides = array<i32>} : memref<20x1024xf32, #tpu.memory_space<vmem>>, vector<4x1024xf32>,
    %c12_142 = arith.constant 12 : index
    %c0_143 = arith.constant 0 : index
    %168 = vector.load %arg7[%c12_142, %c0_143] : memref<20x1024xf32, #tpu.memory_space<vmem>>, vector<4x1024xf32>
    tpu.vector_store %arg7[%c12_142, %c0_143], %158 {strides = array<i32>} : memref<20x1024xf32, #tpu.memory_space<vmem>>, vector<4x1024xf32>,
    %c16_144 = arith.constant 16 : index
    %c0_145 = arith.constant 0 : index
    %169 = vector.load %arg7[%c16_144, %c0_145] : memref<20x1024xf32, #tpu.memory_space<vmem>>, vector<4x1024xf32>
    tpu.vector_store %arg7[%c16_144, %c0_145], %163 {strides = array<i32>} : memref<20x1024xf32, #tpu.memory_space<vmem>>, vector<4x1024xf32>,
    return
  }
}

</mosaic_0001>

<llo_original>
// kernel: generator_forward.1
$region0: #{generator_forward.1}
  #allocation0 [shape = 'u32[]', space=smem, size = 0x4, offset = 0x4, fixed_abs, tag = 'smem constant byte address 0x4 - core index']
  #allocation1 [shape = 'u32[144,128]{1,0:T(1,128)}', space=vmem, size = 0x12000, scoped, tag = 'internal scratch']
  #allocation2 [shape = 'f32[104,1152]{1,0:T(8,128)}', space=vmem, size = 0x75000, scoped, tag = 'scratch operand']
  #allocation3 [shape = 'f32[128,1152]{1,0:T(8,128)}', space=vmem, size = 0x90000, scoped, tag = 'scratch operand']
  #allocation4 [shape = 'f32[200,1152]{1,0:T(8,128)}', space=vmem, size = 0xe1000, scoped, tag = 'scratch operand']
  %s0 = inlined_call_operand.vmem [shape: f32[4,1280], index: 0, kind: input, shape index: {}]
  %s1 = inlined_call_operand.vmem [shape: f32[128,104], index: 1, kind: input, shape index: {}]
  %s2 = inlined_call_operand.vmem [shape: f32[128,1], index: 2, kind: input, shape index: {}]
  %s3 = inlined_call_operand.vmem [shape: f32[128,1], index: 3, kind: input, shape index: {}]
  %s4 = inlined_call_operand.vmem [shape: f32[200,128], index: 4, kind: input, shape index: {}]
  %s5 = inlined_call_operand.vmem [shape: f32[8,1], index: 5, kind: input, shape index: {}]
  %s6 = inlined_call_operand.vmem [shape: f32[1,1152], index: 6, kind: input, shape index: {}]
  %s7 = inlined_call_operand.vmem [shape: f32[20,1024], index: 7, kind: output, shape index: {}]
  %s8 = sld [smem:[#allocation0]]
  $region38: #{generator_forward.1} parent=0
    _
  %s10 = ssub.s32 1, %s8
  %s11 = scalar_select 0, %s10, %s8
  // Predicated region
  $region2: #{generator_forward.1} parent=0 // pred_check
    _
  $region3: #{generator_forward.1} parent=0 // pred_check_branch
    %13 = sbr.rel (0) target = $region5
  $region4: #{generator_forward.1} parent=0 // pred_region
    _
  $region5: #{generator_forward.1} parent=0 // pred_fallthru
    _
  // Predicated region
  $region6: #{generator_forward.1} parent=0 // pred_check
    _
  $region7: #{generator_forward.1} parent=0 // pred_check_branch
    %15 = sbr.rel (0) target = $region9
  $region8: #{generator_forward.1} parent=0 // pred_region
    _
  $region9: #{generator_forward.1} parent=0 // pred_fallthru
    _
  // Predicated region
  $region10: #{generator_forward.1} parent=0 // pred_check
    _
  $region11: #{generator_forward.1} parent=0 // pred_check_branch
    %17 = sbr.rel (0) target = $region13
  $region12: #{generator_forward.1} parent=0 // pred_region
    _
  $region13: #{generator_forward.1} parent=0 // pred_fallthru
    _
  // Predicated region
  $region14: #{generator_forward.1} parent=0 // pred_check
    _
  $region15: #{generator_forward.1} parent=0 // pred_check_branch
    %19 = sbr.rel (0) target = $region17
  $region16: #{generator_forward.1} parent=0 // pred_region
    _
  $region17: #{generator_forward.1} parent=0 // pred_fallthru
    _
  // Predicated region
  $region18: #{generator_forward.1} parent=0 // pred_check
    _
  $region19: #{generator_forward.1} parent=0 // pred_check_branch
    %21 = sbr.rel (0) target = $region21
  $region20: #{generator_forward.1} parent=0 // pred_region
    _
  $region21: #{generator_forward.1} parent=0 // pred_fallthru
    _
  // Predicated region
  $region22: #{generator_forward.1} parent=0 // pred_check
    _
  $region23: #{generator_forward.1} parent=0 // pred_check_branch
    %23 = sbr.rel (0) target = $region25
  $region24: #{generator_forward.1} parent=0 // pred_region
    _
  $region25: #{generator_forward.1} parent=0 // pred_fallthru
    _
  // Predicated region
  $region26: #{generator_forward.1} parent=0 // pred_check
    _
  $region27: #{generator_forward.1} parent=0 // pred_check_branch
    %25 = sbr.rel (0) target = $region29
  $region28: #{generator_forward.1} parent=0 // pred_region
    _
  $region29: #{generator_forward.1} parent=0 // pred_fallthru
    _
  %v26 = vld [vmem:[%s0] sm:$0xff]
  %v27 = vld [vmem:[%s0 + $0x8] sm:$0xff]
  %v28 = vld [vmem:[%s0 + $0x10] sm:$0xff]
  %v29 = vld [vmem:[%s0 + $0x18] sm:$0xff]
  %v30 = vld [vmem:[%s0 + $0x20] sm:$0xf]
  %v35 = vcombine.high %v26, %v26
  %v36 = vcombine.high %v27, %v27
  %v37 = vcombine.high %v28, %v28
  %v38 = vcombine.high %v29, %v29
  %43 = vst [vmem:[#allocation2] sm:$0xf] %v26
  %44 = vst [vmem:[#allocation2 + $0x8] sm:$0xf] %v35
  %45 = vst [vmem:[#allocation2 + $0x10] sm:$0xf] %v27
  %46 = vst [vmem:[#allocation2 + $0x18] sm:$0xf] %v36
  %47 = vst [vmem:[#allocation2 + $0x20] sm:$0xf] %v28
  %48 = vst [vmem:[#allocation2 + $0x28] sm:$0xf] %v37
  %49 = vst [vmem:[#allocation2 + $0x30] sm:$0xf] %v29
  %50 = vst [vmem:[#allocation2 + $0x38] sm:$0xf] %v38
  %51 = vst [vmem:[#allocation2 + $0x40] sm:$0xf] %v30
  %v52 = vld [vmem:[%s0] sm:$0xff]
  %v53 = vld [vmem:[%s0 + $0x8] sm:$0xff]
  %v54 = vld [vmem:[%s0 + $0x10] sm:$0xff]
  %v55 = vld [vmem:[%s0 + $0x18] sm:$0xff]
  %v56 = vld [vmem:[%s0 + $0x20] sm:$0xff]
  %v62 = vcombine.low %v52, %v52
  %v63 = vcombine.low %v53, %v53
  %v64 = vcombine.low %v54, %v54
  %v65 = vcombine.low %v55, %v55
  %v66 = vcombine.low %v56, %v56
  %67 = vrot.lane.b32.xlu0 %v62, 127
  %v68 = vpop.permute.xlu0 %67
  %69 = vrot.lane.b32.xlu0 %v52, 127
  %v70 = vpop.permute.xlu0 %69
  %71 = vrot.lane.b32.xlu0 %v63, 127
  %v72 = vpop.permute.xlu0 %71
  %73 = vrot.lane.b32.xlu0 %v53, 127
  %v74 = vpop.permute.xlu0 %73
  %75 = vrot.lane.b32.xlu0 %v64, 127
  %v76 = vpop.permute.xlu0 %75
  %77 = vrot.lane.b32.xlu0 %v54, 127
  %v78 = vpop.permute.xlu0 %77
  %79 = vrot.lane.b32.xlu0 %v65, 127
  %v80 = vpop.permute.xlu0 %79
  %81 = vrot.lane.b32.xlu0 %v55, 127
  %v82 = vpop.permute.xlu0 %81
  %83 = vrot.lane.b32.xlu0 %v66, 127
  %v84 = vpop.permute.xlu0 %83
  %85 = vrot.lane.b32.xlu0 %v56, 127
  %v86 = vpop.permute.xlu0 %85
  %vm87 = vcmask 1039360
  %v88 = vsel %vm87, %v68, %v70
  %v89 = vsel %vm87, %v70, %v72
  %v90 = vsel %vm87, %v72, %v74
  %v91 = vsel %vm87, %v74, %v76
  %v92 = vsel %vm87, %v76, %v78
  %v93 = vsel %vm87, %v78, %v80
  %v94 = vsel %vm87, %v80, %v82
  %v95 = vsel %vm87, %v82, %v84
  %v96 = vsel %vm87, %v84, %v86
  %106 = vst [vmem:[#allocation2] sm:$0xf0] %v88
  %107 = vst [vmem:[#allocation2 + $0x8] sm:$0xf0] %v89
  %108 = vst [vmem:[#allocation2 + $0x10] sm:$0xf0] %v90
  %109 = vst [vmem:[#allocation2 + $0x18] sm:$0xf0] %v91
  %110 = vst [vmem:[#allocation2 + $0x20] sm:$0xf0] %v92
  %111 = vst [vmem:[#allocation2 + $0x28] sm:$0xf0] %v93
  %112 = vst [vmem:[#allocation2 + $0x30] sm:$0xf0] %v94
  %113 = vst [vmem:[#allocation2 + $0x38] sm:$0xf0] %v95
  %114 = vst [vmem:[#allocation2 + $0x40] sm:$0xf0] %v96
  %v115 = vld [vmem:[%s0] sm:$0xff]
  %v116 = vld [vmem:[%s0 + $0x8] sm:$0xff]
  %v117 = vld [vmem:[%s0 + $0x10] sm:$0xff]
  %v118 = vld [vmem:[%s0 + $0x18] sm:$0xff]
  %v119 = vld [vmem:[%s0 + $0x20] sm:$0xff]
  %v125 = vcombine.high %v115, %v115
  %v126 = vcombine.high %v116, %v116
  %v127 = vcombine.high %v117, %v117
  %v128 = vcombine.high %v118, %v118
  %v129 = vcombine.high %v119, %v119
  %130 = vrot.lane.b32.xlu0 %v115, 126
  %v131 = vpop.permute.xlu0 %130
  %132 = vrot.lane.b32.xlu0 %v125, 126
  %v133 = vpop.permute.xlu0 %132
  %134 = vrot.lane.b32.xlu0 %v116, 126
  %v135 = vpop.permute.xlu0 %134
  %136 = vrot.lane.b32.xlu0 %v126, 126
  %v137 = vpop.permute.xlu0 %136
  %138 = vrot.lane.b32.xlu0 %v117, 126
  %v139 = vpop.permute.xlu0 %138
  %140 = vrot.lane.b32.xlu0 %v127, 126
  %v141 = vpop.permute.xlu0 %140
  %142 = vrot.lane.b32.xlu0 %v118, 126
  %v143 = vpop.permute.xlu0 %142
  %144 = vrot.lane.b32.xlu0 %v128, 126
  %v145 = vpop.permute.xlu0 %144
  %146 = vrot.lane.b32.xlu0 %v119, 126
  %v147 = vpop.permute.xlu0 %146
  %148 = vrot.lane.b32.xlu0 %v129, 126
  %v149 = vpop.permute.xlu0 %148
  %vm150 = vcmask 1031168
  %v151 = vsel %vm150, %v131, %v133
  %v152 = vsel %vm150, %v133, %v135
  %v153 = vsel %vm150, %v135, %v137
  %v154 = vsel %vm150, %v137, %v139
  %v155 = vsel %vm150, %v139, %v141
  %v156 = vsel %vm150, %v141, %v143
  %v157 = vsel %vm150, %v143, %v145
  %v158 = vsel %vm150, %v145, %v147
  %v159 = vsel %vm150, %v147, %v149
  %169 = vst [vmem:[#allocation2 + $0x48] sm:$0xf] %v151
  %170 = vst [vmem:[#allocation2 + $0x50] sm:$0xf] %v152
  %171 = vst [vmem:[#allocation2 + $0x58] sm:$0xf] %v153
  %172 = vst [vmem:[#allocation2 + $0x60] sm:$0xf] %v154
  %173 = vst [vmem:[#allocation2 + $0x68] sm:$0xf] %v155
  %174 = vst [vmem:[#allocation2 + $0x70] sm:$0xf] %v156
  %175 = vst [vmem:[#allocation2 + $0x78] sm:$0xf] %v157
  %176 = vst [vmem:[#allocation2 + $0x80] sm:$0xf] %v158
  %177 = vst [vmem:[#allocation2 + $0x88] sm:$0xf] %v159
  %v178 = vld [vmem:[%s0] sm:$0xff]
  %v179 = vld [vmem:[%s0 + $0x8] sm:$0xff]
  %v180 = vld [vmem:[%s0 + $0x10] sm:$0xff]
  %v181 = vld [vmem:[%s0 + $0x18] sm:$0xff]
  %v182 = vld [vmem:[%s0 + $0x20] sm:$0xff]
  %v188 = vcombine.low %v178, %v178
  %v189 = vcombine.low %v179, %v179
  %v190 = vcombine.low %v180, %v180
  %v191 = vcombine.low %v181, %v181
  %v192 = vcombine.low %v182, %v182
  %193 = vrot.lane.b32.xlu0 %v188, 125
  %v194 = vpop.permute.xlu0 %193
  %195 = vrot.lane.b32.xlu0 %v178, 125
  %v196 = vpop.permute.xlu0 %195
  %197 = vrot.lane.b32.xlu0 %v189, 125
  %v198 = vpop.permute.xlu0 %197
  %199 = vrot.lane.b32.xlu0 %v179, 125
  %v200 = vpop.permute.xlu0 %199
  %201 = vrot.lane.b32.xlu0 %v190, 125
  %v202 = vpop.permute.xlu0 %201
  %203 = vrot.lane.b32.xlu0 %v180, 125
  %v204 = vpop.permute.xlu0 %203
  %205 = vrot.lane.b32.xlu0 %v191, 125
  %v206 = vpop.permute.xlu0 %205
  %207 = vrot.lane.b32.xlu0 %v181, 125
  %v208 = vpop.permute.xlu0 %207
  %209 = vrot.lane.b32.xlu0 %v192, 125
  %v210 = vpop.permute.xlu0 %209
  %211 = vrot.lane.b32.xlu0 %v182, 125
  %v212 = vpop.permute.xlu0 %211
  %vm213 = vcmask 1022976
  %v214 = vsel %vm213, %v194, %v196
  %v215 = vsel %vm213, %v196, %v198
  %v216 = vsel %vm213, %v198, %v200
  %v217 = vsel %vm213, %v200, %v202
  %v218 = vsel %vm213, %v202, %v204
  %v219 = vsel %vm213, %v204, %v206
  %v220 = vsel %vm213, %v206, %v208
  %v221 = vsel %vm213, %v208, %v210
  %v222 = vsel %vm213, %v210, %v212
  %232 = vst [vmem:[#allocation2 + $0x48] sm:$0xf0] %v214
  %233 = vst [vmem:[#allocation2 + $0x50] sm:$0xf0] %v215
  %234 = vst [vmem:[#allocation2 + $0x58] sm:$0xf0] %v216
  %235 = vst [vmem:[#allocation2 + $0x60] sm:$0xf0] %v217
  %236 = vst [vmem:[#allocation2 + $0x68] sm:$0xf0] %v218
  %237 = vst [vmem:[#allocation2 + $0x70] sm:$0xf0] %v219
  %238 = vst [vmem:[#allocation2 + $0x78] sm:$0xf0] %v220
  %239 = vst [vmem:[#allocation2 + $0x80] sm:$0xf0] %v221
  %240 = vst [vmem:[#allocation2 + $0x88] sm:$0xf0] %v222
  %v241 = vld [vmem:[%s0] sm:$0xff]
  %v242 = vld [vmem:[%s0 + $0x8] sm:$0xff]
  %v243 = vld [vmem:[%s0 + $0x10] sm:$0xff]
  %v244 = vld [vmem:[%s0 + $0x18] sm:$0xff]
  %v245 = vld [vmem:[%s0 + $0x20] sm:$0xff]
  %v251 = vcombine.high %v241, %v241
  %v252 = vcombine.high %v242, %v242
  %v253 = vcombine.high %v243, %v243
  %v254 = vcombine.high %v244, %v244
  %v255 = vcombine.high %v245, %v245
  %256 = vrot.lane.b32.xlu0 %v241, 124
  %v257 = vpop.permute.xlu0 %256
  %258 = vrot.lane.b32.xlu0 %v251, 124
  %v259 = vpop.permute.xlu0 %258
  %260 = vrot.lane.b32.xlu0 %v242, 124
  %v261 = vpop.permute.xlu0 %260
  %262 = vrot.lane.b32.xlu0 %v252, 124
  %v263 = vpop.permute.xlu0 %262
  %264 = vrot.lane.b32.xlu0 %v243, 124
  %v265 = vpop.permute.xlu0 %264
  %266 = vrot.lane.b32.xlu0 %v253, 124
  %v267 = vpop.permute.xlu0 %266
  %268 = vrot.lane.b32.xlu0 %v244, 124
  %v269 = vpop.permute.xlu0 %268
  %270 = vrot.lane.b32.xlu0 %v254, 124
  %v271 = vpop.permute.xlu0 %270
  %272 = vrot.lane.b32.xlu0 %v245, 124
  %v273 = vpop.permute.xlu0 %272
  %274 = vrot.lane.b32.xlu0 %v255, 124
  %v275 = vpop.permute.xlu0 %274
  %vm276 = vcmask 1014784
  %v277 = vsel %vm276, %v257, %v259
  %v278 = vsel %vm276, %v259, %v261
  %v279 = vsel %vm276, %v261, %v263
  %v280 = vsel %vm276, %v263, %v265
  %v281 = vsel %vm276, %v265, %v267
  %v282 = vsel %vm276, %v267, %v269
  %v283 = vsel %vm276, %v269, %v271
  %v284 = vsel %vm276, %v271, %v273
  %v285 = vsel %vm276, %v273, %v275
  %295 = vst [vmem:[#allocation2 + $0x90] sm:$0xf] %v277
  %296 = vst [vmem:[#allocation2 + $0x98] sm:$0xf] %v278
  %297 = vst [vmem:[#allocation2 + $0xa0] sm:$0xf] %v279
  %298 = vst [vmem:[#allocation2 + $0xa8] sm:$0xf] %v280
  %299 = vst [vmem:[#allocation2 + $0xb0] sm:$0xf] %v281
  %300 = vst [vmem:[#allocation2 + $0xb8] sm:$0xf] %v282
  %301 = vst [vmem:[#allocation2 + $0xc0] sm:$0xf] %v283
  %302 = vst [vmem:[#allocation2 + $0xc8] sm:$0xf] %v284
  %303 = vst [vmem:[#allocation2 + $0xd0] sm:$0xf] %v285
  %v304 = vld [vmem:[%s0] sm:$0xff]
  %v305 = vld [vmem:[%s0 + $0x8] sm:$0xff]
  %v306 = vld [vmem:[%s0 + $0x10] sm:$0xff]
  %v307 = vld [vmem:[%s0 + $0x18] sm:$0xff]
  %v308 = vld [vmem:[%s0 + $0x20] sm:$0xff]
  %v314 = vcombine.low %v304, %v304
  %v315 = vcombine.low %v305, %v305
  %v316 = vcombine.low %v306, %v306
  %v317 = vcombine.low %v307, %v307
  %v318 = vcombine.low %v308, %v308
  %319 = vrot.lane.b32.xlu0 %v314, 104
  %v320 = vpop.permute.xlu0 %319
  %321 = vrot.lane.b32.xlu0 %v304, 104
  %v322 = vpop.permute.xlu0 %321
  %323 = vrot.lane.b32.xlu0 %v315, 104
  %v324 = vpop.permute.xlu0 %323
  %325 = vrot.lane.b32.xlu0 %v305, 104
  %v326 = vpop.permute.xlu0 %325
  %327 = vrot.lane.b32.xlu0 %v316, 104
  %v328 = vpop.permute.xlu0 %327
  %329 = vrot.lane.b32.xlu0 %v306, 104
  %v330 = vpop.permute.xlu0 %329
  %331 = vrot.lane.b32.xlu0 %v317, 104
  %v332 = vpop.permute.xlu0 %331
  %333 = vrot.lane.b32.xlu0 %v307, 104
  %v334 = vpop.permute.xlu0 %333
  %335 = vrot.lane.b32.xlu0 %v318, 104
  %v336 = vpop.permute.xlu0 %335
  %337 = vrot.lane.b32.xlu0 %v308, 104
  %v338 = vpop.permute.xlu0 %337
  %vm339 = vcmask 850944
  %v340 = vsel %vm339, %v320, %v322
  %v341 = vsel %vm339, %v322, %v324
  %v342 = vsel %vm339, %v324, %v326
  %v343 = vsel %vm339, %v326, %v328
  %v344 = vsel %vm339, %v328, %v330
  %v345 = vsel %vm339, %v330, %v332
  %v346 = vsel %vm339, %v332, %v334
  %v347 = vsel %vm339, %v334, %v336
  %v348 = vsel %vm339, %v336, %v338
  %358 = vst [vmem:[#allocation2 + $0x90] sm:$0xf0] %v340
  %359 = vst [vmem:[#allocation2 + $0x98] sm:$0xf0] %v341
  %360 = vst [vmem:[#allocation2 + $0xa0] sm:$0xf0] %v342
  %361 = vst [vmem:[#allocation2 + $0xa8] sm:$0xf0] %v343
  %362 = vst [vmem:[#allocation2 + $0xb0] sm:$0xf0] %v344
  %363 = vst [vmem:[#allocation2 + $0xb8] sm:$0xf0] %v345
  %364 = vst [vmem:[#allocation2 + $0xc0] sm:$0xf0] %v346
  %365 = vst [vmem:[#allocation2 + $0xc8] sm:$0xf0] %v347
  %366 = vst [vmem:[#allocation2 + $0xd0] sm:$0xf0] %v348
  %v367 = vld [vmem:[%s0] sm:$0xff]
  %v368 = vld [vmem:[%s0 + $0x8] sm:$0xff]
  %v369 = vld [vmem:[%s0 + $0x10] sm:$0xff]
  %v370 = vld [vmem:[%s0 + $0x18] sm:$0xff]
  %v371 = vld [vmem:[%s0 + $0x20] sm:$0xff]
  %v377 = vcombine.high %v367, %v367
  %v378 = vcombine.high %v368, %v368
  %v379 = vcombine.high %v369, %v369
  %v380 = vcombine.high %v370, %v370
  %v381 = vcombine.high %v371, %v371
  %382 = vrot.lane.b32.xlu0 %v367, 103
  %v383 = vpop.permute.xlu0 %382
  %384 = vrot.lane.b32.xlu0 %v377, 103
  %v385 = vpop.permute.xlu0 %384
  %386 = vrot.lane.b32.xlu0 %v368, 103
  %v387 = vpop.permute.xlu0 %386
  %388 = vrot.lane.b32.xlu0 %v378, 103
  %v389 = vpop.permute.xlu0 %388
  %390 = vrot.lane.b32.xlu0 %v369, 103
  %v391 = vpop.permute.xlu0 %390
  %392 = vrot.lane.b32.xlu0 %v379, 103
  %v393 = vpop.permute.xlu0 %392
  %394 = vrot.lane.b32.xlu0 %v370, 103
  %v395 = vpop.permute.xlu0 %394
  %396 = vrot.lane.b32.xlu0 %v380, 103
  %v397 = vpop.permute.xlu0 %396
  %398 = vrot.lane.b32.xlu0 %v371, 103
  %v399 = vpop.permute.xlu0 %398
  %400 = vrot.lane.b32.xlu0 %v381, 103
  %v401 = vpop.permute.xlu0 %400
  %vm402 = vcmask 842752
  %v403 = vsel %vm402, %v383, %v385
  %v404 = vsel %vm402, %v385, %v387
  %v405 = vsel %vm402, %v387, %v389
  %v406 = vsel %vm402, %v389, %v391
  %v407 = vsel %vm402, %v391, %v393
  %v408 = vsel %vm402, %v393, %v395
  %v409 = vsel %vm402, %v395, %v397
  %v410 = vsel %vm402, %v397, %v399
  %v411 = vsel %vm402, %v399, %v401
  %421 = vst [vmem:[#allocation2 + $0xd8] sm:$0xf] %v403
  %422 = vst [vmem:[#allocation2 + $0xe0] sm:$0xf] %v404
  %423 = vst [vmem:[#allocation2 + $0xe8] sm:$0xf] %v405
  %424 = vst [vmem:[#allocation2 + $0xf0] sm:$0xf] %v406
  %425 = vst [vmem:[#allocation2 + $0xf8] sm:$0xf] %v407
  %426 = vst [vmem:[#allocation2 + $0x100] sm:$0xf] %v408
  %427 = vst [vmem:[#allocation2 + $0x108] sm:$0xf] %v409
  %428 = vst [vmem:[#allocation2 + $0x110] sm:$0xf] %v410
  %429 = vst [vmem:[#allocation2 + $0x118] sm:$0xf] %v411
  %v430 = vld [vmem:[%s0] sm:$0xff]
  %v431 = vld [vmem:[%s0 + $0x8] sm:$0xff]
  %v432 = vld [vmem:[%s0 + $0x10] sm:$0xff]
  %v433 = vld [vmem:[%s0 + $0x18] sm:$0xff]
  %v434 = vld [vmem:[%s0 + $0x20] sm:$0xff]
  %v440 = vcombine.low %v430, %v430
  %v441 = vcombine.low %v431, %v431
  %v442 = vcombine.low %v432, %v432
  %v443 = vcombine.low %v433, %v433
  %v444 = vcombine.low %v434, %v434
  %445 = vrot.lane.b32.xlu0 %v440, 102
  %v446 = vpop.permute.xlu0 %445
  %447 = vrot.lane.b32.xlu0 %v430, 102
  %v448 = vpop.permute.xlu0 %447
  %449 = vrot.lane.b32.xlu0 %v441, 102
  %v450 = vpop.permute.xlu0 %449
  %451 = vrot.lane.b32.xlu0 %v431, 102
  %v452 = vpop.permute.xlu0 %451
  %453 = vrot.lane.b32.xlu0 %v442, 102
  %v454 = vpop.permute.xlu0 %453
  %455 = vrot.lane.b32.xlu0 %v432, 102
  %v456 = vpop.permute.xlu0 %455
  %457 = vrot.lane.b32.xlu0 %v443, 102
  %v458 = vpop.permute.xlu0 %457
  %459 = vrot.lane.b32.xlu0 %v433, 102
  %v460 = vpop.permute.xlu0 %459
  %461 = vrot.lane.b32.xlu0 %v444, 102
  %v462 = vpop.permute.xlu0 %461
  %463 = vrot.lane.b32.xlu0 %v434, 102
  %v464 = vpop.permute.xlu0 %463
  %vm465 = vcmask 834560
  %v466 = vsel %vm465, %v446, %v448
  %v467 = vsel %vm465, %v448, %v450
  %v468 = vsel %vm465, %v450, %v452
  %v469 = vsel %vm465, %v452, %v454
  %v470 = vsel %vm465, %v454, %v456
  %v471 = vsel %vm465, %v456, %v458
  %v472 = vsel %vm465, %v458, %v460
  %v473 = vsel %vm465, %v460, %v462
  %v474 = vsel %vm465, %v462, %v464
  %484 = vst [vmem:[#allocation2 + $0xd8] sm:$0xf0] %v466
  %485 = vst [vmem:[#allocation2 + $0xe0] sm:$0xf0] %v467
  %486 = vst [vmem:[#allocation2 + $0xe8] sm:$0xf0] %v468
  %487 = vst [vmem:[#allocation2 + $0xf0] sm:$0xf0] %v469
  %488 = vst [vmem:[#allocation2 + $0xf8] sm:$0xf0] %v470
  %489 = vst [vmem:[#allocation2 + $0x100] sm:$0xf0] %v471
  %490 = vst [vmem:[#allocation2 + $0x108] sm:$0xf0] %v472
  %491 = vst [vmem:[#allocation2 + $0x110] sm:$0xf0] %v473
  %492 = vst [vmem:[#allocation2 + $0x118] sm:$0xf0] %v474
  %v493 = vld [vmem:[%s0] sm:$0xff]
  %v494 = vld [vmem:[%s0 + $0x8] sm:$0xff]
  %v495 = vld [vmem:[%s0 + $0x10] sm:$0xff]
  %v496 = vld [vmem:[%s0 + $0x18] sm:$0xff]
  %v497 = vld [vmem:[%s0 + $0x20] sm:$0xff]
  %v503 = vcombine.high %v493, %v493
  %v504 = vcombine.high %v494, %v494
  %v505 = vcombine.high %v495, %v495
  %v506 = vcombine.high %v496, %v496
  %v507 = vcombine.high %v497, %v497
  %508 = vrot.lane.b32.xlu0 %v493, 101
  %v509 = vpop.permute.xlu0 %508
  %510 = vrot.lane.b32.xlu0 %v503, 101
  %v511 = vpop.permute.xlu0 %510
  %512 = vrot.lane.b32.xlu0 %v494, 101
  %v513 = vpop.permute.xlu0 %512
  %514 = vrot.lane.b32.xlu0 %v504, 101
  %v515 = vpop.permute.xlu0 %514
  %516 = vrot.lane.b32.xlu0 %v495, 101
  %v517 = vpop.permute.xlu0 %516
  %518 = vrot.lane.b32.xlu0 %v505, 101
  %v519 = vpop.permute.xlu0 %518
  %520 = vrot.lane.b32.xlu0 %v496, 101
  %v521 = vpop.permute.xlu0 %520
  %522 = vrot.lane.b32.xlu0 %v506, 101
  %v523 = vpop.permute.xlu0 %522
  %524 = vrot.lane.b32.xlu0 %v497, 101
  %v525 = vpop.permute.xlu0 %524
  %526 = vrot.lane.b32.xlu0 %v507, 101
  %v527 = vpop.permute.xlu0 %526
  %vm528 = vcmask 826368
  %v529 = vsel %vm528, %v509, %v511
  %v530 = vsel %vm528, %v511, %v513
  %v531 = vsel %vm528, %v513, %v515
  %v532 = vsel %vm528, %v515, %v517
  %v533 = vsel %vm528, %v517, %v519
  %v534 = vsel %vm528, %v519, %v521
  %v535 = vsel %vm528, %v521, %v523
  %v536 = vsel %vm528, %v523, %v525
  %v537 = vsel %vm528, %v525, %v527
  %547 = vst [vmem:[#allocation2 + $0x120] sm:$0xf] %v529
  %548 = vst [vmem:[#allocation2 + $0x128] sm:$0xf] %v530
  %549 = vst [vmem:[#allocation2 + $0x130] sm:$0xf] %v531
  %550 = vst [vmem:[#allocation2 + $0x138] sm:$0xf] %v532
  %551 = vst [vmem:[#allocation2 + $0x140] sm:$0xf] %v533
  %552 = vst [vmem:[#allocation2 + $0x148] sm:$0xf] %v534
  %553 = vst [vmem:[#allocation2 + $0x150] sm:$0xf] %v535
  %554 = vst [vmem:[#allocation2 + $0x158] sm:$0xf] %v536
  %555 = vst [vmem:[#allocation2 + $0x160] sm:$0xf] %v537
  %v556 = vld [vmem:[%s0] sm:$0xff]
  %v557 = vld [vmem:[%s0 + $0x8] sm:$0xff]
  %v558 = vld [vmem:[%s0 + $0x10] sm:$0xff]
  %v559 = vld [vmem:[%s0 + $0x18] sm:$0xff]
  %v560 = vld [vmem:[%s0 + $0x20] sm:$0xff]
  %v566 = vcombine.low %v556, %v556
  %v567 = vcombine.low %v557, %v557
  %v568 = vcombine.low %v558, %v558
  %v569 = vcombine.low %v559, %v559
  %v570 = vcombine.low %v560, %v560
  %571 = vrot.lane.b32.xlu0 %v566, 100
  %v572 = vpop.permute.xlu0 %571
  %573 = vrot.lane.b32.xlu0 %v556, 100
  %v574 = vpop.permute.xlu0 %573
  %575 = vrot.lane.b32.xlu0 %v567, 100
  %v576 = vpop.permute.xlu0 %575
  %577 = vrot.lane.b32.xlu0 %v557, 100
  %v578 = vpop.permute.xlu0 %577
  %579 = vrot.lane.b32.xlu0 %v568, 100
  %v580 = vpop.permute.xlu0 %579
  %581 = vrot.lane.b32.xlu0 %v558, 100
  %v582 = vpop.permute.xlu0 %581
  %583 = vrot.lane.b32.xlu0 %v569, 100
  %v584 = vpop.permute.xlu0 %583
  %585 = vrot.lane.b32.xlu0 %v559, 100
  %v586 = vpop.permute.xlu0 %585
  %587 = vrot.lane.b32.xlu0 %v570, 100
  %v588 = vpop.permute.xlu0 %587
  %589 = vrot.lane.b32.xlu0 %v560, 100
  %v590 = vpop.permute.xlu0 %589
  %vm591 = vcmask 818176
  %v592 = vsel %vm591, %v572, %v574
  %v593 = vsel %vm591, %v574, %v576
  %v594 = vsel %vm591, %v576, %v578
  %v595 = vsel %vm591, %v578, %v580
  %v596 = vsel %vm591, %v580, %v582
  %v597 = vsel %vm591, %v582, %v584
  %v598 = vsel %vm591, %v584, %v586
  %v599 = vsel %vm591, %v586, %v588
  %v600 = vsel %vm591, %v588, %v590
  %610 = vst [vmem:[#allocation2 + $0x120] sm:$0xf0] %v592
  %611 = vst [vmem:[#allocation2 + $0x128] sm:$0xf0] %v593
  %612 = vst [vmem:[#allocation2 + $0x130] sm:$0xf0] %v594
  %613 = vst [vmem:[#allocation2 + $0x138] sm:$0xf0] %v595
  %614 = vst [vmem:[#allocation2 + $0x140] sm:$0xf0] %v596
  %615 = vst [vmem:[#allocation2 + $0x148] sm:$0xf0] %v597
  %616 = vst [vmem:[#allocation2 + $0x150] sm:$0xf0] %v598
  %617 = vst [vmem:[#allocation2 + $0x158] sm:$0xf0] %v599
  %618 = vst [vmem:[#allocation2 + $0x160] sm:$0xf0] %v600
  %v619 = vld [vmem:[%s0] sm:$0xff]
  %v620 = vld [vmem:[%s0 + $0x8] sm:$0xff]
  %v621 = vld [vmem:[%s0 + $0x10] sm:$0xff]
  %v622 = vld [vmem:[%s0 + $0x18] sm:$0xff]
  %v623 = vld [vmem:[%s0 + $0x20] sm:$0xff]
  %v629 = vcombine.high %v619, %v619
  %v630 = vcombine.high %v620, %v620
  %v631 = vcombine.high %v621, %v621
  %v632 = vcombine.high %v622, %v622
  %v633 = vcombine.high %v623, %v623
  %634 = vrot.lane.b32.xlu0 %v619, 80
  %v635 = vpop.permute.xlu0 %634
  %636 = vrot.lane.b32.xlu0 %v629, 80
  %v637 = vpop.permute.xlu0 %636
  %638 = vrot.lane.b32.xlu0 %v620, 80
  %v639 = vpop.permute.xlu0 %638
  %640 = vrot.lane.b32.xlu0 %v630, 80
  %v641 = vpop.permute.xlu0 %640
  %642 = vrot.lane.b32.xlu0 %v621, 80
  %v643 = vpop.permute.xlu0 %642
  %644 = vrot.lane.b32.xlu0 %v631, 80
  %v645 = vpop.permute.xlu0 %644
  %646 = vrot.lane.b32.xlu0 %v622, 80
  %v647 = vpop.permute.xlu0 %646
  %648 = vrot.lane.b32.xlu0 %v632, 80
  %v649 = vpop.permute.xlu0 %648
  %650 = vrot.lane.b32.xlu0 %v623, 80
  %v651 = vpop.permute.xlu0 %650
  %652 = vrot.lane.b32.xlu0 %v633, 80
  %v653 = vpop.permute.xlu0 %652
  %vm654 = vcmask 654336
  %v655 = vsel %vm654, %v635, %v637
  %v656 = vsel %vm654, %v637, %v639
  %v657 = vsel %vm654, %v639, %v641
  %v658 = vsel %vm654, %v641, %v643
  %v659 = vsel %vm654, %v643, %v645
  %v660 = vsel %vm654, %v645, %v647
  %v661 = vsel %vm654, %v647, %v649
  %v662 = vsel %vm654, %v649, %v651
  %v663 = vsel %vm654, %v651, %v653
  %673 = vst [vmem:[#allocation2 + $0x168] sm:$0xf] %v655
  %674 = vst [vmem:[#allocation2 + $0x170] sm:$0xf] %v656
  %675 = vst [vmem:[#allocation2 + $0x178] sm:$0xf] %v657
  %676 = vst [vmem:[#allocation2 + $0x180] sm:$0xf] %v658
  %677 = vst [vmem:[#allocation2 + $0x188] sm:$0xf] %v659
  %678 = vst [vmem:[#allocation2 + $0x190] sm:$0xf] %v660
  %679 = vst [vmem:[#allocation2 + $0x198] sm:$0xf] %v661
  %680 = vst [vmem:[#allocation2 + $0x1a0] sm:$0xf] %v662
  %681 = vst [vmem:[#allocation2 + $0x1a8] sm:$0xf] %v663
  %v682 = vld [vmem:[%s0] sm:$0xff]
  %v683 = vld [vmem:[%s0 + $0x8] sm:$0xff]
  %v684 = vld [vmem:[%s0 + $0x10] sm:$0xff]
  %v685 = vld [vmem:[%s0 + $0x18] sm:$0xff]
  %v686 = vld [vmem:[%s0 + $0x20] sm:$0xff]
  %v692 = vcombine.low %v682, %v682
  %v693 = vcombine.low %v683, %v683
  %v694 = vcombine.low %v684, %v684
  %v695 = vcombine.low %v685, %v685
  %v696 = vcombine.low %v686, %v686
  %697 = vrot.lane.b32.xlu0 %v692, 79
  %v698 = vpop.permute.xlu0 %697
  %699 = vrot.lane.b32.xlu0 %v682, 79
  %v700 = vpop.permute.xlu0 %699
  %701 = vrot.lane.b32.xlu0 %v693, 79
  %v702 = vpop.permute.xlu0 %701
  %703 = vrot.lane.b32.xlu0 %v683, 79
  %v704 = vpop.permute.xlu0 %703
  %705 = vrot.lane.b32.xlu0 %v694, 79
  %v706 = vpop.permute.xlu0 %705
  %707 = vrot.lane.b32.xlu0 %v684, 79
  %v708 = vpop.permute.xlu0 %707
  %709 = vrot.lane.b32.xlu0 %v695, 79
  %v710 = vpop.permute.xlu0 %709
  %711 = vrot.lane.b32.xlu0 %v685, 79
  %v712 = vpop.permute.xlu0 %711
  %713 = vrot.lane.b32.xlu0 %v696, 79
  %v714 = vpop.permute.xlu0 %713
  %715 = vrot.lane.b32.xlu0 %v686, 79
  %v716 = vpop.permute.xlu0 %715
  %vm717 = vcmask 646144
  %v718 = vsel %vm717, %v698, %v700
  %v719 = vsel %vm717, %v700, %v702
  %v720 = vsel %vm717, %v702, %v704
  %v721 = vsel %vm717, %v704, %v706
  %v722 = vsel %vm717, %v706, %v708
  %v723 = vsel %vm717, %v708, %v710
  %v724 = vsel %vm717, %v710, %v712
  %v725 = vsel %vm717, %v712, %v714
  %v726 = vsel %vm717, %v714, %v716
  %736 = vst [vmem:[#allocation2 + $0x168] sm:$0xf0] %v718
  %737 = vst [vmem:[#allocation2 + $0x170] sm:$0xf0] %v719
  %738 = vst [vmem:[#allocation2 + $0x178] sm:$0xf0] %v720
  %739 = vst [vmem:[#allocation2 + $0x180] sm:$0xf0] %v721
  %740 = vst [vmem:[#allocation2 + $0x188] sm:$0xf0] %v722
  %741 = vst [vmem:[#allocation2 + $0x190] sm:$0xf0] %v723
  %742 = vst [vmem:[#allocation2 + $0x198] sm:$0xf0] %v724
  %743 = vst [vmem:[#allocation2 + $0x1a0] sm:$0xf0] %v725
  %744 = vst [vmem:[#allocation2 + $0x1a8] sm:$0xf0] %v726
  %v745 = vld [vmem:[%s0] sm:$0xff]
  %v746 = vld [vmem:[%s0 + $0x8] sm:$0xff]
  %v747 = vld [vmem:[%s0 + $0x10] sm:$0xff]
  %v748 = vld [vmem:[%s0 + $0x18] sm:$0xff]
  %v749 = vld [vmem:[%s0 + $0x20] sm:$0xff]
  %v755 = vcombine.high %v745, %v745
  %v756 = vcombine.high %v746, %v746
  %v757 = vcombine.high %v747, %v747
  %v758 = vcombine.high %v748, %v748
  %v759 = vcombine.high %v749, %v749
  %760 = vrot.lane.b32.xlu0 %v745, 78
  %v761 = vpop.permute.xlu0 %760
  %762 = vrot.lane.b32.xlu0 %v755, 78
  %v763 = vpop.permute.xlu0 %762
  %764 = vrot.lane.b32.xlu0 %v746, 78
  %v765 = vpop.permute.xlu0 %764
  %766 = vrot.lane.b32.xlu0 %v756, 78
  %v767 = vpop.permute.xlu0 %766
  %768 = vrot.lane.b32.xlu0 %v747, 78
  %v769 = vpop.permute.xlu0 %768
  %770 = vrot.lane.b32.xlu0 %v757, 78
  %v771 = vpop.permute.xlu0 %770
  %772 = vrot.lane.b32.xlu0 %v748, 78
  %v773 = vpop.permute.xlu0 %772
  %774 = vrot.lane.b32.xlu0 %v758, 78
  %v775 = vpop.permute.xlu0 %774
  %776 = vrot.lane.b32.xlu0 %v749, 78
  %v777 = vpop.permute.xlu0 %776
  %778 = vrot.lane.b32.xlu0 %v759, 78
  %v779 = vpop.permute.xlu0 %778
  %vm780 = vcmask 637952
  %v781 = vsel %vm780, %v761, %v763
  %v782 = vsel %vm780, %v763, %v765
  %v783 = vsel %vm780, %v765, %v767
  %v784 = vsel %vm780, %v767, %v769
  %v785 = vsel %vm780, %v769, %v771
  %v786 = vsel %vm780, %v771, %v773
  %v787 = vsel %vm780, %v773, %v775
  %v788 = vsel %vm780, %v775, %v777
  %v789 = vsel %vm780, %v777, %v779
  %799 = vst [vmem:[#allocation2 + $0x1b0] sm:$0xf] %v781
  %800 = vst [vmem:[#allocation2 + $0x1b8] sm:$0xf] %v782
  %801 = vst [vmem:[#allocation2 + $0x1c0] sm:$0xf] %v783
  %802 = vst [vmem:[#allocation2 + $0x1c8] sm:$0xf] %v784
  %803 = vst [vmem:[#allocation2 + $0x1d0] sm:$0xf] %v785
  %804 = vst [vmem:[#allocation2 + $0x1d8] sm:$0xf] %v786
  %805 = vst [vmem:[#allocation2 + $0x1e0] sm:$0xf] %v787
  %806 = vst [vmem:[#allocation2 + $0x1e8] sm:$0xf] %v788
  %807 = vst [vmem:[#allocation2 + $0x1f0] sm:$0xf] %v789
  %v808 = vld [vmem:[%s0] sm:$0xff]
  %v809 = vld [vmem:[%s0 + $0x8] sm:$0xff]
  %v810 = vld [vmem:[%s0 + $0x10] sm:$0xff]
  %v811 = vld [vmem:[%s0 + $0x18] sm:$0xff]
  %v812 = vld [vmem:[%s0 + $0x20] sm:$0xff]
  %v818 = vcombine.low %v808, %v808
  %v819 = vcombine.low %v809, %v809
  %v820 = vcombine.low %v810, %v810
  %v821 = vcombine.low %v811, %v811
  %v822 = vcombine.low %v812, %v812
  %823 = vrot.lane.b32.xlu0 %v818, 77
  %v824 = vpop.permute.xlu0 %823
  %825 = vrot.lane.b32.xlu0 %v808, 77
  %v826 = vpop.permute.xlu0 %825
  %827 = vrot.lane.b32.xlu0 %v819, 77
  %v828 = vpop.permute.xlu0 %827
  %829 = vrot.lane.b32.xlu0 %v809, 77
  %v830 = vpop.permute.xlu0 %829
  %831 = vrot.lane.b32.xlu0 %v820, 77
  %v832 = vpop.permute.xlu0 %831
  %833 = vrot.lane.b32.xlu0 %v810, 77
  %v834 = vpop.permute.xlu0 %833
  %835 = vrot.lane.b32.xlu0 %v821, 77
  %v836 = vpop.permute.xlu0 %835
  %837 = vrot.lane.b32.xlu0 %v811, 77
  %v838 = vpop.permute.xlu0 %837
  %839 = vrot.lane.b32.xlu0 %v822, 77
  %v840 = vpop.permute.xlu0 %839
  %841 = vrot.lane.b32.xlu0 %v812, 77
  %v842 = vpop.permute.xlu0 %841
  %vm843 = vcmask 629760
  %v844 = vsel %vm843, %v824, %v826
  %v845 = vsel %vm843, %v826, %v828
  %v846 = vsel %vm843, %v828, %v830
  %v847 = vsel %vm843, %v830, %v832
  %v848 = vsel %vm843, %v832, %v834
  %v849 = vsel %vm843, %v834, %v836
  %v850 = vsel %vm843, %v836, %v838
  %v851 = vsel %vm843, %v838, %v840
  %v852 = vsel %vm843, %v840, %v842
  %862 = vst [vmem:[#allocation2 + $0x1b0] sm:$0xf0] %v844
  %863 = vst [vmem:[#allocation2 + $0x1b8] sm:$0xf0] %v845
  %864 = vst [vmem:[#allocation2 + $0x1c0] sm:$0xf0] %v846
  %865 = vst [vmem:[#allocation2 + $0x1c8] sm:$0xf0] %v847
  %866 = vst [vmem:[#allocation2 + $0x1d0] sm:$0xf0] %v848
  %867 = vst [vmem:[#allocation2 + $0x1d8] sm:$0xf0] %v849
  %868 = vst [vmem:[#allocation2 + $0x1e0] sm:$0xf0] %v850
  %869 = vst [vmem:[#allocation2 + $0x1e8] sm:$0xf0] %v851
  %870 = vst [vmem:[#allocation2 + $0x1f0] sm:$0xf0] %v852
  %v871 = vld [vmem:[%s0] sm:$0xff]
  %v872 = vld [vmem:[%s0 + $0x8] sm:$0xff]
  %v873 = vld [vmem:[%s0 + $0x10] sm:$0xff]
  %v874 = vld [vmem:[%s0 + $0x18] sm:$0xff]
  %v875 = vld [vmem:[%s0 + $0x20] sm:$0xff]
  %v881 = vcombine.high %v871, %v871
  %v882 = vcombine.high %v872, %v872
  %v883 = vcombine.high %v873, %v873
  %v884 = vcombine.high %v874, %v874
  %v885 = vcombine.high %v875, %v875
  %886 = vrot.lane.b32.xlu0 %v871, 76
  %v887 = vpop.permute.xlu0 %886
  %888 = vrot.lane.b32.xlu0 %v881, 76
  %v889 = vpop.permute.xlu0 %888
  %890 = vrot.lane.b32.xlu0 %v872, 76
  %v891 = vpop.permute.xlu0 %890
  %892 = vrot.lane.b32.xlu0 %v882, 76
  %v893 = vpop.permute.xlu0 %892
  %894 = vrot.lane.b32.xlu0 %v873, 76
  %v895 = vpop.permute.xlu0 %894
  %896 = vrot.lane.b32.xlu0 %v883, 76
  %v897 = vpop.permute.xlu0 %896
  %898 = vrot.lane.b32.xlu0 %v874, 76
  %v899 = vpop.permute.xlu0 %898
  %900 = vrot.lane.b32.xlu0 %v884, 76
  %v901 = vpop.permute.xlu0 %900
  %902 = vrot.lane.b32.xlu0 %v875, 76
  %v903 = vpop.permute.xlu0 %902
  %904 = vrot.lane.b32.xlu0 %v885, 76
  %v905 = vpop.permute.xlu0 %904
  %vm906 = vcmask 621568
  %v907 = vsel %vm906, %v887, %v889
  %v908 = vsel %vm906, %v889, %v891
  %v909 = vsel %vm906, %v891, %v893
  %v910 = vsel %vm906, %v893, %v895
  %v911 = vsel %vm906, %v895, %v897
  %v912 = vsel %vm906, %v897, %v899
  %v913 = vsel %vm906, %v899, %v901
  %v914 = vsel %vm906, %v901, %v903
  %v915 = vsel %vm906, %v903, %v905
  %925 = vst [vmem:[#allocation2 + $0x1f8] sm:$0xf] %v907
  %926 = vst [vmem:[#allocation2 + $0x200] sm:$0xf] %v908
  %927 = vst [vmem:[#allocation2 + $0x208] sm:$0xf] %v909
  %928 = vst [vmem:[#allocation2 + $0x210] sm:$0xf] %v910
  %929 = vst [vmem:[#allocation2 + $0x218] sm:$0xf] %v911
  %930 = vst [vmem:[#allocation2 + $0x220] sm:$0xf] %v912
  %931 = vst [vmem:[#allocation2 + $0x228] sm:$0xf] %v913
  %932 = vst [vmem:[#allocation2 + $0x230] sm:$0xf] %v914
  %933 = vst [vmem:[#allocation2 + $0x238] sm:$0xf] %v915
  %v934 = vld [vmem:[%s0] sm:$0xff]
  %v935 = vld [vmem:[%s0 + $0x8] sm:$0xff]
  %v936 = vld [vmem:[%s0 + $0x10] sm:$0xff]
  %v937 = vld [vmem:[%s0 + $0x18] sm:$0xff]
  %v938 = vld [vmem:[%s0 + $0x20] sm:$0xff]
  %v944 = vcombine.low %v934, %v934
  %v945 = vcombine.low %v935, %v935
  %v946 = vcombine.low %v936, %v936
  %v947 = vcombine.low %v937, %v937
  %v948 = vcombine.low %v938, %v938
  %949 = vrot.lane.b32.xlu0 %v944, 56
  %v950 = vpop.permute.xlu0 %949
  %951 = vrot.lane.b32.xlu0 %v934, 56
  %v952 = vpop.permute.xlu0 %951
  %953 = vrot.lane.b32.xlu0 %v945, 56
  %v954 = vpop.permute.xlu0 %953
  %955 = vrot.lane.b32.xlu0 %v935, 56
  %v956 = vpop.permute.xlu0 %955
  %957 = vrot.lane.b32.xlu0 %v946, 56
  %v958 = vpop.permute.xlu0 %957
  %959 = vrot.lane.b32.xlu0 %v936, 56
  %v960 = vpop.permute.xlu0 %959
  %961 = vrot.lane.b32.xlu0 %v947, 56
  %v962 = vpop.permute.xlu0 %961
  %963 = vrot.lane.b32.xlu0 %v937, 56
  %v964 = vpop.permute.xlu0 %963
  %965 = vrot.lane.b32.xlu0 %v948, 56
  %v966 = vpop.permute.xlu0 %965
  %967 = vrot.lane.b32.xlu0 %v938, 56
  %v968 = vpop.permute.xlu0 %967
  %vm969 = vcmask 457728
  %v970 = vsel %vm969, %v950, %v952
  %v971 = vsel %vm969, %v952, %v954
  %v972 = vsel %vm969, %v954, %v956
  %v973 = vsel %vm969, %v956, %v958
  %v974 = vsel %vm969, %v958, %v960
  %v975 = vsel %vm969, %v960, %v962
  %v976 = vsel %vm969, %v962, %v964
  %v977 = vsel %vm969, %v964, %v966
  %v978 = vsel %vm969, %v966, %v968
  %988 = vst [vmem:[#allocation2 + $0x1f8] sm:$0xf0] %v970
  %989 = vst [vmem:[#allocation2 + $0x200] sm:$0xf0] %v971
  %990 = vst [vmem:[#allocation2 + $0x208] sm:$0xf0] %v972
  %991 = vst [vmem:[#allocation2 + $0x210] sm:$0xf0] %v973
  %992 = vst [vmem:[#allocation2 + $0x218] sm:$0xf0] %v974
  %993 = vst [vmem:[#allocation2 + $0x220] sm:$0xf0] %v975
  %994 = vst [vmem:[#allocation2 + $0x228] sm:$0xf0] %v976
  %995 = vst [vmem:[#allocation2 + $0x230] sm:$0xf0] %v977
  %996 = vst [vmem:[#allocation2 + $0x238] sm:$0xf0] %v978
  %v997 = vld [vmem:[%s0] sm:$0xff]
  %v998 = vld [vmem:[%s0 + $0x8] sm:$0xff]
  %v999 = vld [vmem:[%s0 + $0x10] sm:$0xff]
  %v1000 = vld [vmem:[%s0 + $0x18] sm:$0xff]
  %v1001 = vld [vmem:[%s0 + $0x20] sm:$0xff]
  %v1007 = vcombine.high %v997, %v997
  %v1008 = vcombine.high %v998, %v998
  %v1009 = vcombine.high %v999, %v999
  %v1010 = vcombine.high %v1000, %v1000
  %v1011 = vcombine.high %v1001, %v1001
  %1012 = vrot.lane.b32.xlu0 %v997, 55
  %v1013 = vpop.permute.xlu0 %1012
  %1014 = vrot.lane.b32.xlu0 %v1007, 55
  %v1015 = vpop.permute.xlu0 %1014
  %1016 = vrot.lane.b32.xlu0 %v998, 55
  %v1017 = vpop.permute.xlu0 %1016
  %1018 = vrot.lane.b32.xlu0 %v1008, 55
  %v1019 = vpop.permute.xlu0 %1018
  %1020 = vrot.lane.b32.xlu0 %v999, 55
  %v1021 = vpop.permute.xlu0 %1020
  %1022 = vrot.lane.b32.xlu0 %v1009, 55
  %v1023 = vpop.permute.xlu0 %1022
  %1024 = vrot.lane.b32.xlu0 %v1000, 55
  %v1025 = vpop.permute.xlu0 %1024
  %1026 = vrot.lane.b32.xlu0 %v1010, 55
  %v1027 = vpop.permute.xlu0 %1026
  %1028 = vrot.lane.b32.xlu0 %v1001, 55
  %v1029 = vpop.permute.xlu0 %1028
  %1030 = vrot.lane.b32.xlu0 %v1011, 55
  %v1031 = vpop.permute.xlu0 %1030
  %vm1032 = vcmask 449536
  %v1033 = vsel %vm1032, %v1013, %v1015
  %v1034 = vsel %vm1032, %v1015, %v1017
  %v1035 = vsel %vm1032, %v1017, %v1019
  %v1036 = vsel %vm1032, %v1019, %v1021
  %v1037 = vsel %vm1032, %v1021, %v1023
  %v1038 = vsel %vm1032, %v1023, %v1025
  %v1039 = vsel %vm1032, %v1025, %v1027
  %v1040 = vsel %vm1032, %v1027, %v1029
  %v1041 = vsel %vm1032, %v1029, %v1031
  %1051 = vst [vmem:[#allocation2 + $0x240] sm:$0xf] %v1033
  %1052 = vst [vmem:[#allocation2 + $0x248] sm:$0xf] %v1034
  %1053 = vst [vmem:[#allocation2 + $0x250] sm:$0xf] %v1035
  %1054 = vst [vmem:[#allocation2 + $0x258] sm:$0xf] %v1036
  %1055 = vst [vmem:[#allocation2 + $0x260] sm:$0xf] %v1037
  %1056 = vst [vmem:[#allocation2 + $0x268] sm:$0xf] %v1038
  %1057 = vst [vmem:[#allocation2 + $0x270] sm:$0xf] %v1039
  %1058 = vst [vmem:[#allocation2 + $0x278] sm:$0xf] %v1040
  %1059 = vst [vmem:[#allocation2 + $0x280] sm:$0xf] %v1041
  %v1060 = vld [vmem:[%s0] sm:$0xff]
  %v1061 = vld [vmem:[%s0 + $0x8] sm:$0xff]
  %v1062 = vld [vmem:[%s0 + $0x10] sm:$0xff]
  %v1063 = vld [vmem:[%s0 + $0x18] sm:$0xff]
  %v1064 = vld [vmem:[%s0 + $0x20] sm:$0xff]
  %v1070 = vcombine.low %v1060, %v1060
  %v1071 = vcombine.low %v1061, %v1061
  %v1072 = vcombine.low %v1062, %v1062
  %v1073 = vcombine.low %v1063, %v1063
  %v1074 = vcombine.low %v1064, %v1064
  %1075 = vrot.lane.b32.xlu0 %v1070, 54
  %v1076 = vpop.permute.xlu0 %1075
  %1077 = vrot.lane.b32.xlu0 %v1060, 54
  %v1078 = vpop.permute.xlu0 %1077
  %1079 = vrot.lane.b32.xlu0 %v1071, 54
  %v1080 = vpop.permute.xlu0 %1079
  %1081 = vrot.lane.b32.xlu0 %v1061, 54
  %v1082 = vpop.permute.xlu0 %1081
  %1083 = vrot.lane.b32.xlu0 %v1072, 54
  %v1084 = vpop.permute.xlu0 %1083
  %1085 = vrot.lane.b32.xlu0 %v1062, 54
  %v1086 = vpop.permute.xlu0 %1085
  %1087 = vrot.lane.b32.xlu0 %v1073, 54
  %v1088 = vpop.permute.xlu0 %1087
  %1089 = vrot.lane.b32.xlu0 %v1063, 54
  %v1090 = vpop.permute.xlu0 %1089
  %1091 = vrot.lane.b32.xlu0 %v1074, 54
  %v1092 = vpop.permute.xlu0 %1091
  %1093 = vrot.lane.b32.xlu0 %v1064, 54
  %v1094 = vpop.permute.xlu0 %1093
  %vm1095 = vcmask 441344
  %v1096 = vsel %vm1095, %v1076, %v1078
  %v1097 = vsel %vm1095, %v1078, %v1080
  %v1098 = vsel %vm1095, %v1080, %v1082
  %v1099 = vsel %vm1095, %v1082, %v1084
  %v1100 = vsel %vm1095, %v1084, %v1086
  %v1101 = vsel %vm1095, %v1086, %v1088
  %v1102 = vsel %vm1095, %v1088, %v1090
  %v1103 = vsel %vm1095, %v1090, %v1092
  %v1104 = vsel %vm1095, %v1092, %v1094
  %1114 = vst [vmem:[#allocation2 + $0x240] sm:$0xf0] %v1096
  %1115 = vst [vmem:[#allocation2 + $0x248] sm:$0xf0] %v1097
  %1116 = vst [vmem:[#allocation2 + $0x250] sm:$0xf0] %v1098
  %1117 = vst [vmem:[#allocation2 + $0x258] sm:$0xf0] %v1099
  %1118 = vst [vmem:[#allocation2 + $0x260] sm:$0xf0] %v1100
  %1119 = vst [vmem:[#allocation2 + $0x268] sm:$0xf0] %v1101
  %1120 = vst [vmem:[#allocation2 + $0x270] sm:$0xf0] %v1102
  %1121 = vst [vmem:[#allocation2 + $0x278] sm:$0xf0] %v1103
  %1122 = vst [vmem:[#allocation2 + $0x280] sm:$0xf0] %v1104
  %v1123 = vld [vmem:[%s0] sm:$0xff]
  %v1124 = vld [vmem:[%s0 + $0x8] sm:$0xff]
  %v1125 = vld [vmem:[%s0 + $0x10] sm:$0xff]
  %v1126 = vld [vmem:[%s0 + $0x18] sm:$0xff]
  %v1127 = vld [vmem:[%s0 + $0x20] sm:$0xff]
  %v1133 = vcombine.high %v1123, %v1123
  %v1134 = vcombine.high %v1124, %v1124
  %v1135 = vcombine.high %v1125, %v1125
  %v1136 = vcombine.high %v1126, %v1126
  %v1137 = vcombine.high %v1127, %v1127
  %1138 = vrot.lane.b32.xlu0 %v1123, 53
  %v1139 = vpop.permute.xlu0 %1138
  %1140 = vrot.lane.b32.xlu0 %v1133, 53
  %v1141 = vpop.permute.xlu0 %1140
  %1142 = vrot.lane.b32.xlu0 %v1124, 53
  %v1143 = vpop.permute.xlu0 %1142
  %1144 = vrot.lane.b32.xlu0 %v1134, 53
  %v1145 = vpop.permute.xlu0 %1144
  %1146 = vrot.lane.b32.xlu0 %v1125, 53
  %v1147 = vpop.permute.xlu0 %1146
  %1148 = vrot.lane.b32.xlu0 %v1135, 53
  %v1149 = vpop.permute.xlu0 %1148
  %1150 = vrot.lane.b32.xlu0 %v1126, 53
  %v1151 = vpop.permute.xlu0 %1150
  %1152 = vrot.lane.b32.xlu0 %v1136, 53
  %v1153 = vpop.permute.xlu0 %1152
  %1154 = vrot.lane.b32.xlu0 %v1127, 53
  %v1155 = vpop.permute.xlu0 %1154
  %1156 = vrot.lane.b32.xlu0 %v1137, 53
  %v1157 = vpop.permute.xlu0 %1156
  %vm1158 = vcmask 433152
  %v1159 = vsel %vm1158, %v1139, %v1141
  %v1160 = vsel %vm1158, %v1141, %v1143
  %v1161 = vsel %vm1158, %v1143, %v1145
  %v1162 = vsel %vm1158, %v1145, %v1147
  %v1163 = vsel %vm1158, %v1147, %v1149
  %v1164 = vsel %vm1158, %v1149, %v1151
  %v1165 = vsel %vm1158, %v1151, %v1153
  %v1166 = vsel %vm1158, %v1153, %v1155
  %v1167 = vsel %vm1158, %v1155, %v1157
  %1177 = vst [vmem:[#allocation2 + $0x288] sm:$0xf] %v1159
  %1178 = vst [vmem:[#allocation2 + $0x290] sm:$0xf] %v1160
  %1179 = vst [vmem:[#allocation2 + $0x298] sm:$0xf] %v1161
  %1180 = vst [vmem:[#allocation2 + $0x2a0] sm:$0xf] %v1162
  %1181 = vst [vmem:[#allocation2 + $0x2a8] sm:$0xf] %v1163
  %1182 = vst [vmem:[#allocation2 + $0x2b0] sm:$0xf] %v1164
  %1183 = vst [vmem:[#allocation2 + $0x2b8] sm:$0xf] %v1165
  %1184 = vst [vmem:[#allocation2 + $0x2c0] sm:$0xf] %v1166
  %1185 = vst [vmem:[#allocation2 + $0x2c8] sm:$0xf] %v1167
  %v1186 = vld [vmem:[%s0] sm:$0xff]
  %v1187 = vld [vmem:[%s0 + $0x8] sm:$0xff]
  %v1188 = vld [vmem:[%s0 + $0x10] sm:$0xff]
  %v1189 = vld [vmem:[%s0 + $0x18] sm:$0xff]
  %v1190 = vld [vmem:[%s0 + $0x20] sm:$0xff]
  %v1196 = vcombine.low %v1186, %v1186
  %v1197 = vcombine.low %v1187, %v1187
  %v1198 = vcombine.low %v1188, %v1188
  %v1199 = vcombine.low %v1189, %v1189
  %v1200 = vcombine.low %v1190, %v1190
  %1201 = vrot.lane.b32.xlu0 %v1196, 52
  %v1202 = vpop.permute.xlu0 %1201
  %1203 = vrot.lane.b32.xlu0 %v1186, 52
  %v1204 = vpop.permute.xlu0 %1203
  %1205 = vrot.lane.b32.xlu0 %v1197, 52
  %v1206 = vpop.permute.xlu0 %1205
  %1207 = vrot.lane.b32.xlu0 %v1187, 52
  %v1208 = vpop.permute.xlu0 %1207
  %1209 = vrot.lane.b32.xlu0 %v1198, 52
  %v1210 = vpop.permute.xlu0 %1209
  %1211 = vrot.lane.b32.xlu0 %v1188, 52
  %v1212 = vpop.permute.xlu0 %1211
  %1213 = vrot.lane.b32.xlu0 %v1199, 52
  %v1214 = vpop.permute.xlu0 %1213
  %1215 = vrot.lane.b32.xlu0 %v1189, 52
  %v1216 = vpop.permute.xlu0 %1215
  %1217 = vrot.lane.b32.xlu0 %v1200, 52
  %v1218 = vpop.permute.xlu0 %1217
  %1219 = vrot.lane.b32.xlu0 %v1190, 52
  %v1220 = vpop.permute.xlu0 %1219
  %vm1221 = vcmask 424960
  %v1222 = vsel %vm1221, %v1202, %v1204
  %v1223 = vsel %vm1221, %v1204, %v1206
  %v1224 = vsel %vm1221, %v1206, %v1208
  %v1225 = vsel %vm1221, %v1208, %v1210
  %v1226 = vsel %vm1221, %v1210, %v1212
  %v1227 = vsel %vm1221, %v1212, %v1214
  %v1228 = vsel %vm1221, %v1214, %v1216
  %v1229 = vsel %vm1221, %v1216, %v1218
  %v1230 = vsel %vm1221, %v1218, %v1220
  %1240 = vst [vmem:[#allocation2 + $0x288] sm:$0xf0] %v1222
  %1241 = vst [vmem:[#allocation2 + $0x290] sm:$0xf0] %v1223
  %1242 = vst [vmem:[#allocation2 + $0x298] sm:$0xf0] %v1224
  %1243 = vst [vmem:[#allocation2 + $0x2a0] sm:$0xf0] %v1225
  %1244 = vst [vmem:[#allocation2 + $0x2a8] sm:$0xf0] %v1226
  %1245 = vst [vmem:[#allocation2 + $0x2b0] sm:$0xf0] %v1227
  %1246 = vst [vmem:[#allocation2 + $0x2b8] sm:$0xf0] %v1228
  %1247 = vst [vmem:[#allocation2 + $0x2c0] sm:$0xf0] %v1229
  %1248 = vst [vmem:[#allocation2 + $0x2c8] sm:$0xf0] %v1230
  %v1249 = vld [vmem:[%s0] sm:$0xff]
  %v1250 = vld [vmem:[%s0 + $0x8] sm:$0xff]
  %v1251 = vld [vmem:[%s0 + $0x10] sm:$0xff]
  %v1252 = vld [vmem:[%s0 + $0x18] sm:$0xff]
  %v1253 = vld [vmem:[%s0 + $0x20] sm:$0xff]
  %v1259 = vcombine.high %v1249, %v1249
  %v1260 = vcombine.high %v1250, %v1250
  %v1261 = vcombine.high %v1251, %v1251
  %v1262 = vcombine.high %v1252, %v1252
  %v1263 = vcombine.high %v1253, %v1253
  %1264 = vrot.lane.b32.xlu0 %v1249, 32
  %v1265 = vpop.permute.xlu0 %1264
  %1266 = vrot.lane.b32.xlu0 %v1259, 32
  %v1267 = vpop.permute.xlu0 %1266
  %1268 = vrot.lane.b32.xlu0 %v1250, 32
  %v1269 = vpop.permute.xlu0 %1268
  %1270 = vrot.lane.b32.xlu0 %v1260, 32
  %v1271 = vpop.permute.xlu0 %1270
  %1272 = vrot.lane.b32.xlu0 %v1251, 32
  %v1273 = vpop.permute.xlu0 %1272
  %1274 = vrot.lane.b32.xlu0 %v1261, 32
  %v1275 = vpop.permute.xlu0 %1274
  %1276 = vrot.lane.b32.xlu0 %v1252, 32
  %v1277 = vpop.permute.xlu0 %1276
  %1278 = vrot.lane.b32.xlu0 %v1262, 32
  %v1279 = vpop.permute.xlu0 %1278
  %1280 = vrot.lane.b32.xlu0 %v1253, 32
  %v1281 = vpop.permute.xlu0 %1280
  %1282 = vrot.lane.b32.xlu0 %v1263, 32
  %v1283 = vpop.permute.xlu0 %1282
  %vm1284 = vcmask 261120
  %v1285 = vsel %vm1284, %v1265, %v1267
  %v1286 = vsel %vm1284, %v1267, %v1269
  %v1287 = vsel %vm1284, %v1269, %v1271
  %v1288 = vsel %vm1284, %v1271, %v1273
  %v1289 = vsel %vm1284, %v1273, %v1275
  %v1290 = vsel %vm1284, %v1275, %v1277
  %v1291 = vsel %vm1284, %v1277, %v1279
  %v1292 = vsel %vm1284, %v1279, %v1281
  %v1293 = vsel %vm1284, %v1281, %v1283
  %1303 = vst [vmem:[#allocation2 + $0x2d0] sm:$0xf] %v1285
  %1304 = vst [vmem:[#allocation2 + $0x2d8] sm:$0xf] %v1286
  %1305 = vst [vmem:[#allocation2 + $0x2e0] sm:$0xf] %v1287
  %1306 = vst [vmem:[#allocation2 + $0x2e8] sm:$0xf] %v1288
  %1307 = vst [vmem:[#allocation2 + $0x2f0] sm:$0xf] %v1289
  %1308 = vst [vmem:[#allocation2 + $0x2f8] sm:$0xf] %v1290
  %1309 = vst [vmem:[#allocation2 + $0x300] sm:$0xf] %v1291
  %1310 = vst [vmem:[#allocation2 + $0x308] sm:$0xf] %v1292
  %1311 = vst [vmem:[#allocation2 + $0x310] sm:$0xf] %v1293
  %v1312 = vld [vmem:[%s0] sm:$0xff]
  %v1313 = vld [vmem:[%s0 + $0x8] sm:$0xff]
  %v1314 = vld [vmem:[%s0 + $0x10] sm:$0xff]
  %v1315 = vld [vmem:[%s0 + $0x18] sm:$0xff]
  %v1316 = vld [vmem:[%s0 + $0x20] sm:$0xff]
  %v1322 = vcombine.low %v1312, %v1312
  %v1323 = vcombine.low %v1313, %v1313
  %v1324 = vcombine.low %v1314, %v1314
  %v1325 = vcombine.low %v1315, %v1315
  %v1326 = vcombine.low %v1316, %v1316
  %1327 = vrot.lane.b32.xlu0 %v1322, 31
  %v1328 = vpop.permute.xlu0 %1327
  %1329 = vrot.lane.b32.xlu0 %v1312, 31
  %v1330 = vpop.permute.xlu0 %1329
  %1331 = vrot.lane.b32.xlu0 %v1323, 31
  %v1332 = vpop.permute.xlu0 %1331
  %1333 = vrot.lane.b32.xlu0 %v1313, 31
  %v1334 = vpop.permute.xlu0 %1333
  %1335 = vrot.lane.b32.xlu0 %v1324, 31
  %v1336 = vpop.permute.xlu0 %1335
  %1337 = vrot.lane.b32.xlu0 %v1314, 31
  %v1338 = vpop.permute.xlu0 %1337
  %1339 = vrot.lane.b32.xlu0 %v1325, 31
  %v1340 = vpop.permute.xlu0 %1339
  %1341 = vrot.lane.b32.xlu0 %v1315, 31
  %v1342 = vpop.permute.xlu0 %1341
  %1343 = vrot.lane.b32.xlu0 %v1326, 31
  %v1344 = vpop.permute.xlu0 %1343
  %1345 = vrot.lane.b32.xlu0 %v1316, 31
  %v1346 = vpop.permute.xlu0 %1345
  %vm1347 = vcmask 252928
  %v1348 = vsel %vm1347, %v1328, %v1330
  %v1349 = vsel %vm1347, %v1330, %v1332
  %v1350 = vsel %vm1347, %v1332, %v1334
  %v1351 = vsel %vm1347, %v1334, %v1336
  %v1352 = vsel %vm1347, %v1336, %v1338
  %v1353 = vsel %vm1347, %v1338, %v1340
  %v1354 = vsel %vm1347, %v1340, %v1342
  %v1355 = vsel %vm1347, %v1342, %v1344
  %v1356 = vsel %vm1347, %v1344, %v1346
  %1366 = vst [vmem:[#allocation2 + $0x2d0] sm:$0xf0] %v1348
  %1367 = vst [vmem:[#allocation2 + $0x2d8] sm:$0xf0] %v1349
  %1368 = vst [vmem:[#allocation2 + $0x2e0] sm:$0xf0] %v1350
  %1369 = vst [vmem:[#allocation2 + $0x2e8] sm:$0xf0] %v1351
  %1370 = vst [vmem:[#allocation2 + $0x2f0] sm:$0xf0] %v1352
  %1371 = vst [vmem:[#allocation2 + $0x2f8] sm:$0xf0] %v1353
  %1372 = vst [vmem:[#allocation2 + $0x300] sm:$0xf0] %v1354
  %1373 = vst [vmem:[#allocation2 + $0x308] sm:$0xf0] %v1355
  %1374 = vst [vmem:[#allocation2 + $0x310] sm:$0xf0] %v1356
  %v1375 = vld [vmem:[%s0] sm:$0xff]
  %v1376 = vld [vmem:[%s0 + $0x8] sm:$0xff]
  %v1377 = vld [vmem:[%s0 + $0x10] sm:$0xff]
  %v1378 = vld [vmem:[%s0 + $0x18] sm:$0xff]
  %v1379 = vld [vmem:[%s0 + $0x20] sm:$0xff]
  %v1385 = vcombine.high %v1375, %v1375
  %v1386 = vcombine.high %v1376, %v1376
  %v1387 = vcombine.high %v1377, %v1377
  %v1388 = vcombine.high %v1378, %v1378
  %v1389 = vcombine.high %v1379, %v1379
  %1390 = vrot.lane.b32.xlu0 %v1375, 30
  %v1391 = vpop.permute.xlu0 %1390
  %1392 = vrot.lane.b32.xlu0 %v1385, 30
  %v1393 = vpop.permute.xlu0 %1392
  %1394 = vrot.lane.b32.xlu0 %v1376, 30
  %v1395 = vpop.permute.xlu0 %1394
  %1396 = vrot.lane.b32.xlu0 %v1386, 30
  %v1397 = vpop.permute.xlu0 %1396
  %1398 = vrot.lane.b32.xlu0 %v1377, 30
  %v1399 = vpop.permute.xlu0 %1398
  %1400 = vrot.lane.b32.xlu0 %v1387, 30
  %v1401 = vpop.permute.xlu0 %1400
  %1402 = vrot.lane.b32.xlu0 %v1378, 30
  %v1403 = vpop.permute.xlu0 %1402
  %1404 = vrot.lane.b32.xlu0 %v1388, 30
  %v1405 = vpop.permute.xlu0 %1404
  %1406 = vrot.lane.b32.xlu0 %v1379, 30
  %v1407 = vpop.permute.xlu0 %1406
  %1408 = vrot.lane.b32.xlu0 %v1389, 30
  %v1409 = vpop.permute.xlu0 %1408
  %vm1410 = vcmask 244736
  %v1411 = vsel %vm1410, %v1391, %v1393
  %v1412 = vsel %vm1410, %v1393, %v1395
  %v1413 = vsel %vm1410, %v1395, %v1397
  %v1414 = vsel %vm1410, %v1397, %v1399
  %v1415 = vsel %vm1410, %v1399, %v1401
  %v1416 = vsel %vm1410, %v1401, %v1403
  %v1417 = vsel %vm1410, %v1403, %v1405
  %v1418 = vsel %vm1410, %v1405, %v1407
  %v1419 = vsel %vm1410, %v1407, %v1409
  %1429 = vst [vmem:[#allocation2 + $0x318] sm:$0xf] %v1411
  %1430 = vst [vmem:[#allocation2 + $0x320] sm:$0xf] %v1412
  %1431 = vst [vmem:[#allocation2 + $0x328] sm:$0xf] %v1413
  %1432 = vst [vmem:[#allocation2 + $0x330] sm:$0xf] %v1414
  %1433 = vst [vmem:[#allocation2 + $0x338] sm:$0xf] %v1415
  %1434 = vst [vmem:[#allocation2 + $0x340] sm:$0xf] %v1416
  %1435 = vst [vmem:[#allocation2 + $0x348] sm:$0xf] %v1417
  %1436 = vst [vmem:[#allocation2 + $0x350] sm:$0xf] %v1418
  %1437 = vst [vmem:[#allocation2 + $0x358] sm:$0xf] %v1419
  %v1438 = vld [vmem:[%s0] sm:$0xff]
  %v1439 = vld [vmem:[%s0 + $0x8] sm:$0xff]
  %v1440 = vld [vmem:[%s0 + $0x10] sm:$0xff]
  %v1441 = vld [vmem:[%s0 + $0x18] sm:$0xff]
  %v1442 = vld [vmem:[%s0 + $0x20] sm:$0xff]
  %v1448 = vcombine.low %v1438, %v1438
  %v1449 = vcombine.low %v1439, %v1439
  %v1450 = vcombine.low %v1440, %v1440
  %v1451 = vcombine.low %v1441, %v1441
  %v1452 = vcombine.low %v1442, %v1442
  %1453 = vrot.lane.b32.xlu0 %v1448, 29
  %v1454 = vpop.permute.xlu0 %1453
  %1455 = vrot.lane.b32.xlu0 %v1438, 29
  %v1456 = vpop.permute.xlu0 %1455
  %1457 = vrot.lane.b32.xlu0 %v1449, 29
  %v1458 = vpop.permute.xlu0 %1457
  %1459 = vrot.lane.b32.xlu0 %v1439, 29
  %v1460 = vpop.permute.xlu0 %1459
  %1461 = vrot.lane.b32.xlu0 %v1450, 29
  %v1462 = vpop.permute.xlu0 %1461
  %1463 = vrot.lane.b32.xlu0 %v1440, 29
  %v1464 = vpop.permute.xlu0 %1463
  %1465 = vrot.lane.b32.xlu0 %v1451, 29
  %v1466 = vpop.permute.xlu0 %1465
  %1467 = vrot.lane.b32.xlu0 %v1441, 29
  %v1468 = vpop.permute.xlu0 %1467
  %1469 = vrot.lane.b32.xlu0 %v1452, 29
  %v1470 = vpop.permute.xlu0 %1469
  %1471 = vrot.lane.b32.xlu0 %v1442, 29
  %v1472 = vpop.permute.xlu0 %1471
  %vm1473 = vcmask 236544
  %v1474 = vsel %vm1473, %v1454, %v1456
  %v1475 = vsel %vm1473, %v1456, %v1458
  %v1476 = vsel %vm1473, %v1458, %v1460
  %v1477 = vsel %vm1473, %v1460, %v1462
  %v1478 = vsel %vm1473, %v1462, %v1464
  %v1479 = vsel %vm1473, %v1464, %v1466
  %v1480 = vsel %vm1473, %v1466, %v1468
  %v1481 = vsel %vm1473, %v1468, %v1470
  %v1482 = vsel %vm1473, %v1470, %v1472
  %1492 = vst [vmem:[#allocation2 + $0x318] sm:$0xf0] %v1474
  %1493 = vst [vmem:[#allocation2 + $0x320] sm:$0xf0] %v1475
  %1494 = vst [vmem:[#allocation2 + $0x328] sm:$0xf0] %v1476
  %1495 = vst [vmem:[#allocation2 + $0x330] sm:$0xf0] %v1477
  %1496 = vst [vmem:[#allocation2 + $0x338] sm:$0xf0] %v1478
  %1497 = vst [vmem:[#allocation2 + $0x340] sm:$0xf0] %v1479
  %1498 = vst [vmem:[#allocation2 + $0x348] sm:$0xf0] %v1480
  %1499 = vst [vmem:[#allocation2 + $0x350] sm:$0xf0] %v1481
  %1500 = vst [vmem:[#allocation2 + $0x358] sm:$0xf0] %v1482
  %v1501 = vld [vmem:[%s0] sm:$0xff]
  %v1502 = vld [vmem:[%s0 + $0x8] sm:$0xff]
  %v1503 = vld [vmem:[%s0 + $0x10] sm:$0xff]
  %v1504 = vld [vmem:[%s0 + $0x18] sm:$0xff]
  %v1505 = vld [vmem:[%s0 + $0x20] sm:$0xff]
  %v1511 = vcombine.high %v1501, %v1501
  %v1512 = vcombine.high %v1502, %v1502
  %v1513 = vcombine.high %v1503, %v1503
  %v1514 = vcombine.high %v1504, %v1504
  %v1515 = vcombine.high %v1505, %v1505
  %1516 = vrot.lane.b32.xlu0 %v1501, 28
  %v1517 = vpop.permute.xlu0 %1516
  %1518 = vrot.lane.b32.xlu0 %v1511, 28
  %v1519 = vpop.permute.xlu0 %1518
  %1520 = vrot.lane.b32.xlu0 %v1502, 28
  %v1521 = vpop.permute.xlu0 %1520
  %1522 = vrot.lane.b32.xlu0 %v1512, 28
  %v1523 = vpop.permute.xlu0 %1522
  %1524 = vrot.lane.b32.xlu0 %v1503, 28
  %v1525 = vpop.permute.xlu0 %1524
  %1526 = vrot.lane.b32.xlu0 %v1513, 28
  %v1527 = vpop.permute.xlu0 %1526
  %1528 = vrot.lane.b32.xlu0 %v1504, 28
  %v1529 = vpop.permute.xlu0 %1528
  %1530 = vrot.lane.b32.xlu0 %v1514, 28
  %v1531 = vpop.permute.xlu0 %1530
  %1532 = vrot.lane.b32.xlu0 %v1505, 28
  %v1533 = vpop.permute.xlu0 %1532
  %1534 = vrot.lane.b32.xlu0 %v1515, 28
  %v1535 = vpop.permute.xlu0 %1534
  %vm1536 = vcmask 228352
  %v1537 = vsel %vm1536, %v1517, %v1519
  %v1538 = vsel %vm1536, %v1519, %v1521
  %v1539 = vsel %vm1536, %v1521, %v1523
  %v1540 = vsel %vm1536, %v1523, %v1525
  %v1541 = vsel %vm1536, %v1525, %v1527
  %v1542 = vsel %vm1536, %v1527, %v1529
  %v1543 = vsel %vm1536, %v1529, %v1531
  %v1544 = vsel %vm1536, %v1531, %v1533
  %v1545 = vsel %vm1536, %v1533, %v1535
  %1555 = vst [vmem:[#allocation2 + $0x360] sm:$0xf] %v1537
  %1556 = vst [vmem:[#allocation2 + $0x368] sm:$0xf] %v1538
  %1557 = vst [vmem:[#allocation2 + $0x370] sm:$0xf] %v1539
  %1558 = vst [vmem:[#allocation2 + $0x378] sm:$0xf] %v1540
  %1559 = vst [vmem:[#allocation2 + $0x380] sm:$0xf] %v1541
  %1560 = vst [vmem:[#allocation2 + $0x388] sm:$0xf] %v1542
  %1561 = vst [vmem:[#allocation2 + $0x390] sm:$0xf] %v1543
  %1562 = vst [vmem:[#allocation2 + $0x398] sm:$0xf] %v1544
  %1563 = vst [vmem:[#allocation2 + $0x3a0] sm:$0xf] %v1545
  %s1564 = scalar_lea.vmem [#allocation2], 868
  %1565 = vst [vmem:[%s1564] ss:$8 sm:$0xf] 1.0
  %1566 = vst [vmem:[%s1564] ss:$8 sm:$0xf0] 1.0
  %v1567 = vlaneseq
  %vm1568 = vcmp.ge.s32.totalorder %v1567, 0
  %vm1569 = vcmp.lt.s32.totalorder %v1567, 128
  %vm1570 = vmand %vm1568, %vm1569
  %s1571 = scalar_lea.vmem [#allocation2], 932
  %1572 = vst.msk [vmem:[%s1571] ss:$8 sm:$0x1] %vm1570, 1.0
  %1573 = vst.msk [vmem:[%s1571] ss:$8 sm:$0x0] %vm1570, 1.0
  %1574 = vst [vmem:[#allocation2 + $0x360] sm:$0xe0] 0.0
  %1575 = vst [vmem:[#allocation2 + $0x368] sm:$0xe0] 0.0
  %1576 = vst [vmem:[#allocation2 + $0x370] sm:$0xe0] 0.0
  %1577 = vst [vmem:[#allocation2 + $0x378] sm:$0xe0] 0.0
  %1578 = vst [vmem:[#allocation2 + $0x380] sm:$0xe0] 0.0
  %1579 = vst [vmem:[#allocation2 + $0x388] sm:$0xe0] 0.0
  %1580 = vst [vmem:[#allocation2 + $0x390] sm:$0xe0] 0.0
  %1581 = vst [vmem:[#allocation2 + $0x398] sm:$0xe0] 0.0
  %1582 = vst [vmem:[#allocation2 + $0x3a0] sm:$0xe0] 0.0
  %v1583 = vld [vmem:[%s1] sm:$0xff]
  %v1584 = vld [vmem:[%s1 + $0x8] sm:$0xff]
  %v1585 = vld [vmem:[%s1 + $0x10] sm:$0xff]
  %v1586 = vld [vmem:[%s1 + $0x18] sm:$0xff]
  %v1587 = vld [vmem:[%s1 + $0x20] sm:$0xff]
  %v1588 = vld [vmem:[%s1 + $0x28] sm:$0xff]
  %v1589 = vld [vmem:[%s1 + $0x30] sm:$0xff]
  %v1590 = vld [vmem:[%s1 + $0x38] sm:$0xff]
  %v1591 = vld [vmem:[%s1 + $0x40] sm:$0xff]
  %v1592 = vld [vmem:[%s1 + $0x48] sm:$0xff]
  %v1593 = vld [vmem:[%s1 + $0x50] sm:$0xff]
  %v1594 = vld [vmem:[%s1 + $0x58] sm:$0xff]
  %v1595 = vld [vmem:[%s1 + $0x60] sm:$0xff]
  %v1596 = vld [vmem:[%s1 + $0x68] sm:$0xff]
  %v1597 = vld [vmem:[%s1 + $0x70] sm:$0xff]
  %v1598 = vld [vmem:[%s1 + $0x78] sm:$0xff]
  %v1599 = vld [vmem:[#allocation2] sm:$0xff]
  %v1600 = vld [vmem:[#allocation2 + $0x8] sm:$0xff]
  %v1601 = vld [vmem:[#allocation2 + $0x10] sm:$0xff]
  %v1602 = vld [vmem:[#allocation2 + $0x18] sm:$0xff]
  %v1603 = vld [vmem:[#allocation2 + $0x20] sm:$0xff]
  %v1604 = vld [vmem:[#allocation2 + $0x28] sm:$0xff]
  %v1605 = vld [vmem:[#allocation2 + $0x30] sm:$0xff]
  %v1606 = vld [vmem:[#allocation2 + $0x38] sm:$0xff]
  %v1607 = vld [vmem:[#allocation2 + $0x40] sm:$0xff]
  %v1608 = vld [vmem:[#allocation2 + $0x48] sm:$0xff]
  %v1609 = vld [vmem:[#allocation2 + $0x50] sm:$0xff]
  %v1610 = vld [vmem:[#allocation2 + $0x58] sm:$0xff]
  %v1611 = vld [vmem:[#allocation2 + $0x60] sm:$0xff]
  %v1612 = vld [vmem:[#allocation2 + $0x68] sm:$0xff]
  %v1613 = vld [vmem:[#allocation2 + $0x70] sm:$0xff]
  %v1614 = vld [vmem:[#allocation2 + $0x78] sm:$0xff]
  %v1615 = vld [vmem:[#allocation2 + $0x80] sm:$0xff]
  %v1616 = vld [vmem:[#allocation2 + $0x88] sm:$0xff]
  %v1617 = vld [vmem:[#allocation2 + $0x90] sm:$0xff]
  %v1618 = vld [vmem:[#allocation2 + $0x98] sm:$0xff]
  %v1619 = vld [vmem:[#allocation2 + $0xa0] sm:$0xff]
  %v1620 = vld [vmem:[#allocation2 + $0xa8] sm:$0xff]
  %v1621 = vld [vmem:[#allocation2 + $0xb0] sm:$0xff]
  %v1622 = vld [vmem:[#allocation2 + $0xb8] sm:$0xff]
  %v1623 = vld [vmem:[#allocation2 + $0xc0] sm:$0xff]
  %v1624 = vld [vmem:[#allocation2 + $0xc8] sm:$0xff]
  %v1625 = vld [vmem:[#allocation2 + $0xd0] sm:$0xff]
  %v1626 = vld [vmem:[#allocation2 + $0xd8] sm:$0xff]
  %v1627 = vld [vmem:[#allocation2 + $0xe0] sm:$0xff]
  %v1628 = vld [vmem:[#allocation2 + $0xe8] sm:$0xff]
  %v1629 = vld [vmem:[#allocation2 + $0xf0] sm:$0xff]
  %v1630 = vld [vmem:[#allocation2 + $0xf8] sm:$0xff]
  %v1631 = vld [vmem:[#allocation2 + $0x100] sm:$0xff]
  %v1632 = vld [vmem:[#allocation2 + $0x108] sm:$0xff]
  %v1633 = vld [vmem:[#allocation2 + $0x110] sm:$0xff]
  %v1634 = vld [vmem:[#allocation2 + $0x118] sm:$0xff]
  %v1635 = vld [vmem:[#allocation2 + $0x120] sm:$0xff]
  %v1636 = vld [vmem:[#allocation2 + $0x128] sm:$0xff]
  %v1637 = vld [vmem:[#allocation2 + $0x130] sm:$0xff]
  %v1638 = vld [vmem:[#allocation2 + $0x138] sm:$0xff]
  %v1639 = vld [vmem:[#allocation2 + $0x140] sm:$0xff]
  %v1640 = vld [vmem:[#allocation2 + $0x148] sm:$0xff]
  %v1641 = vld [vmem:[#allocation2 + $0x150] sm:$0xff]
  %v1642 = vld [vmem:[#allocation2 + $0x158] sm:$0xff]
  %v1643 = vld [vmem:[#allocation2 + $0x160] sm:$0xff]
  %v1644 = vld [vmem:[#allocation2 + $0x168] sm:$0xff]
  %v1645 = vld [vmem:[#allocation2 + $0x170] sm:$0xff]
  %v1646 = vld [vmem:[#allocation2 + $0x178] sm:$0xff]
  %v1647 = vld [vmem:[#allocation2 + $0x180] sm:$0xff]
  %v1648 = vld [vmem:[#allocation2 + $0x188] sm:$0xff]
  %v1649 = vld [vmem:[#allocation2 + $0x190] sm:$0xff]
  %v1650 = vld [vmem:[#allocation2 + $0x198] sm:$0xff]
  %v1651 = vld [vmem:[#allocation2 + $0x1a0] sm:$0xff]
  %v1652 = vld [vmem:[#allocation2 + $0x1a8] sm:$0xff]
  %v1653 = vld [vmem:[#allocation2 + $0x1b0] sm:$0xff]
  %v1654 = vld [vmem:[#allocation2 + $0x1b8] sm:$0xff]
  %v1655 = vld [vmem:[#allocation2 + $0x1c0] sm:$0xff]
  %v1656 = vld [vmem:[#allocation2 + $0x1c8] sm:$0xff]
  %v1657 = vld [vmem:[#allocation2 + $0x1d0] sm:$0xff]
  %v1658 = vld [vmem:[#allocation2 + $0x1d8] sm:$0xff]
  %v1659 = vld [vmem:[#allocation2 + $0x1e0] sm:$0xff]
  %v1660 = vld [vmem:[#allocation2 + $0x1e8] sm:$0xff]
  %v1661 = vld [vmem:[#allocation2 + $0x1f0] sm:$0xff]
  %v1662 = vld [vmem:[#allocation2 + $0x1f8] sm:$0xff]
  %v1663 = vld [vmem:[#allocation2 + $0x200] sm:$0xff]
  %v1664 = vld [vmem:[#allocation2 + $0x208] sm:$0xff]
  %v1665 = vld [vmem:[#allocation2 + $0x210] sm:$0xff]
  %v1666 = vld [vmem:[#allocation2 + $0x218] sm:$0xff]
  %v1667 = vld [vmem:[#allocation2 + $0x220] sm:$0xff]
  %v1668 = vld [vmem:[#allocation2 + $0x228] sm:$0xff]
  %v1669 = vld [vmem:[#allocation2 + $0x230] sm:$0xff]
  %v1670 = vld [vmem:[#allocation2 + $0x238] sm:$0xff]
  %v1671 = vld [vmem:[#allocation2 + $0x240] sm:$0xff]
  %v1672 = vld [vmem:[#allocation2 + $0x248] sm:$0xff]
  %v1673 = vld [vmem:[#allocation2 + $0x250] sm:$0xff]
  %v1674 = vld [vmem:[#allocation2 + $0x258] sm:$0xff]
  %v1675 = vld [vmem:[#allocation2 + $0x260] sm:$0xff]
  %v1676 = vld [vmem:[#allocation2 + $0x268] sm:$0xff]
  %v1677 = vld [vmem:[#allocation2 + $0x270] sm:$0xff]
  %v1678 = vld [vmem:[#allocation2 + $0x278] sm:$0xff]
  %v1679 = vld [vmem:[#allocation2 + $0x280] sm:$0xff]
  %v1680 = vld [vmem:[#allocation2 + $0x288] sm:$0xff]
  %v1681 = vld [vmem:[#allocation2 + $0x290] sm:$0xff]
  %v1682 = vld [vmem:[#allocation2 + $0x298] sm:$0xff]
  %v1683 = vld [vmem:[#allocation2 + $0x2a0] sm:$0xff]
  %v1684 = vld [vmem:[#allocation2 + $0x2a8] sm:$0xff]
  %v1685 = vld [vmem:[#allocation2 + $0x2b0] sm:$0xff]
  %v1686 = vld [vmem:[#allocation2 + $0x2b8] sm:$0xff]
  %v1687 = vld [vmem:[#allocation2 + $0x2c0] sm:$0xff]
  %v1688 = vld [vmem:[#allocation2 + $0x2c8] sm:$0xff]
  %v1689 = vld [vmem:[#allocation2 + $0x2d0] sm:$0xff]
  %v1690 = vld [vmem:[#allocation2 + $0x2d8] sm:$0xff]
  %v1691 = vld [vmem:[#allocation2 + $0x2e0] sm:$0xff]
  %v1692 = vld [vmem:[#allocation2 + $0x2e8] sm:$0xff]
  %v1693 = vld [vmem:[#allocation2 + $0x2f0] sm:$0xff]
  %v1694 = vld [vmem:[#allocation2 + $0x2f8] sm:$0xff]
  %v1695 = vld [vmem:[#allocation2 + $0x300] sm:$0xff]
  %v1696 = vld [vmem:[#allocation2 + $0x308] sm:$0xff]
  %v1697 = vld [vmem:[#allocation2 + $0x310] sm:$0xff]
  %v1698 = vld [vmem:[#allocation2 + $0x318] sm:$0xff]
  %v1699 = vld [vmem:[#allocation2 + $0x320] sm:$0xff]
  %v1700 = vld [vmem:[#allocation2 + $0x328] sm:$0xff]
  %v1701 = vld [vmem:[#allocation2 + $0x330] sm:$0xff]
  %v1702 = vld [vmem:[#allocation2 + $0x338] sm:$0xff]
  %v1703 = vld [vmem:[#allocation2 + $0x340] sm:$0xff]
  %v1704 = vld [vmem:[#allocation2 + $0x348] sm:$0xff]
  %v1705 = vld [vmem:[#allocation2 + $0x350] sm:$0xff]
  %v1706 = vld [vmem:[#allocation2 + $0x358] sm:$0xff]
  %v1707 = vld [vmem:[#allocation2 + $0x360] sm:$0xff]
  %v1708 = vld [vmem:[#allocation2 + $0x368] sm:$0xff]
  %v1709 = vld [vmem:[#allocation2 + $0x370] sm:$0xff]
  %v1710 = vld [vmem:[#allocation2 + $0x378] sm:$0xff]
  %v1711 = vld [vmem:[#allocation2 + $0x380] sm:$0xff]
  %v1712 = vld [vmem:[#allocation2 + $0x388] sm:$0xff]
  %v1713 = vld [vmem:[#allocation2 + $0x390] sm:$0xff]
  %v1714 = vld [vmem:[#allocation2 + $0x398] sm:$0xff]
  %v1715 = vld [vmem:[#allocation2 + $0x3a0] sm:$0xff]
  %v1717 = vsel %vm339, %v1583, 0
  %v1720 = vsel %vm339, %v1584, 0
  %v1723 = vsel %vm339, %v1585, 0
  %v1726 = vsel %vm339, %v1586, 0
  %v1729 = vsel %vm339, %v1587, 0
  %v1732 = vsel %vm339, %v1588, 0
  %v1735 = vsel %vm339, %v1589, 0
  %v1738 = vsel %vm339, %v1590, 0
  %v1741 = vsel %vm339, %v1591, 0
  %v1744 = vsel %vm339, %v1592, 0
  %v1747 = vsel %vm339, %v1593, 0
  %v1750 = vsel %vm339, %v1594, 0
  %v1753 = vsel %vm339, %v1595, 0
  %v1756 = vsel %vm339, %v1596, 0
  %v1759 = vsel %vm339, %v1597, 0
  %v1762 = vsel %vm339, %v1598, 0
  %1764 = vmatprep.subr.mxu0 %v1600
  %1765 = vmatpush1.msra.mxu0 %v1599
  %1766 = vmatprep.subr.mxu0 %v1609
  %1767 = vmatpush1.msra.mxu0 %v1608
  %1768 = vmatprep.subr.mxu0 %v1618
  %1769 = vmatpush1.msra.mxu0 %v1617
  %1770 = vmatprep.subr.mxu0 %v1627
  %1771 = vmatpush1.msra.mxu0 %v1626
  %1772 = vmatprep.subr.mxu0 %v1636
  %1773 = vmatpush1.msra.mxu0 %v1635
  %1774 = vmatprep.subr.mxu0 %v1645
  %1775 = vmatpush1.msra.mxu0 %v1644
  %1776 = vmatprep.subr.mxu0 %v1654
  %1777 = vmatpush1.msra.mxu0 %v1653
  %1778 = vmatprep.subr.mxu0 %v1663
  %1779 = vmatpush1.msra.mxu0 %v1662
  %1780 = vmatprep.subr.mxu0 %v1672
  %1781 = vmatpush1.msra.mxu0 %v1671
  %1782 = vmatprep.subr.mxu0 %v1681
  %1783 = vmatpush1.msra.mxu0 %v1680
  %1784 = vmatprep.subr.mxu0 %v1690
  %1785 = vmatpush1.msra.mxu0 %v1689
  %1786 = vmatprep.subr.mxu0 %v1699
  %1787 = vmatpush1.msra.mxu0 %v1698
  %1788 = vmatprep.subr.mxu0 %v1708
  %1789 = vmatpush1.msra.mxu0 %v1707
  %1790 = vmatprep.subr.mxu0 0.0
  %1791 = vmatpush1.msra.mxu0 0.0
  %1792 = vmatprep.subr.mxu0 0.0
  %1793 = vmatpush1.msra.mxu0 0.0
  %1794 = vmatprep.subr.mxu0 0.0
  %1795 = vmatpush1.msra.mxu0 0.0
  %1796 = vmatprep.subr.mxu0 0.0
  %1797 = vmatpush1.msra.mxu0 0.0
  %1798 = vmatprep.subr.mxu0 0.0
  %1799 = vmatpush1.msra.mxu0 0.0
  %1800 = vmatprep.subr.mxu0 0.0
  %1801 = vmatpush1.msra.mxu0 0.0
  %1802 = vmatprep.subr.mxu0 0.0
  %1803 = vmatpush1.msra.mxu0 0.0
  %1804 = vmatprep.subr.mxu0 0.0
  %1805 = vmatpush1.msra.mxu0 0.0
  %1806 = vmatprep.subr.mxu0 0.0
  %1807 = vmatpush1.msra.mxu0 0.0
  %1808 = vmatprep.subr.mxu0 0.0
  %1809 = vmatpush1.msra.mxu0 0.0
  %1810 = vmatprep.subr.mxu0 0.0
  %1811 = vmatpush1.msra.mxu0 0.0
  %1812 = vmatprep.subr.mxu0 0.0
  %1813 = vmatpush1.msra.mxu0 0.0
  %1814 = vmatprep.subr.mxu0 0.0
  %1815 = vmatpush1.msra.mxu0 0.0
  %1816 = vmatprep.subr.mxu0 0.0
  %1817 = vmatpush1.msra.mxu0 0.0
  %1818 = vmatprep.subr.mxu0 0.0
  %1819 = vmatpush1.msra.mxu0 0.0
  %1820 = vmatprep.subr.mxu0 0.0
  %1821 = vmatpush1.msra.mxu0 0.0
  %1822 = vmatprep.subr.mxu0 0.0
  %1823 = vmatpush1.msra.mxu0 0.0
  %1824 = vmatprep.subr.mxu0 0.0
  %1825 = vmatpush1.msra.mxu0 0.0
  %1826 = vmatprep.subr.mxu0 0.0
  %1827 = vmatpush1.msra.mxu0 0.0
  %1828 = vmatprep.mubr.f32.mxu0 0.0
  %1829 = vmatmul.mubr.f32.gmra.mrb[0].mxu0 %v1717
  %v1830 = vpop.f32.mrb[0].mxu0
  %v1831 = vadd.f32 0.0, %v1830
  %v1832 = vpop.f32.mrb[0].mxu0
  %v1833 = vadd.f32 0.0, %v1832
  %1834 = vmatprep.mubr.f32.mxu0 0.0
  %1835 = vmatmul.mubr.f32.gmra.mrb[0].mxu0 %v1720
  %v1836 = vpop.f32.mrb[0].mxu0
  %v1837 = vadd.f32 0.0, %v1836
  %v1838 = vpop.f32.mrb[0].mxu0
  %v1839 = vadd.f32 0.0, %v1838
  %1840 = vmatprep.mubr.f32.mxu0 0.0
  %1841 = vmatmul.mubr.f32.gmra.mrb[0].mxu0 %v1723
  %v1842 = vpop.f32.mrb[0].mxu0
  %v1843 = vadd.f32 0.0, %v1842
  %v1844 = vpop.f32.mrb[0].mxu0
  %v1845 = vadd.f32 0.0, %v1844
  %1846 = vmatprep.mubr.f32.mxu0 0.0
  %1847 = vmatmul.mubr.f32.gmra.mrb[0].mxu0 %v1726
  %v1848 = vpop.f32.mrb[0].mxu0
  %v1849 = vadd.f32 0.0, %v1848
  %v1850 = vpop.f32.mrb[0].mxu0
  %v1851 = vadd.f32 0.0, %v1850
  %1852 = vmatprep.mubr.f32.mxu0 0.0
  %1853 = vmatmul.mubr.f32.gmra.mrb[0].mxu0 %v1729
  %v1854 = vpop.f32.mrb[0].mxu0
  %v1855 = vadd.f32 0.0, %v1854
  %v1856 = vpop.f32.mrb[0].mxu0
  %v1857 = vadd.f32 0.0, %v1856
  %1858 = vmatprep.mubr.f32.mxu0 0.0
  %1859 = vmatmul.mubr.f32.gmra.mrb[0].mxu0 %v1732
  %v1860 = vpop.f32.mrb[0].mxu0
  %v1861 = vadd.f32 0.0, %v1860
  %v1862 = vpop.f32.mrb[0].mxu0
  %v1863 = vadd.f32 0.0, %v1862
  %1864 = vmatprep.mubr.f32.mxu0 0.0
  %1865 = vmatmul.mubr.f32.gmra.mrb[0].mxu0 %v1735
  %v1866 = vpop.f32.mrb[0].mxu0
  %v1867 = vadd.f32 0.0, %v1866
  %v1868 = vpop.f32.mrb[0].mxu0
  %v1869 = vadd.f32 0.0, %v1868
  %1870 = vmatprep.mubr.f32.mxu0 0.0
  %1871 = vmatmul.mubr.f32.gmra.mrb[0].mxu0 %v1738
  %v1872 = vpop.f32.mrb[0].mxu0
  %v1873 = vadd.f32 0.0, %v1872
  %v1874 = vpop.f32.mrb[0].mxu0
  %v1875 = vadd.f32 0.0, %v1874
  %1876 = vmatprep.mubr.f32.mxu0 0.0
  %1877 = vmatmul.mubr.f32.gmra.mrb[0].mxu0 %v1741
  %v1878 = vpop.f32.mrb[0].mxu0
  %v1879 = vadd.f32 0.0, %v1878
  %v1880 = vpop.f32.mrb[0].mxu0
  %v1881 = vadd.f32 0.0, %v1880
  %1882 = vmatprep.mubr.f32.mxu0 0.0
  %1883 = vmatmul.mubr.f32.gmra.mrb[0].mxu0 %v1744
  %v1884 = vpop.f32.mrb[0].mxu0
  %v1885 = vadd.f32 0.0, %v1884
  %v1886 = vpop.f32.mrb[0].mxu0
  %v1887 = vadd.f32 0.0, %v1886
  %1888 = vmatprep.mubr.f32.mxu0 0.0
  %1889 = vmatmul.mubr.f32.gmra.mrb[0].mxu0 %v1747
  %v1890 = vpop.f32.mrb[0].mxu0
  %v1891 = vadd.f32 0.0, %v1890
  %v1892 = vpop.f32.mrb[0].mxu0
  %v1893 = vadd.f32 0.0, %v1892
  %1894 = vmatprep.mubr.f32.mxu0 0.0
  %1895 = vmatmul.mubr.f32.gmra.mrb[0].mxu0 %v1750
  %v1896 = vpop.f32.mrb[0].mxu0
  %v1897 = vadd.f32 0.0, %v1896
  %v1898 = vpop.f32.mrb[0].mxu0
  %v1899 = vadd.f32 0.0, %v1898
  %1900 = vmatprep.mubr.f32.mxu0 0.0
  %1901 = vmatmul.mubr.f32.gmra.mrb[0].mxu0 %v1753
  %v1902 = vpop.f32.mrb[0].mxu0
  %v1903 = vadd.f32 0.0, %v1902
  %v1904 = vpop.f32.mrb[0].mxu0
  %v1905 = vadd.f32 0.0, %v1904
  %1906 = vmatprep.mubr.f32.mxu0 0.0
  %1907 = vmatmul.mubr.f32.gmra.mrb[0].mxu0 %v1756
  %v1908 = vpop.f32.mrb[0].mxu0
  %v1909 = vadd.f32 0.0, %v1908
  %v1910 = vpop.f32.mrb[0].mxu0
  %v1911 = vadd.f32 0.0, %v1910
  %1912 = vmatprep.mubr.f32.mxu0 0.0
  %1913 = vmatmul.mubr.f32.gmra.mrb[0].mxu0 %v1759
  %v1914 = vpop.f32.mrb[0].mxu0
  %v1915 = vadd.f32 0.0, %v1914
  %v1916 = vpop.f32.mrb[0].mxu0
  %v1917 = vadd.f32 0.0, %v1916
  %1918 = vmatprep.mubr.f32.mxu0 0.0
  %1919 = vmatmul.mubr.f32.gmra.mrb[0].mxu0 %v1762
  %v1920 = vpop.f32.mrb[0].mxu0
  %v1921 = vadd.f32 0.0, %v1920
  %v1922 = vpop.f32.mrb[0].mxu0
  %v1923 = vadd.f32 0.0, %v1922
  %1924 = vdwg.mxu0
  %1925 = vmatprep.subr.mxu0 %v1602
  %1926 = vmatpush1.msra.mxu0 %v1601
  %1927 = vmatprep.subr.mxu0 %v1611
  %1928 = vmatpush1.msra.mxu0 %v1610
  %1929 = vmatprep.subr.mxu0 %v1620
  %1930 = vmatpush1.msra.mxu0 %v1619
  %1931 = vmatprep.subr.mxu0 %v1629
  %1932 = vmatpush1.msra.mxu0 %v1628
  %1933 = vmatprep.subr.mxu0 %v1638
  %1934 = vmatpush1.msra.mxu0 %v1637
  %1935 = vmatprep.subr.mxu0 %v1647
  %1936 = vmatpush1.msra.mxu0 %v1646
  %1937 = vmatprep.subr.mxu0 %v1656
  %1938 = vmatpush1.msra.mxu0 %v1655
  %1939 = vmatprep.subr.mxu0 %v1665
  %1940 = vmatpush1.msra.mxu0 %v1664
  %1941 = vmatprep.subr.mxu0 %v1674
  %1942 = vmatpush1.msra.mxu0 %v1673
  %1943 = vmatprep.subr.mxu0 %v1683
  %1944 = vmatpush1.msra.mxu0 %v1682
  %1945 = vmatprep.subr.mxu0 %v1692
  %1946 = vmatpush1.msra.mxu0 %v1691
  %1947 = vmatprep.subr.mxu0 %v1701
  %1948 = vmatpush1.msra.mxu0 %v1700
  %1949 = vmatprep.subr.mxu0 %v1710
  %1950 = vmatpush1.msra.mxu0 %v1709
  %1951 = vmatprep.subr.mxu0 0.0
  %1952 = vmatpush1.msra.mxu0 0.0
  %1953 = vmatprep.subr.mxu0 0.0
  %1954 = vmatpush1.msra.mxu0 0.0
  %1955 = vmatprep.subr.mxu0 0.0
  %1956 = vmatpush1.msra.mxu0 0.0
  %1957 = vmatprep.subr.mxu0 0.0
  %1958 = vmatpush1.msra.mxu0 0.0
  %1959 = vmatprep.subr.mxu0 0.0
  %1960 = vmatpush1.msra.mxu0 0.0
  %1961 = vmatprep.subr.mxu0 0.0
  %1962 = vmatpush1.msra.mxu0 0.0
  %1963 = vmatprep.subr.mxu0 0.0
  %1964 = vmatpush1.msra.mxu0 0.0
  %1965 = vmatprep.subr.mxu0 0.0
  %1966 = vmatpush1.msra.mxu0 0.0
  %1967 = vmatprep.subr.mxu0 0.0
  %1968 = vmatpush1.msra.mxu0 0.0
  %1969 = vmatprep.subr.mxu0 0.0
  %1970 = vmatpush1.msra.mxu0 0.0
  %1971 = vmatprep.subr.mxu0 0.0
  %1972 = vmatpush1.msra.mxu0 0.0
  %1973 = vmatprep.subr.mxu0 0.0
  %1974 = vmatpush1.msra.mxu0 0.0
  %1975 = vmatprep.subr.mxu0 0.0
  %1976 = vmatpush1.msra.mxu0 0.0
  %1977 = vmatprep.subr.mxu0 0.0
  %1978 = vmatpush1.msra.mxu0 0.0
  %1979 = vmatprep.subr.mxu0 0.0
  %1980 = vmatpush1.msra.mxu0 0.0
  %1981 = vmatprep.subr.mxu0 0.0
  %1982 = vmatpush1.msra.mxu0 0.0
  %1983 = vmatprep.subr.mxu0 0.0
  %1984 = vmatpush1.msra.mxu0 0.0
  %1985 = vmatprep.subr.mxu0 0.0
  %1986 = vmatpush1.msra.mxu0 0.0
  %1987 = vmatprep.subr.mxu0 0.0
  %1988 = vmatpush1.msra.mxu0 0.0
  %1989 = vmatprep.mubr.f32.mxu0 0.0
  %1990 = vmatmul.mubr.f32.gmra.mrb[0].mxu0 %v1717
  %v1991 = vpop.f32.mrb[0].mxu0
  %v1992 = vadd.f32 0.0, %v1991
  %v1993 = vpop.f32.mrb[0].mxu0
  %v1994 = vadd.f32 0.0, %v1993
  %1995 = vmatprep.mubr.f32.mxu0 0.0
  %1996 = vmatmul.mubr.f32.gmra.mrb[0].mxu0 %v1720
  %v1997 = vpop.f32.mrb[0].mxu0
  %v1998 = vadd.f32 0.0, %v1997
  %v1999 = vpop.f32.mrb[0].mxu0
  %v2000 = vadd.f32 0.0, %v1999
  %2001 = vmatprep.mubr.f32.mxu0 0.0
  %2002 = vmatmul.mubr.f32.gmra.mrb[0].mxu0 %v1723
  %v2003 = vpop.f32.mrb[0].mxu0
  %v2004 = vadd.f32 0.0, %v2003
  %v2005 = vpop.f32.mrb[0].mxu0
  %v2006 = vadd.f32 0.0, %v2005
  %2007 = vmatprep.mubr.f32.mxu0 0.0
  %2008 = vmatmul.mubr.f32.gmra.mrb[0].mxu0 %v1726
  %v2009 = vpop.f32.mrb[0].mxu0
  %v2010 = vadd.f32 0.0, %v2009
  %v2011 = vpop.f32.mrb[0].mxu0
  %v2012 = vadd.f32 0.0, %v2011
  %2013 = vmatprep.mubr.f32.mxu0 0.0
  %2014 = vmatmul.mubr.f32.gmra.mrb[0].mxu0 %v1729
  %v2015 = vpop.f32.mrb[0].mxu0
  %v2016 = vadd.f32 0.0, %v2015
  %v2017 = vpop.f32.mrb[0].mxu0
  %v2018 = vadd.f32 0.0, %v2017
  %2019 = vmatprep.mubr.f32.mxu0 0.0
  %2020 = vmatmul.mubr.f32.gmra.mrb[0].mxu0 %v1732
  %v2021 = vpop.f32.mrb[0].mxu0
  %v2022 = vadd.f32 0.0, %v2021
  %v2023 = vpop.f32.mrb[0].mxu0
  %v2024 = vadd.f32 0.0, %v2023
  %2025 = vmatprep.mubr.f32.mxu0 0.0
  %2026 = vmatmul.mubr.f32.gmra.mrb[0].mxu0 %v1735
  %v2027 = vpop.f32.mrb[0].mxu0
  %v2028 = vadd.f32 0.0, %v2027
  %v2029 = vpop.f32.mrb[0].mxu0
  %v2030 = vadd.f32 0.0, %v2029
  %2031 = vmatprep.mubr.f32.mxu0 0.0
  %2032 = vmatmul.mubr.f32.gmra.mrb[0].mxu0 %v1738
  %v2033 = vpop.f32.mrb[0].mxu0
  %v2034 = vadd.f32 0.0, %v2033
  %v2035 = vpop.f32.mrb[0].mxu0
  %v2036 = vadd.f32 0.0, %v2035
  %2037 = vmatprep.mubr.f32.mxu0 0.0
  %2038 = vmatmul.mubr.f32.gmra.mrb[0].mxu0 %v1741
  %v2039 = vpop.f32.mrb[0].mxu0
  %v2040 = vadd.f32 0.0, %v2039
  %v2041 = vpop.f32.mrb[0].mxu0
  %v2042 = vadd.f32 0.0, %v2041
  %2043 = vmatprep.mubr.f32.mxu0 0.0
  %2044 = vmatmul.mubr.f32.gmra.mrb[0].mxu0 %v1744
  %v2045 = vpop.f32.mrb[0].mxu0
  %v2046 = vadd.f32 0.0, %v2045
  %v2047 = vpop.f32.mrb[0].mxu0
  %v2048 = vadd.f32 0.0, %v2047
  %2049 = vmatprep.mubr.f32.mxu0 0.0
  %2050 = vmatmul.mubr.f32.gmra.mrb[0].mxu0 %v1747
  %v2051 = vpop.f32.mrb[0].mxu0
  %v2052 = vadd.f32 0.0, %v2051
  %v2053 = vpop.f32.mrb[0].mxu0
  %v2054 = vadd.f32 0.0, %v2053
  %2055 = vmatprep.mubr.f32.mxu0 0.0
  %2056 = vmatmul.mubr.f32.gmra.mrb[0].mxu0 %v1750
  %v2057 = vpop.f32.mrb[0].mxu0
  %v2058 = vadd.f32 0.0, %v2057
  %v2059 = vpop.f32.mrb[0].mxu0
  %v2060 = vadd.f32 0.0, %v2059
  %2061 = vmatprep.mubr.f32.mxu0 0.0
  %2062 = vmatmul.mubr.f32.gmra.mrb[0].mxu0 %v1753
  %v2063 = vpop.f32.mrb[0].mxu0
  %v2064 = vadd.f32 0.0, %v2063
  %v2065 = vpop.f32.mrb[0].mxu0
  %v2066 = vadd.f32 0.0, %v2065
  %2067 = vmatprep.mubr.f32.mxu0 0.0
  %2068 = vmatmul.mubr.f32.gmra.mrb[0].mxu0 %v1756
  %v2069 = vpop.f32.mrb[0].mxu0
  %v2070 = vadd.f32 0.0, %v2069
  %v2071 = vpop.f32.mrb[0].mxu0
  %v2072 = vadd.f32 0.0, %v2071
  %2073 = vmatprep.mubr.f32.mxu0 0.0
  %2074 = vmatmul.mubr.f32.gmra.mrb[0].mxu0 %v1759
  %v2075 = vpop.f32.mrb[0].mxu0
  %v2076 = vadd.f32 0.0, %v2075
  %v2077 = vpop.f32.mrb[0].mxu0
  %v2078 = vadd.f32 0.0, %v2077
  %2079 = vmatprep.mubr.f32.mxu0 0.0
  %2080 = vmatmul.mubr.f32.gmra.mrb[0].mxu0 %v1762
  %v2081 = vpop.f32.mrb[0].mxu0
  %v2082 = vadd.f32 0.0, %v2081
  %v2083 = vpop.f32.mrb[0].mxu0
  %v2084 = vadd.f32 0.0, %v2083
  %2085 = vdwg.mxu0
  %2086 = vmatprep.subr.mxu0 %v1604
  %2087 = vmatpush1.msra.mxu0 %v1603
  %2088 = vmatprep.subr.mxu0 %v1613
  %2089 = vmatpush1.msra.mxu0 %v1612
  %2090 = vmatprep.subr.mxu0 %v1622
  %2091 = vmatpush1.msra.mxu0 %v1621
  %2092 = vmatprep.subr.mxu0 %v1631
  %2093 = vmatpush1.msra.mxu0 %v1630
  %2094 = vmatprep.subr.mxu0 %v1640
  %2095 = vmatpush1.msra.mxu0 %v1639
  %2096 = vmatprep.subr.mxu0 %v1649
  %2097 = vmatpush1.msra.mxu0 %v1648
  %2098 = vmatprep.subr.mxu0 %v1658
  %2099 = vmatpush1.msra.mxu0 %v1657
  %2100 = vmatprep.subr.mxu0 %v1667
  %2101 = vmatpush1.msra.mxu0 %v1666
  %2102 = vmatprep.subr.mxu0 %v1676
  %2103 = vmatpush1.msra.mxu0 %v1675
  %2104 = vmatprep.subr.mxu0 %v1685
  %2105 = vmatpush1.msra.mxu0 %v1684
  %2106 = vmatprep.subr.mxu0 %v1694
  %2107 = vmatpush1.msra.mxu0 %v1693
  %2108 = vmatprep.subr.mxu0 %v1703
  %2109 = vmatpush1.msra.mxu0 %v1702
  %2110 = vmatprep.subr.mxu0 %v1712
  %2111 = vmatpush1.msra.mxu0 %v1711
  %2112 = vmatprep.subr.mxu0 0.0
  %2113 = vmatpush1.msra.mxu0 0.0
  %2114 = vmatprep.subr.mxu0 0.0
  %2115 = vmatpush1.msra.mxu0 0.0
  %2116 = vmatprep.subr.mxu0 0.0
  %2117 = vmatpush1.msra.mxu0 0.0
  %2118 = vmatprep.subr.mxu0 0.0
  %2119 = vmatpush1.msra.mxu0 0.0
  %2120 = vmatprep.subr.mxu0 0.0
  %2121 = vmatpush1.msra.mxu0 0.0
  %2122 = vmatprep.subr.mxu0 0.0
  %2123 = vmatpush1.msra.mxu0 0.0
  %2124 = vmatprep.subr.mxu0 0.0
  %2125 = vmatpush1.msra.mxu0 0.0
  %2126 = vmatprep.subr.mxu0 0.0
  %2127 = vmatpush1.msra.mxu0 0.0
  %2128 = vmatprep.subr.mxu0 0.0
  %2129 = vmatpush1.msra.mxu0 0.0
  %2130 = vmatprep.subr.mxu0 0.0
  %2131 = vmatpush1.msra.mxu0 0.0
  %2132 = vmatprep.subr.mxu0 0.0
  %2133 = vmatpush1.msra.mxu0 0.0
  %2134 = vmatprep.subr.mxu0 0.0
  %2135 = vmatpush1.msra.mxu0 0.0
  %2136 = vmatprep.subr.mxu0 0.0
  %2137 = vmatpush1.msra.mxu0 0.0
  %2138 = vmatprep.subr.mxu0 0.0
  %2139 = vmatpush1.msra.mxu0 0.0
  %2140 = vmatprep.subr.mxu0 0.0
  %2141 = vmatpush1.msra.mxu0 0.0
  %2142 = vmatprep.subr.mxu0 0.0
  %2143 = vmatpush1.msra.mxu0 0.0
  %2144 = vmatprep.subr.mxu0 0.0
  %2145 = vmatpush1.msra.mxu0 0.0
  %2146 = vmatprep.subr.mxu0 0.0
  %2147 = vmatpush1.msra.mxu0 0.0
  %2148 = vmatprep.subr.mxu0 0.0
  %2149 = vmatpush1.msra.mxu0 0.0
  %2150 = vmatprep.mubr.f32.mxu0 0.0
  %2151 = vmatmul.mubr.f32.gmra.mrb[0].mxu0 %v1717
  %v2152 = vpop.f32.mrb[0].mxu0
  %v2153 = vadd.f32 0.0, %v2152
  %v2154 = vpop.f32.mrb[0].mxu0
  %v2155 = vadd.f32 0.0, %v2154
  %2156 = vmatprep.mubr.f32.mxu0 0.0
  %2157 = vmatmul.mubr.f32.gmra.mrb[0].mxu0 %v1720
  %v2158 = vpop.f32.mrb[0].mxu0
  %v2159 = vadd.f32 0.0, %v2158
  %v2160 = vpop.f32.mrb[0].mxu0
  %v2161 = vadd.f32 0.0, %v2160
  %2162 = vmatprep.mubr.f32.mxu0 0.0
  %2163 = vmatmul.mubr.f32.gmra.mrb[0].mxu0 %v1723
  %v2164 = vpop.f32.mrb[0].mxu0
  %v2165 = vadd.f32 0.0, %v2164
  %v2166 = vpop.f32.mrb[0].mxu0
  %v2167 = vadd.f32 0.0, %v2166
  %2168 = vmatprep.mubr.f32.mxu0 0.0
  %2169 = vmatmul.mubr.f32.gmra.mrb[0].mxu0 %v1726
  %v2170 = vpop.f32.mrb[0].mxu0
  %v2171 = vadd.f32 0.0, %v2170
  %v2172 = vpop.f32.mrb[0].mxu0
  %v2173 = vadd.f32 0.0, %v2172
  %2174 = vmatprep.mubr.f32.mxu0 0.0
  %2175 = vmatmul.mubr.f32.gmra.mrb[0].mxu0 %v1729
  %v2176 = vpop.f32.mrb[0].mxu0
  %v2177 = vadd.f32 0.0, %v2176
  %v2178 = vpop.f32.mrb[0].mxu0
  %v2179 = vadd.f32 0.0, %v2178
  %2180 = vmatprep.mubr.f32.mxu0 0.0
  %2181 = vmatmul.mubr.f32.gmra.mrb[0].mxu0 %v1732
  %v2182 = vpop.f32.mrb[0].mxu0
  %v2183 = vadd.f32 0.0, %v2182
  %v2184 = vpop.f32.mrb[0].mxu0
  %v2185 = vadd.f32 0.0, %v2184
  %2186 = vmatprep.mubr.f32.mxu0 0.0
  %2187 = vmatmul.mubr.f32.gmra.mrb[0].mxu0 %v1735
  %v2188 = vpop.f32.mrb[0].mxu0
  %v2189 = vadd.f32 0.0, %v2188
  %v2190 = vpop.f32.mrb[0].mxu0
  %v2191 = vadd.f32 0.0, %v2190
  %2192 = vmatprep.mubr.f32.mxu0 0.0
  %2193 = vmatmul.mubr.f32.gmra.mrb[0].mxu0 %v1738
  %v2194 = vpop.f32.mrb[0].mxu0
  %v2195 = vadd.f32 0.0, %v2194
  %v2196 = vpop.f32.mrb[0].mxu0
  %v2197 = vadd.f32 0.0, %v2196
  %2198 = vmatprep.mubr.f32.mxu0 0.0
  %2199 = vmatmul.mubr.f32.gmra.mrb[0].mxu0 %v1741
  %v2200 = vpop.f32.mrb[0].mxu0
  %v2201 = vadd.f32 0.0, %v2200
  %v2202 = vpop.f32.mrb[0].mxu0
  %v2203 = vadd.f32 0.0, %v2202
  %2204 = vmatprep.mubr.f32.mxu0 0.0
  %2205 = vmatmul.mubr.f32.gmra.mrb[0].mxu0 %v1744
  %v2206 = vpop.f32.mrb[0].mxu0
  %v2207 = vadd.f32 0.0, %v2206
  %v2208 = vpop.f32.mrb[0].mxu0
  %v2209 = vadd.f32 0.0, %v2208
  %2210 = vmatprep.mubr.f32.mxu0 0.0
  %2211 = vmatmul.mubr.f32.gmra.mrb[0].mxu0 %v1747
  %v2212 = vpop.f32.mrb[0].mxu0
  %v2213 = vadd.f32 0.0, %v2212
  %v2214 = vpop.f32.mrb[0].mxu0
  %v2215 = vadd.f32 0.0, %v2214
  %2216 = vmatprep.mubr.f32.mxu0 0.0
  %2217 = vmatmul.mubr.f32.gmra.mrb[0].mxu0 %v1750
  %v2218 = vpop.f32.mrb[0].mxu0
  %v2219 = vadd.f32 0.0, %v2218
  %v2220 = vpop.f32.mrb[0].mxu0
  %v2221 = vadd.f32 0.0, %v2220
  %2222 = vmatprep.mubr.f32.mxu0 0.0
  %2223 = vmatmul.mubr.f32.gmra.mrb[0].mxu0 %v1753
  %v2224 = vpop.f32.mrb[0].mxu0
  %v2225 = vadd.f32 0.0, %v2224
  %v2226 = vpop.f32.mrb[0].mxu0
  %v2227 = vadd.f32 0.0, %v2226
  %2228 = vmatprep.mubr.f32.mxu0 0.0
  %2229 = vmatmul.mubr.f32.gmra.mrb[0].mxu0 %v1756
  %v2230 = vpop.f32.mrb[0].mxu0
  %v2231 = vadd.f32 0.0, %v2230
  %v2232 = vpop.f32.mrb[0].mxu0
  %v2233 = vadd.f32 0.0, %v2232
  %2234 = vmatprep.mubr.f32.mxu0 0.0
  %2235 = vmatmul.mubr.f32.gmra.mrb[0].mxu0 %v1759
  %v2236 = vpop.f32.mrb[0].mxu0
  %v2237 = vadd.f32 0.0, %v2236
  %v2238 = vpop.f32.mrb[0].mxu0
  %v2239 = vadd.f32 0.0, %v2238
  %2240 = vmatprep.mubr.f32.mxu0 0.0
  %2241 = vmatmul.mubr.f32.gmra.mrb[0].mxu0 %v1762
  %v2242 = vpop.f32.mrb[0].mxu0
  %v2243 = vadd.f32 0.0, %v2242
  %v2244 = vpop.f32.mrb[0].mxu0
  %v2245 = vadd.f32 0.0, %v2244
  %2246 = vdwg.mxu0
  %2247 = vmatprep.subr.mxu0 %v1606
  %2248 = vmatpush1.msra.mxu0 %v1605
  %2249 = vmatprep.subr.mxu0 %v1615
  %2250 = vmatpush1.msra.mxu0 %v1614
  %2251 = vmatprep.subr.mxu0 %v1624
  %2252 = vmatpush1.msra.mxu0 %v1623
  %2253 = vmatprep.subr.mxu0 %v1633
  %2254 = vmatpush1.msra.mxu0 %v1632
  %2255 = vmatprep.subr.mxu0 %v1642
  %2256 = vmatpush1.msra.mxu0 %v1641
  %2257 = vmatprep.subr.mxu0 %v1651
  %2258 = vmatpush1.msra.mxu0 %v1650
  %2259 = vmatprep.subr.mxu0 %v1660
  %2260 = vmatpush1.msra.mxu0 %v1659
  %2261 = vmatprep.subr.mxu0 %v1669
  %2262 = vmatpush1.msra.mxu0 %v1668
  %2263 = vmatprep.subr.mxu0 %v1678
  %2264 = vmatpush1.msra.mxu0 %v1677
  %2265 = vmatprep.subr.mxu0 %v1687
  %2266 = vmatpush1.msra.mxu0 %v1686
  %2267 = vmatprep.subr.mxu0 %v1696
  %2268 = vmatpush1.msra.mxu0 %v1695
  %2269 = vmatprep.subr.mxu0 %v1705
  %2270 = vmatpush1.msra.mxu0 %v1704
  %2271 = vmatprep.subr.mxu0 %v1714
  %2272 = vmatpush1.msra.mxu0 %v1713
  %2273 = vmatprep.subr.mxu0 0.0
  %2274 = vmatpush1.msra.mxu0 0.0
  %2275 = vmatprep.subr.mxu0 0.0
  %2276 = vmatpush1.msra.mxu0 0.0
  %2277 = vmatprep.subr.mxu0 0.0
  %2278 = vmatpush1.msra.mxu0 0.0
  %2279 = vmatprep.subr.mxu0 0.0
  %2280 = vmatpush1.msra.mxu0 0.0
  %2281 = vmatprep.subr.mxu0 0.0
  %2282 = vmatpush1.msra.mxu0 0.0
  %2283 = vmatprep.subr.mxu0 0.0
  %2284 = vmatpush1.msra.mxu0 0.0
  %2285 = vmatprep.subr.mxu0 0.0
  %2286 = vmatpush1.msra.mxu0 0.0
  %2287 = vmatprep.subr.mxu0 0.0
  %2288 = vmatpush1.msra.mxu0 0.0
  %2289 = vmatprep.subr.mxu0 0.0
  %2290 = vmatpush1.msra.mxu0 0.0
  %2291 = vmatprep.subr.mxu0 0.0
  %2292 = vmatpush1.msra.mxu0 0.0
  %2293 = vmatprep.subr.mxu0 0.0
  %2294 = vmatpush1.msra.mxu0 0.0
  %2295 = vmatprep.subr.mxu0 0.0
  %2296 = vmatpush1.msra.mxu0 0.0
  %2297 = vmatprep.subr.mxu0 0.0
  %2298 = vmatpush1.msra.mxu0 0.0
  %2299 = vmatprep.subr.mxu0 0.0
  %2300 = vmatpush1.msra.mxu0 0.0
  %2301 = vmatprep.subr.mxu0 0.0
  %2302 = vmatpush1.msra.mxu0 0.0
  %2303 = vmatprep.subr.mxu0 0.0
  %2304 = vmatpush1.msra.mxu0 0.0
  %2305 = vmatprep.subr.mxu0 0.0
  %2306 = vmatpush1.msra.mxu0 0.0
  %2307 = vmatprep.subr.mxu0 0.0
  %2308 = vmatpush1.msra.mxu0 0.0
  %2309 = vmatprep.subr.mxu0 0.0
  %2310 = vmatpush1.msra.mxu0 0.0
  %2311 = vmatprep.mubr.f32.mxu0 0.0
  %2312 = vmatmul.mubr.f32.gmra.mrb[0].mxu0 %v1717
  %v2313 = vpop.f32.mrb[0].mxu0
  %v2314 = vadd.f32 0.0, %v2313
  %v2315 = vpop.f32.mrb[0].mxu0
  %v2316 = vadd.f32 0.0, %v2315
  %2317 = vmatprep.mubr.f32.mxu0 0.0
  %2318 = vmatmul.mubr.f32.gmra.mrb[0].mxu0 %v1720
  %v2319 = vpop.f32.mrb[0].mxu0
  %v2320 = vadd.f32 0.0, %v2319
  %v2321 = vpop.f32.mrb[0].mxu0
  %v2322 = vadd.f32 0.0, %v2321
  %2323 = vmatprep.mubr.f32.mxu0 0.0
  %2324 = vmatmul.mubr.f32.gmra.mrb[0].mxu0 %v1723
  %v2325 = vpop.f32.mrb[0].mxu0
  %v2326 = vadd.f32 0.0, %v2325
  %v2327 = vpop.f32.mrb[0].mxu0
  %v2328 = vadd.f32 0.0, %v2327
  %2329 = vmatprep.mubr.f32.mxu0 0.0
  %2330 = vmatmul.mubr.f32.gmra.mrb[0].mxu0 %v1726
  %v2331 = vpop.f32.mrb[0].mxu0
  %v2332 = vadd.f32 0.0, %v2331
  %v2333 = vpop.f32.mrb[0].mxu0
  %v2334 = vadd.f32 0.0, %v2333
  %2335 = vmatprep.mubr.f32.mxu0 0.0
  %2336 = vmatmul.mubr.f32.gmra.mrb[0].mxu0 %v1729
  %v2337 = vpop.f32.mrb[0].mxu0
  %v2338 = vadd.f32 0.0, %v2337
  %v2339 = vpop.f32.mrb[0].mxu0
  %v2340 = vadd.f32 0.0, %v2339
  %2341 = vmatprep.mubr.f32.mxu0 0.0
  %2342 = vmatmul.mubr.f32.gmra.mrb[0].mxu0 %v1732
  %v2343 = vpop.f32.mrb[0].mxu0
  %v2344 = vadd.f32 0.0, %v2343
  %v2345 = vpop.f32.mrb[0].mxu0
  %v2346 = vadd.f32 0.0, %v2345
  %2347 = vmatprep.mubr.f32.mxu0 0.0
  %2348 = vmatmul.mubr.f32.gmra.mrb[0].mxu0 %v1735
  %v2349 = vpop.f32.mrb[0].mxu0
  %v2350 = vadd.f32 0.0, %v2349
  %v2351 = vpop.f32.mrb[0].mxu0
  %v2352 = vadd.f32 0.0, %v2351
  %2353 = vmatprep.mubr.f32.mxu0 0.0
  %2354 = vmatmul.mubr.f32.gmra.mrb[0].mxu0 %v1738
  %v2355 = vpop.f32.mrb[0].mxu0
  %v2356 = vadd.f32 0.0, %v2355
  %v2357 = vpop.f32.mrb[0].mxu0
  %v2358 = vadd.f32 0.0, %v2357
  %2359 = vmatprep.mubr.f32.mxu0 0.0
  %2360 = vmatmul.mubr.f32.gmra.mrb[0].mxu0 %v1741
  %v2361 = vpop.f32.mrb[0].mxu0
  %v2362 = vadd.f32 0.0, %v2361
  %v2363 = vpop.f32.mrb[0].mxu0
  %v2364 = vadd.f32 0.0, %v2363
  %2365 = vmatprep.mubr.f32.mxu0 0.0
  %2366 = vmatmul.mubr.f32.gmra.mrb[0].mxu0 %v1744
  %v2367 = vpop.f32.mrb[0].mxu0
  %v2368 = vadd.f32 0.0, %v2367
  %v2369 = vpop.f32.mrb[0].mxu0
  %v2370 = vadd.f32 0.0, %v2369
  %2371 = vmatprep.mubr.f32.mxu0 0.0
  %2372 = vmatmul.mubr.f32.gmra.mrb[0].mxu0 %v1747
  %v2373 = vpop.f32.mrb[0].mxu0
  %v2374 = vadd.f32 0.0, %v2373
  %v2375 = vpop.f32.mrb[0].mxu0
  %v2376 = vadd.f32 0.0, %v2375
  %2377 = vmatprep.mubr.f32.mxu0 0.0
  %2378 = vmatmul.mubr.f32.gmra.mrb[0].mxu0 %v1750
  %v2379 = vpop.f32.mrb[0].mxu0
  %v2380 = vadd.f32 0.0, %v2379
  %v2381 = vpop.f32.mrb[0].mxu0
  %v2382 = vadd.f32 0.0, %v2381
  %2383 = vmatprep.mubr.f32.mxu0 0.0
  %2384 = vmatmul.mubr.f32.gmra.mrb[0].mxu0 %v1753
  %v2385 = vpop.f32.mrb[0].mxu0
  %v2386 = vadd.f32 0.0, %v2385
  %v2387 = vpop.f32.mrb[0].mxu0
  %v2388 = vadd.f32 0.0, %v2387
  %2389 = vmatprep.mubr.f32.mxu0 0.0
  %2390 = vmatmul.mubr.f32.gmra.mrb[0].mxu0 %v1756
  %v2391 = vpop.f32.mrb[0].mxu0
  %v2392 = vadd.f32 0.0, %v2391
  %v2393 = vpop.f32.mrb[0].mxu0
  %v2394 = vadd.f32 0.0, %v2393
  %2395 = vmatprep.mubr.f32.mxu0 0.0
  %2396 = vmatmul.mubr.f32.gmra.mrb[0].mxu0 %v1759
  %v2397 = vpop.f32.mrb[0].mxu0
  %v2398 = vadd.f32 0.0, %v2397
  %v2399 = vpop.f32.mrb[0].mxu0
  %v2400 = vadd.f32 0.0, %v2399
  %2401 = vmatprep.mubr.f32.mxu0 0.0
  %2402 = vmatmul.mubr.f32.gmra.mrb[0].mxu0 %v1762
  %v2403 = vpop.f32.mrb[0].mxu0
  %v2404 = vadd.f32 0.0, %v2403
  %v2405 = vpop.f32.mrb[0].mxu0
  %v2406 = vadd.f32 0.0, %v2405
  %2407 = vdwg.mxu0
  %2408 = vmatprep.subr.mxu0 0.0
  %2409 = vmatpush1.msra.mxu0 %v1607
  %2410 = vmatprep.subr.mxu0 0.0
  %2411 = vmatpush1.msra.mxu0 %v1616
  %2412 = vmatprep.subr.mxu0 0.0
  %2413 = vmatpush1.msra.mxu0 %v1625
  %2414 = vmatprep.subr.mxu0 0.0
  %2415 = vmatpush1.msra.mxu0 %v1634
  %2416 = vmatprep.subr.mxu0 0.0
  %2417 = vmatpush1.msra.mxu0 %v1643
  %2418 = vmatprep.subr.mxu0 0.0
  %2419 = vmatpush1.msra.mxu0 %v1652
  %2420 = vmatprep.subr.mxu0 0.0
  %2421 = vmatpush1.msra.mxu0 %v1661
  %2422 = vmatprep.subr.mxu0 0.0
  %2423 = vmatpush1.msra.mxu0 %v1670
  %2424 = vmatprep.subr.mxu0 0.0
  %2425 = vmatpush1.msra.mxu0 %v1679
  %2426 = vmatprep.subr.mxu0 0.0
  %2427 = vmatpush1.msra.mxu0 %v1688
  %2428 = vmatprep.subr.mxu0 0.0
  %2429 = vmatpush1.msra.mxu0 %v1697
  %2430 = vmatprep.subr.mxu0 0.0
  %2431 = vmatpush1.msra.mxu0 %v1706
  %2432 = vmatprep.subr.mxu0 0.0
  %2433 = vmatpush1.msra.mxu0 %v1715
  %2434 = vmatprep.subr.mxu0 0.0
  %2435 = vmatpush1.msra.mxu0 0.0
  %2436 = vmatprep.subr.mxu0 0.0
  %2437 = vmatpush1.msra.mxu0 0.0
  %2438 = vmatprep.subr.mxu0 0.0
  %2439 = vmatpush1.msra.mxu0 0.0
  %2440 = vmatprep.subr.mxu0 0.0
  %2441 = vmatpush1.msra.mxu0 0.0
  %2442 = vmatprep.subr.mxu0 0.0
  %2443 = vmatpush1.msra.mxu0 0.0
  %2444 = vmatprep.subr.mxu0 0.0
  %2445 = vmatpush1.msra.mxu0 0.0
  %2446 = vmatprep.subr.mxu0 0.0
  %2447 = vmatpush1.msra.mxu0 0.0
  %2448 = vmatprep.subr.mxu0 0.0
  %2449 = vmatpush1.msra.mxu0 0.0
  %2450 = vmatprep.subr.mxu0 0.0
  %2451 = vmatpush1.msra.mxu0 0.0
  %2452 = vmatprep.subr.mxu0 0.0
  %2453 = vmatpush1.msra.mxu0 0.0
  %2454 = vmatprep.subr.mxu0 0.0
  %2455 = vmatpush1.msra.mxu0 0.0
  %2456 = vmatprep.subr.mxu0 0.0
  %2457 = vmatpush1.msra.mxu0 0.0
  %2458 = vmatprep.subr.mxu0 0.0
  %2459 = vmatpush1.msra.mxu0 0.0
  %2460 = vmatprep.subr.mxu0 0.0
  %2461 = vmatpush1.msra.mxu0 0.0
  %2462 = vmatprep.subr.mxu0 0.0
  %2463 = vmatpush1.msra.mxu0 0.0
  %2464 = vmatprep.subr.mxu0 0.0
  %2465 = vmatpush1.msra.mxu0 0.0
  %2466 = vmatprep.subr.mxu0 0.0
  %2467 = vmatpush1.msra.mxu0 0.0
  %2468 = vmatprep.subr.mxu0 0.0
  %2469 = vmatpush1.msra.mxu0 0.0
  %2470 = vmatprep.subr.mxu0 0.0
  %2471 = vmatpush1.msra.mxu0 0.0
  %2472 = vmatprep.mubr.f32.mxu0 0.0
  %2473 = vmatmul.mubr.f32.gmra.mrb[0].mxu0 %v1717
  %v2474 = vpop.f32.mrb[0].mxu0
  %v2475 = vadd.f32 0.0, %v2474
  %v2476 = vpop.f32.mrb[0].mxu0
  %2477 = vmatprep.mubr.f32.mxu0 0.0
  %2478 = vmatmul.mubr.f32.gmra.mrb[0].mxu0 %v1720
  %v2479 = vpop.f32.mrb[0].mxu0
  %v2480 = vadd.f32 0.0, %v2479
  %v2481 = vpop.f32.mrb[0].mxu0
  %2482 = vmatprep.mubr.f32.mxu0 0.0
  %2483 = vmatmul.mubr.f32.gmra.mrb[0].mxu0 %v1723
  %v2484 = vpop.f32.mrb[0].mxu0
  %v2485 = vadd.f32 0.0, %v2484
  %v2486 = vpop.f32.mrb[0].mxu0
  %2487 = vmatprep.mubr.f32.mxu0 0.0
  %2488 = vmatmul.mubr.f32.gmra.mrb[0].mxu0 %v1726
  %v2489 = vpop.f32.mrb[0].mxu0
  %v2490 = vadd.f32 0.0, %v2489
  %v2491 = vpop.f32.mrb[0].mxu0
  %2492 = vmatprep.mubr.f32.mxu0 0.0
  %2493 = vmatmul.mubr.f32.gmra.mrb[0].mxu0 %v1729
  %v2494 = vpop.f32.mrb[0].mxu0
  %v2495 = vadd.f32 0.0, %v2494
  %v2496 = vpop.f32.mrb[0].mxu0
  %2497 = vmatprep.mubr.f32.mxu0 0.0
  %2498 = vmatmul.mubr.f32.gmra.mrb[0].mxu0 %v1732
  %v2499 = vpop.f32.mrb[0].mxu0
  %v2500 = vadd.f32 0.0, %v2499
  %v2501 = vpop.f32.mrb[0].mxu0
  %2502 = vmatprep.mubr.f32.mxu0 0.0
  %2503 = vmatmul.mubr.f32.gmra.mrb[0].mxu0 %v1735
  %v2504 = vpop.f32.mrb[0].mxu0
  %v2505 = vadd.f32 0.0, %v2504
  %v2506 = vpop.f32.mrb[0].mxu0
  %2507 = vmatprep.mubr.f32.mxu0 0.0
  %2508 = vmatmul.mubr.f32.gmra.mrb[0].mxu0 %v1738
  %v2509 = vpop.f32.mrb[0].mxu0
  %v2510 = vadd.f32 0.0, %v2509
  %v2511 = vpop.f32.mrb[0].mxu0
  %2512 = vmatprep.mubr.f32.mxu0 0.0
  %2513 = vmatmul.mubr.f32.gmra.mrb[0].mxu0 %v1741
  %v2514 = vpop.f32.mrb[0].mxu0
  %v2515 = vadd.f32 0.0, %v2514
  %v2516 = vpop.f32.mrb[0].mxu0
  %2517 = vmatprep.mubr.f32.mxu0 0.0
  %2518 = vmatmul.mubr.f32.gmra.mrb[0].mxu0 %v1744
  %v2519 = vpop.f32.mrb[0].mxu0
  %v2520 = vadd.f32 0.0, %v2519
  %v2521 = vpop.f32.mrb[0].mxu0
  %2522 = vmatprep.mubr.f32.mxu0 0.0
  %2523 = vmatmul.mubr.f32.gmra.mrb[0].mxu0 %v1747
  %v2524 = vpop.f32.mrb[0].mxu0
  %v2525 = vadd.f32 0.0, %v2524
  %v2526 = vpop.f32.mrb[0].mxu0
  %2527 = vmatprep.mubr.f32.mxu0 0.0
  %2528 = vmatmul.mubr.f32.gmra.mrb[0].mxu0 %v1750
  %v2529 = vpop.f32.mrb[0].mxu0
  %v2530 = vadd.f32 0.0, %v2529
  %v2531 = vpop.f32.mrb[0].mxu0
  %2532 = vmatprep.mubr.f32.mxu0 0.0
  %2533 = vmatmul.mubr.f32.gmra.mrb[0].mxu0 %v1753
  %v2534 = vpop.f32.mrb[0].mxu0
  %v2535 = vadd.f32 0.0, %v2534
  %v2536 = vpop.f32.mrb[0].mxu0
  %2537 = vmatprep.mubr.f32.mxu0 0.0
  %2538 = vmatmul.mubr.f32.gmra.mrb[0].mxu0 %v1756
  %v2539 = vpop.f32.mrb[0].mxu0
  %v2540 = vadd.f32 0.0, %v2539
  %v2541 = vpop.f32.mrb[0].mxu0
  %2542 = vmatprep.mubr.f32.mxu0 0.0
  %2543 = vmatmul.mubr.f32.gmra.mrb[0].mxu0 %v1759
  %v2544 = vpop.f32.mrb[0].mxu0
  %v2545 = vadd.f32 0.0, %v2544
  %v2546 = vpop.f32.mrb[0].mxu0
  %2547 = vmatprep.mubr.f32.mxu0 0.0
  %2548 = vmatmul.mubr.f32.gmra.mrb[0].mxu0 %v1762
  %v2549 = vpop.f32.mrb[0].mxu0
  %v2550 = vadd.f32 0.0, %v2549
  %v2551 = vpop.f32.mrb[0].mxu0
  %2552 = vdwg.mxu0
  %v2553 = vld [vmem:[%s6] sm:$0xff]
  %v2554 = vld [vmem:[%s6 + $0x8] sm:$0x1]
  %v2557 = vlaneseq
  %v2558 = vshrl.u32 %v2557, 7
  %v2559 = vsub.s32 0, %v2558
  %v2560 = vrot.slane %v2553, %v2559
  %v2561 = vlaneseq
  %v2562 = vshrl.u32 %v2561, 7
  %v2563 = vsub.s32 1, %v2562
  %v2564 = vrot.slane %v2553, %v2563
  %v2565 = vlaneseq
  %v2566 = vshrl.u32 %v2565, 7
  %v2567 = vsub.s32 2, %v2566
  %v2568 = vrot.slane %v2553, %v2567
  %v2569 = vlaneseq
  %v2570 = vshrl.u32 %v2569, 7
  %v2571 = vsub.s32 3, %v2570
  %v2572 = vrot.slane %v2553, %v2571
  %v2573 = vlaneseq
  %v2574 = vshrl.u32 %v2573, 7
  %v2575 = vsub.s32 4, %v2574
  %v2576 = vrot.slane %v2553, %v2575
  %v2577 = vlaneseq
  %v2578 = vshrl.u32 %v2577, 7
  %v2579 = vsub.s32 5, %v2578
  %v2580 = vrot.slane %v2553, %v2579
  %v2581 = vlaneseq
  %v2582 = vshrl.u32 %v2581, 7
  %v2583 = vsub.s32 6, %v2582
  %v2584 = vrot.slane %v2553, %v2583
  %v2585 = vlaneseq
  %v2586 = vshrl.u32 %v2585, 7
  %v2587 = vsub.s32 7, %v2586
  %v2588 = vrot.slane %v2553, %v2587
  %v2589 = vlaneseq
  %v2590 = vshrl.u32 %v2589, 7
  %v2591 = vsub.s32 0, %v2590
  %v2592 = vrot.slane %v2554, %v2591
  %v2602 = vmul.f32 %v1831, %v2560
  %v2603 = vmul.f32 %v1833, %v2564
  %v2604 = vmul.f32 %v1992, %v2568
  %v2605 = vmul.f32 %v1994, %v2572
  %v2606 = vmul.f32 %v2153, %v2576
  %v2607 = vmul.f32 %v2155, %v2580
  %v2608 = vmul.f32 %v2314, %v2584
  %v2609 = vmul.f32 %v2316, %v2588
  %v2610 = vmul.f32 %v2475, %v2592
  %v2611 = vmul.f32 %v1837, %v2560
  %v2612 = vmul.f32 %v1839, %v2564
  %v2613 = vmul.f32 %v1998, %v2568
  %v2614 = vmul.f32 %v2000, %v2572
  %v2615 = vmul.f32 %v2159, %v2576
  %v2616 = vmul.f32 %v2161, %v2580
  %v2617 = vmul.f32 %v2320, %v2584
  %v2618 = vmul.f32 %v2322, %v2588
  %v2619 = vmul.f32 %v2480, %v2592
  %v2620 = vmul.f32 %v1843, %v2560
  %v2621 = vmul.f32 %v1845, %v2564
  %v2622 = vmul.f32 %v2004, %v2568
  %v2623 = vmul.f32 %v2006, %v2572
  %v2624 = vmul.f32 %v2165, %v2576
  %v2625 = vmul.f32 %v2167, %v2580
  %v2626 = vmul.f32 %v2326, %v2584
  %v2627 = vmul.f32 %v2328, %v2588
  %v2628 = vmul.f32 %v2485, %v2592
  %v2629 = vmul.f32 %v1849, %v2560
  %v2630 = vmul.f32 %v1851, %v2564
  %v2631 = vmul.f32 %v2010, %v2568
  %v2632 = vmul.f32 %v2012, %v2572
  %v2633 = vmul.f32 %v2171, %v2576
  %v2634 = vmul.f32 %v2173, %v2580
  %v2635 = vmul.f32 %v2332, %v2584
  %v2636 = vmul.f32 %v2334, %v2588
  %v2637 = vmul.f32 %v2490, %v2592
  %v2638 = vmul.f32 %v1855, %v2560
  %v2639 = vmul.f32 %v1857, %v2564
  %v2640 = vmul.f32 %v2016, %v2568
  %v2641 = vmul.f32 %v2018, %v2572
  %v2642 = vmul.f32 %v2177, %v2576
  %v2643 = vmul.f32 %v2179, %v2580
  %v2644 = vmul.f32 %v2338, %v2584
  %v2645 = vmul.f32 %v2340, %v2588
  %v2646 = vmul.f32 %v2495, %v2592
  %v2647 = vmul.f32 %v1861, %v2560
  %v2648 = vmul.f32 %v1863, %v2564
  %v2649 = vmul.f32 %v2022, %v2568
  %v2650 = vmul.f32 %v2024, %v2572
  %v2651 = vmul.f32 %v2183, %v2576
  %v2652 = vmul.f32 %v2185, %v2580
  %v2653 = vmul.f32 %v2344, %v2584
  %v2654 = vmul.f32 %v2346, %v2588
  %v2655 = vmul.f32 %v2500, %v2592
  %v2656 = vmul.f32 %v1867, %v2560
  %v2657 = vmul.f32 %v1869, %v2564
  %v2658 = vmul.f32 %v2028, %v2568
  %v2659 = vmul.f32 %v2030, %v2572
  %v2660 = vmul.f32 %v2189, %v2576
  %v2661 = vmul.f32 %v2191, %v2580
  %v2662 = vmul.f32 %v2350, %v2584
  %v2663 = vmul.f32 %v2352, %v2588
  %v2664 = vmul.f32 %v2505, %v2592
  %v2665 = vmul.f32 %v1873, %v2560
  %v2666 = vmul.f32 %v1875, %v2564
  %v2667 = vmul.f32 %v2034, %v2568
  %v2668 = vmul.f32 %v2036, %v2572
  %v2669 = vmul.f32 %v2195, %v2576
  %v2670 = vmul.f32 %v2197, %v2580
  %v2671 = vmul.f32 %v2356, %v2584
  %v2672 = vmul.f32 %v2358, %v2588
  %v2673 = vmul.f32 %v2510, %v2592
  %v2674 = vmul.f32 %v1879, %v2560
  %v2675 = vmul.f32 %v1881, %v2564
  %v2676 = vmul.f32 %v2040, %v2568
  %v2677 = vmul.f32 %v2042, %v2572
  %v2678 = vmul.f32 %v2201, %v2576
  %v2679 = vmul.f32 %v2203, %v2580
  %v2680 = vmul.f32 %v2362, %v2584
  %v2681 = vmul.f32 %v2364, %v2588
  %v2682 = vmul.f32 %v2515, %v2592
  %v2683 = vmul.f32 %v1885, %v2560
  %v2684 = vmul.f32 %v1887, %v2564
  %v2685 = vmul.f32 %v2046, %v2568
  %v2686 = vmul.f32 %v2048, %v2572
  %v2687 = vmul.f32 %v2207, %v2576
  %v2688 = vmul.f32 %v2209, %v2580
  %v2689 = vmul.f32 %v2368, %v2584
  %v2690 = vmul.f32 %v2370, %v2588
  %v2691 = vmul.f32 %v2520, %v2592
  %v2692 = vmul.f32 %v1891, %v2560
  %v2693 = vmul.f32 %v1893, %v2564
  %v2694 = vmul.f32 %v2052, %v2568
  %v2695 = vmul.f32 %v2054, %v2572
  %v2696 = vmul.f32 %v2213, %v2576
  %v2697 = vmul.f32 %v2215, %v2580
  %v2698 = vmul.f32 %v2374, %v2584
  %v2699 = vmul.f32 %v2376, %v2588
  %v2700 = vmul.f32 %v2525, %v2592
  %v2701 = vmul.f32 %v1897, %v2560
  %v2702 = vmul.f32 %v1899, %v2564
  %v2703 = vmul.f32 %v2058, %v2568
  %v2704 = vmul.f32 %v2060, %v2572
  %v2705 = vmul.f32 %v2219, %v2576
  %v2706 = vmul.f32 %v2221, %v2580
  %v2707 = vmul.f32 %v2380, %v2584
  %v2708 = vmul.f32 %v2382, %v2588
  %v2709 = vmul.f32 %v2530, %v2592
  %v2710 = vmul.f32 %v1903, %v2560
  %v2711 = vmul.f32 %v1905, %v2564
  %v2712 = vmul.f32 %v2064, %v2568
  %v2713 = vmul.f32 %v2066, %v2572
  %v2714 = vmul.f32 %v2225, %v2576
  %v2715 = vmul.f32 %v2227, %v2580
  %v2716 = vmul.f32 %v2386, %v2584
  %v2717 = vmul.f32 %v2388, %v2588
  %v2718 = vmul.f32 %v2535, %v2592
  %v2719 = vmul.f32 %v1909, %v2560
  %v2720 = vmul.f32 %v1911, %v2564
  %v2721 = vmul.f32 %v2070, %v2568
  %v2722 = vmul.f32 %v2072, %v2572
  %v2723 = vmul.f32 %v2231, %v2576
  %v2724 = vmul.f32 %v2233, %v2580
  %v2725 = vmul.f32 %v2392, %v2584
  %v2726 = vmul.f32 %v2394, %v2588
  %v2727 = vmul.f32 %v2540, %v2592
  %v2728 = vmul.f32 %v1915, %v2560
  %v2729 = vmul.f32 %v1917, %v2564
  %v2730 = vmul.f32 %v2076, %v2568
  %v2731 = vmul.f32 %v2078, %v2572
  %v2732 = vmul.f32 %v2237, %v2576
  %v2733 = vmul.f32 %v2239, %v2580
  %v2734 = vmul.f32 %v2398, %v2584
  %v2735 = vmul.f32 %v2400, %v2588
  %v2736 = vmul.f32 %v2545, %v2592
  %v2737 = vmul.f32 %v1921, %v2560
  %v2738 = vmul.f32 %v1923, %v2564
  %v2739 = vmul.f32 %v2082, %v2568
  %v2740 = vmul.f32 %v2084, %v2572
  %v2741 = vmul.f32 %v2243, %v2576
  %v2742 = vmul.f32 %v2245, %v2580
  %v2743 = vmul.f32 %v2404, %v2584
  %v2744 = vmul.f32 %v2406, %v2588
  %v2745 = vmul.f32 %v2550, %v2592
  %v2746 = vadd.f32 %v2602, %v2603
  %v2747 = vadd.f32 %v2746, %v2604
  %v2748 = vadd.f32 %v2747, %v2605
  %v2749 = vadd.f32 %v2748, %v2606
  %v2750 = vadd.f32 %v2749, %v2607
  %v2751 = vadd.f32 %v2750, %v2608
  %v2752 = vadd.f32 %v2751, %v2609
  %v2753 = vadd.f32 %v2752, %v2610
  %2754 = vadd.xlane.f32.xlu0 %v2753
  %v2755 = vpop.xlane.xlu0 %2754
  %v2756 = vadd.f32 %v2611, %v2612
  %v2757 = vadd.f32 %v2756, %v2613
  %v2758 = vadd.f32 %v2757, %v2614
  %v2759 = vadd.f32 %v2758, %v2615
  %v2760 = vadd.f32 %v2759, %v2616
  %v2761 = vadd.f32 %v2760, %v2617
  %v2762 = vadd.f32 %v2761, %v2618
  %v2763 = vadd.f32 %v2762, %v2619
  %2764 = vadd.xlane.f32.xlu0 %v2763
  %v2765 = vpop.xlane.xlu0 %2764
  %v2766 = vadd.f32 %v2620, %v2621
  %v2767 = vadd.f32 %v2766, %v2622
  %v2768 = vadd.f32 %v2767, %v2623
  %v2769 = vadd.f32 %v2768, %v2624
  %v2770 = vadd.f32 %v2769, %v2625
  %v2771 = vadd.f32 %v2770, %v2626
  %v2772 = vadd.f32 %v2771, %v2627
  %v2773 = vadd.f32 %v2772, %v2628
  %2774 = vadd.xlane.f32.xlu0 %v2773
  %v2775 = vpop.xlane.xlu0 %2774
  %v2776 = vadd.f32 %v2629, %v2630
  %v2777 = vadd.f32 %v2776, %v2631
  %v2778 = vadd.f32 %v2777, %v2632
  %v2779 = vadd.f32 %v2778, %v2633
  %v2780 = vadd.f32 %v2779, %v2634
  %v2781 = vadd.f32 %v2780, %v2635
  %v2782 = vadd.f32 %v2781, %v2636
  %v2783 = vadd.f32 %v2782, %v2637
  %2784 = vadd.xlane.f32.xlu0 %v2783
  %v2785 = vpop.xlane.xlu0 %2784
  %v2786 = vadd.f32 %v2638, %v2639
  %v2787 = vadd.f32 %v2786, %v2640
  %v2788 = vadd.f32 %v2787, %v2641
  %v2789 = vadd.f32 %v2788, %v2642
  %v2790 = vadd.f32 %v2789, %v2643
  %v2791 = vadd.f32 %v2790, %v2644
  %v2792 = vadd.f32 %v2791, %v2645
  %v2793 = vadd.f32 %v2792, %v2646
  %2794 = vadd.xlane.f32.xlu0 %v2793
  %v2795 = vpop.xlane.xlu0 %2794
  %v2796 = vadd.f32 %v2647, %v2648
  %v2797 = vadd.f32 %v2796, %v2649
  %v2798 = vadd.f32 %v2797, %v2650
  %v2799 = vadd.f32 %v2798, %v2651
  %v2800 = vadd.f32 %v2799, %v2652
  %v2801 = vadd.f32 %v2800, %v2653
  %v2802 = vadd.f32 %v2801, %v2654
  %v2803 = vadd.f32 %v2802, %v2655
  %2804 = vadd.xlane.f32.xlu0 %v2803
  %v2805 = vpop.xlane.xlu0 %2804
  %v2806 = vadd.f32 %v2656, %v2657
  %v2807 = vadd.f32 %v2806, %v2658
  %v2808 = vadd.f32 %v2807, %v2659
  %v2809 = vadd.f32 %v2808, %v2660
  %v2810 = vadd.f32 %v2809, %v2661
  %v2811 = vadd.f32 %v2810, %v2662
  %v2812 = vadd.f32 %v2811, %v2663
  %v2813 = vadd.f32 %v2812, %v2664
  %2814 = vadd.xlane.f32.xlu0 %v2813
  %v2815 = vpop.xlane.xlu0 %2814
  %v2816 = vadd.f32 %v2665, %v2666
  %v2817 = vadd.f32 %v2816, %v2667
  %v2818 = vadd.f32 %v2817, %v2668
  %v2819 = vadd.f32 %v2818, %v2669
  %v2820 = vadd.f32 %v2819, %v2670
  %v2821 = vadd.f32 %v2820, %v2671
  %v2822 = vadd.f32 %v2821, %v2672
  %v2823 = vadd.f32 %v2822, %v2673
  %2824 = vadd.xlane.f32.xlu0 %v2823
  %v2825 = vpop.xlane.xlu0 %2824
  %v2826 = vadd.f32 %v2674, %v2675
  %v2827 = vadd.f32 %v2826, %v2676
  %v2828 = vadd.f32 %v2827, %v2677
  %v2829 = vadd.f32 %v2828, %v2678
  %v2830 = vadd.f32 %v2829, %v2679
  %v2831 = vadd.f32 %v2830, %v2680
  %v2832 = vadd.f32 %v2831, %v2681
  %v2833 = vadd.f32 %v2832, %v2682
  %2834 = vadd.xlane.f32.xlu0 %v2833
  %v2835 = vpop.xlane.xlu0 %2834
  %v2836 = vadd.f32 %v2683, %v2684
  %v2837 = vadd.f32 %v2836, %v2685
  %v2838 = vadd.f32 %v2837, %v2686
  %v2839 = vadd.f32 %v2838, %v2687
  %v2840 = vadd.f32 %v2839, %v2688
  %v2841 = vadd.f32 %v2840, %v2689
  %v2842 = vadd.f32 %v2841, %v2690
  %v2843 = vadd.f32 %v2842, %v2691
  %2844 = vadd.xlane.f32.xlu0 %v2843
  %v2845 = vpop.xlane.xlu0 %2844
  %v2846 = vadd.f32 %v2692, %v2693
  %v2847 = vadd.f32 %v2846, %v2694
  %v2848 = vadd.f32 %v2847, %v2695
  %v2849 = vadd.f32 %v2848, %v2696
  %v2850 = vadd.f32 %v2849, %v2697
  %v2851 = vadd.f32 %v2850, %v2698
  %v2852 = vadd.f32 %v2851, %v2699
  %v2853 = vadd.f32 %v2852, %v2700
  %2854 = vadd.xlane.f32.xlu0 %v2853
  %v2855 = vpop.xlane.xlu0 %2854
  %v2856 = vadd.f32 %v2701, %v2702
  %v2857 = vadd.f32 %v2856, %v2703
  %v2858 = vadd.f32 %v2857, %v2704
  %v2859 = vadd.f32 %v2858, %v2705
  %v2860 = vadd.f32 %v2859, %v2706
  %v2861 = vadd.f32 %v2860, %v2707
  %v2862 = vadd.f32 %v2861, %v2708
  %v2863 = vadd.f32 %v2862, %v2709
  %2864 = vadd.xlane.f32.xlu0 %v2863
  %v2865 = vpop.xlane.xlu0 %2864
  %v2866 = vadd.f32 %v2710, %v2711
  %v2867 = vadd.f32 %v2866, %v2712
  %v2868 = vadd.f32 %v2867, %v2713
  %v2869 = vadd.f32 %v2868, %v2714
  %v2870 = vadd.f32 %v2869, %v2715
  %v2871 = vadd.f32 %v2870, %v2716
  %v2872 = vadd.f32 %v2871, %v2717
  %v2873 = vadd.f32 %v2872, %v2718
  %2874 = vadd.xlane.f32.xlu0 %v2873
  %v2875 = vpop.xlane.xlu0 %2874
  %v2876 = vadd.f32 %v2719, %v2720
  %v2877 = vadd.f32 %v2876, %v2721
  %v2878 = vadd.f32 %v2877, %v2722
  %v2879 = vadd.f32 %v2878, %v2723
  %v2880 = vadd.f32 %v2879, %v2724
  %v2881 = vadd.f32 %v2880, %v2725
  %v2882 = vadd.f32 %v2881, %v2726
  %v2883 = vadd.f32 %v2882, %v2727
  %2884 = vadd.xlane.f32.xlu0 %v2883
  %v2885 = vpop.xlane.xlu0 %2884
  %v2886 = vadd.f32 %v2728, %v2729
  %v2887 = vadd.f32 %v2886, %v2730
  %v2888 = vadd.f32 %v2887, %v2731
  %v2889 = vadd.f32 %v2888, %v2732
  %v2890 = vadd.f32 %v2889, %v2733
  %v2891 = vadd.f32 %v2890, %v2734
  %v2892 = vadd.f32 %v2891, %v2735
  %v2893 = vadd.f32 %v2892, %v2736
  %2894 = vadd.xlane.f32.xlu0 %v2893
  %v2895 = vpop.xlane.xlu0 %2894
  %v2896 = vadd.f32 %v2737, %v2738
  %v2897 = vadd.f32 %v2896, %v2739
  %v2898 = vadd.f32 %v2897, %v2740
  %v2899 = vadd.f32 %v2898, %v2741
  %v2900 = vadd.f32 %v2899, %v2742
  %v2901 = vadd.f32 %v2900, %v2743
  %v2902 = vadd.f32 %v2901, %v2744
  %v2903 = vadd.f32 %v2902, %v2745
  %2904 = vadd.xlane.f32.xlu0 %v2903
  %v2905 = vpop.xlane.xlu0 %2904
  %v2906 = vmul.f32 %v2755, 0.001953125
  %v2907 = vmul.f32 %v2765, 0.001953125
  %v2908 = vmul.f32 %v2775, 0.001953125
  %v2909 = vmul.f32 %v2785, 0.001953125
  %v2910 = vmul.f32 %v2795, 0.001953125
  %v2911 = vmul.f32 %v2805, 0.001953125
  %v2912 = vmul.f32 %v2815, 0.001953125
  %v2913 = vmul.f32 %v2825, 0.001953125
  %v2914 = vmul.f32 %v2835, 0.001953125
  %v2915 = vmul.f32 %v2845, 0.001953125
  %v2916 = vmul.f32 %v2855, 0.001953125
  %v2917 = vmul.f32 %v2865, 0.001953125
  %v2918 = vmul.f32 %v2875, 0.001953125
  %v2919 = vmul.f32 %v2885, 0.001953125
  %v2920 = vmul.f32 %v2895, 0.001953125
  %v2921 = vmul.f32 %v2905, 0.001953125
  %v2922 = vmul.f32 %v2602, %v1831
  %v2923 = vmul.f32 %v2603, %v1833
  %v2924 = vmul.f32 %v2604, %v1992
  %v2925 = vmul.f32 %v2605, %v1994
  %v2926 = vmul.f32 %v2606, %v2153
  %v2927 = vmul.f32 %v2607, %v2155
  %v2928 = vmul.f32 %v2608, %v2314
  %v2929 = vmul.f32 %v2609, %v2316
  %v2930 = vmul.f32 %v2610, %v2475
  %v2931 = vmul.f32 %v2611, %v1837
  %v2932 = vmul.f32 %v2612, %v1839
  %v2933 = vmul.f32 %v2613, %v1998
  %v2934 = vmul.f32 %v2614, %v2000
  %v2935 = vmul.f32 %v2615, %v2159
  %v2936 = vmul.f32 %v2616, %v2161
  %v2937 = vmul.f32 %v2617, %v2320
  %v2938 = vmul.f32 %v2618, %v2322
  %v2939 = vmul.f32 %v2619, %v2480
  %v2940 = vmul.f32 %v2620, %v1843
  %v2941 = vmul.f32 %v2621, %v1845
  %v2942 = vmul.f32 %v2622, %v2004
  %v2943 = vmul.f32 %v2623, %v2006
  %v2944 = vmul.f32 %v2624, %v2165
  %v2945 = vmul.f32 %v2625, %v2167
  %v2946 = vmul.f32 %v2626, %v2326
  %v2947 = vmul.f32 %v2627, %v2328
  %v2948 = vmul.f32 %v2628, %v2485
  %v2949 = vmul.f32 %v2629, %v1849
  %v2950 = vmul.f32 %v2630, %v1851
  %v2951 = vmul.f32 %v2631, %v2010
  %v2952 = vmul.f32 %v2632, %v2012
  %v2953 = vmul.f32 %v2633, %v2171
  %v2954 = vmul.f32 %v2634, %v2173
  %v2955 = vmul.f32 %v2635, %v2332
  %v2956 = vmul.f32 %v2636, %v2334
  %v2957 = vmul.f32 %v2637, %v2490
  %v2958 = vmul.f32 %v2638, %v1855
  %v2959 = vmul.f32 %v2639, %v1857
  %v2960 = vmul.f32 %v2640, %v2016
  %v2961 = vmul.f32 %v2641, %v2018
  %v2962 = vmul.f32 %v2642, %v2177
  %v2963 = vmul.f32 %v2643, %v2179
  %v2964 = vmul.f32 %v2644, %v2338
  %v2965 = vmul.f32 %v2645, %v2340
  %v2966 = vmul.f32 %v2646, %v2495
  %v2967 = vmul.f32 %v2647, %v1861
  %v2968 = vmul.f32 %v2648, %v1863
  %v2969 = vmul.f32 %v2649, %v2022
  %v2970 = vmul.f32 %v2650, %v2024
  %v2971 = vmul.f32 %v2651, %v2183
  %v2972 = vmul.f32 %v2652, %v2185
  %v2973 = vmul.f32 %v2653, %v2344
  %v2974 = vmul.f32 %v2654, %v2346
  %v2975 = vmul.f32 %v2655, %v2500
  %v2976 = vmul.f32 %v2656, %v1867
  %v2977 = vmul.f32 %v2657, %v1869
  %v2978 = vmul.f32 %v2658, %v2028
  %v2979 = vmul.f32 %v2659, %v2030
  %v2980 = vmul.f32 %v2660, %v2189
  %v2981 = vmul.f32 %v2661, %v2191
  %v2982 = vmul.f32 %v2662, %v2350
  %v2983 = vmul.f32 %v2663, %v2352
  %v2984 = vmul.f32 %v2664, %v2505
  %v2985 = vmul.f32 %v2665, %v1873
  %v2986 = vmul.f32 %v2666, %v1875
  %v2987 = vmul.f32 %v2667, %v2034
  %v2988 = vmul.f32 %v2668, %v2036
  %v2989 = vmul.f32 %v2669, %v2195
  %v2990 = vmul.f32 %v2670, %v2197
  %v2991 = vmul.f32 %v2671, %v2356
  %v2992 = vmul.f32 %v2672, %v2358
  %v2993 = vmul.f32 %v2673, %v2510
  %v2994 = vmul.f32 %v2674, %v1879
  %v2995 = vmul.f32 %v2675, %v1881
  %v2996 = vmul.f32 %v2676, %v2040
  %v2997 = vmul.f32 %v2677, %v2042
  %v2998 = vmul.f32 %v2678, %v2201
  %v2999 = vmul.f32 %v2679, %v2203
  %v3000 = vmul.f32 %v2680, %v2362
  %v3001 = vmul.f32 %v2681, %v2364
  %v3002 = vmul.f32 %v2682, %v2515
  %v3003 = vmul.f32 %v2683, %v1885
  %v3004 = vmul.f32 %v2684, %v1887
  %v3005 = vmul.f32 %v2685, %v2046
  %v3006 = vmul.f32 %v2686, %v2048
  %v3007 = vmul.f32 %v2687, %v2207
  %v3008 = vmul.f32 %v2688, %v2209
  %v3009 = vmul.f32 %v2689, %v2368
  %v3010 = vmul.f32 %v2690, %v2370
  %v3011 = vmul.f32 %v2691, %v2520
  %v3012 = vmul.f32 %v2692, %v1891
  %v3013 = vmul.f32 %v2693, %v1893
  %v3014 = vmul.f32 %v2694, %v2052
  %v3015 = vmul.f32 %v2695, %v2054
  %v3016 = vmul.f32 %v2696, %v2213
  %v3017 = vmul.f32 %v2697, %v2215
  %v3018 = vmul.f32 %v2698, %v2374
  %v3019 = vmul.f32 %v2699, %v2376
  %v3020 = vmul.f32 %v2700, %v2525
  %v3021 = vmul.f32 %v2701, %v1897
  %v3022 = vmul.f32 %v2702, %v1899
  %v3023 = vmul.f32 %v2703, %v2058
  %v3024 = vmul.f32 %v2704, %v2060
  %v3025 = vmul.f32 %v2705, %v2219
  %v3026 = vmul.f32 %v2706, %v2221
  %v3027 = vmul.f32 %v2707, %v2380
  %v3028 = vmul.f32 %v2708, %v2382
  %v3029 = vmul.f32 %v2709, %v2530
  %v3030 = vmul.f32 %v2710, %v1903
  %v3031 = vmul.f32 %v2711, %v1905
  %v3032 = vmul.f32 %v2712, %v2064
  %v3033 = vmul.f32 %v2713, %v2066
  %v3034 = vmul.f32 %v2714, %v2225
  %v3035 = vmul.f32 %v2715, %v2227
  %v3036 = vmul.f32 %v2716, %v2386
  %v3037 = vmul.f32 %v2717, %v2388
  %v3038 = vmul.f32 %v2718, %v2535
  %v3039 = vmul.f32 %v2719, %v1909
  %v3040 = vmul.f32 %v2720, %v1911
  %v3041 = vmul.f32 %v2721, %v2070
  %v3042 = vmul.f32 %v2722, %v2072
  %v3043 = vmul.f32 %v2723, %v2231
  %v3044 = vmul.f32 %v2724, %v2233
  %v3045 = vmul.f32 %v2725, %v2392
  %v3046 = vmul.f32 %v2726, %v2394
  %v3047 = vmul.f32 %v2727, %v2540
  %v3048 = vmul.f32 %v2728, %v1915
  %v3049 = vmul.f32 %v2729, %v1917
  %v3050 = vmul.f32 %v2730, %v2076
  %v3051 = vmul.f32 %v2731, %v2078
  %v3052 = vmul.f32 %v2732, %v2237
  %v3053 = vmul.f32 %v2733, %v2239
  %v3054 = vmul.f32 %v2734, %v2398
  %v3055 = vmul.f32 %v2735, %v2400
  %v3056 = vmul.f32 %v2736, %v2545
  %v3057 = vmul.f32 %v2737, %v1921
  %v3058 = vmul.f32 %v2738, %v1923
  %v3059 = vmul.f32 %v2739, %v2082
  %v3060 = vmul.f32 %v2740, %v2084
  %v3061 = vmul.f32 %v2741, %v2243
  %v3062 = vmul.f32 %v2742, %v2245
  %v3063 = vmul.f32 %v2743, %v2404
  %v3064 = vmul.f32 %v2744, %v2406
  %v3065 = vmul.f32 %v2745, %v2550
  %v3066 = vadd.f32 %v2922, %v2923
  %v3067 = vadd.f32 %v3066, %v2924
  %v3068 = vadd.f32 %v3067, %v2925
  %v3069 = vadd.f32 %v3068, %v2926
  %v3070 = vadd.f32 %v3069, %v2927
  %v3071 = vadd.f32 %v3070, %v2928
  %v3072 = vadd.f32 %v3071, %v2929
  %v3073 = vadd.f32 %v3072, %v2930
  %3074 = vadd.xlane.f32.xlu0 %v3073
  %v3075 = vpop.xlane.xlu0 %3074
  %v3076 = vadd.f32 %v2931, %v2932
  %v3077 = vadd.f32 %v3076, %v2933
  %v3078 = vadd.f32 %v3077, %v2934
  %v3079 = vadd.f32 %v3078, %v2935
  %v3080 = vadd.f32 %v3079, %v2936
  %v3081 = vadd.f32 %v3080, %v2937
  %v3082 = vadd.f32 %v3081, %v2938
  %v3083 = vadd.f32 %v3082, %v2939
  %3084 = vadd.xlane.f32.xlu0 %v3083
  %v3085 = vpop.xlane.xlu0 %3084
  %v3086 = vadd.f32 %v2940, %v2941
  %v3087 = vadd.f32 %v3086, %v2942
  %v3088 = vadd.f32 %v3087, %v2943
  %v3089 = vadd.f32 %v3088, %v2944
  %v3090 = vadd.f32 %v3089, %v2945
  %v3091 = vadd.f32 %v3090, %v2946
  %v3092 = vadd.f32 %v3091, %v2947
  %v3093 = vadd.f32 %v3092, %v2948
  %3094 = vadd.xlane.f32.xlu0 %v3093
  %v3095 = vpop.xlane.xlu0 %3094
  %v3096 = vadd.f32 %v2949, %v2950
  %v3097 = vadd.f32 %v3096, %v2951
  %v3098 = vadd.f32 %v3097, %v2952
  %v3099 = vadd.f32 %v3098, %v2953
  %v3100 = vadd.f32 %v3099, %v2954
  %v3101 = vadd.f32 %v3100, %v2955
  %v3102 = vadd.f32 %v3101, %v2956
  %v3103 = vadd.f32 %v3102, %v2957
  %3104 = vadd.xlane.f32.xlu0 %v3103
  %v3105 = vpop.xlane.xlu0 %3104
  %v3106 = vadd.f32 %v2958, %v2959
  %v3107 = vadd.f32 %v3106, %v2960
  %v3108 = vadd.f32 %v3107, %v2961
  %v3109 = vadd.f32 %v3108, %v2962
  %v3110 = vadd.f32 %v3109, %v2963
  %v3111 = vadd.f32 %v3110, %v2964
  %v3112 = vadd.f32 %v3111, %v2965
  %v3113 = vadd.f32 %v3112, %v2966
  %3114 = vadd.xlane.f32.xlu0 %v3113
  %v3115 = vpop.xlane.xlu0 %3114
  %v3116 = vadd.f32 %v2967, %v2968
  %v3117 = vadd.f32 %v3116, %v2969
  %v3118 = vadd.f32 %v3117, %v2970
  %v3119 = vadd.f32 %v3118, %v2971
  %v3120 = vadd.f32 %v3119, %v2972
  %v3121 = vadd.f32 %v3120, %v2973
  %v3122 = vadd.f32 %v3121, %v2974
  %v3123 = vadd.f32 %v3122, %v2975
  %3124 = vadd.xlane.f32.xlu0 %v3123
  %v3125 = vpop.xlane.xlu0 %3124
  %v3126 = vadd.f32 %v2976, %v2977
  %v3127 = vadd.f32 %v3126, %v2978
  %v3128 = vadd.f32 %v3127, %v2979
  %v3129 = vadd.f32 %v3128, %v2980
  %v3130 = vadd.f32 %v3129, %v2981
  %v3131 = vadd.f32 %v3130, %v2982
  %v3132 = vadd.f32 %v3131, %v2983
  %v3133 = vadd.f32 %v3132, %v2984
  %3134 = vadd.xlane.f32.xlu0 %v3133
  %v3135 = vpop.xlane.xlu0 %3134
  %v3136 = vadd.f32 %v2985, %v2986
  %v3137 = vadd.f32 %v3136, %v2987
  %v3138 = vadd.f32 %v3137, %v2988
  %v3139 = vadd.f32 %v3138, %v2989
  %v3140 = vadd.f32 %v3139, %v2990
  %v3141 = vadd.f32 %v3140, %v2991
  %v3142 = vadd.f32 %v3141, %v2992
  %v3143 = vadd.f32 %v3142, %v2993
  %3144 = vadd.xlane.f32.xlu0 %v3143
  %v3145 = vpop.xlane.xlu0 %3144
  %v3146 = vadd.f32 %v2994, %v2995
  %v3147 = vadd.f32 %v3146, %v2996
  %v3148 = vadd.f32 %v3147, %v2997
  %v3149 = vadd.f32 %v3148, %v2998
  %v3150 = vadd.f32 %v3149, %v2999
  %v3151 = vadd.f32 %v3150, %v3000
  %v3152 = vadd.f32 %v3151, %v3001
  %v3153 = vadd.f32 %v3152, %v3002
  %3154 = vadd.xlane.f32.xlu0 %v3153
  %v3155 = vpop.xlane.xlu0 %3154
  %v3156 = vadd.f32 %v3003, %v3004
  %v3157 = vadd.f32 %v3156, %v3005
  %v3158 = vadd.f32 %v3157, %v3006
  %v3159 = vadd.f32 %v3158, %v3007
  %v3160 = vadd.f32 %v3159, %v3008
  %v3161 = vadd.f32 %v3160, %v3009
  %v3162 = vadd.f32 %v3161, %v3010
  %v3163 = vadd.f32 %v3162, %v3011
  %3164 = vadd.xlane.f32.xlu0 %v3163
  %v3165 = vpop.xlane.xlu0 %3164
  %v3166 = vadd.f32 %v3012, %v3013
  %v3167 = vadd.f32 %v3166, %v3014
  %v3168 = vadd.f32 %v3167, %v3015
  %v3169 = vadd.f32 %v3168, %v3016
  %v3170 = vadd.f32 %v3169, %v3017
  %v3171 = vadd.f32 %v3170, %v3018
  %v3172 = vadd.f32 %v3171, %v3019
  %v3173 = vadd.f32 %v3172, %v3020
  %3174 = vadd.xlane.f32.xlu0 %v3173
  %v3175 = vpop.xlane.xlu0 %3174
  %v3176 = vadd.f32 %v3021, %v3022
  %v3177 = vadd.f32 %v3176, %v3023
  %v3178 = vadd.f32 %v3177, %v3024
  %v3179 = vadd.f32 %v3178, %v3025
  %v3180 = vadd.f32 %v3179, %v3026
  %v3181 = vadd.f32 %v3180, %v3027
  %v3182 = vadd.f32 %v3181, %v3028
  %v3183 = vadd.f32 %v3182, %v3029
  %3184 = vadd.xlane.f32.xlu0 %v3183
  %v3185 = vpop.xlane.xlu0 %3184
  %v3186 = vadd.f32 %v3030, %v3031
  %v3187 = vadd.f32 %v3186, %v3032
  %v3188 = vadd.f32 %v3187, %v3033
  %v3189 = vadd.f32 %v3188, %v3034
  %v3190 = vadd.f32 %v3189, %v3035
  %v3191 = vadd.f32 %v3190, %v3036
  %v3192 = vadd.f32 %v3191, %v3037
  %v3193 = vadd.f32 %v3192, %v3038
  %3194 = vadd.xlane.f32.xlu0 %v3193
  %v3195 = vpop.xlane.xlu0 %3194
  %v3196 = vadd.f32 %v3039, %v3040
  %v3197 = vadd.f32 %v3196, %v3041
  %v3198 = vadd.f32 %v3197, %v3042
  %v3199 = vadd.f32 %v3198, %v3043
  %v3200 = vadd.f32 %v3199, %v3044
  %v3201 = vadd.f32 %v3200, %v3045
  %v3202 = vadd.f32 %v3201, %v3046
  %v3203 = vadd.f32 %v3202, %v3047
  %3204 = vadd.xlane.f32.xlu0 %v3203
  %v3205 = vpop.xlane.xlu0 %3204
  %v3206 = vadd.f32 %v3048, %v3049
  %v3207 = vadd.f32 %v3206, %v3050
  %v3208 = vadd.f32 %v3207, %v3051
  %v3209 = vadd.f32 %v3208, %v3052
  %v3210 = vadd.f32 %v3209, %v3053
  %v3211 = vadd.f32 %v3210, %v3054
  %v3212 = vadd.f32 %v3211, %v3055
  %v3213 = vadd.f32 %v3212, %v3056
  %3214 = vadd.xlane.f32.xlu0 %v3213
  %v3215 = vpop.xlane.xlu0 %3214
  %v3216 = vadd.f32 %v3057, %v3058
  %v3217 = vadd.f32 %v3216, %v3059
  %v3218 = vadd.f32 %v3217, %v3060
  %v3219 = vadd.f32 %v3218, %v3061
  %v3220 = vadd.f32 %v3219, %v3062
  %v3221 = vadd.f32 %v3220, %v3063
  %v3222 = vadd.f32 %v3221, %v3064
  %v3223 = vadd.f32 %v3222, %v3065
  %3224 = vadd.xlane.f32.xlu0 %v3223
  %v3225 = vpop.xlane.xlu0 %3224
  %v3226 = vmul.f32 %v3075, 0.001953125
  %v3227 = vmul.f32 %v3085, 0.001953125
  %v3228 = vmul.f32 %v3095, 0.001953125
  %v3229 = vmul.f32 %v3105, 0.001953125
  %v3230 = vmul.f32 %v3115, 0.001953125
  %v3231 = vmul.f32 %v3125, 0.001953125
  %v3232 = vmul.f32 %v3135, 0.001953125
  %v3233 = vmul.f32 %v3145, 0.001953125
  %v3234 = vmul.f32 %v3155, 0.001953125
  %v3235 = vmul.f32 %v3165, 0.001953125
  %v3236 = vmul.f32 %v3175, 0.001953125
  %v3237 = vmul.f32 %v3185, 0.001953125
  %v3238 = vmul.f32 %v3195, 0.001953125
  %v3239 = vmul.f32 %v3205, 0.001953125
  %v3240 = vmul.f32 %v3215, 0.001953125
  %v3241 = vmul.f32 %v3225, 0.001953125
  %v3242 = vmul.f32 %v2906, %v2906
  %v3243 = vmul.f32 %v2907, %v2907
  %v3244 = vmul.f32 %v2908, %v2908
  %v3245 = vmul.f32 %v2909, %v2909
  %v3246 = vmul.f32 %v2910, %v2910
  %v3247 = vmul.f32 %v2911, %v2911
  %v3248 = vmul.f32 %v2912, %v2912
  %v3249 = vmul.f32 %v2913, %v2913
  %v3250 = vmul.f32 %v2914, %v2914
  %v3251 = vmul.f32 %v2915, %v2915
  %v3252 = vmul.f32 %v2916, %v2916
  %v3253 = vmul.f32 %v2917, %v2917
  %v3254 = vmul.f32 %v2918, %v2918
  %v3255 = vmul.f32 %v2919, %v2919
  %v3256 = vmul.f32 %v2920, %v2920
  %v3257 = vmul.f32 %v2921, %v2921
  %v3258 = vsub.f32 %v3226, %v3242
  %v3259 = vsub.f32 %v3227, %v3243
  %v3260 = vsub.f32 %v3228, %v3244
  %v3261 = vsub.f32 %v3229, %v3245
  %v3262 = vsub.f32 %v3230, %v3246
  %v3263 = vsub.f32 %v3231, %v3247
  %v3264 = vsub.f32 %v3232, %v3248
  %v3265 = vsub.f32 %v3233, %v3249
  %v3266 = vsub.f32 %v3234, %v3250
  %v3267 = vsub.f32 %v3235, %v3251
  %v3268 = vsub.f32 %v3236, %v3252
  %v3269 = vsub.f32 %v3237, %v3253
  %v3270 = vsub.f32 %v3238, %v3254
  %v3271 = vsub.f32 %v3239, %v3255
  %v3272 = vsub.f32 %v3240, %v3256
  %v3273 = vsub.f32 %v3241, %v3257
  %v3274 = vmax.f32 %v3258, 0.0
  %v3275 = vmax.f32 %v3259, 0.0
  %v3276 = vmax.f32 %v3260, 0.0
  %v3277 = vmax.f32 %v3261, 0.0
  %v3278 = vmax.f32 %v3262, 0.0
  %v3279 = vmax.f32 %v3263, 0.0
  %v3280 = vmax.f32 %v3264, 0.0
  %v3281 = vmax.f32 %v3265, 0.0
  %v3282 = vmax.f32 %v3266, 0.0
  %v3283 = vmax.f32 %v3267, 0.0
  %v3284 = vmax.f32 %v3268, 0.0
  %v3285 = vmax.f32 %v3269, 0.0
  %v3286 = vmax.f32 %v3270, 0.0
  %v3287 = vmax.f32 %v3271, 0.0
  %v3288 = vmax.f32 %v3272, 0.0
  %v3289 = vmax.f32 %v3273, 0.0
  %v3290 = vld [vmem:[%s2] sm:$0xff]
  %v3291 = vld [vmem:[%s2 + $0x8] sm:$0xff]
  %v3292 = vld [vmem:[%s2 + $0x10] sm:$0xff]
  %v3293 = vld [vmem:[%s2 + $0x18] sm:$0xff]
  %v3294 = vld [vmem:[%s2 + $0x20] sm:$0xff]
  %v3295 = vld [vmem:[%s2 + $0x28] sm:$0xff]
  %v3296 = vld [vmem:[%s2 + $0x30] sm:$0xff]
  %v3297 = vld [vmem:[%s2 + $0x38] sm:$0xff]
  %v3298 = vld [vmem:[%s2 + $0x40] sm:$0xff]
  %v3299 = vld [vmem:[%s2 + $0x48] sm:$0xff]
  %v3300 = vld [vmem:[%s2 + $0x50] sm:$0xff]
  %v3301 = vld [vmem:[%s2 + $0x58] sm:$0xff]
  %v3302 = vld [vmem:[%s2 + $0x60] sm:$0xff]
  %v3303 = vld [vmem:[%s2 + $0x68] sm:$0xff]
  %v3304 = vld [vmem:[%s2 + $0x70] sm:$0xff]
  %v3305 = vld [vmem:[%s2 + $0x78] sm:$0xff]
  %v3306 = vadd.f32 %v3274, 1e-05
  %v3307 = vadd.f32 %v3275, 1e-05
  %v3308 = vadd.f32 %v3276, 1e-05
  %v3309 = vadd.f32 %v3277, 1e-05
  %v3310 = vadd.f32 %v3278, 1e-05
  %v3311 = vadd.f32 %v3279, 1e-05
  %v3312 = vadd.f32 %v3280, 1e-05
  %v3313 = vadd.f32 %v3281, 1e-05
  %v3314 = vadd.f32 %v3282, 1e-05
  %v3315 = vadd.f32 %v3283, 1e-05
  %v3316 = vadd.f32 %v3284, 1e-05
  %v3317 = vadd.f32 %v3285, 1e-05
  %v3318 = vadd.f32 %v3286, 1e-05
  %v3319 = vadd.f32 %v3287, 1e-05
  %v3320 = vadd.f32 %v3288, 1e-05
  %v3321 = vadd.f32 %v3289, 1e-05
  %v3322 = vrsqrt.pop %v3306
  %v3323 = vrsqrt.pop %v3307
  %v3324 = vrsqrt.pop %v3308
  %v3325 = vrsqrt.pop %v3309
  %v3326 = vrsqrt.pop %v3310
  %v3327 = vrsqrt.pop %v3311
  %v3328 = vrsqrt.pop %v3312
  %v3329 = vrsqrt.pop %v3313
  %v3330 = vrsqrt.pop %v3314
  %v3331 = vrsqrt.pop %v3315
  %v3332 = vrsqrt.pop %v3316
  %v3333 = vrsqrt.pop %v3317
  %v3334 = vrsqrt.pop %v3318
  %v3335 = vrsqrt.pop %v3319
  %v3336 = vrsqrt.pop %v3320
  %v3337 = vrsqrt.pop %v3321
  %v3338 = vmul.f32 %v3290, %v3322
  %v3339 = vmul.f32 %v3291, %v3323
  %v3340 = vmul.f32 %v3292, %v3324
  %v3341 = vmul.f32 %v3293, %v3325
  %v3342 = vmul.f32 %v3294, %v3326
  %v3343 = vmul.f32 %v3295, %v3327
  %v3344 = vmul.f32 %v3296, %v3328
  %v3345 = vmul.f32 %v3297, %v3329
  %v3346 = vmul.f32 %v3298, %v3330
  %v3347 = vmul.f32 %v3299, %v3331
  %v3348 = vmul.f32 %v3300, %v3332
  %v3349 = vmul.f32 %v3301, %v3333
  %v3350 = vmul.f32 %v3302, %v3334
  %v3351 = vmul.f32 %v3303, %v3335
  %v3352 = vmul.f32 %v3304, %v3336
  %v3353 = vmul.f32 %v3305, %v3337
  %v3354 = vld [vmem:[%s3] sm:$0xff]
  %v3355 = vld [vmem:[%s3 + $0x8] sm:$0xff]
  %v3356 = vld [vmem:[%s3 + $0x10] sm:$0xff]
  %v3357 = vld [vmem:[%s3 + $0x18] sm:$0xff]
  %v3358 = vld [vmem:[%s3 + $0x20] sm:$0xff]
  %v3359 = vld [vmem:[%s3 + $0x28] sm:$0xff]
  %v3360 = vld [vmem:[%s3 + $0x30] sm:$0xff]
  %v3361 = vld [vmem:[%s3 + $0x38] sm:$0xff]
  %v3362 = vld [vmem:[%s3 + $0x40] sm:$0xff]
  %v3363 = vld [vmem:[%s3 + $0x48] sm:$0xff]
  %v3364 = vld [vmem:[%s3 + $0x50] sm:$0xff]
  %v3365 = vld [vmem:[%s3 + $0x58] sm:$0xff]
  %v3366 = vld [vmem:[%s3 + $0x60] sm:$0xff]
  %v3367 = vld [vmem:[%s3 + $0x68] sm:$0xff]
  %v3368 = vld [vmem:[%s3 + $0x70] sm:$0xff]
  %v3369 = vld [vmem:[%s3 + $0x78] sm:$0xff]
  %v3370 = vmul.f32 %v2906, %v3338
  %v3371 = vmul.f32 %v2907, %v3339
  %v3372 = vmul.f32 %v2908, %v3340
  %v3373 = vmul.f32 %v2909, %v3341
  %v3374 = vmul.f32 %v2910, %v3342
  %v3375 = vmul.f32 %v2911, %v3343
  %v3376 = vmul.f32 %v2912, %v3344
  %v3377 = vmul.f32 %v2913, %v3345
  %v3378 = vmul.f32 %v2914, %v3346
  %v3379 = vmul.f32 %v2915, %v3347
  %v3380 = vmul.f32 %v2916, %v3348
  %v3381 = vmul.f32 %v2917, %v3349
  %v3382 = vmul.f32 %v2918, %v3350
  %v3383 = vmul.f32 %v2919, %v3351
  %v3384 = vmul.f32 %v2920, %v3352
  %v3385 = vmul.f32 %v2921, %v3353
  %v3386 = vsub.f32 %v3354, %v3370
  %v3387 = vsub.f32 %v3355, %v3371
  %v3388 = vsub.f32 %v3356, %v3372
  %v3389 = vsub.f32 %v3357, %v3373
  %v3390 = vsub.f32 %v3358, %v3374
  %v3391 = vsub.f32 %v3359, %v3375
  %v3392 = vsub.f32 %v3360, %v3376
  %v3393 = vsub.f32 %v3361, %v3377
  %v3394 = vsub.f32 %v3362, %v3378
  %v3395 = vsub.f32 %v3363, %v3379
  %v3396 = vsub.f32 %v3364, %v3380
  %v3397 = vsub.f32 %v3365, %v3381
  %v3398 = vsub.f32 %v3366, %v3382
  %v3399 = vsub.f32 %v3367, %v3383
  %v3400 = vsub.f32 %v3368, %v3384
  %v3401 = vsub.f32 %v3369, %v3385
  %3403 = vset.pattern.permute.xlu0 0
  %3404 = vperm.xlu0 %3403, %v3338
  %v3405 = vpop.permute.xlu0 %3404
  %3408 = vset.pattern.permute.xlu0 0
  %3409 = vperm.xlu0 %3408, %v3339
  %v3410 = vpop.permute.xlu0 %3409
  %3413 = vset.pattern.permute.xlu0 0
  %3414 = vperm.xlu0 %3413, %v3340
  %v3415 = vpop.permute.xlu0 %3414
  %3418 = vset.pattern.permute.xlu0 0
  %3419 = vperm.xlu0 %3418, %v3341
  %v3420 = vpop.permute.xlu0 %3419
  %3423 = vset.pattern.permute.xlu0 0
  %3424 = vperm.xlu0 %3423, %v3342
  %v3425 = vpop.permute.xlu0 %3424
  %3428 = vset.pattern.permute.xlu0 0
  %3429 = vperm.xlu0 %3428, %v3343
  %v3430 = vpop.permute.xlu0 %3429
  %3433 = vset.pattern.permute.xlu0 0
  %3434 = vperm.xlu0 %3433, %v3344
  %v3435 = vpop.permute.xlu0 %3434
  %3438 = vset.pattern.permute.xlu0 0
  %3439 = vperm.xlu0 %3438, %v3345
  %v3440 = vpop.permute.xlu0 %3439
  %3443 = vset.pattern.permute.xlu0 0
  %3444 = vperm.xlu0 %3443, %v3346
  %v3445 = vpop.permute.xlu0 %3444
  %3448 = vset.pattern.permute.xlu0 0
  %3449 = vperm.xlu0 %3448, %v3347
  %v3450 = vpop.permute.xlu0 %3449
  %3453 = vset.pattern.permute.xlu0 0
  %3454 = vperm.xlu0 %3453, %v3348
  %v3455 = vpop.permute.xlu0 %3454
  %3458 = vset.pattern.permute.xlu0 0
  %3459 = vperm.xlu0 %3458, %v3349
  %v3460 = vpop.permute.xlu0 %3459
  %3463 = vset.pattern.permute.xlu0 0
  %3464 = vperm.xlu0 %3463, %v3350
  %v3465 = vpop.permute.xlu0 %3464
  %3468 = vset.pattern.permute.xlu0 0
  %3469 = vperm.xlu0 %3468, %v3351
  %v3470 = vpop.permute.xlu0 %3469
  %3473 = vset.pattern.permute.xlu0 0
  %3474 = vperm.xlu0 %3473, %v3352
  %v3475 = vpop.permute.xlu0 %3474
  %3478 = vset.pattern.permute.xlu0 0
  %3479 = vperm.xlu0 %3478, %v3353
  %v3480 = vpop.permute.xlu0 %3479
  %v3482 = vmul.f32 %v1831, %v3405
  %v3483 = vmul.f32 %v1833, %v3405
  %v3484 = vmul.f32 %v1992, %v3405
  %v3485 = vmul.f32 %v1994, %v3405
  %v3486 = vmul.f32 %v2153, %v3405
  %v3487 = vmul.f32 %v2155, %v3405
  %v3488 = vmul.f32 %v2314, %v3405
  %v3489 = vmul.f32 %v2316, %v3405
  %v3490 = vmul.f32 %v2475, %v3405
  %v3491 = vmul.f32 %v1837, %v3410
  %v3492 = vmul.f32 %v1839, %v3410
  %v3493 = vmul.f32 %v1998, %v3410
  %v3494 = vmul.f32 %v2000, %v3410
  %v3495 = vmul.f32 %v2159, %v3410
  %v3496 = vmul.f32 %v2161, %v3410
  %v3497 = vmul.f32 %v2320, %v3410
  %v3498 = vmul.f32 %v2322, %v3410
  %v3499 = vmul.f32 %v2480, %v3410
  %v3500 = vmul.f32 %v1843, %v3415
  %v3501 = vmul.f32 %v1845, %v3415
  %v3502 = vmul.f32 %v2004, %v3415
  %v3503 = vmul.f32 %v2006, %v3415
  %v3504 = vmul.f32 %v2165, %v3415
  %v3505 = vmul.f32 %v2167, %v3415
  %v3506 = vmul.f32 %v2326, %v3415
  %v3507 = vmul.f32 %v2328, %v3415
  %v3508 = vmul.f32 %v2485, %v3415
  %v3509 = vmul.f32 %v1849, %v3420
  %v3510 = vmul.f32 %v1851, %v3420
  %v3511 = vmul.f32 %v2010, %v3420
  %v3512 = vmul.f32 %v2012, %v3420
  %v3513 = vmul.f32 %v2171, %v3420
  %v3514 = vmul.f32 %v2173, %v3420
  %v3515 = vmul.f32 %v2332, %v3420
  %v3516 = vmul.f32 %v2334, %v3420
  %v3517 = vmul.f32 %v2490, %v3420
  %v3518 = vmul.f32 %v1855, %v3425
  %v3519 = vmul.f32 %v1857, %v3425
  %v3520 = vmul.f32 %v2016, %v3425
  %v3521 = vmul.f32 %v2018, %v3425
  %v3522 = vmul.f32 %v2177, %v3425
  %v3523 = vmul.f32 %v2179, %v3425
  %v3524 = vmul.f32 %v2338, %v3425
  %v3525 = vmul.f32 %v2340, %v3425
  %v3526 = vmul.f32 %v2495, %v3425
  %v3527 = vmul.f32 %v1861, %v3430
  %v3528 = vmul.f32 %v1863, %v3430
  %v3529 = vmul.f32 %v2022, %v3430
  %v3530 = vmul.f32 %v2024, %v3430
  %v3531 = vmul.f32 %v2183, %v3430
  %v3532 = vmul.f32 %v2185, %v3430
  %v3533 = vmul.f32 %v2344, %v3430
  %v3534 = vmul.f32 %v2346, %v3430
  %v3535 = vmul.f32 %v2500, %v3430
  %v3536 = vmul.f32 %v1867, %v3435
  %v3537 = vmul.f32 %v1869, %v3435
  %v3538 = vmul.f32 %v2028, %v3435
  %v3539 = vmul.f32 %v2030, %v3435
  %v3540 = vmul.f32 %v2189, %v3435
  %v3541 = vmul.f32 %v2191, %v3435
  %v3542 = vmul.f32 %v2350, %v3435
  %v3543 = vmul.f32 %v2352, %v3435
  %v3544 = vmul.f32 %v2505, %v3435
  %v3545 = vmul.f32 %v1873, %v3440
  %v3546 = vmul.f32 %v1875, %v3440
  %v3547 = vmul.f32 %v2034, %v3440
  %v3548 = vmul.f32 %v2036, %v3440
  %v3549 = vmul.f32 %v2195, %v3440
  %v3550 = vmul.f32 %v2197, %v3440
  %v3551 = vmul.f32 %v2356, %v3440
  %v3552 = vmul.f32 %v2358, %v3440
  %v3553 = vmul.f32 %v2510, %v3440
  %v3554 = vmul.f32 %v1879, %v3445
  %v3555 = vmul.f32 %v1881, %v3445
  %v3556 = vmul.f32 %v2040, %v3445
  %v3557 = vmul.f32 %v2042, %v3445
  %v3558 = vmul.f32 %v2201, %v3445
  %v3559 = vmul.f32 %v2203, %v3445
  %v3560 = vmul.f32 %v2362, %v3445
  %v3561 = vmul.f32 %v2364, %v3445
  %v3562 = vmul.f32 %v2515, %v3445
  %v3563 = vmul.f32 %v1885, %v3450
  %v3564 = vmul.f32 %v1887, %v3450
  %v3565 = vmul.f32 %v2046, %v3450
  %v3566 = vmul.f32 %v2048, %v3450
  %v3567 = vmul.f32 %v2207, %v3450
  %v3568 = vmul.f32 %v2209, %v3450
  %v3569 = vmul.f32 %v2368, %v3450
  %v3570 = vmul.f32 %v2370, %v3450
  %v3571 = vmul.f32 %v2520, %v3450
  %v3572 = vmul.f32 %v1891, %v3455
  %v3573 = vmul.f32 %v1893, %v3455
  %v3574 = vmul.f32 %v2052, %v3455
  %v3575 = vmul.f32 %v2054, %v3455
  %v3576 = vmul.f32 %v2213, %v3455
  %v3577 = vmul.f32 %v2215, %v3455
  %v3578 = vmul.f32 %v2374, %v3455
  %v3579 = vmul.f32 %v2376, %v3455
  %v3580 = vmul.f32 %v2525, %v3455
  %v3581 = vmul.f32 %v1897, %v3460
  %v3582 = vmul.f32 %v1899, %v3460
  %v3583 = vmul.f32 %v2058, %v3460
  %v3584 = vmul.f32 %v2060, %v3460
  %v3585 = vmul.f32 %v2219, %v3460
  %v3586 = vmul.f32 %v2221, %v3460
  %v3587 = vmul.f32 %v2380, %v3460
  %v3588 = vmul.f32 %v2382, %v3460
  %v3589 = vmul.f32 %v2530, %v3460
  %v3590 = vmul.f32 %v1903, %v3465
  %v3591 = vmul.f32 %v1905, %v3465
  %v3592 = vmul.f32 %v2064, %v3465
  %v3593 = vmul.f32 %v2066, %v3465
  %v3594 = vmul.f32 %v2225, %v3465
  %v3595 = vmul.f32 %v2227, %v3465
  %v3596 = vmul.f32 %v2386, %v3465
  %v3597 = vmul.f32 %v2388, %v3465
  %v3598 = vmul.f32 %v2535, %v3465
  %v3599 = vmul.f32 %v1909, %v3470
  %v3600 = vmul.f32 %v1911, %v3470
  %v3601 = vmul.f32 %v2070, %v3470
  %v3602 = vmul.f32 %v2072, %v3470
  %v3603 = vmul.f32 %v2231, %v3470
  %v3604 = vmul.f32 %v2233, %v3470
  %v3605 = vmul.f32 %v2392, %v3470
  %v3606 = vmul.f32 %v2394, %v3470
  %v3607 = vmul.f32 %v2540, %v3470
  %v3608 = vmul.f32 %v1915, %v3475
  %v3609 = vmul.f32 %v1917, %v3475
  %v3610 = vmul.f32 %v2076, %v3475
  %v3611 = vmul.f32 %v2078, %v3475
  %v3612 = vmul.f32 %v2237, %v3475
  %v3613 = vmul.f32 %v2239, %v3475
  %v3614 = vmul.f32 %v2398, %v3475
  %v3615 = vmul.f32 %v2400, %v3475
  %v3616 = vmul.f32 %v2545, %v3475
  %v3617 = vmul.f32 %v1921, %v3480
  %v3618 = vmul.f32 %v1923, %v3480
  %v3619 = vmul.f32 %v2082, %v3480
  %v3620 = vmul.f32 %v2084, %v3480
  %v3621 = vmul.f32 %v2243, %v3480
  %v3622 = vmul.f32 %v2245, %v3480
  %v3623 = vmul.f32 %v2404, %v3480
  %v3624 = vmul.f32 %v2406, %v3480
  %v3625 = vmul.f32 %v2550, %v3480
  %3627 = vset.pattern.permute.xlu0 0
  %3628 = vperm.xlu0 %3627, %v3386
  %v3629 = vpop.permute.xlu0 %3628
  %3632 = vset.pattern.permute.xlu0 0
  %3633 = vperm.xlu0 %3632, %v3387
  %v3634 = vpop.permute.xlu0 %3633
  %3637 = vset.pattern.permute.xlu0 0
  %3638 = vperm.xlu0 %3637, %v3388
  %v3639 = vpop.permute.xlu0 %3638
  %3642 = vset.pattern.permute.xlu0 0
  %3643 = vperm.xlu0 %3642, %v3389
  %v3644 = vpop.permute.xlu0 %3643
  %3647 = vset.pattern.permute.xlu0 0
  %3648 = vperm.xlu0 %3647, %v3390
  %v3649 = vpop.permute.xlu0 %3648
  %3652 = vset.pattern.permute.xlu0 0
  %3653 = vperm.xlu0 %3652, %v3391
  %v3654 = vpop.permute.xlu0 %3653
  %3657 = vset.pattern.permute.xlu0 0
  %3658 = vperm.xlu0 %3657, %v3392
  %v3659 = vpop.permute.xlu0 %3658
  %3662 = vset.pattern.permute.xlu0 0
  %3663 = vperm.xlu0 %3662, %v3393
  %v3664 = vpop.permute.xlu0 %3663
  %3667 = vset.pattern.permute.xlu0 0
  %3668 = vperm.xlu0 %3667, %v3394
  %v3669 = vpop.permute.xlu0 %3668
  %3672 = vset.pattern.permute.xlu0 0
  %3673 = vperm.xlu0 %3672, %v3395
  %v3674 = vpop.permute.xlu0 %3673
  %3677 = vset.pattern.permute.xlu0 0
  %3678 = vperm.xlu0 %3677, %v3396
  %v3679 = vpop.permute.xlu0 %3678
  %3682 = vset.pattern.permute.xlu0 0
  %3683 = vperm.xlu0 %3682, %v3397
  %v3684 = vpop.permute.xlu0 %3683
  %3687 = vset.pattern.permute.xlu0 0
  %3688 = vperm.xlu0 %3687, %v3398
  %v3689 = vpop.permute.xlu0 %3688
  %3692 = vset.pattern.permute.xlu0 0
  %3693 = vperm.xlu0 %3692, %v3399
  %v3694 = vpop.permute.xlu0 %3693
  %3697 = vset.pattern.permute.xlu0 0
  %3698 = vperm.xlu0 %3697, %v3400
  %v3699 = vpop.permute.xlu0 %3698
  %3702 = vset.pattern.permute.xlu0 0
  %3703 = vperm.xlu0 %3702, %v3401
  %v3704 = vpop.permute.xlu0 %3703
  %v3706 = vadd.f32 %v3482, %v3629
  %v3707 = vadd.f32 %v3483, %v3629
  %v3708 = vadd.f32 %v3484, %v3629
  %v3709 = vadd.f32 %v3485, %v3629
  %v3710 = vadd.f32 %v3486, %v3629
  %v3711 = vadd.f32 %v3487, %v3629
  %v3712 = vadd.f32 %v3488, %v3629
  %v3713 = vadd.f32 %v3489, %v3629
  %v3714 = vadd.f32 %v3490, %v3629
  %v3715 = vadd.f32 %v3491, %v3634
  %v3716 = vadd.f32 %v3492, %v3634
  %v3717 = vadd.f32 %v3493, %v3634
  %v3718 = vadd.f32 %v3494, %v3634
  %v3719 = vadd.f32 %v3495, %v3634
  %v3720 = vadd.f32 %v3496, %v3634
  %v3721 = vadd.f32 %v3497, %v3634
  %v3722 = vadd.f32 %v3498, %v3634
  %v3723 = vadd.f32 %v3499, %v3634
  %v3724 = vadd.f32 %v3500, %v3639
  %v3725 = vadd.f32 %v3501, %v3639
  %v3726 = vadd.f32 %v3502, %v3639
  %v3727 = vadd.f32 %v3503, %v3639
  %v3728 = vadd.f32 %v3504, %v3639
  %v3729 = vadd.f32 %v3505, %v3639
  %v3730 = vadd.f32 %v3506, %v3639
  %v3731 = vadd.f32 %v3507, %v3639
  %v3732 = vadd.f32 %v3508, %v3639
  %v3733 = vadd.f32 %v3509, %v3644
  %v3734 = vadd.f32 %v3510, %v3644
  %v3735 = vadd.f32 %v3511, %v3644
  %v3736 = vadd.f32 %v3512, %v3644
  %v3737 = vadd.f32 %v3513, %v3644
  %v3738 = vadd.f32 %v3514, %v3644
  %v3739 = vadd.f32 %v3515, %v3644
  %v3740 = vadd.f32 %v3516, %v3644
  %v3741 = vadd.f32 %v3517, %v3644
  %v3742 = vadd.f32 %v3518, %v3649
  %v3743 = vadd.f32 %v3519, %v3649
  %v3744 = vadd.f32 %v3520, %v3649
  %v3745 = vadd.f32 %v3521, %v3649
  %v3746 = vadd.f32 %v3522, %v3649
  %v3747 = vadd.f32 %v3523, %v3649
  %v3748 = vadd.f32 %v3524, %v3649
  %v3749 = vadd.f32 %v3525, %v3649
  %v3750 = vadd.f32 %v3526, %v3649
  %v3751 = vadd.f32 %v3527, %v3654
  %v3752 = vadd.f32 %v3528, %v3654
  %v3753 = vadd.f32 %v3529, %v3654
  %v3754 = vadd.f32 %v3530, %v3654
  %v3755 = vadd.f32 %v3531, %v3654
  %v3756 = vadd.f32 %v3532, %v3654
  %v3757 = vadd.f32 %v3533, %v3654
  %v3758 = vadd.f32 %v3534, %v3654
  %v3759 = vadd.f32 %v3535, %v3654
  %v3760 = vadd.f32 %v3536, %v3659
  %v3761 = vadd.f32 %v3537, %v3659
  %v3762 = vadd.f32 %v3538, %v3659
  %v3763 = vadd.f32 %v3539, %v3659
  %v3764 = vadd.f32 %v3540, %v3659
  %v3765 = vadd.f32 %v3541, %v3659
  %v3766 = vadd.f32 %v3542, %v3659
  %v3767 = vadd.f32 %v3543, %v3659
  %v3768 = vadd.f32 %v3544, %v3659
  %v3769 = vadd.f32 %v3545, %v3664
  %v3770 = vadd.f32 %v3546, %v3664
  %v3771 = vadd.f32 %v3547, %v3664
  %v3772 = vadd.f32 %v3548, %v3664
  %v3773 = vadd.f32 %v3549, %v3664
  %v3774 = vadd.f32 %v3550, %v3664
  %v3775 = vadd.f32 %v3551, %v3664
  %v3776 = vadd.f32 %v3552, %v3664
  %v3777 = vadd.f32 %v3553, %v3664
  %v3778 = vadd.f32 %v3554, %v3669
  %v3779 = vadd.f32 %v3555, %v3669
  %v3780 = vadd.f32 %v3556, %v3669
  %v3781 = vadd.f32 %v3557, %v3669
  %v3782 = vadd.f32 %v3558, %v3669
  %v3783 = vadd.f32 %v3559, %v3669
  %v3784 = vadd.f32 %v3560, %v3669
  %v3785 = vadd.f32 %v3561, %v3669
  %v3786 = vadd.f32 %v3562, %v3669
  %v3787 = vadd.f32 %v3563, %v3674
  %v3788 = vadd.f32 %v3564, %v3674
  %v3789 = vadd.f32 %v3565, %v3674
  %v3790 = vadd.f32 %v3566, %v3674
  %v3791 = vadd.f32 %v3567, %v3674
  %v3792 = vadd.f32 %v3568, %v3674
  %v3793 = vadd.f32 %v3569, %v3674
  %v3794 = vadd.f32 %v3570, %v3674
  %v3795 = vadd.f32 %v3571, %v3674
  %v3796 = vadd.f32 %v3572, %v3679
  %v3797 = vadd.f32 %v3573, %v3679
  %v3798 = vadd.f32 %v3574, %v3679
  %v3799 = vadd.f32 %v3575, %v3679
  %v3800 = vadd.f32 %v3576, %v3679
  %v3801 = vadd.f32 %v3577, %v3679
  %v3802 = vadd.f32 %v3578, %v3679
  %v3803 = vadd.f32 %v3579, %v3679
  %v3804 = vadd.f32 %v3580, %v3679
  %v3805 = vadd.f32 %v3581, %v3684
  %v3806 = vadd.f32 %v3582, %v3684
  %v3807 = vadd.f32 %v3583, %v3684
  %v3808 = vadd.f32 %v3584, %v3684
  %v3809 = vadd.f32 %v3585, %v3684
  %v3810 = vadd.f32 %v3586, %v3684
  %v3811 = vadd.f32 %v3587, %v3684
  %v3812 = vadd.f32 %v3588, %v3684
  %v3813 = vadd.f32 %v3589, %v3684
  %v3814 = vadd.f32 %v3590, %v3689
  %v3815 = vadd.f32 %v3591, %v3689
  %v3816 = vadd.f32 %v3592, %v3689
  %v3817 = vadd.f32 %v3593, %v3689
  %v3818 = vadd.f32 %v3594, %v3689
  %v3819 = vadd.f32 %v3595, %v3689
  %v3820 = vadd.f32 %v3596, %v3689
  %v3821 = vadd.f32 %v3597, %v3689
  %v3822 = vadd.f32 %v3598, %v3689
  %v3823 = vadd.f32 %v3599, %v3694
  %v3824 = vadd.f32 %v3600, %v3694
  %v3825 = vadd.f32 %v3601, %v3694
  %v3826 = vadd.f32 %v3602, %v3694
  %v3827 = vadd.f32 %v3603, %v3694
  %v3828 = vadd.f32 %v3604, %v3694
  %v3829 = vadd.f32 %v3605, %v3694
  %v3830 = vadd.f32 %v3606, %v3694
  %v3831 = vadd.f32 %v3607, %v3694
  %v3832 = vadd.f32 %v3608, %v3699
  %v3833 = vadd.f32 %v3609, %v3699
  %v3834 = vadd.f32 %v3610, %v3699
  %v3835 = vadd.f32 %v3611, %v3699
  %v3836 = vadd.f32 %v3612, %v3699
  %v3837 = vadd.f32 %v3613, %v3699
  %v3838 = vadd.f32 %v3614, %v3699
  %v3839 = vadd.f32 %v3615, %v3699
  %v3840 = vadd.f32 %v3616, %v3699
  %v3841 = vadd.f32 %v3617, %v3704
  %v3842 = vadd.f32 %v3618, %v3704
  %v3843 = vadd.f32 %v3619, %v3704
  %v3844 = vadd.f32 %v3620, %v3704
  %v3845 = vadd.f32 %v3621, %v3704
  %v3846 = vadd.f32 %v3622, %v3704
  %v3847 = vadd.f32 %v3623, %v3704
  %v3848 = vadd.f32 %v3624, %v3704
  %v3849 = vadd.f32 %v3625, %v3704
  %vm3850 = vcmp.ge.f32.partialorder %v3706, 0.0
  %vm3851 = vcmp.ge.f32.partialorder %v3707, 0.0
  %vm3852 = vcmp.ge.f32.partialorder %v3708, 0.0
  %vm3853 = vcmp.ge.f32.partialorder %v3709, 0.0
  %vm3854 = vcmp.ge.f32.partialorder %v3710, 0.0
  %vm3855 = vcmp.ge.f32.partialorder %v3711, 0.0
  %vm3856 = vcmp.ge.f32.partialorder %v3712, 0.0
  %vm3857 = vcmp.ge.f32.partialorder %v3713, 0.0
  %vm3858 = vcmp.ge.f32.partialorder %v3714, 0.0
  %vm3859 = vcmp.ge.f32.partialorder %v3715, 0.0
  %vm3860 = vcmp.ge.f32.partialorder %v3716, 0.0
  %vm3861 = vcmp.ge.f32.partialorder %v3717, 0.0
  %vm3862 = vcmp.ge.f32.partialorder %v3718, 0.0
  %vm3863 = vcmp.ge.f32.partialorder %v3719, 0.0
  %vm3864 = vcmp.ge.f32.partialorder %v3720, 0.0
  %vm3865 = vcmp.ge.f32.partialorder %v3721, 0.0
  %vm3866 = vcmp.ge.f32.partialorder %v3722, 0.0
  %vm3867 = vcmp.ge.f32.partialorder %v3723, 0.0
  %vm3868 = vcmp.ge.f32.partialorder %v3724, 0.0
  %vm3869 = vcmp.ge.f32.partialorder %v3725, 0.0
  %vm3870 = vcmp.ge.f32.partialorder %v3726, 0.0
  %vm3871 = vcmp.ge.f32.partialorder %v3727, 0.0
  %vm3872 = vcmp.ge.f32.partialorder %v3728, 0.0
  %vm3873 = vcmp.ge.f32.partialorder %v3729, 0.0
  %vm3874 = vcmp.ge.f32.partialorder %v3730, 0.0
  %vm3875 = vcmp.ge.f32.partialorder %v3731, 0.0
  %vm3876 = vcmp.ge.f32.partialorder %v3732, 0.0
  %vm3877 = vcmp.ge.f32.partialorder %v3733, 0.0
  %vm3878 = vcmp.ge.f32.partialorder %v3734, 0.0
  %vm3879 = vcmp.ge.f32.partialorder %v3735, 0.0
  %vm3880 = vcmp.ge.f32.partialorder %v3736, 0.0
  %vm3881 = vcmp.ge.f32.partialorder %v3737, 0.0
  %vm3882 = vcmp.ge.f32.partialorder %v3738, 0.0
  %vm3883 = vcmp.ge.f32.partialorder %v3739, 0.0
  %vm3884 = vcmp.ge.f32.partialorder %v3740, 0.0
  %vm3885 = vcmp.ge.f32.partialorder %v3741, 0.0
  %vm3886 = vcmp.ge.f32.partialorder %v3742, 0.0
  %vm3887 = vcmp.ge.f32.partialorder %v3743, 0.0
  %vm3888 = vcmp.ge.f32.partialorder %v3744, 0.0
  %vm3889 = vcmp.ge.f32.partialorder %v3745, 0.0
  %vm3890 = vcmp.ge.f32.partialorder %v3746, 0.0
  %vm3891 = vcmp.ge.f32.partialorder %v3747, 0.0
  %vm3892 = vcmp.ge.f32.partialorder %v3748, 0.0
  %vm3893 = vcmp.ge.f32.partialorder %v3749, 0.0
  %vm3894 = vcmp.ge.f32.partialorder %v3750, 0.0
  %vm3895 = vcmp.ge.f32.partialorder %v3751, 0.0
  %vm3896 = vcmp.ge.f32.partialorder %v3752, 0.0
  %vm3897 = vcmp.ge.f32.partialorder %v3753, 0.0
  %vm3898 = vcmp.ge.f32.partialorder %v3754, 0.0
  %vm3899 = vcmp.ge.f32.partialorder %v3755, 0.0
  %vm3900 = vcmp.ge.f32.partialorder %v3756, 0.0
  %vm3901 = vcmp.ge.f32.partialorder %v3757, 0.0
  %vm3902 = vcmp.ge.f32.partialorder %v3758, 0.0
  %vm3903 = vcmp.ge.f32.partialorder %v3759, 0.0
  %vm3904 = vcmp.ge.f32.partialorder %v3760, 0.0
  %vm3905 = vcmp.ge.f32.partialorder %v3761, 0.0
  %vm3906 = vcmp.ge.f32.partialorder %v3762, 0.0
  %vm3907 = vcmp.ge.f32.partialorder %v3763, 0.0
  %vm3908 = vcmp.ge.f32.partialorder %v3764, 0.0
  %vm3909 = vcmp.ge.f32.partialorder %v3765, 0.0
  %vm3910 = vcmp.ge.f32.partialorder %v3766, 0.0
  %vm3911 = vcmp.ge.f32.partialorder %v3767, 0.0
  %vm3912 = vcmp.ge.f32.partialorder %v3768, 0.0
  %vm3913 = vcmp.ge.f32.partialorder %v3769, 0.0
  %vm3914 = vcmp.ge.f32.partialorder %v3770, 0.0
  %vm3915 = vcmp.ge.f32.partialorder %v3771, 0.0
  %vm3916 = vcmp.ge.f32.partialorder %v3772, 0.0
  %vm3917 = vcmp.ge.f32.partialorder %v3773, 0.0
  %vm3918 = vcmp.ge.f32.partialorder %v3774, 0.0
  %vm3919 = vcmp.ge.f32.partialorder %v3775, 0.0
  %vm3920 = vcmp.ge.f32.partialorder %v3776, 0.0
  %vm3921 = vcmp.ge.f32.partialorder %v3777, 0.0
  %vm3922 = vcmp.ge.f32.partialorder %v3778, 0.0
  %vm3923 = vcmp.ge.f32.partialorder %v3779, 0.0
  %vm3924 = vcmp.ge.f32.partialorder %v3780, 0.0
  %vm3925 = vcmp.ge.f32.partialorder %v3781, 0.0
  %vm3926 = vcmp.ge.f32.partialorder %v3782, 0.0
  %vm3927 = vcmp.ge.f32.partialorder %v3783, 0.0
  %vm3928 = vcmp.ge.f32.partialorder %v3784, 0.0
  %vm3929 = vcmp.ge.f32.partialorder %v3785, 0.0
  %vm3930 = vcmp.ge.f32.partialorder %v3786, 0.0
  %vm3931 = vcmp.ge.f32.partialorder %v3787, 0.0
  %vm3932 = vcmp.ge.f32.partialorder %v3788, 0.0
  %vm3933 = vcmp.ge.f32.partialorder %v3789, 0.0
  %vm3934 = vcmp.ge.f32.partialorder %v3790, 0.0
  %vm3935 = vcmp.ge.f32.partialorder %v3791, 0.0
  %vm3936 = vcmp.ge.f32.partialorder %v3792, 0.0
  %vm3937 = vcmp.ge.f32.partialorder %v3793, 0.0
  %vm3938 = vcmp.ge.f32.partialorder %v3794, 0.0
  %vm3939 = vcmp.ge.f32.partialorder %v3795, 0.0
  %vm3940 = vcmp.ge.f32.partialorder %v3796, 0.0
  %vm3941 = vcmp.ge.f32.partialorder %v3797, 0.0
  %vm3942 = vcmp.ge.f32.partialorder %v3798, 0.0
  %vm3943 = vcmp.ge.f32.partialorder %v3799, 0.0
  %vm3944 = vcmp.ge.f32.partialorder %v3800, 0.0
  %vm3945 = vcmp.ge.f32.partialorder %v3801, 0.0
  %vm3946 = vcmp.ge.f32.partialorder %v3802, 0.0
  %vm3947 = vcmp.ge.f32.partialorder %v3803, 0.0
  %vm3948 = vcmp.ge.f32.partialorder %v3804, 0.0
  %vm3949 = vcmp.ge.f32.partialorder %v3805, 0.0
  %vm3950 = vcmp.ge.f32.partialorder %v3806, 0.0
  %vm3951 = vcmp.ge.f32.partialorder %v3807, 0.0
  %vm3952 = vcmp.ge.f32.partialorder %v3808, 0.0
  %vm3953 = vcmp.ge.f32.partialorder %v3809, 0.0
  %vm3954 = vcmp.ge.f32.partialorder %v3810, 0.0
  %vm3955 = vcmp.ge.f32.partialorder %v3811, 0.0
  %vm3956 = vcmp.ge.f32.partialorder %v3812, 0.0
  %vm3957 = vcmp.ge.f32.partialorder %v3813, 0.0
  %vm3958 = vcmp.ge.f32.partialorder %v3814, 0.0
  %vm3959 = vcmp.ge.f32.partialorder %v3815, 0.0
  %vm3960 = vcmp.ge.f32.partialorder %v3816, 0.0
  %vm3961 = vcmp.ge.f32.partialorder %v3817, 0.0
  %vm3962 = vcmp.ge.f32.partialorder %v3818, 0.0
  %vm3963 = vcmp.ge.f32.partialorder %v3819, 0.0
  %vm3964 = vcmp.ge.f32.partialorder %v3820, 0.0
  %vm3965 = vcmp.ge.f32.partialorder %v3821, 0.0
  %vm3966 = vcmp.ge.f32.partialorder %v3822, 0.0
  %vm3967 = vcmp.ge.f32.partialorder %v3823, 0.0
  %vm3968 = vcmp.ge.f32.partialorder %v3824, 0.0
  %vm3969 = vcmp.ge.f32.partialorder %v3825, 0.0
  %vm3970 = vcmp.ge.f32.partialorder %v3826, 0.0
  %vm3971 = vcmp.ge.f32.partialorder %v3827, 0.0
  %vm3972 = vcmp.ge.f32.partialorder %v3828, 0.0
  %vm3973 = vcmp.ge.f32.partialorder %v3829, 0.0
  %vm3974 = vcmp.ge.f32.partialorder %v3830, 0.0
  %vm3975 = vcmp.ge.f32.partialorder %v3831, 0.0
  %vm3976 = vcmp.ge.f32.partialorder %v3832, 0.0
  %vm3977 = vcmp.ge.f32.partialorder %v3833, 0.0
  %vm3978 = vcmp.ge.f32.partialorder %v3834, 0.0
  %vm3979 = vcmp.ge.f32.partialorder %v3835, 0.0
  %vm3980 = vcmp.ge.f32.partialorder %v3836, 0.0
  %vm3981 = vcmp.ge.f32.partialorder %v3837, 0.0
  %vm3982 = vcmp.ge.f32.partialorder %v3838, 0.0
  %vm3983 = vcmp.ge.f32.partialorder %v3839, 0.0
  %vm3984 = vcmp.ge.f32.partialorder %v3840, 0.0
  %vm3985 = vcmp.ge.f32.partialorder %v3841, 0.0
  %vm3986 = vcmp.ge.f32.partialorder %v3842, 0.0
  %vm3987 = vcmp.ge.f32.partialorder %v3843, 0.0
  %vm3988 = vcmp.ge.f32.partialorder %v3844, 0.0
  %vm3989 = vcmp.ge.f32.partialorder %v3845, 0.0
  %vm3990 = vcmp.ge.f32.partialorder %v3846, 0.0
  %vm3991 = vcmp.ge.f32.partialorder %v3847, 0.0
  %vm3992 = vcmp.ge.f32.partialorder %v3848, 0.0
  %vm3993 = vcmp.ge.f32.partialorder %v3849, 0.0
  %v3994 = vmul.f32 %v3706, 0.2
  %v3995 = vmul.f32 %v3707, 0.2
  %v3996 = vmul.f32 %v3708, 0.2
  %v3997 = vmul.f32 %v3709, 0.2
  %v3998 = vmul.f32 %v3710, 0.2
  %v3999 = vmul.f32 %v3711, 0.2
  %v4000 = vmul.f32 %v3712, 0.2
  %v4001 = vmul.f32 %v3713, 0.2
  %v4002 = vmul.f32 %v3714, 0.2
  %v4003 = vmul.f32 %v3715, 0.2
  %v4004 = vmul.f32 %v3716, 0.2
  %v4005 = vmul.f32 %v3717, 0.2
  %v4006 = vmul.f32 %v3718, 0.2
  %v4007 = vmul.f32 %v3719, 0.2
  %v4008 = vmul.f32 %v3720, 0.2
  %v4009 = vmul.f32 %v3721, 0.2
  %v4010 = vmul.f32 %v3722, 0.2
  %v4011 = vmul.f32 %v3723, 0.2
  %v4012 = vmul.f32 %v3724, 0.2
  %v4013 = vmul.f32 %v3725, 0.2
  %v4014 = vmul.f32 %v3726, 0.2
  %v4015 = vmul.f32 %v3727, 0.2
  %v4016 = vmul.f32 %v3728, 0.2
  %v4017 = vmul.f32 %v3729, 0.2
  %v4018 = vmul.f32 %v3730, 0.2
  %v4019 = vmul.f32 %v3731, 0.2
  %v4020 = vmul.f32 %v3732, 0.2
  %v4021 = vmul.f32 %v3733, 0.2
  %v4022 = vmul.f32 %v3734, 0.2
  %v4023 = vmul.f32 %v3735, 0.2
  %v4024 = vmul.f32 %v3736, 0.2
  %v4025 = vmul.f32 %v3737, 0.2
  %v4026 = vmul.f32 %v3738, 0.2
  %v4027 = vmul.f32 %v3739, 0.2
  %v4028 = vmul.f32 %v3740, 0.2
  %v4029 = vmul.f32 %v3741, 0.2
  %v4030 = vmul.f32 %v3742, 0.2
  %v4031 = vmul.f32 %v3743, 0.2
  %v4032 = vmul.f32 %v3744, 0.2
  %v4033 = vmul.f32 %v3745, 0.2
  %v4034 = vmul.f32 %v3746, 0.2
  %v4035 = vmul.f32 %v3747, 0.2
  %v4036 = vmul.f32 %v3748, 0.2
  %v4037 = vmul.f32 %v3749, 0.2
  %v4038 = vmul.f32 %v3750, 0.2
  %v4039 = vmul.f32 %v3751, 0.2
  %v4040 = vmul.f32 %v3752, 0.2
  %v4041 = vmul.f32 %v3753, 0.2
  %v4042 = vmul.f32 %v3754, 0.2
  %v4043 = vmul.f32 %v3755, 0.2
  %v4044 = vmul.f32 %v3756, 0.2
  %v4045 = vmul.f32 %v3757, 0.2
  %v4046 = vmul.f32 %v3758, 0.2
  %v4047 = vmul.f32 %v3759, 0.2
  %v4048 = vmul.f32 %v3760, 0.2
  %v4049 = vmul.f32 %v3761, 0.2
  %v4050 = vmul.f32 %v3762, 0.2
  %v4051 = vmul.f32 %v3763, 0.2
  %v4052 = vmul.f32 %v3764, 0.2
  %v4053 = vmul.f32 %v3765, 0.2
  %v4054 = vmul.f32 %v3766, 0.2
  %v4055 = vmul.f32 %v3767, 0.2
  %v4056 = vmul.f32 %v3768, 0.2
  %v4057 = vmul.f32 %v3769, 0.2
  %v4058 = vmul.f32 %v3770, 0.2
  %v4059 = vmul.f32 %v3771, 0.2
  %v4060 = vmul.f32 %v3772, 0.2
  %v4061 = vmul.f32 %v3773, 0.2
  %v4062 = vmul.f32 %v3774, 0.2
  %v4063 = vmul.f32 %v3775, 0.2
  %v4064 = vmul.f32 %v3776, 0.2
  %v4065 = vmul.f32 %v3777, 0.2
  %v4066 = vmul.f32 %v3778, 0.2
  %v4067 = vmul.f32 %v3779, 0.2
  %v4068 = vmul.f32 %v3780, 0.2
  %v4069 = vmul.f32 %v3781, 0.2
  %v4070 = vmul.f32 %v3782, 0.2
  %v4071 = vmul.f32 %v3783, 0.2
  %v4072 = vmul.f32 %v3784, 0.2
  %v4073 = vmul.f32 %v3785, 0.2
  %v4074 = vmul.f32 %v3786, 0.2
  %v4075 = vmul.f32 %v3787, 0.2
  %v4076 = vmul.f32 %v3788, 0.2
  %v4077 = vmul.f32 %v3789, 0.2
  %v4078 = vmul.f32 %v3790, 0.2
  %v4079 = vmul.f32 %v3791, 0.2
  %v4080 = vmul.f32 %v3792, 0.2
  %v4081 = vmul.f32 %v3793, 0.2
  %v4082 = vmul.f32 %v3794, 0.2
  %v4083 = vmul.f32 %v3795, 0.2
  %v4084 = vmul.f32 %v3796, 0.2
  %v4085 = vmul.f32 %v3797, 0.2
  %v4086 = vmul.f32 %v3798, 0.2
  %v4087 = vmul.f32 %v3799, 0.2
  %v4088 = vmul.f32 %v3800, 0.2
  %v4089 = vmul.f32 %v3801, 0.2
  %v4090 = vmul.f32 %v3802, 0.2
  %v4091 = vmul.f32 %v3803, 0.2
  %v4092 = vmul.f32 %v3804, 0.2
  %v4093 = vmul.f32 %v3805, 0.2
  %v4094 = vmul.f32 %v3806, 0.2
  %v4095 = vmul.f32 %v3807, 0.2
  %v4096 = vmul.f32 %v3808, 0.2
  %v4097 = vmul.f32 %v3809, 0.2
  %v4098 = vmul.f32 %v3810, 0.2
  %v4099 = vmul.f32 %v3811, 0.2
  %v4100 = vmul.f32 %v3812, 0.2
  %v4101 = vmul.f32 %v3813, 0.2
  %v4102 = vmul.f32 %v3814, 0.2
  %v4103 = vmul.f32 %v3815, 0.2
  %v4104 = vmul.f32 %v3816, 0.2
  %v4105 = vmul.f32 %v3817, 0.2
  %v4106 = vmul.f32 %v3818, 0.2
  %v4107 = vmul.f32 %v3819, 0.2
  %v4108 = vmul.f32 %v3820, 0.2
  %v4109 = vmul.f32 %v3821, 0.2
  %v4110 = vmul.f32 %v3822, 0.2
  %v4111 = vmul.f32 %v3823, 0.2
  %v4112 = vmul.f32 %v3824, 0.2
  %v4113 = vmul.f32 %v3825, 0.2
  %v4114 = vmul.f32 %v3826, 0.2
  %v4115 = vmul.f32 %v3827, 0.2
  %v4116 = vmul.f32 %v3828, 0.2
  %v4117 = vmul.f32 %v3829, 0.2
  %v4118 = vmul.f32 %v3830, 0.2
  %v4119 = vmul.f32 %v3831, 0.2
  %v4120 = vmul.f32 %v3832, 0.2
  %v4121 = vmul.f32 %v3833, 0.2
  %v4122 = vmul.f32 %v3834, 0.2
  %v4123 = vmul.f32 %v3835, 0.2
  %v4124 = vmul.f32 %v3836, 0.2
  %v4125 = vmul.f32 %v3837, 0.2
  %v4126 = vmul.f32 %v3838, 0.2
  %v4127 = vmul.f32 %v3839, 0.2
  %v4128 = vmul.f32 %v3840, 0.2
  %v4129 = vmul.f32 %v3841, 0.2
  %v4130 = vmul.f32 %v3842, 0.2
  %v4131 = vmul.f32 %v3843, 0.2
  %v4132 = vmul.f32 %v3844, 0.2
  %v4133 = vmul.f32 %v3845, 0.2
  %v4134 = vmul.f32 %v3846, 0.2
  %v4135 = vmul.f32 %v3847, 0.2
  %v4136 = vmul.f32 %v3848, 0.2
  %v4137 = vmul.f32 %v3849, 0.2
  %v4138 = vsel %vm3850, %v3706, %v3994
  %v4139 = vsel %vm3851, %v3707, %v3995
  %v4140 = vsel %vm3852, %v3708, %v3996
  %v4141 = vsel %vm3853, %v3709, %v3997
  %v4142 = vsel %vm3854, %v3710, %v3998
  %v4143 = vsel %vm3855, %v3711, %v3999
  %v4144 = vsel %vm3856, %v3712, %v4000
  %v4145 = vsel %vm3857, %v3713, %v4001
  %v4146 = vsel %vm3858, %v3714, %v4002
  %v4147 = vsel %vm3859, %v3715, %v4003
  %v4148 = vsel %vm3860, %v3716, %v4004
  %v4149 = vsel %vm3861, %v3717, %v4005
  %v4150 = vsel %vm3862, %v3718, %v4006
  %v4151 = vsel %vm3863, %v3719, %v4007
  %v4152 = vsel %vm3864, %v3720, %v4008
  %v4153 = vsel %vm3865, %v3721, %v4009
  %v4154 = vsel %vm3866, %v3722, %v4010
  %v4155 = vsel %vm3867, %v3723, %v4011
  %v4156 = vsel %vm3868, %v3724, %v4012
  %v4157 = vsel %vm3869, %v3725, %v4013
  %v4158 = vsel %vm3870, %v3726, %v4014
  %v4159 = vsel %vm3871, %v3727, %v4015
  %v4160 = vsel %vm3872, %v3728, %v4016
  %v4161 = vsel %vm3873, %v3729, %v4017
  %v4162 = vsel %vm3874, %v3730, %v4018
  %v4163 = vsel %vm3875, %v3731, %v4019
  %v4164 = vsel %vm3876, %v3732, %v4020
  %v4165 = vsel %vm3877, %v3733, %v4021
  %v4166 = vsel %vm3878, %v3734, %v4022
  %v4167 = vsel %vm3879, %v3735, %v4023
  %v4168 = vsel %vm3880, %v3736, %v4024
  %v4169 = vsel %vm3881, %v3737, %v4025
  %v4170 = vsel %vm3882, %v3738, %v4026
  %v4171 = vsel %vm3883, %v3739, %v4027
  %v4172 = vsel %vm3884, %v3740, %v4028
  %v4173 = vsel %vm3885, %v3741, %v4029
  %v4174 = vsel %vm3886, %v3742, %v4030
  %v4175 = vsel %vm3887, %v3743, %v4031
  %v4176 = vsel %vm3888, %v3744, %v4032
  %v4177 = vsel %vm3889, %v3745, %v4033
  %v4178 = vsel %vm3890, %v3746, %v4034
  %v4179 = vsel %vm3891, %v3747, %v4035
  %v4180 = vsel %vm3892, %v3748, %v4036
  %v4181 = vsel %vm3893, %v3749, %v4037
  %v4182 = vsel %vm3894, %v3750, %v4038
  %v4183 = vsel %vm3895, %v3751, %v4039
  %v4184 = vsel %vm3896, %v3752, %v4040
  %v4185 = vsel %vm3897, %v3753, %v4041
  %v4186 = vsel %vm3898, %v3754, %v4042
  %v4187 = vsel %vm3899, %v3755, %v4043
  %v4188 = vsel %vm3900, %v3756, %v4044
  %v4189 = vsel %vm3901, %v3757, %v4045
  %v4190 = vsel %vm3902, %v3758, %v4046
  %v4191 = vsel %vm3903, %v3759, %v4047
  %v4192 = vsel %vm3904, %v3760, %v4048
  %v4193 = vsel %vm3905, %v3761, %v4049
  %v4194 = vsel %vm3906, %v3762, %v4050
  %v4195 = vsel %vm3907, %v3763, %v4051
  %v4196 = vsel %vm3908, %v3764, %v4052
  %v4197 = vsel %vm3909, %v3765, %v4053
  %v4198 = vsel %vm3910, %v3766, %v4054
  %v4199 = vsel %vm3911, %v3767, %v4055
  %v4200 = vsel %vm3912, %v3768, %v4056
  %v4201 = vsel %vm3913, %v3769, %v4057
  %v4202 = vsel %vm3914, %v3770, %v4058
  %v4203 = vsel %vm3915, %v3771, %v4059
  %v4204 = vsel %vm3916, %v3772, %v4060
  %v4205 = vsel %vm3917, %v3773, %v4061
  %v4206 = vsel %vm3918, %v3774, %v4062
  %v4207 = vsel %vm3919, %v3775, %v4063
  %v4208 = vsel %vm3920, %v3776, %v4064
  %v4209 = vsel %vm3921, %v3777, %v4065
  %v4210 = vsel %vm3922, %v3778, %v4066
  %v4211 = vsel %vm3923, %v3779, %v4067
  %v4212 = vsel %vm3924, %v3780, %v4068
  %v4213 = vsel %vm3925, %v3781, %v4069
  %v4214 = vsel %vm3926, %v3782, %v4070
  %v4215 = vsel %vm3927, %v3783, %v4071
  %v4216 = vsel %vm3928, %v3784, %v4072
  %v4217 = vsel %vm3929, %v3785, %v4073
  %v4218 = vsel %vm3930, %v3786, %v4074
  %v4219 = vsel %vm3931, %v3787, %v4075
  %v4220 = vsel %vm3932, %v3788, %v4076
  %v4221 = vsel %vm3933, %v3789, %v4077
  %v4222 = vsel %vm3934, %v3790, %v4078
  %v4223 = vsel %vm3935, %v3791, %v4079
  %v4224 = vsel %vm3936, %v3792, %v4080
  %v4225 = vsel %vm3937, %v3793, %v4081
  %v4226 = vsel %vm3938, %v3794, %v4082
  %v4227 = vsel %vm3939, %v3795, %v4083
  %v4228 = vsel %vm3940, %v3796, %v4084
  %v4229 = vsel %vm3941, %v3797, %v4085
  %v4230 = vsel %vm3942, %v3798, %v4086
  %v4231 = vsel %vm3943, %v3799, %v4087
  %v4232 = vsel %vm3944, %v3800, %v4088
  %v4233 = vsel %vm3945, %v3801, %v4089
  %v4234 = vsel %vm3946, %v3802, %v4090
  %v4235 = vsel %vm3947, %v3803, %v4091
  %v4236 = vsel %vm3948, %v3804, %v4092
  %v4237 = vsel %vm3949, %v3805, %v4093
  %v4238 = vsel %vm3950, %v3806, %v4094
  %v4239 = vsel %vm3951, %v3807, %v4095
  %v4240 = vsel %vm3952, %v3808, %v4096
  %v4241 = vsel %vm3953, %v3809, %v4097
  %v4242 = vsel %vm3954, %v3810, %v4098
  %v4243 = vsel %vm3955, %v3811, %v4099
  %v4244 = vsel %vm3956, %v3812, %v4100
  %v4245 = vsel %vm3957, %v3813, %v4101
  %v4246 = vsel %vm3958, %v3814, %v4102
  %v4247 = vsel %vm3959, %v3815, %v4103
  %v4248 = vsel %vm3960, %v3816, %v4104
  %v4249 = vsel %vm3961, %v3817, %v4105
  %v4250 = vsel %vm3962, %v3818, %v4106
  %v4251 = vsel %vm3963, %v3819, %v4107
  %v4252 = vsel %vm3964, %v3820, %v4108
  %v4253 = vsel %vm3965, %v3821, %v4109
  %v4254 = vsel %vm3966, %v3822, %v4110
  %v4255 = vsel %vm3967, %v3823, %v4111
  %v4256 = vsel %vm3968, %v3824, %v4112
  %v4257 = vsel %vm3969, %v3825, %v4113
  %v4258 = vsel %vm3970, %v3826, %v4114
  %v4259 = vsel %vm3971, %v3827, %v4115
  %v4260 = vsel %vm3972, %v3828, %v4116
  %v4261 = vsel %vm3973, %v3829, %v4117
  %v4262 = vsel %vm3974, %v3830, %v4118
  %v4263 = vsel %vm3975, %v3831, %v4119
  %v4264 = vsel %vm3976, %v3832, %v4120
  %v4265 = vsel %vm3977, %v3833, %v4121
  %v4266 = vsel %vm3978, %v3834, %v4122
  %v4267 = vsel %vm3979, %v3835, %v4123
  %v4268 = vsel %vm3980, %v3836, %v4124
  %v4269 = vsel %vm3981, %v3837, %v4125
  %v4270 = vsel %vm3982, %v3838, %v4126
  %v4271 = vsel %vm3983, %v3839, %v4127
  %v4272 = vsel %vm3984, %v3840, %v4128
  %v4273 = vsel %vm3985, %v3841, %v4129
  %v4274 = vsel %vm3986, %v3842, %v4130
  %v4275 = vsel %vm3987, %v3843, %v4131
  %v4276 = vsel %vm3988, %v3844, %v4132
  %v4277 = vsel %vm3989, %v3845, %v4133
  %v4278 = vsel %vm3990, %v3846, %v4134
  %v4279 = vsel %vm3991, %v3847, %v4135
  %v4280 = vsel %vm3992, %v3848, %v4136
  %v4281 = vsel %vm3993, %v3849, %v4137
  %v4282 = vmul.f32 %v4138, %v2560
  %v4283 = vmul.f32 %v4139, %v2564
  %v4284 = vmul.f32 %v4140, %v2568
  %v4285 = vmul.f32 %v4141, %v2572
  %v4286 = vmul.f32 %v4142, %v2576
  %v4287 = vmul.f32 %v4143, %v2580
  %v4288 = vmul.f32 %v4144, %v2584
  %v4289 = vmul.f32 %v4145, %v2588
  %v4290 = vmul.f32 %v4146, %v2592
  %v4291 = vmul.f32 %v4147, %v2560
  %v4292 = vmul.f32 %v4148, %v2564
  %v4293 = vmul.f32 %v4149, %v2568
  %v4294 = vmul.f32 %v4150, %v2572
  %v4295 = vmul.f32 %v4151, %v2576
  %v4296 = vmul.f32 %v4152, %v2580
  %v4297 = vmul.f32 %v4153, %v2584
  %v4298 = vmul.f32 %v4154, %v2588
  %v4299 = vmul.f32 %v4155, %v2592
  %v4300 = vmul.f32 %v4156, %v2560
  %v4301 = vmul.f32 %v4157, %v2564
  %v4302 = vmul.f32 %v4158, %v2568
  %v4303 = vmul.f32 %v4159, %v2572
  %v4304 = vmul.f32 %v4160, %v2576
  %v4305 = vmul.f32 %v4161, %v2580
  %v4306 = vmul.f32 %v4162, %v2584
  %v4307 = vmul.f32 %v4163, %v2588
  %v4308 = vmul.f32 %v4164, %v2592
  %v4309 = vmul.f32 %v4165, %v2560
  %v4310 = vmul.f32 %v4166, %v2564
  %v4311 = vmul.f32 %v4167, %v2568
  %v4312 = vmul.f32 %v4168, %v2572
  %v4313 = vmul.f32 %v4169, %v2576
  %v4314 = vmul.f32 %v4170, %v2580
  %v4315 = vmul.f32 %v4171, %v2584
  %v4316 = vmul.f32 %v4172, %v2588
  %v4317 = vmul.f32 %v4173, %v2592
  %v4318 = vmul.f32 %v4174, %v2560
  %v4319 = vmul.f32 %v4175, %v2564
  %v4320 = vmul.f32 %v4176, %v2568
  %v4321 = vmul.f32 %v4177, %v2572
  %v4322 = vmul.f32 %v4178, %v2576
  %v4323 = vmul.f32 %v4179, %v2580
  %v4324 = vmul.f32 %v4180, %v2584
  %v4325 = vmul.f32 %v4181, %v2588
  %v4326 = vmul.f32 %v4182, %v2592
  %v4327 = vmul.f32 %v4183, %v2560
  %v4328 = vmul.f32 %v4184, %v2564
  %v4329 = vmul.f32 %v4185, %v2568
  %v4330 = vmul.f32 %v4186, %v2572
  %v4331 = vmul.f32 %v4187, %v2576
  %v4332 = vmul.f32 %v4188, %v2580
  %v4333 = vmul.f32 %v4189, %v2584
  %v4334 = vmul.f32 %v4190, %v2588
  %v4335 = vmul.f32 %v4191, %v2592
  %v4336 = vmul.f32 %v4192, %v2560
  %v4337 = vmul.f32 %v4193, %v2564
  %v4338 = vmul.f32 %v4194, %v2568
  %v4339 = vmul.f32 %v4195, %v2572
  %v4340 = vmul.f32 %v4196, %v2576
  %v4341 = vmul.f32 %v4197, %v2580
  %v4342 = vmul.f32 %v4198, %v2584
  %v4343 = vmul.f32 %v4199, %v2588
  %v4344 = vmul.f32 %v4200, %v2592
  %v4345 = vmul.f32 %v4201, %v2560
  %v4346 = vmul.f32 %v4202, %v2564
  %v4347 = vmul.f32 %v4203, %v2568
  %v4348 = vmul.f32 %v4204, %v2572
  %v4349 = vmul.f32 %v4205, %v2576
  %v4350 = vmul.f32 %v4206, %v2580
  %v4351 = vmul.f32 %v4207, %v2584
  %v4352 = vmul.f32 %v4208, %v2588
  %v4353 = vmul.f32 %v4209, %v2592
  %v4354 = vmul.f32 %v4210, %v2560
  %v4355 = vmul.f32 %v4211, %v2564
  %v4356 = vmul.f32 %v4212, %v2568
  %v4357 = vmul.f32 %v4213, %v2572
  %v4358 = vmul.f32 %v4214, %v2576
  %v4359 = vmul.f32 %v4215, %v2580
  %v4360 = vmul.f32 %v4216, %v2584
  %v4361 = vmul.f32 %v4217, %v2588
  %v4362 = vmul.f32 %v4218, %v2592
  %v4363 = vmul.f32 %v4219, %v2560
  %v4364 = vmul.f32 %v4220, %v2564
  %v4365 = vmul.f32 %v4221, %v2568
  %v4366 = vmul.f32 %v4222, %v2572
  %v4367 = vmul.f32 %v4223, %v2576
  %v4368 = vmul.f32 %v4224, %v2580
  %v4369 = vmul.f32 %v4225, %v2584
  %v4370 = vmul.f32 %v4226, %v2588
  %v4371 = vmul.f32 %v4227, %v2592
  %v4372 = vmul.f32 %v4228, %v2560
  %v4373 = vmul.f32 %v4229, %v2564
  %v4374 = vmul.f32 %v4230, %v2568
  %v4375 = vmul.f32 %v4231, %v2572
  %v4376 = vmul.f32 %v4232, %v2576
  %v4377 = vmul.f32 %v4233, %v2580
  %v4378 = vmul.f32 %v4234, %v2584
  %v4379 = vmul.f32 %v4235, %v2588
  %v4380 = vmul.f32 %v4236, %v2592
  %v4381 = vmul.f32 %v4237, %v2560
  %v4382 = vmul.f32 %v4238, %v2564
  %v4383 = vmul.f32 %v4239, %v2568
  %v4384 = vmul.f32 %v4240, %v2572
  %v4385 = vmul.f32 %v4241, %v2576
  %v4386 = vmul.f32 %v4242, %v2580
  %v4387 = vmul.f32 %v4243, %v2584
  %v4388 = vmul.f32 %v4244, %v2588
  %v4389 = vmul.f32 %v4245, %v2592
  %v4390 = vmul.f32 %v4246, %v2560
  %v4391 = vmul.f32 %v4247, %v2564
  %v4392 = vmul.f32 %v4248, %v2568
  %v4393 = vmul.f32 %v4249, %v2572
  %v4394 = vmul.f32 %v4250, %v2576
  %v4395 = vmul.f32 %v4251, %v2580
  %v4396 = vmul.f32 %v4252, %v2584
  %v4397 = vmul.f32 %v4253, %v2588
  %v4398 = vmul.f32 %v4254, %v2592
  %v4399 = vmul.f32 %v4255, %v2560
  %v4400 = vmul.f32 %v4256, %v2564
  %v4401 = vmul.f32 %v4257, %v2568
  %v4402 = vmul.f32 %v4258, %v2572
  %v4403 = vmul.f32 %v4259, %v2576
  %v4404 = vmul.f32 %v4260, %v2580
  %v4405 = vmul.f32 %v4261, %v2584
  %v4406 = vmul.f32 %v4262, %v2588
  %v4407 = vmul.f32 %v4263, %v2592
  %v4408 = vmul.f32 %v4264, %v2560
  %v4409 = vmul.f32 %v4265, %v2564
  %v4410 = vmul.f32 %v4266, %v2568
  %v4411 = vmul.f32 %v4267, %v2572
  %v4412 = vmul.f32 %v4268, %v2576
  %v4413 = vmul.f32 %v4269, %v2580
  %v4414 = vmul.f32 %v4270, %v2584
  %v4415 = vmul.f32 %v4271, %v2588
  %v4416 = vmul.f32 %v4272, %v2592
  %v4417 = vmul.f32 %v4273, %v2560
  %v4418 = vmul.f32 %v4274, %v2564
  %v4419 = vmul.f32 %v4275, %v2568
  %v4420 = vmul.f32 %v4276, %v2572
  %v4421 = vmul.f32 %v4277, %v2576
  %v4422 = vmul.f32 %v4278, %v2580
  %v4423 = vmul.f32 %v4279, %v2584
  %v4424 = vmul.f32 %v4280, %v2588
  %v4425 = vmul.f32 %v4281, %v2592
  %4426 = vst [vmem:[#allocation3] sm:$0xff] %v4282
  %4427 = vst [vmem:[#allocation3 + $0x8] sm:$0xff] %v4283
  %4428 = vst [vmem:[#allocation3 + $0x10] sm:$0xff] %v4284
  %4429 = vst [vmem:[#allocation3 + $0x18] sm:$0xff] %v4285
  %4430 = vst [vmem:[#allocation3 + $0x20] sm:$0xff] %v4286
  %4431 = vst [vmem:[#allocation3 + $0x28] sm:$0xff] %v4287
  %4432 = vst [vmem:[#allocation3 + $0x30] sm:$0xff] %v4288
  %4433 = vst [vmem:[#allocation3 + $0x38] sm:$0xff] %v4289
  %4434 = vst [vmem:[#allocation3 + $0x40] sm:$0xff] %v4290
  %4435 = vst [vmem:[#allocation3 + $0x48] sm:$0xff] %v4291
  %4436 = vst [vmem:[#allocation3 + $0x50] sm:$0xff] %v4292
  %4437 = vst [vmem:[#allocation3 + $0x58] sm:$0xff] %v4293
  %4438 = vst [vmem:[#allocation3 + $0x60] sm:$0xff] %v4294
  %4439 = vst [vmem:[#allocation3 + $0x68] sm:$0xff] %v4295
  %4440 = vst [vmem:[#allocation3 + $0x70] sm:$0xff] %v4296
  %4441 = vst [vmem:[#allocation3 + $0x78] sm:$0xff] %v4297
  %4442 = vst [vmem:[#allocation3 + $0x80] sm:$0xff] %v4298
  %4443 = vst [vmem:[#allocation3 + $0x88] sm:$0xff] %v4299
  %4444 = vst [vmem:[#allocation3 + $0x90] sm:$0xff] %v4300
  %4445 = vst [vmem:[#allocation3 + $0x98] sm:$0xff] %v4301
  %4446 = vst [vmem:[#allocation3 + $0xa0] sm:$0xff] %v4302
  %4447 = vst [vmem:[#allocation3 + $0xa8] sm:$0xff] %v4303
  %4448 = vst [vmem:[#allocation3 + $0xb0] sm:$0xff] %v4304
  %4449 = vst [vmem:[#allocation3 + $0xb8] sm:$0xff] %v4305
  %4450 = vst [vmem:[#allocation3 + $0xc0] sm:$0xff] %v4306
  %4451 = vst [vmem:[#allocation3 + $0xc8] sm:$0xff] %v4307
  %4452 = vst [vmem:[#allocation3 + $0xd0] sm:$0xff] %v4308
  %4453 = vst [vmem:[#allocation3 + $0xd8] sm:$0xff] %v4309
  %4454 = vst [vmem:[#allocation3 + $0xe0] sm:$0xff] %v4310
  %4455 = vst [vmem:[#allocation3 + $0xe8] sm:$0xff] %v4311
  %4456 = vst [vmem:[#allocation3 + $0xf0] sm:$0xff] %v4312
  %4457 = vst [vmem:[#allocation3 + $0xf8] sm:$0xff] %v4313
  %4458 = vst [vmem:[#allocation3 + $0x100] sm:$0xff] %v4314
  %4459 = vst [vmem:[#allocation3 + $0x108] sm:$0xff] %v4315
  %4460 = vst [vmem:[#allocation3 + $0x110] sm:$0xff] %v4316
  %4461 = vst [vmem:[#allocation3 + $0x118] sm:$0xff] %v4317
  %4462 = vst [vmem:[#allocation3 + $0x120] sm:$0xff] %v4318
  %4463 = vst [vmem:[#allocation3 + $0x128] sm:$0xff] %v4319
  %4464 = vst [vmem:[#allocation3 + $0x130] sm:$0xff] %v4320
  %4465 = vst [vmem:[#allocation3 + $0x138] sm:$0xff] %v4321
  %4466 = vst [vmem:[#allocation3 + $0x140] sm:$0xff] %v4322
  %4467 = vst [vmem:[#allocation3 + $0x148] sm:$0xff] %v4323
  %4468 = vst [vmem:[#allocation3 + $0x150] sm:$0xff] %v4324
  %4469 = vst [vmem:[#allocation3 + $0x158] sm:$0xff] %v4325
  %4470 = vst [vmem:[#allocation3 + $0x160] sm:$0xff] %v4326
  %4471 = vst [vmem:[#allocation3 + $0x168] sm:$0xff] %v4327
  %4472 = vst [vmem:[#allocation3 + $0x170] sm:$0xff] %v4328
  %4473 = vst [vmem:[#allocation3 + $0x178] sm:$0xff] %v4329
  %4474 = vst [vmem:[#allocation3 + $0x180] sm:$0xff] %v4330
  %4475 = vst [vmem:[#allocation3 + $0x188] sm:$0xff] %v4331
  %4476 = vst [vmem:[#allocation3 + $0x190] sm:$0xff] %v4332
  %4477 = vst [vmem:[#allocation3 + $0x198] sm:$0xff] %v4333
  %4478 = vst [vmem:[#allocation3 + $0x1a0] sm:$0xff] %v4334
  %4479 = vst [vmem:[#allocation3 + $0x1a8] sm:$0xff] %v4335
  %4480 = vst [vmem:[#allocation3 + $0x1b0] sm:$0xff] %v4336
  %4481 = vst [vmem:[#allocation3 + $0x1b8] sm:$0xff] %v4337
  %4482 = vst [vmem:[#allocation3 + $0x1c0] sm:$0xff] %v4338
  %4483 = vst [vmem:[#allocation3 + $0x1c8] sm:$0xff] %v4339
  %4484 = vst [vmem:[#allocation3 + $0x1d0] sm:$0xff] %v4340
  %4485 = vst [vmem:[#allocation3 + $0x1d8] sm:$0xff] %v4341
  %4486 = vst [vmem:[#allocation3 + $0x1e0] sm:$0xff] %v4342
  %4487 = vst [vmem:[#allocation3 + $0x1e8] sm:$0xff] %v4343
  %4488 = vst [vmem:[#allocation3 + $0x1f0] sm:$0xff] %v4344
  %4489 = vst [vmem:[#allocation3 + $0x1f8] sm:$0xff] %v4345
  %4490 = vst [vmem:[#allocation3 + $0x200] sm:$0xff] %v4346
  %4491 = vst [vmem:[#allocation3 + $0x208] sm:$0xff] %v4347
  %4492 = vst [vmem:[#allocation3 + $0x210] sm:$0xff] %v4348
  %4493 = vst [vmem:[#allocation3 + $0x218] sm:$0xff] %v4349
  %4494 = vst [vmem:[#allocation3 + $0x220] sm:$0xff] %v4350
  %4495 = vst [vmem:[#allocation3 + $0x228] sm:$0xff] %v4351
  %4496 = vst [vmem:[#allocation3 + $0x230] sm:$0xff] %v4352
  %4497 = vst [vmem:[#allocation3 + $0x238] sm:$0xff] %v4353
  %4498 = vst [vmem:[#allocation3 + $0x240] sm:$0xff] %v4354
  %4499 = vst [vmem:[#allocation3 + $0x248] sm:$0xff] %v4355
  %4500 = vst [vmem:[#allocation3 + $0x250] sm:$0xff] %v4356
  %4501 = vst [vmem:[#allocation3 + $0x258] sm:$0xff] %v4357
  %4502 = vst [vmem:[#allocation3 + $0x260] sm:$0xff] %v4358
  %4503 = vst [vmem:[#allocation3 + $0x268] sm:$0xff] %v4359
  %4504 = vst [vmem:[#allocation3 + $0x270] sm:$0xff] %v4360
  %4505 = vst [vmem:[#allocation3 + $0x278] sm:$0xff] %v4361
  %4506 = vst [vmem:[#allocation3 + $0x280] sm:$0xff] %v4362
  %4507 = vst [vmem:[#allocation3 + $0x288] sm:$0xff] %v4363
  %4508 = vst [vmem:[#allocation3 + $0x290] sm:$0xff] %v4364
  %4509 = vst [vmem:[#allocation3 + $0x298] sm:$0xff] %v4365
  %4510 = vst [vmem:[#allocation3 + $0x2a0] sm:$0xff] %v4366
  %4511 = vst [vmem:[#allocation3 + $0x2a8] sm:$0xff] %v4367
  %4512 = vst [vmem:[#allocation3 + $0x2b0] sm:$0xff] %v4368
  %4513 = vst [vmem:[#allocation3 + $0x2b8] sm:$0xff] %v4369
  %4514 = vst [vmem:[#allocation3 + $0x2c0] sm:$0xff] %v4370
  %4515 = vst [vmem:[#allocation3 + $0x2c8] sm:$0xff] %v4371
  %4516 = vst [vmem:[#allocation3 + $0x2d0] sm:$0xff] %v4372
  %4517 = vst [vmem:[#allocation3 + $0x2d8] sm:$0xff] %v4373
  %4518 = vst [vmem:[#allocation3 + $0x2e0] sm:$0xff] %v4374
  %4519 = vst [vmem:[#allocation3 + $0x2e8] sm:$0xff] %v4375
  %4520 = vst [vmem:[#allocation3 + $0x2f0] sm:$0xff] %v4376
  %4521 = vst [vmem:[#allocation3 + $0x2f8] sm:$0xff] %v4377
  %4522 = vst [vmem:[#allocation3 + $0x300] sm:$0xff] %v4378
  %4523 = vst [vmem:[#allocation3 + $0x308] sm:$0xff] %v4379
  %4524 = vst [vmem:[#allocation3 + $0x310] sm:$0xff] %v4380
  %4525 = vst [vmem:[#allocation3 + $0x318] sm:$0xff] %v4381
  %4526 = vst [vmem:[#allocation3 + $0x320] sm:$0xff] %v4382
  %4527 = vst [vmem:[#allocation3 + $0x328] sm:$0xff] %v4383
  %4528 = vst [vmem:[#allocation3 + $0x330] sm:$0xff] %v4384
  %4529 = vst [vmem:[#allocation3 + $0x338] sm:$0xff] %v4385
  %4530 = vst [vmem:[#allocation3 + $0x340] sm:$0xff] %v4386
  %4531 = vst [vmem:[#allocation3 + $0x348] sm:$0xff] %v4387
  %4532 = vst [vmem:[#allocation3 + $0x350] sm:$0xff] %v4388
  %4533 = vst [vmem:[#allocation3 + $0x358] sm:$0xff] %v4389
  %4534 = vst [vmem:[#allocation3 + $0x360] sm:$0xff] %v4390
  %4535 = vst [vmem:[#allocation3 + $0x368] sm:$0xff] %v4391
  %4536 = vst [vmem:[#allocation3 + $0x370] sm:$0xff] %v4392
  %4537 = vst [vmem:[#allocation3 + $0x378] sm:$0xff] %v4393
  %4538 = vst [vmem:[#allocation3 + $0x380] sm:$0xff] %v4394
  %4539 = vst [vmem:[#allocation3 + $0x388] sm:$0xff] %v4395
  %4540 = vst [vmem:[#allocation3 + $0x390] sm:$0xff] %v4396
  %4541 = vst [vmem:[#allocation3 + $0x398] sm:$0xff] %v4397
  %4542 = vst [vmem:[#allocation3 + $0x3a0] sm:$0xff] %v4398
  %4543 = vst [vmem:[#allocation3 + $0x3a8] sm:$0xff] %v4399
  %4544 = vst [vmem:[#allocation3 + $0x3b0] sm:$0xff] %v4400
  %4545 = vst [vmem:[#allocation3 + $0x3b8] sm:$0xff] %v4401
  %4546 = vst [vmem:[#allocation3 + $0x3c0] sm:$0xff] %v4402
  %4547 = vst [vmem:[#allocation3 + $0x3c8] sm:$0xff] %v4403
  %4548 = vst [vmem:[#allocation3 + $0x3d0] sm:$0xff] %v4404
  %4549 = vst [vmem:[#allocation3 + $0x3d8] sm:$0xff] %v4405
  %4550 = vst [vmem:[#allocation3 + $0x3e0] sm:$0xff] %v4406
  %4551 = vst [vmem:[#allocation3 + $0x3e8] sm:$0xff] %v4407
  %4552 = vst [vmem:[#allocation3 + $0x3f0] sm:$0xff] %v4408
  %4553 = vst [vmem:[#allocation3 + $0x3f8] sm:$0xff] %v4409
  %4554 = vst [vmem:[#allocation3 + $0x400] sm:$0xff] %v4410
  %4555 = vst [vmem:[#allocation3 + $0x408] sm:$0xff] %v4411
  %4556 = vst [vmem:[#allocation3 + $0x410] sm:$0xff] %v4412
  %4557 = vst [vmem:[#allocation3 + $0x418] sm:$0xff] %v4413
  %4558 = vst [vmem:[#allocation3 + $0x420] sm:$0xff] %v4414
  %4559 = vst [vmem:[#allocation3 + $0x428] sm:$0xff] %v4415
  %4560 = vst [vmem:[#allocation3 + $0x430] sm:$0xff] %v4416
  %4561 = vst [vmem:[#allocation3 + $0x438] sm:$0xff] %v4417
  %4562 = vst [vmem:[#allocation3 + $0x440] sm:$0xff] %v4418
  %4563 = vst [vmem:[#allocation3 + $0x448] sm:$0xff] %v4419
  %4564 = vst [vmem:[#allocation3 + $0x450] sm:$0xff] %v4420
  %4565 = vst [vmem:[#allocation3 + $0x458] sm:$0xff] %v4421
  %4566 = vst [vmem:[#allocation3 + $0x460] sm:$0xff] %v4422
  %4567 = vst [vmem:[#allocation3 + $0x468] sm:$0xff] %v4423
  %4568 = vst [vmem:[#allocation3 + $0x470] sm:$0xff] %v4424
  %4569 = vst [vmem:[#allocation3 + $0x478] sm:$0xff] %v4425
  %v4570 = vld [vmem:[%s4] sm:$0xff]
  %v4571 = vld [vmem:[%s4 + $0x8] sm:$0xff]
  %v4572 = vld [vmem:[%s4 + $0x10] sm:$0xff]
  %v4573 = vld [vmem:[%s4 + $0x18] sm:$0xff]
  %v4574 = vld [vmem:[%s4 + $0x20] sm:$0xff]
  %v4575 = vld [vmem:[%s4 + $0x28] sm:$0xff]
  %v4576 = vld [vmem:[%s4 + $0x30] sm:$0xff]
  %v4577 = vld [vmem:[%s4 + $0x38] sm:$0xff]
  %v4578 = vld [vmem:[%s4 + $0x40] sm:$0xff]
  %v4579 = vld [vmem:[%s4 + $0x48] sm:$0xff]
  %v4580 = vld [vmem:[%s4 + $0x50] sm:$0xff]
  %v4581 = vld [vmem:[%s4 + $0x58] sm:$0xff]
  %v4582 = vld [vmem:[%s4 + $0x60] sm:$0xff]
  %v4583 = vld [vmem:[%s4 + $0x68] sm:$0xff]
  %v4584 = vld [vmem:[%s4 + $0x70] sm:$0xff]
  %v4585 = vld [vmem:[%s4 + $0x78] sm:$0xff]
  %v4586 = vld [vmem:[%s4 + $0x80] sm:$0xff]
  %v4587 = vld [vmem:[%s4 + $0x88] sm:$0xff]
  %v4588 = vld [vmem:[%s4 + $0x90] sm:$0xff]
  %v4589 = vld [vmem:[%s4 + $0x98] sm:$0xff]
  %v4590 = vld [vmem:[%s4 + $0xa0] sm:$0xff]
  %v4591 = vld [vmem:[%s4 + $0xa8] sm:$0xff]
  %v4592 = vld [vmem:[%s4 + $0xb0] sm:$0xff]
  %v4593 = vld [vmem:[%s4 + $0xb8] sm:$0xff]
  %v4594 = vld [vmem:[%s4 + $0xc0] sm:$0xff]
  %v4595 = vld [vmem:[#allocation3] sm:$0xff]
  %v4596 = vld [vmem:[#allocation3 + $0x8] sm:$0xff]
  %v4597 = vld [vmem:[#allocation3 + $0x10] sm:$0xff]
  %v4598 = vld [vmem:[#allocation3 + $0x18] sm:$0xff]
  %v4599 = vld [vmem:[#allocation3 + $0x20] sm:$0xff]
  %v4600 = vld [vmem:[#allocation3 + $0x28] sm:$0xff]
  %v4601 = vld [vmem:[#allocation3 + $0x30] sm:$0xff]
  %v4602 = vld [vmem:[#allocation3 + $0x38] sm:$0xff]
  %v4603 = vld [vmem:[#allocation3 + $0x40] sm:$0xff]
  %v4604 = vld [vmem:[#allocation3 + $0x48] sm:$0xff]
  %v4605 = vld [vmem:[#allocation3 + $0x50] sm:$0xff]
  %v4606 = vld [vmem:[#allocation3 + $0x58] sm:$0xff]
  %v4607 = vld [vmem:[#allocation3 + $0x60] sm:$0xff]
  %v4608 = vld [vmem:[#allocation3 + $0x68] sm:$0xff]
  %v4609 = vld [vmem:[#allocation3 + $0x70] sm:$0xff]
  %v4610 = vld [vmem:[#allocation3 + $0x78] sm:$0xff]
  %v4611 = vld [vmem:[#allocation3 + $0x80] sm:$0xff]
  %v4612 = vld [vmem:[#allocation3 + $0x88] sm:$0xff]
  %v4613 = vld [vmem:[#allocation3 + $0x90] sm:$0xff]
  %v4614 = vld [vmem:[#allocation3 + $0x98] sm:$0xff]
  %v4615 = vld [vmem:[#allocation3 + $0xa0] sm:$0xff]
  %v4616 = vld [vmem:[#allocation3 + $0xa8] sm:$0xff]
  %v4617 = vld [vmem:[#allocation3 + $0xb0] sm:$0xff]
  %v4618 = vld [vmem:[#allocation3 + $0xb8] sm:$0xff]
  %v4619 = vld [vmem:[#allocation3 + $0xc0] sm:$0xff]
  %v4620 = vld [vmem:[#allocation3 + $0xc8] sm:$0xff]
  %v4621 = vld [vmem:[#allocation3 + $0xd0] sm:$0xff]
  %v4622 = vld [vmem:[#allocation3 + $0xd8] sm:$0xff]
  %v4623 = vld [vmem:[#allocation3 + $0xe0] sm:$0xff]
  %v4624 = vld [vmem:[#allocation3 + $0xe8] sm:$0xff]
  %v4625 = vld [vmem:[#allocation3 + $0xf0] sm:$0xff]
  %v4626 = vld [vmem:[#allocation3 + $0xf8] sm:$0xff]
  %v4627 = vld [vmem:[#allocation3 + $0x100] sm:$0xff]
  %v4628 = vld [vmem:[#allocation3 + $0x108] sm:$0xff]
  %v4629 = vld [vmem:[#allocation3 + $0x110] sm:$0xff]
  %v4630 = vld [vmem:[#allocation3 + $0x118] sm:$0xff]
  %v4631 = vld [vmem:[#allocation3 + $0x120] sm:$0xff]
  %v4632 = vld [vmem:[#allocation3 + $0x128] sm:$0xff]
  %v4633 = vld [vmem:[#allocation3 + $0x130] sm:$0xff]
  %v4634 = vld [vmem:[#allocation3 + $0x138] sm:$0xff]
  %v4635 = vld [vmem:[#allocation3 + $0x140] sm:$0xff]
  %v4636 = vld [vmem:[#allocation3 + $0x148] sm:$0xff]
  %v4637 = vld [vmem:[#allocation3 + $0x150] sm:$0xff]
  %v4638 = vld [vmem:[#allocation3 + $0x158] sm:$0xff]
  %v4639 = vld [vmem:[#allocation3 + $0x160] sm:$0xff]
  %v4640 = vld [vmem:[#allocation3 + $0x168] sm:$0xff]
  %v4641 = vld [vmem:[#allocation3 + $0x170] sm:$0xff]
  %v4642 = vld [vmem:[#allocation3 + $0x178] sm:$0xff]
  %v4643 = vld [vmem:[#allocation3 + $0x180] sm:$0xff]
  %v4644 = vld [vmem:[#allocation3 + $0x188] sm:$0xff]
  %v4645 = vld [vmem:[#allocation3 + $0x190] sm:$0xff]
  %v4646 = vld [vmem:[#allocation3 + $0x198] sm:$0xff]
  %v4647 = vld [vmem:[#allocation3 + $0x1a0] sm:$0xff]
  %v4648 = vld [vmem:[#allocation3 + $0x1a8] sm:$0xff]
  %v4649 = vld [vmem:[#allocation3 + $0x1b0] sm:$0xff]
  %v4650 = vld [vmem:[#allocation3 + $0x1b8] sm:$0xff]
  %v4651 = vld [vmem:[#allocation3 + $0x1c0] sm:$0xff]
  %v4652 = vld [vmem:[#allocation3 + $0x1c8] sm:$0xff]
  %v4653 = vld [vmem:[#allocation3 + $0x1d0] sm:$0xff]
  %v4654 = vld [vmem:[#allocation3 + $0x1d8] sm:$0xff]
  %v4655 = vld [vmem:[#allocation3 + $0x1e0] sm:$0xff]
  %v4656 = vld [vmem:[#allocation3 + $0x1e8] sm:$0xff]
  %v4657 = vld [vmem:[#allocation3 + $0x1f0] sm:$0xff]
  %v4658 = vld [vmem:[#allocation3 + $0x1f8] sm:$0xff]
  %v4659 = vld [vmem:[#allocation3 + $0x200] sm:$0xff]
  %v4660 = vld [vmem:[#allocation3 + $0x208] sm:$0xff]
  %v4661 = vld [vmem:[#allocation3 + $0x210] sm:$0xff]
  %v4662 = vld [vmem:[#allocation3 + $0x218] sm:$0xff]
  %v4663 = vld [vmem:[#allocation3 + $0x220] sm:$0xff]
  %v4664 = vld [vmem:[#allocation3 + $0x228] sm:$0xff]
  %v4665 = vld [vmem:[#allocation3 + $0x230] sm:$0xff]
  %v4666 = vld [vmem:[#allocation3 + $0x238] sm:$0xff]
  %v4667 = vld [vmem:[#allocation3 + $0x240] sm:$0xff]
  %v4668 = vld [vmem:[#allocation3 + $0x248] sm:$0xff]
  %v4669 = vld [vmem:[#allocation3 + $0x250] sm:$0xff]
  %v4670 = vld [vmem:[#allocation3 + $0x258] sm:$0xff]
  %v4671 = vld [vmem:[#allocation3 + $0x260] sm:$0xff]
  %v4672 = vld [vmem:[#allocation3 + $0x268] sm:$0xff]
  %v4673 = vld [vmem:[#allocation3 + $0x270] sm:$0xff]
  %v4674 = vld [vmem:[#allocation3 + $0x278] sm:$0xff]
  %v4675 = vld [vmem:[#allocation3 + $0x280] sm:$0xff]
  %v4676 = vld [vmem:[#allocation3 + $0x288] sm:$0xff]
  %v4677 = vld [vmem:[#allocation3 + $0x290] sm:$0xff]
  %v4678 = vld [vmem:[#allocation3 + $0x298] sm:$0xff]
  %v4679 = vld [vmem:[#allocation3 + $0x2a0] sm:$0xff]
  %v4680 = vld [vmem:[#allocation3 + $0x2a8] sm:$0xff]
  %v4681 = vld [vmem:[#allocation3 + $0x2b0] sm:$0xff]
  %v4682 = vld [vmem:[#allocation3 + $0x2b8] sm:$0xff]
  %v4683 = vld [vmem:[#allocation3 + $0x2c0] sm:$0xff]
  %v4684 = vld [vmem:[#allocation3 + $0x2c8] sm:$0xff]
  %v4685 = vld [vmem:[#allocation3 + $0x2d0] sm:$0xff]
  %v4686 = vld [vmem:[#allocation3 + $0x2d8] sm:$0xff]
  %v4687 = vld [vmem:[#allocation3 + $0x2e0] sm:$0xff]
  %v4688 = vld [vmem:[#allocation3 + $0x2e8] sm:$0xff]
  %v4689 = vld [vmem:[#allocation3 + $0x2f0] sm:$0xff]
  %v4690 = vld [vmem:[#allocation3 + $0x2f8] sm:$0xff]
  %v4691 = vld [vmem:[#allocation3 + $0x300] sm:$0xff]
  %v4692 = vld [vmem:[#allocation3 + $0x308] sm:$0xff]
  %v4693 = vld [vmem:[#allocation3 + $0x310] sm:$0xff]
  %v4694 = vld [vmem:[#allocation3 + $0x318] sm:$0xff]
  %v4695 = vld [vmem:[#allocation3 + $0x320] sm:$0xff]
  %v4696 = vld [vmem:[#allocation3 + $0x328] sm:$0xff]
  %v4697 = vld [vmem:[#allocation3 + $0x330] sm:$0xff]
  %v4698 = vld [vmem:[#allocation3 + $0x338] sm:$0xff]
  %v4699 = vld [vmem:[#allocation3 + $0x340] sm:$0xff]
  %v4700 = vld [vmem:[#allocation3 + $0x348] sm:$0xff]
  %v4701 = vld [vmem:[#allocation3 + $0x350] sm:$0xff]
  %v4702 = vld [vmem:[#allocation3 + $0x358] sm:$0xff]
  %v4703 = vld [vmem:[#allocation3 + $0x360] sm:$0xff]
  %v4704 = vld [vmem:[#allocation3 + $0x368] sm:$0xff]
  %v4705 = vld [vmem:[#allocation3 + $0x370] sm:$0xff]
  %v4706 = vld [vmem:[#allocation3 + $0x378] sm:$0xff]
  %v4707 = vld [vmem:[#allocation3 + $0x380] sm:$0xff]
  %v4708 = vld [vmem:[#allocation3 + $0x388] sm:$0xff]
  %v4709 = vld [vmem:[#allocation3 + $0x390] sm:$0xff]
  %v4710 = vld [vmem:[#allocation3 + $0x398] sm:$0xff]
  %v4711 = vld [vmem:[#allocation3 + $0x3a0] sm:$0xff]
  %v4712 = vld [vmem:[#allocation3 + $0x3a8] sm:$0xff]
  %v4713 = vld [vmem:[#allocation3 + $0x3b0] sm:$0xff]
  %v4714 = vld [vmem:[#allocation3 + $0x3b8] sm:$0xff]
  %v4715 = vld [vmem:[#allocation3 + $0x3c0] sm:$0xff]
  %v4716 = vld [vmem:[#allocation3 + $0x3c8] sm:$0xff]
  %v4717 = vld [vmem:[#allocation3 + $0x3d0] sm:$0xff]
  %v4718 = vld [vmem:[#allocation3 + $0x3d8] sm:$0xff]
  %v4719 = vld [vmem:[#allocation3 + $0x3e0] sm:$0xff]
  %v4720 = vld [vmem:[#allocation3 + $0x3e8] sm:$0xff]
  %v4721 = vld [vmem:[#allocation3 + $0x3f0] sm:$0xff]
  %v4722 = vld [vmem:[#allocation3 + $0x3f8] sm:$0xff]
  %v4723 = vld [vmem:[#allocation3 + $0x400] sm:$0xff]
  %v4724 = vld [vmem:[#allocation3 + $0x408] sm:$0xff]
  %v4725 = vld [vmem:[#allocation3 + $0x410] sm:$0xff]
  %v4726 = vld [vmem:[#allocation3 + $0x418] sm:$0xff]
  %v4727 = vld [vmem:[#allocation3 + $0x420] sm:$0xff]
  %v4728 = vld [vmem:[#allocation3 + $0x428] sm:$0xff]
  %v4729 = vld [vmem:[#allocation3 + $0x430] sm:$0xff]
  %v4730 = vld [vmem:[#allocation3 + $0x438] sm:$0xff]
  %v4731 = vld [vmem:[#allocation3 + $0x440] sm:$0xff]
  %v4732 = vld [vmem:[#allocation3 + $0x448] sm:$0xff]
  %v4733 = vld [vmem:[#allocation3 + $0x450] sm:$0xff]
  %v4734 = vld [vmem:[#allocation3 + $0x458] sm:$0xff]
  %v4735 = vld [vmem:[#allocation3 + $0x460] sm:$0xff]
  %v4736 = vld [vmem:[#allocation3 + $0x468] sm:$0xff]
  %v4737 = vld [vmem:[#allocation3 + $0x470] sm:$0xff]
  %v4738 = vld [vmem:[#allocation3 + $0x478] sm:$0xff]
  %4739 = vmatprep.subr.mxu0 %v4596
  %4740 = vmatpush1.msra.mxu0 %v4595
  %4741 = vmatprep.subr.mxu0 %v4605
  %4742 = vmatpush1.msra.mxu0 %v4604
  %4743 = vmatprep.subr.mxu0 %v4614
  %4744 = vmatpush1.msra.mxu0 %v4613
  %4745 = vmatprep.subr.mxu0 %v4623
  %4746 = vmatpush1.msra.mxu0 %v4622
  %4747 = vmatprep.subr.mxu0 %v4632
  %4748 = vmatpush1.msra.mxu0 %v4631
  %4749 = vmatprep.subr.mxu0 %v4641
  %4750 = vmatpush1.msra.mxu0 %v4640
  %4751 = vmatprep.subr.mxu0 %v4650
  %4752 = vmatpush1.msra.mxu0 %v4649
  %4753 = vmatprep.subr.mxu0 %v4659
  %4754 = vmatpush1.msra.mxu0 %v4658
  %4755 = vmatprep.subr.mxu0 %v4668
  %4756 = vmatpush1.msra.mxu0 %v4667
  %4757 = vmatprep.subr.mxu0 %v4677
  %4758 = vmatpush1.msra.mxu0 %v4676
  %4759 = vmatprep.subr.mxu0 %v4686
  %4760 = vmatpush1.msra.mxu0 %v4685
  %4761 = vmatprep.subr.mxu0 %v4695
  %4762 = vmatpush1.msra.mxu0 %v4694
  %4763 = vmatprep.subr.mxu0 %v4704
  %4764 = vmatpush1.msra.mxu0 %v4703
  %4765 = vmatprep.subr.mxu0 %v4713
  %4766 = vmatpush1.msra.mxu0 %v4712
  %4767 = vmatprep.subr.mxu0 %v4722
  %4768 = vmatpush1.msra.mxu0 %v4721
  %4769 = vmatprep.subr.mxu0 %v4731
  %4770 = vmatpush1.msra.mxu0 %v4730
  %4771 = vmatprep.subr.mxu0 0.0
  %4772 = vmatpush1.msra.mxu0 0.0
  %4773 = vmatprep.subr.mxu0 0.0
  %4774 = vmatpush1.msra.mxu0 0.0
  %4775 = vmatprep.subr.mxu0 0.0
  %4776 = vmatpush1.msra.mxu0 0.0
  %4777 = vmatprep.subr.mxu0 0.0
  %4778 = vmatpush1.msra.mxu0 0.0
  %4779 = vmatprep.subr.mxu0 0.0
  %4780 = vmatpush1.msra.mxu0 0.0
  %4781 = vmatprep.subr.mxu0 0.0
  %4782 = vmatpush1.msra.mxu0 0.0
  %4783 = vmatprep.subr.mxu0 0.0
  %4784 = vmatpush1.msra.mxu0 0.0
  %4785 = vmatprep.subr.mxu0 0.0
  %4786 = vmatpush1.msra.mxu0 0.0
  %4787 = vmatprep.subr.mxu0 0.0
  %4788 = vmatpush1.msra.mxu0 0.0
  %4789 = vmatprep.subr.mxu0 0.0
  %4790 = vmatpush1.msra.mxu0 0.0
  %4791 = vmatprep.subr.mxu0 0.0
  %4792 = vmatpush1.msra.mxu0 0.0
  %4793 = vmatprep.subr.mxu0 0.0
  %4794 = vmatpush1.msra.mxu0 0.0
  %4795 = vmatprep.subr.mxu0 0.0
  %4796 = vmatpush1.msra.mxu0 0.0
  %4797 = vmatprep.subr.mxu0 0.0
  %4798 = vmatpush1.msra.mxu0 0.0
  %4799 = vmatprep.subr.mxu0 0.0
  %4800 = vmatpush1.msra.mxu0 0.0
  %4801 = vmatprep.subr.mxu0 0.0
  %4802 = vmatpush1.msra.mxu0 0.0
  %4803 = vmatprep.mubr.f32.mxu0 0.0
  %4804 = vmatmul.mubr.f32.gmra.mrb[0].mxu0 %v4570
  %v4805 = vpop.f32.mrb[0].mxu0
  %v4806 = vadd.f32 0.0, %v4805
  %v4807 = vpop.f32.mrb[0].mxu0
  %v4808 = vadd.f32 0.0, %v4807
  %4809 = vmatprep.mubr.f32.mxu0 0.0
  %4810 = vmatmul.mubr.f32.gmra.mrb[0].mxu0 %v4571
  %v4811 = vpop.f32.mrb[0].mxu0
  %v4812 = vadd.f32 0.0, %v4811
  %v4813 = vpop.f32.mrb[0].mxu0
  %v4814 = vadd.f32 0.0, %v4813
  %4815 = vmatprep.mubr.f32.mxu0 0.0
  %4816 = vmatmul.mubr.f32.gmra.mrb[0].mxu0 %v4572
  %v4817 = vpop.f32.mrb[0].mxu0
  %v4818 = vadd.f32 0.0, %v4817
  %v4819 = vpop.f32.mrb[0].mxu0
  %v4820 = vadd.f32 0.0, %v4819
  %4821 = vmatprep.mubr.f32.mxu0 0.0
  %4822 = vmatmul.mubr.f32.gmra.mrb[0].mxu0 %v4573
  %v4823 = vpop.f32.mrb[0].mxu0
  %v4824 = vadd.f32 0.0, %v4823
  %v4825 = vpop.f32.mrb[0].mxu0
  %v4826 = vadd.f32 0.0, %v4825
  %4827 = vmatprep.mubr.f32.mxu0 0.0
  %4828 = vmatmul.mubr.f32.gmra.mrb[0].mxu0 %v4574
  %v4829 = vpop.f32.mrb[0].mxu0
  %v4830 = vadd.f32 0.0, %v4829
  %v4831 = vpop.f32.mrb[0].mxu0
  %v4832 = vadd.f32 0.0, %v4831
  %4833 = vmatprep.mubr.f32.mxu0 0.0
  %4834 = vmatmul.mubr.f32.gmra.mrb[0].mxu0 %v4575
  %v4835 = vpop.f32.mrb[0].mxu0
  %v4836 = vadd.f32 0.0, %v4835
  %v4837 = vpop.f32.mrb[0].mxu0
  %v4838 = vadd.f32 0.0, %v4837
  %4839 = vmatprep.mubr.f32.mxu0 0.0
  %4840 = vmatmul.mubr.f32.gmra.mrb[0].mxu0 %v4576
  %v4841 = vpop.f32.mrb[0].mxu0
  %v4842 = vadd.f32 0.0, %v4841
  %v4843 = vpop.f32.mrb[0].mxu0
  %v4844 = vadd.f32 0.0, %v4843
  %4845 = vmatprep.mubr.f32.mxu0 0.0
  %4846 = vmatmul.mubr.f32.gmra.mrb[0].mxu0 %v4577
  %v4847 = vpop.f32.mrb[0].mxu0
  %v4848 = vadd.f32 0.0, %v4847
  %v4849 = vpop.f32.mrb[0].mxu0
  %v4850 = vadd.f32 0.0, %v4849
  %4851 = vmatprep.mubr.f32.mxu0 0.0
  %4852 = vmatmul.mubr.f32.gmra.mrb[0].mxu0 %v4578
  %v4853 = vpop.f32.mrb[0].mxu0
  %v4854 = vadd.f32 0.0, %v4853
  %v4855 = vpop.f32.mrb[0].mxu0
  %v4856 = vadd.f32 0.0, %v4855
  %4857 = vmatprep.mubr.f32.mxu0 0.0
  %4858 = vmatmul.mubr.f32.gmra.mrb[0].mxu0 %v4579
  %v4859 = vpop.f32.mrb[0].mxu0
  %v4860 = vadd.f32 0.0, %v4859
  %v4861 = vpop.f32.mrb[0].mxu0
  %v4862 = vadd.f32 0.0, %v4861
  %4863 = vmatprep.mubr.f32.mxu0 0.0
  %4864 = vmatmul.mubr.f32.gmra.mrb[0].mxu0 %v4580
  %v4865 = vpop.f32.mrb[0].mxu0
  %v4866 = vadd.f32 0.0, %v4865
  %v4867 = vpop.f32.mrb[0].mxu0
  %v4868 = vadd.f32 0.0, %v4867
  %4869 = vmatprep.mubr.f32.mxu0 0.0
  %4870 = vmatmul.mubr.f32.gmra.mrb[0].mxu0 %v4581
  %v4871 = vpop.f32.mrb[0].mxu0
  %v4872 = vadd.f32 0.0, %v4871
  %v4873 = vpop.f32.mrb[0].mxu0
  %v4874 = vadd.f32 0.0, %v4873
  %4875 = vmatprep.mubr.f32.mxu0 0.0
  %4876 = vmatmul.mubr.f32.gmra.mrb[0].mxu0 %v4582
  %v4877 = vpop.f32.mrb[0].mxu0
  %v4878 = vadd.f32 0.0, %v4877
  %v4879 = vpop.f32.mrb[0].mxu0
  %v4880 = vadd.f32 0.0, %v4879
  %4881 = vmatprep.mubr.f32.mxu0 0.0
  %4882 = vmatmul.mubr.f32.gmra.mrb[0].mxu0 %v4583
  %v4883 = vpop.f32.mrb[0].mxu0
  %v4884 = vadd.f32 0.0, %v4883
  %v4885 = vpop.f32.mrb[0].mxu0
  %v4886 = vadd.f32 0.0, %v4885
  %4887 = vmatprep.mubr.f32.mxu0 0.0
  %4888 = vmatmul.mubr.f32.gmra.mrb[0].mxu0 %v4584
  %v4889 = vpop.f32.mrb[0].mxu0
  %v4890 = vadd.f32 0.0, %v4889
  %v4891 = vpop.f32.mrb[0].mxu0
  %v4892 = vadd.f32 0.0, %v4891
  %4893 = vmatprep.mubr.f32.mxu0 0.0
  %4894 = vmatmul.mubr.f32.gmra.mrb[0].mxu0 %v4585
  %v4895 = vpop.f32.mrb[0].mxu0
  %v4896 = vadd.f32 0.0, %v4895
  %v4897 = vpop.f32.mrb[0].mxu0
  %v4898 = vadd.f32 0.0, %v4897
  %4899 = vmatprep.mubr.f32.mxu0 0.0
  %4900 = vmatmul.mubr.f32.gmra.mrb[0].mxu0 %v4586
  %v4901 = vpop.f32.mrb[0].mxu0
  %v4902 = vadd.f32 0.0, %v4901
  %v4903 = vpop.f32.mrb[0].mxu0
  %v4904 = vadd.f32 0.0, %v4903
  %4905 = vmatprep.mubr.f32.mxu0 0.0
  %4906 = vmatmul.mubr.f32.gmra.mrb[0].mxu0 %v4587
  %v4907 = vpop.f32.mrb[0].mxu0
  %v4908 = vadd.f32 0.0, %v4907
  %v4909 = vpop.f32.mrb[0].mxu0
  %v4910 = vadd.f32 0.0, %v4909
  %4911 = vmatprep.mubr.f32.mxu0 0.0
  %4912 = vmatmul.mubr.f32.gmra.mrb[0].mxu0 %v4588
  %v4913 = vpop.f32.mrb[0].mxu0
  %v4914 = vadd.f32 0.0, %v4913
  %v4915 = vpop.f32.mrb[0].mxu0
  %v4916 = vadd.f32 0.0, %v4915
  %4917 = vmatprep.mubr.f32.mxu0 0.0
  %4918 = vmatmul.mubr.f32.gmra.mrb[0].mxu0 %v4589
  %v4919 = vpop.f32.mrb[0].mxu0
  %v4920 = vadd.f32 0.0, %v4919
  %v4921 = vpop.f32.mrb[0].mxu0
  %v4922 = vadd.f32 0.0, %v4921
  %4923 = vmatprep.mubr.f32.mxu0 0.0
  %4924 = vmatmul.mubr.f32.gmra.mrb[0].mxu0 %v4590
  %v4925 = vpop.f32.mrb[0].mxu0
  %v4926 = vadd.f32 0.0, %v4925
  %v4927 = vpop.f32.mrb[0].mxu0
  %v4928 = vadd.f32 0.0, %v4927
  %4929 = vmatprep.mubr.f32.mxu0 0.0
  %4930 = vmatmul.mubr.f32.gmra.mrb[0].mxu0 %v4591
  %v4931 = vpop.f32.mrb[0].mxu0
  %v4932 = vadd.f32 0.0, %v4931
  %v4933 = vpop.f32.mrb[0].mxu0
  %v4934 = vadd.f32 0.0, %v4933
  %4935 = vmatprep.mubr.f32.mxu0 0.0
  %4936 = vmatmul.mubr.f32.gmra.mrb[0].mxu0 %v4592
  %v4937 = vpop.f32.mrb[0].mxu0
  %v4938 = vadd.f32 0.0, %v4937
  %v4939 = vpop.f32.mrb[0].mxu0
  %v4940 = vadd.f32 0.0, %v4939
  %4941 = vmatprep.mubr.f32.mxu0 0.0
  %4942 = vmatmul.mubr.f32.gmra.mrb[0].mxu0 %v4593
  %v4943 = vpop.f32.mrb[0].mxu0
  %v4944 = vadd.f32 0.0, %v4943
  %v4945 = vpop.f32.mrb[0].mxu0
  %v4946 = vadd.f32 0.0, %v4945
  %4947 = vmatprep.mubr.f32.mxu0 0.0
  %4948 = vmatmul.mubr.f32.gmra.mrb[0].mxu0 %v4594
  %v4949 = vpop.f32.mrb[0].mxu0
  %v4950 = vadd.f32 0.0, %v4949
  %v4951 = vpop.f32.mrb[0].mxu0
  %v4952 = vadd.f32 0.0, %v4951
  %4953 = vdwg.mxu0
  %4954 = vmatprep.subr.mxu0 %v4598
  %4955 = vmatpush1.msra.mxu0 %v4597
  %4956 = vmatprep.subr.mxu0 %v4607
  %4957 = vmatpush1.msra.mxu0 %v4606
  %4958 = vmatprep.subr.mxu0 %v4616
  %4959 = vmatpush1.msra.mxu0 %v4615
  %4960 = vmatprep.subr.mxu0 %v4625
  %4961 = vmatpush1.msra.mxu0 %v4624
  %4962 = vmatprep.subr.mxu0 %v4634
  %4963 = vmatpush1.msra.mxu0 %v4633
  %4964 = vmatprep.subr.mxu0 %v4643
  %4965 = vmatpush1.msra.mxu0 %v4642
  %4966 = vmatprep.subr.mxu0 %v4652
  %4967 = vmatpush1.msra.mxu0 %v4651
  %4968 = vmatprep.subr.mxu0 %v4661
  %4969 = vmatpush1.msra.mxu0 %v4660
  %4970 = vmatprep.subr.mxu0 %v4670
  %4971 = vmatpush1.msra.mxu0 %v4669
  %4972 = vmatprep.subr.mxu0 %v4679
  %4973 = vmatpush1.msra.mxu0 %v4678
  %4974 = vmatprep.subr.mxu0 %v4688
  %4975 = vmatpush1.msra.mxu0 %v4687
  %4976 = vmatprep.subr.mxu0 %v4697
  %4977 = vmatpush1.msra.mxu0 %v4696
  %4978 = vmatprep.subr.mxu0 %v4706
  %4979 = vmatpush1.msra.mxu0 %v4705
  %4980 = vmatprep.subr.mxu0 %v4715
  %4981 = vmatpush1.msra.mxu0 %v4714
  %4982 = vmatprep.subr.mxu0 %v4724
  %4983 = vmatpush1.msra.mxu0 %v4723
  %4984 = vmatprep.subr.mxu0 %v4733
  %4985 = vmatpush1.msra.mxu0 %v4732
  %4986 = vmatprep.subr.mxu0 0.0
  %4987 = vmatpush1.msra.mxu0 0.0
  %4988 = vmatprep.subr.mxu0 0.0
  %4989 = vmatpush1.msra.mxu0 0.0
  %4990 = vmatprep.subr.mxu0 0.0
  %4991 = vmatpush1.msra.mxu0 0.0
  %4992 = vmatprep.subr.mxu0 0.0
  %4993 = vmatpush1.msra.mxu0 0.0
  %4994 = vmatprep.subr.mxu0 0.0
  %4995 = vmatpush1.msra.mxu0 0.0
  %4996 = vmatprep.subr.mxu0 0.0
  %4997 = vmatpush1.msra.mxu0 0.0
  %4998 = vmatprep.subr.mxu0 0.0
  %4999 = vmatpush1.msra.mxu0 0.0
  %5000 = vmatprep.subr.mxu0 0.0
  %5001 = vmatpush1.msra.mxu0 0.0
  %5002 = vmatprep.subr.mxu0 0.0
  %5003 = vmatpush1.msra.mxu0 0.0
  %5004 = vmatprep.subr.mxu0 0.0
  %5005 = vmatpush1.msra.mxu0 0.0
  %5006 = vmatprep.subr.mxu0 0.0
  %5007 = vmatpush1.msra.mxu0 0.0
  %5008 = vmatprep.subr.mxu0 0.0
  %5009 = vmatpush1.msra.mxu0 0.0
  %5010 = vmatprep.subr.mxu0 0.0
  %5011 = vmatpush1.msra.mxu0 0.0
  %5012 = vmatprep.subr.mxu0 0.0
  %5013 = vmatpush1.msra.mxu0 0.0
  %5014 = vmatprep.subr.mxu0 0.0
  %5015 = vmatpush1.msra.mxu0 0.0
  %5016 = vmatprep.subr.mxu0 0.0
  %5017 = vmatpush1.msra.mxu0 0.0
  %5018 = vmatprep.mubr.f32.mxu0 0.0
  %5019 = vmatmul.mubr.f32.gmra.mrb[0].mxu0 %v4570
  %v5020 = vpop.f32.mrb[0].mxu0
  %v5021 = vadd.f32 0.0, %v5020
  %v5022 = vpop.f32.mrb[0].mxu0
  %v5023 = vadd.f32 0.0, %v5022
  %5024 = vmatprep.mubr.f32.mxu0 0.0
  %5025 = vmatmul.mubr.f32.gmra.mrb[0].mxu0 %v4571
  %v5026 = vpop.f32.mrb[0].mxu0
  %v5027 = vadd.f32 0.0, %v5026
  %v5028 = vpop.f32.mrb[0].mxu0
  %v5029 = vadd.f32 0.0, %v5028
  %5030 = vmatprep.mubr.f32.mxu0 0.0
  %5031 = vmatmul.mubr.f32.gmra.mrb[0].mxu0 %v4572
  %v5032 = vpop.f32.mrb[0].mxu0
  %v5033 = vadd.f32 0.0, %v5032
  %v5034 = vpop.f32.mrb[0].mxu0
  %v5035 = vadd.f32 0.0, %v5034
  %5036 = vmatprep.mubr.f32.mxu0 0.0
  %5037 = vmatmul.mubr.f32.gmra.mrb[0].mxu0 %v4573
  %v5038 = vpop.f32.mrb[0].mxu0
  %v5039 = vadd.f32 0.0, %v5038
  %v5040 = vpop.f32.mrb[0].mxu0
  %v5041 = vadd.f32 0.0, %v5040
  %5042 = vmatprep.mubr.f32.mxu0 0.0
  %5043 = vmatmul.mubr.f32.gmra.mrb[0].mxu0 %v4574
  %v5044 = vpop.f32.mrb[0].mxu0
  %v5045 = vadd.f32 0.0, %v5044
  %v5046 = vpop.f32.mrb[0].mxu0
  %v5047 = vadd.f32 0.0, %v5046
  %5048 = vmatprep.mubr.f32.mxu0 0.0
  %5049 = vmatmul.mubr.f32.gmra.mrb[0].mxu0 %v4575
  %v5050 = vpop.f32.mrb[0].mxu0
  %v5051 = vadd.f32 0.0, %v5050
  %v5052 = vpop.f32.mrb[0].mxu0
  %v5053 = vadd.f32 0.0, %v5052
  %5054 = vmatprep.mubr.f32.mxu0 0.0
  %5055 = vmatmul.mubr.f32.gmra.mrb[0].mxu0 %v4576
  %v5056 = vpop.f32.mrb[0].mxu0
  %v5057 = vadd.f32 0.0, %v5056
  %v5058 = vpop.f32.mrb[0].mxu0
  %v5059 = vadd.f32 0.0, %v5058
  %5060 = vmatprep.mubr.f32.mxu0 0.0
  %5061 = vmatmul.mubr.f32.gmra.mrb[0].mxu0 %v4577
  %v5062 = vpop.f32.mrb[0].mxu0
  %v5063 = vadd.f32 0.0, %v5062
  %v5064 = vpop.f32.mrb[0].mxu0
  %v5065 = vadd.f32 0.0, %v5064
  %5066 = vmatprep.mubr.f32.mxu0 0.0
  %5067 = vmatmul.mubr.f32.gmra.mrb[0].mxu0 %v4578
  %v5068 = vpop.f32.mrb[0].mxu0
  %v5069 = vadd.f32 0.0, %v5068
  %v5070 = vpop.f32.mrb[0].mxu0
  %v5071 = vadd.f32 0.0, %v5070
  %5072 = vmatprep.mubr.f32.mxu0 0.0
  %5073 = vmatmul.mubr.f32.gmra.mrb[0].mxu0 %v4579
  %v5074 = vpop.f32.mrb[0].mxu0
  %v5075 = vadd.f32 0.0, %v5074
  %v5076 = vpop.f32.mrb[0].mxu0
  %v5077 = vadd.f32 0.0, %v5076
  %5078 = vmatprep.mubr.f32.mxu0 0.0
  %5079 = vmatmul.mubr.f32.gmra.mrb[0].mxu0 %v4580
  %v5080 = vpop.f32.mrb[0].mxu0
  %v5081 = vadd.f32 0.0, %v5080
  %v5082 = vpop.f32.mrb[0].mxu0
  %v5083 = vadd.f32 0.0, %v5082
  %5084 = vmatprep.mubr.f32.mxu0 0.0
  %5085 = vmatmul.mubr.f32.gmra.mrb[0].mxu0 %v4581
  %v5086 = vpop.f32.mrb[0].mxu0
  %v5087 = vadd.f32 0.0, %v5086
  %v5088 = vpop.f32.mrb[0].mxu0
  %v5089 = vadd.f32 0.0, %v5088
  %5090 = vmatprep.mubr.f32.mxu0 0.0
  %5091 = vmatmul.mubr.f32.gmra.mrb[0].mxu0 %v4582
  %v5092 = vpop.f32.mrb[0].mxu0
  %v5093 = vadd.f32 0.0, %v5092
  %v5094 = vpop.f32.mrb[0].mxu0
  %v5095 = vadd.f32 0.0, %v5094
  %5096 = vmatprep.mubr.f32.mxu0 0.0
  %5097 = vmatmul.mubr.f32.gmra.mrb[0].mxu0 %v4583
  %v5098 = vpop.f32.mrb[0].mxu0
  %v5099 = vadd.f32 0.0, %v5098
  %v5100 = vpop.f32.mrb[0].mxu0
  %v5101 = vadd.f32 0.0, %v5100
  %5102 = vmatprep.mubr.f32.mxu0 0.0
  %5103 = vmatmul.mubr.f32.gmra.mrb[0].mxu0 %v4584
  %v5104 = vpop.f32.mrb[0].mxu0
  %v5105 = vadd.f32 0.0, %v5104
  %v5106 = vpop.f32.mrb[0].mxu0
  %v5107 = vadd.f32 0.0, %v5106
  %5108 = vmatprep.mubr.f32.mxu0 0.0
  %5109 = vmatmul.mubr.f32.gmra.mrb[0].mxu0 %v4585
  %v5110 = vpop.f32.mrb[0].mxu0
  %v5111 = vadd.f32 0.0, %v5110
  %v5112 = vpop.f32.mrb[0].mxu0
  %v5113 = vadd.f32 0.0, %v5112
  %5114 = vmatprep.mubr.f32.mxu0 0.0
  %5115 = vmatmul.mubr.f32.gmra.mrb[0].mxu0 %v4586
  %v5116 = vpop.f32.mrb[0].mxu0
  %v5117 = vadd.f32 0.0, %v5116
  %v5118 = vpop.f32.mrb[0].mxu0
  %v5119 = vadd.f32 0.0, %v5118
  %5120 = vmatprep.mubr.f32.mxu0 0.0
  %5121 = vmatmul.mubr.f32.gmra.mrb[0].mxu0 %v4587
  %v5122 = vpop.f32.mrb[0].mxu0
  %v5123 = vadd.f32 0.0, %v5122
  %v5124 = vpop.f32.mrb[0].mxu0
  %v5125 = vadd.f32 0.0, %v5124
  %5126 = vmatprep.mubr.f32.mxu0 0.0
  %5127 = vmatmul.mubr.f32.gmra.mrb[0].mxu0 %v4588
  %v5128 = vpop.f32.mrb[0].mxu0
  %v5129 = vadd.f32 0.0, %v5128
  %v5130 = vpop.f32.mrb[0].mxu0
  %v5131 = vadd.f32 0.0, %v5130
  %5132 = vmatprep.mubr.f32.mxu0 0.0
  %5133 = vmatmul.mubr.f32.gmra.mrb[0].mxu0 %v4589
  %v5134 = vpop.f32.mrb[0].mxu0
  %v5135 = vadd.f32 0.0, %v5134
  %v5136 = vpop.f32.mrb[0].mxu0
  %v5137 = vadd.f32 0.0, %v5136
  %5138 = vmatprep.mubr.f32.mxu0 0.0
  %5139 = vmatmul.mubr.f32.gmra.mrb[0].mxu0 %v4590
  %v5140 = vpop.f32.mrb[0].mxu0
  %v5141 = vadd.f32 0.0, %v5140
  %v5142 = vpop.f32.mrb[0].mxu0
  %v5143 = vadd.f32 0.0, %v5142
  %5144 = vmatprep.mubr.f32.mxu0 0.0
  %5145 = vmatmul.mubr.f32.gmra.mrb[0].mxu0 %v4591
  %v5146 = vpop.f32.mrb[0].mxu0
  %v5147 = vadd.f32 0.0, %v5146
  %v5148 = vpop.f32.mrb[0].mxu0
  %v5149 = vadd.f32 0.0, %v5148
  %5150 = vmatprep.mubr.f32.mxu0 0.0
  %5151 = vmatmul.mubr.f32.gmra.mrb[0].mxu0 %v4592
  %v5152 = vpop.f32.mrb[0].mxu0
  %v5153 = vadd.f32 0.0, %v5152
  %v5154 = vpop.f32.mrb[0].mxu0
  %v5155 = vadd.f32 0.0, %v5154
  %5156 = vmatprep.mubr.f32.mxu0 0.0
  %5157 = vmatmul.mubr.f32.gmra.mrb[0].mxu0 %v4593
  %v5158 = vpop.f32.mrb[0].mxu0
  %v5159 = vadd.f32 0.0, %v5158
  %v5160 = vpop.f32.mrb[0].mxu0
  %v5161 = vadd.f32 0.0, %v5160
  %5162 = vmatprep.mubr.f32.mxu0 0.0
  %5163 = vmatmul.mubr.f32.gmra.mrb[0].mxu0 %v4594
  %v5164 = vpop.f32.mrb[0].mxu0
  %v5165 = vadd.f32 0.0, %v5164
  %v5166 = vpop.f32.mrb[0].mxu0
  %v5167 = vadd.f32 0.0, %v5166
  %5168 = vdwg.mxu0
  %5169 = vmatprep.subr.mxu0 %v4600
  %5170 = vmatpush1.msra.mxu0 %v4599
  %5171 = vmatprep.subr.mxu0 %v4609
  %5172 = vmatpush1.msra.mxu0 %v4608
  %5173 = vmatprep.subr.mxu0 %v4618
  %5174 = vmatpush1.msra.mxu0 %v4617
  %5175 = vmatprep.subr.mxu0 %v4627
  %5176 = vmatpush1.msra.mxu0 %v4626
  %5177 = vmatprep.subr.mxu0 %v4636
  %5178 = vmatpush1.msra.mxu0 %v4635
  %5179 = vmatprep.subr.mxu0 %v4645
  %5180 = vmatpush1.msra.mxu0 %v4644
  %5181 = vmatprep.subr.mxu0 %v4654
  %5182 = vmatpush1.msra.mxu0 %v4653
  %5183 = vmatprep.subr.mxu0 %v4663
  %5184 = vmatpush1.msra.mxu0 %v4662
  %5185 = vmatprep.subr.mxu0 %v4672
  %5186 = vmatpush1.msra.mxu0 %v4671
  %5187 = vmatprep.subr.mxu0 %v4681
  %5188 = vmatpush1.msra.mxu0 %v4680
  %5189 = vmatprep.subr.mxu0 %v4690
  %5190 = vmatpush1.msra.mxu0 %v4689
  %5191 = vmatprep.subr.mxu0 %v4699
  %5192 = vmatpush1.msra.mxu0 %v4698
  %5193 = vmatprep.subr.mxu0 %v4708
  %5194 = vmatpush1.msra.mxu0 %v4707
  %5195 = vmatprep.subr.mxu0 %v4717
  %5196 = vmatpush1.msra.mxu0 %v4716
  %5197 = vmatprep.subr.mxu0 %v4726
  %5198 = vmatpush1.msra.mxu0 %v4725
  %5199 = vmatprep.subr.mxu0 %v4735
  %5200 = vmatpush1.msra.mxu0 %v4734
  %5201 = vmatprep.subr.mxu0 0.0
  %5202 = vmatpush1.msra.mxu0 0.0
  %5203 = vmatprep.subr.mxu0 0.0
  %5204 = vmatpush1.msra.mxu0 0.0
  %5205 = vmatprep.subr.mxu0 0.0
  %5206 = vmatpush1.msra.mxu0 0.0
  %5207 = vmatprep.subr.mxu0 0.0
  %5208 = vmatpush1.msra.mxu0 0.0
  %5209 = vmatprep.subr.mxu0 0.0
  %5210 = vmatpush1.msra.mxu0 0.0
  %5211 = vmatprep.subr.mxu0 0.0
  %5212 = vmatpush1.msra.mxu0 0.0
  %5213 = vmatprep.subr.mxu0 0.0
  %5214 = vmatpush1.msra.mxu0 0.0
  %5215 = vmatprep.subr.mxu0 0.0
  %5216 = vmatpush1.msra.mxu0 0.0
  %5217 = vmatprep.subr.mxu0 0.0
  %5218 = vmatpush1.msra.mxu0 0.0
  %5219 = vmatprep.subr.mxu0 0.0
  %5220 = vmatpush1.msra.mxu0 0.0
  %5221 = vmatprep.subr.mxu0 0.0
  %5222 = vmatpush1.msra.mxu0 0.0
  %5223 = vmatprep.subr.mxu0 0.0
  %5224 = vmatpush1.msra.mxu0 0.0
  %5225 = vmatprep.subr.mxu0 0.0
  %5226 = vmatpush1.msra.mxu0 0.0
  %5227 = vmatprep.subr.mxu0 0.0
  %5228 = vmatpush1.msra.mxu0 0.0
  %5229 = vmatprep.subr.mxu0 0.0
  %5230 = vmatpush1.msra.mxu0 0.0
  %5231 = vmatprep.subr.mxu0 0.0
  %5232 = vmatpush1.msra.mxu0 0.0
  %5233 = vmatprep.mubr.f32.mxu0 0.0
  %5234 = vmatmul.mubr.f32.gmra.mrb[0].mxu0 %v4570
  %v5235 = vpop.f32.mrb[0].mxu0
  %v5236 = vadd.f32 0.0, %v5235
  %v5237 = vpop.f32.mrb[0].mxu0
  %v5238 = vadd.f32 0.0, %v5237
  %5239 = vmatprep.mubr.f32.mxu0 0.0
  %5240 = vmatmul.mubr.f32.gmra.mrb[0].mxu0 %v4571
  %v5241 = vpop.f32.mrb[0].mxu0
  %v5242 = vadd.f32 0.0, %v5241
  %v5243 = vpop.f32.mrb[0].mxu0
  %v5244 = vadd.f32 0.0, %v5243
  %5245 = vmatprep.mubr.f32.mxu0 0.0
  %5246 = vmatmul.mubr.f32.gmra.mrb[0].mxu0 %v4572
  %v5247 = vpop.f32.mrb[0].mxu0
  %v5248 = vadd.f32 0.0, %v5247
  %v5249 = vpop.f32.mrb[0].mxu0
  %v5250 = vadd.f32 0.0, %v5249
  %5251 = vmatprep.mubr.f32.mxu0 0.0
  %5252 = vmatmul.mubr.f32.gmra.mrb[0].mxu0 %v4573
  %v5253 = vpop.f32.mrb[0].mxu0
  %v5254 = vadd.f32 0.0, %v5253
  %v5255 = vpop.f32.mrb[0].mxu0
  %v5256 = vadd.f32 0.0, %v5255
  %5257 = vmatprep.mubr.f32.mxu0 0.0
  %5258 = vmatmul.mubr.f32.gmra.mrb[0].mxu0 %v4574
  %v5259 = vpop.f32.mrb[0].mxu0
  %v5260 = vadd.f32 0.0, %v5259
  %v5261 = vpop.f32.mrb[0].mxu0
  %v5262 = vadd.f32 0.0, %v5261
  %5263 = vmatprep.mubr.f32.mxu0 0.0
  %5264 = vmatmul.mubr.f32.gmra.mrb[0].mxu0 %v4575
  %v5265 = vpop.f32.mrb[0].mxu0
  %v5266 = vadd.f32 0.0, %v5265
  %v5267 = vpop.f32.mrb[0].mxu0
  %v5268 = vadd.f32 0.0, %v5267
  %5269 = vmatprep.mubr.f32.mxu0 0.0
  %5270 = vmatmul.mubr.f32.gmra.mrb[0].mxu0 %v4576
  %v5271 = vpop.f32.mrb[0].mxu0
  %v5272 = vadd.f32 0.0, %v5271
  %v5273 = vpop.f32.mrb[0].mxu0
  %v5274 = vadd.f32 0.0, %v5273
  %5275 = vmatprep.mubr.f32.mxu0 0.0
  %5276 = vmatmul.mubr.f32.gmra.mrb[0].mxu0 %v4577
  %v5277 = vpop.f32.mrb[0].mxu0
  %v5278 = vadd.f32 0.0, %v5277
  %v5279 = vpop.f32.mrb[0].mxu0
  %v5280 = vadd.f32 0.0, %v5279
  %5281 = vmatprep.mubr.f32.mxu0 0.0
  %5282 = vmatmul.mubr.f32.gmra.mrb[0].mxu0 %v4578
  %v5283 = vpop.f32.mrb[0].mxu0
  %v5284 = vadd.f32 0.0, %v5283
  %v5285 = vpop.f32.mrb[0].mxu0
  %v5286 = vadd.f32 0.0, %v5285
  %5287 = vmatprep.mubr.f32.mxu0 0.0
  %5288 = vmatmul.mubr.f32.gmra.mrb[0].mxu0 %v4579
  %v5289 = vpop.f32.mrb[0].mxu0
  %v5290 = vadd.f32 0.0, %v5289
  %v5291 = vpop.f32.mrb[0].mxu0
  %v5292 = vadd.f32 0.0, %v5291
  %5293 = vmatprep.mubr.f32.mxu0 0.0
  %5294 = vmatmul.mubr.f32.gmra.mrb[0].mxu0 %v4580
  %v5295 = vpop.f32.mrb[0].mxu0
  %v5296 = vadd.f32 0.0, %v5295
  %v5297 = vpop.f32.mrb[0].mxu0
  %v5298 = vadd.f32 0.0, %v5297
  %5299 = vmatprep.mubr.f32.mxu0 0.0
  %5300 = vmatmul.mubr.f32.gmra.mrb[0].mxu0 %v4581
  %v5301 = vpop.f32.mrb[0].mxu0
  %v5302 = vadd.f32 0.0, %v5301
  %v5303 = vpop.f32.mrb[0].mxu0
  %v5304 = vadd.f32 0.0, %v5303
  %5305 = vmatprep.mubr.f32.mxu0 0.0
  %5306 = vmatmul.mubr.f32.gmra.mrb[0].mxu0 %v4582
  %v5307 = vpop.f32.mrb[0].mxu0
  %v5308 = vadd.f32 0.0, %v5307
  %v5309 = vpop.f32.mrb[0].mxu0
  %v5310 = vadd.f32 0.0, %v5309
  %5311 = vmatprep.mubr.f32.mxu0 0.0
  %5312 = vmatmul.mubr.f32.gmra.mrb[0].mxu0 %v4583
  %v5313 = vpop.f32.mrb[0].mxu0
  %v5314 = vadd.f32 0.0, %v5313
  %v5315 = vpop.f32.mrb[0].mxu0
  %v5316 = vadd.f32 0.0, %v5315
  %5317 = vmatprep.mubr.f32.mxu0 0.0
  %5318 = vmatmul.mubr.f32.gmra.mrb[0].mxu0 %v4584
  %v5319 = vpop.f32.mrb[0].mxu0
  %v5320 = vadd.f32 0.0, %v5319
  %v5321 = vpop.f32.mrb[0].mxu0
  %v5322 = vadd.f32 0.0, %v5321
  %5323 = vmatprep.mubr.f32.mxu0 0.0
  %5324 = vmatmul.mubr.f32.gmra.mrb[0].mxu0 %v4585
  %v5325 = vpop.f32.mrb[0].mxu0
  %v5326 = vadd.f32 0.0, %v5325
  %v5327 = vpop.f32.mrb[0].mxu0
  %v5328 = vadd.f32 0.0, %v5327
  %5329 = vmatprep.mubr.f32.mxu0 0.0
  %5330 = vmatmul.mubr.f32.gmra.mrb[0].mxu0 %v4586
  %v5331 = vpop.f32.mrb[0].mxu0
  %v5332 = vadd.f32 0.0, %v5331
  %v5333 = vpop.f32.mrb[0].mxu0
  %v5334 = vadd.f32 0.0, %v5333
  %5335 = vmatprep.mubr.f32.mxu0 0.0
  %5336 = vmatmul.mubr.f32.gmra.mrb[0].mxu0 %v4587
  %v5337 = vpop.f32.mrb[0].mxu0
  %v5338 = vadd.f32 0.0, %v5337
  %v5339 = vpop.f32.mrb[0].mxu0
  %v5340 = vadd.f32 0.0, %v5339
  %5341 = vmatprep.mubr.f32.mxu0 0.0
  %5342 = vmatmul.mubr.f32.gmra.mrb[0].mxu0 %v4588
  %v5343 = vpop.f32.mrb[0].mxu0
  %v5344 = vadd.f32 0.0, %v5343
  %v5345 = vpop.f32.mrb[0].mxu0
  %v5346 = vadd.f32 0.0, %v5345
  %5347 = vmatprep.mubr.f32.mxu0 0.0
  %5348 = vmatmul.mubr.f32.gmra.mrb[0].mxu0 %v4589
  %v5349 = vpop.f32.mrb[0].mxu0
  %v5350 = vadd.f32 0.0, %v5349
  %v5351 = vpop.f32.mrb[0].mxu0
  %v5352 = vadd.f32 0.0, %v5351
  %5353 = vmatprep.mubr.f32.mxu0 0.0
  %5354 = vmatmul.mubr.f32.gmra.mrb[0].mxu0 %v4590
  %v5355 = vpop.f32.mrb[0].mxu0
  %v5356 = vadd.f32 0.0, %v5355
  %v5357 = vpop.f32.mrb[0].mxu0
  %v5358 = vadd.f32 0.0, %v5357
  %5359 = vmatprep.mubr.f32.mxu0 0.0
  %5360 = vmatmul.mubr.f32.gmra.mrb[0].mxu0 %v4591
  %v5361 = vpop.f32.mrb[0].mxu0
  %v5362 = vadd.f32 0.0, %v5361
  %v5363 = vpop.f32.mrb[0].mxu0
  %v5364 = vadd.f32 0.0, %v5363
  %5365 = vmatprep.mubr.f32.mxu0 0.0
  %5366 = vmatmul.mubr.f32.gmra.mrb[0].mxu0 %v4592
  %v5367 = vpop.f32.mrb[0].mxu0
  %v5368 = vadd.f32 0.0, %v5367
  %v5369 = vpop.f32.mrb[0].mxu0
  %v5370 = vadd.f32 0.0, %v5369
  %5371 = vmatprep.mubr.f32.mxu0 0.0
  %5372 = vmatmul.mubr.f32.gmra.mrb[0].mxu0 %v4593
  %v5373 = vpop.f32.mrb[0].mxu0
  %v5374 = vadd.f32 0.0, %v5373
  %v5375 = vpop.f32.mrb[0].mxu0
  %v5376 = vadd.f32 0.0, %v5375
  %5377 = vmatprep.mubr.f32.mxu0 0.0
  %5378 = vmatmul.mubr.f32.gmra.mrb[0].mxu0 %v4594
  %v5379 = vpop.f32.mrb[0].mxu0
  %v5380 = vadd.f32 0.0, %v5379
  %v5381 = vpop.f32.mrb[0].mxu0
  %v5382 = vadd.f32 0.0, %v5381
  %5383 = vdwg.mxu0
  %5384 = vmatprep.subr.mxu0 %v4602
  %5385 = vmatpush1.msra.mxu0 %v4601
  %5386 = vmatprep.subr.mxu0 %v4611
  %5387 = vmatpush1.msra.mxu0 %v4610
  %5388 = vmatprep.subr.mxu0 %v4620
  %5389 = vmatpush1.msra.mxu0 %v4619
  %5390 = vmatprep.subr.mxu0 %v4629
  %5391 = vmatpush1.msra.mxu0 %v4628
  %5392 = vmatprep.subr.mxu0 %v4638
  %5393 = vmatpush1.msra.mxu0 %v4637
  %5394 = vmatprep.subr.mxu0 %v4647
  %5395 = vmatpush1.msra.mxu0 %v4646
  %5396 = vmatprep.subr.mxu0 %v4656
  %5397 = vmatpush1.msra.mxu0 %v4655
  %5398 = vmatprep.subr.mxu0 %v4665
  %5399 = vmatpush1.msra.mxu0 %v4664
  %5400 = vmatprep.subr.mxu0 %v4674
  %5401 = vmatpush1.msra.mxu0 %v4673
  %5402 = vmatprep.subr.mxu0 %v4683
  %5403 = vmatpush1.msra.mxu0 %v4682
  %5404 = vmatprep.subr.mxu0 %v4692
  %5405 = vmatpush1.msra.mxu0 %v4691
  %5406 = vmatprep.subr.mxu0 %v4701
  %5407 = vmatpush1.msra.mxu0 %v4700
  %5408 = vmatprep.subr.mxu0 %v4710
  %5409 = vmatpush1.msra.mxu0 %v4709
  %5410 = vmatprep.subr.mxu0 %v4719
  %5411 = vmatpush1.msra.mxu0 %v4718
  %5412 = vmatprep.subr.mxu0 %v4728
  %5413 = vmatpush1.msra.mxu0 %v4727
  %5414 = vmatprep.subr.mxu0 %v4737
  %5415 = vmatpush1.msra.mxu0 %v4736
  %5416 = vmatprep.subr.mxu0 0.0
  %5417 = vmatpush1.msra.mxu0 0.0
  %5418 = vmatprep.subr.mxu0 0.0
  %5419 = vmatpush1.msra.mxu0 0.0
  %5420 = vmatprep.subr.mxu0 0.0
  %5421 = vmatpush1.msra.mxu0 0.0
  %5422 = vmatprep.subr.mxu0 0.0
  %5423 = vmatpush1.msra.mxu0 0.0
  %5424 = vmatprep.subr.mxu0 0.0
  %5425 = vmatpush1.msra.mxu0 0.0
  %5426 = vmatprep.subr.mxu0 0.0
  %5427 = vmatpush1.msra.mxu0 0.0
  %5428 = vmatprep.subr.mxu0 0.0
  %5429 = vmatpush1.msra.mxu0 0.0
  %5430 = vmatprep.subr.mxu0 0.0
  %5431 = vmatpush1.msra.mxu0 0.0
  %5432 = vmatprep.subr.mxu0 0.0
  %5433 = vmatpush1.msra.mxu0 0.0
  %5434 = vmatprep.subr.mxu0 0.0
  %5435 = vmatpush1.msra.mxu0 0.0
  %5436 = vmatprep.subr.mxu0 0.0
  %5437 = vmatpush1.msra.mxu0 0.0
  %5438 = vmatprep.subr.mxu0 0.0
  %5439 = vmatpush1.msra.mxu0 0.0
  %5440 = vmatprep.subr.mxu0 0.0
  %5441 = vmatpush1.msra.mxu0 0.0
  %5442 = vmatprep.subr.mxu0 0.0
  %5443 = vmatpush1.msra.mxu0 0.0
  %5444 = vmatprep.subr.mxu0 0.0
  %5445 = vmatpush1.msra.mxu0 0.0
  %5446 = vmatprep.subr.mxu0 0.0
  %5447 = vmatpush1.msra.mxu0 0.0
  %5448 = vmatprep.mubr.f32.mxu0 0.0
  %5449 = vmatmul.mubr.f32.gmra.mrb[0].mxu0 %v4570
  %v5450 = vpop.f32.mrb[0].mxu0
  %v5451 = vadd.f32 0.0, %v5450
  %v5452 = vpop.f32.mrb[0].mxu0
  %v5453 = vadd.f32 0.0, %v5452
  %5454 = vmatprep.mubr.f32.mxu0 0.0
  %5455 = vmatmul.mubr.f32.gmra.mrb[0].mxu0 %v4571
  %v5456 = vpop.f32.mrb[0].mxu0
  %v5457 = vadd.f32 0.0, %v5456
  %v5458 = vpop.f32.mrb[0].mxu0
  %v5459 = vadd.f32 0.0, %v5458
  %5460 = vmatprep.mubr.f32.mxu0 0.0
  %5461 = vmatmul.mubr.f32.gmra.mrb[0].mxu0 %v4572
  %v5462 = vpop.f32.mrb[0].mxu0
  %v5463 = vadd.f32 0.0, %v5462
  %v5464 = vpop.f32.mrb[0].mxu0
  %v5465 = vadd.f32 0.0, %v5464
  %5466 = vmatprep.mubr.f32.mxu0 0.0
  %5467 = vmatmul.mubr.f32.gmra.mrb[0].mxu0 %v4573
  %v5468 = vpop.f32.mrb[0].mxu0
  %v5469 = vadd.f32 0.0, %v5468
  %v5470 = vpop.f32.mrb[0].mxu0
  %v5471 = vadd.f32 0.0, %v5470
  %5472 = vmatprep.mubr.f32.mxu0 0.0
  %5473 = vmatmul.mubr.f32.gmra.mrb[0].mxu0 %v4574
  %v5474 = vpop.f32.mrb[0].mxu0
  %v5475 = vadd.f32 0.0, %v5474
  %v5476 = vpop.f32.mrb[0].mxu0
  %v5477 = vadd.f32 0.0, %v5476
  %5478 = vmatprep.mubr.f32.mxu0 0.0
  %5479 = vmatmul.mubr.f32.gmra.mrb[0].mxu0 %v4575
  %v5480 = vpop.f32.mrb[0].mxu0
  %v5481 = vadd.f32 0.0, %v5480
  %v5482 = vpop.f32.mrb[0].mxu0
  %v5483 = vadd.f32 0.0, %v5482
  %5484 = vmatprep.mubr.f32.mxu0 0.0
  %5485 = vmatmul.mubr.f32.gmra.mrb[0].mxu0 %v4576
  %v5486 = vpop.f32.mrb[0].mxu0
  %v5487 = vadd.f32 0.0, %v5486
  %v5488 = vpop.f32.mrb[0].mxu0
  %v5489 = vadd.f32 0.0, %v5488
  %5490 = vmatprep.mubr.f32.mxu0 0.0
  %5491 = vmatmul.mubr.f32.gmra.mrb[0].mxu0 %v4577
  %v5492 = vpop.f32.mrb[0].mxu0
  %v5493 = vadd.f32 0.0, %v5492
  %v5494 = vpop.f32.mrb[0].mxu0
  %v5495 = vadd.f32 0.0, %v5494
  %5496 = vmatprep.mubr.f32.mxu0 0.0
  %5497 = vmatmul.mubr.f32.gmra.mrb[0].mxu0 %v4578
  %v5498 = vpop.f32.mrb[0].mxu0
  %v5499 = vadd.f32 0.0, %v5498
  %v5500 = vpop.f32.mrb[0].mxu0
  %v5501 = vadd.f32 0.0, %v5500
  %5502 = vmatprep.mubr.f32.mxu0 0.0
  %5503 = vmatmul.mubr.f32.gmra.mrb[0].mxu0 %v4579
  %v5504 = vpop.f32.mrb[0].mxu0
  %v5505 = vadd.f32 0.0, %v5504
  %v5506 = vpop.f32.mrb[0].mxu0
  %v5507 = vadd.f32 0.0, %v5506
  %5508 = vmatprep.mubr.f32.mxu0 0.0
  %5509 = vmatmul.mubr.f32.gmra.mrb[0].mxu0 %v4580
  %v5510 = vpop.f32.mrb[0].mxu0
  %v5511 = vadd.f32 0.0, %v5510
  %v5512 = vpop.f32.mrb[0].mxu0
  %v5513 = vadd.f32 0.0, %v5512
  %5514 = vmatprep.mubr.f32.mxu0 0.0
  %5515 = vmatmul.mubr.f32.gmra.mrb[0].mxu0 %v4581
  %v5516 = vpop.f32.mrb[0].mxu0
  %v5517 = vadd.f32 0.0, %v5516
  %v5518 = vpop.f32.mrb[0].mxu0
  %v5519 = vadd.f32 0.0, %v5518
  %5520 = vmatprep.mubr.f32.mxu0 0.0
  %5521 = vmatmul.mubr.f32.gmra.mrb[0].mxu0 %v4582
  %v5522 = vpop.f32.mrb[0].mxu0
  %v5523 = vadd.f32 0.0, %v5522
  %v5524 = vpop.f32.mrb[0].mxu0
  %v5525 = vadd.f32 0.0, %v5524
  %5526 = vmatprep.mubr.f32.mxu0 0.0
  %5527 = vmatmul.mubr.f32.gmra.mrb[0].mxu0 %v4583
  %v5528 = vpop.f32.mrb[0].mxu0
  %v5529 = vadd.f32 0.0, %v5528
  %v5530 = vpop.f32.mrb[0].mxu0
  %v5531 = vadd.f32 0.0, %v5530
  %5532 = vmatprep.mubr.f32.mxu0 0.0
  %5533 = vmatmul.mubr.f32.gmra.mrb[0].mxu0 %v4584
  %v5534 = vpop.f32.mrb[0].mxu0
  %v5535 = vadd.f32 0.0, %v5534
  %v5536 = vpop.f32.mrb[0].mxu0
  %v5537 = vadd.f32 0.0, %v5536
  %5538 = vmatprep.mubr.f32.mxu0 0.0
  %5539 = vmatmul.mubr.f32.gmra.mrb[0].mxu0 %v4585
  %v5540 = vpop.f32.mrb[0].mxu0
  %v5541 = vadd.f32 0.0, %v5540
  %v5542 = vpop.f32.mrb[0].mxu0
  %v5543 = vadd.f32 0.0, %v5542
  %5544 = vmatprep.mubr.f32.mxu0 0.0
  %5545 = vmatmul.mubr.f32.gmra.mrb[0].mxu0 %v4586
  %v5546 = vpop.f32.mrb[0].mxu0
  %v5547 = vadd.f32 0.0, %v5546
  %v5548 = vpop.f32.mrb[0].mxu0
  %v5549 = vadd.f32 0.0, %v5548
  %5550 = vmatprep.mubr.f32.mxu0 0.0
  %5551 = vmatmul.mubr.f32.gmra.mrb[0].mxu0 %v4587
  %v5552 = vpop.f32.mrb[0].mxu0
  %v5553 = vadd.f32 0.0, %v5552
  %v5554 = vpop.f32.mrb[0].mxu0
  %v5555 = vadd.f32 0.0, %v5554
  %5556 = vmatprep.mubr.f32.mxu0 0.0
  %5557 = vmatmul.mubr.f32.gmra.mrb[0].mxu0 %v4588
  %v5558 = vpop.f32.mrb[0].mxu0
  %v5559 = vadd.f32 0.0, %v5558
  %v5560 = vpop.f32.mrb[0].mxu0
  %v5561 = vadd.f32 0.0, %v5560
  %5562 = vmatprep.mubr.f32.mxu0 0.0
  %5563 = vmatmul.mubr.f32.gmra.mrb[0].mxu0 %v4589
  %v5564 = vpop.f32.mrb[0].mxu0
  %v5565 = vadd.f32 0.0, %v5564
  %v5566 = vpop.f32.mrb[0].mxu0
  %v5567 = vadd.f32 0.0, %v5566
  %5568 = vmatprep.mubr.f32.mxu0 0.0
  %5569 = vmatmul.mubr.f32.gmra.mrb[0].mxu0 %v4590
  %v5570 = vpop.f32.mrb[0].mxu0
  %v5571 = vadd.f32 0.0, %v5570
  %v5572 = vpop.f32.mrb[0].mxu0
  %v5573 = vadd.f32 0.0, %v5572
  %5574 = vmatprep.mubr.f32.mxu0 0.0
  %5575 = vmatmul.mubr.f32.gmra.mrb[0].mxu0 %v4591
  %v5576 = vpop.f32.mrb[0].mxu0
  %v5577 = vadd.f32 0.0, %v5576
  %v5578 = vpop.f32.mrb[0].mxu0
  %v5579 = vadd.f32 0.0, %v5578
  %5580 = vmatprep.mubr.f32.mxu0 0.0
  %5581 = vmatmul.mubr.f32.gmra.mrb[0].mxu0 %v4592
  %v5582 = vpop.f32.mrb[0].mxu0
  %v5583 = vadd.f32 0.0, %v5582
  %v5584 = vpop.f32.mrb[0].mxu0
  %v5585 = vadd.f32 0.0, %v5584
  %5586 = vmatprep.mubr.f32.mxu0 0.0
  %5587 = vmatmul.mubr.f32.gmra.mrb[0].mxu0 %v4593
  %v5588 = vpop.f32.mrb[0].mxu0
  %v5589 = vadd.f32 0.0, %v5588
  %v5590 = vpop.f32.mrb[0].mxu0
  %v5591 = vadd.f32 0.0, %v5590
  %5592 = vmatprep.mubr.f32.mxu0 0.0
  %5593 = vmatmul.mubr.f32.gmra.mrb[0].mxu0 %v4594
  %v5594 = vpop.f32.mrb[0].mxu0
  %v5595 = vadd.f32 0.0, %v5594
  %v5596 = vpop.f32.mrb[0].mxu0
  %v5597 = vadd.f32 0.0, %v5596
  %5598 = vdwg.mxu0
  %5599 = vmatprep.subr.mxu0 0.0
  %5600 = vmatpush1.msra.mxu0 %v4603
  %5601 = vmatprep.subr.mxu0 0.0
  %5602 = vmatpush1.msra.mxu0 %v4612
  %5603 = vmatprep.subr.mxu0 0.0
  %5604 = vmatpush1.msra.mxu0 %v4621
  %5605 = vmatprep.subr.mxu0 0.0
  %5606 = vmatpush1.msra.mxu0 %v4630
  %5607 = vmatprep.subr.mxu0 0.0
  %5608 = vmatpush1.msra.mxu0 %v4639
  %5609 = vmatprep.subr.mxu0 0.0
  %5610 = vmatpush1.msra.mxu0 %v4648
  %5611 = vmatprep.subr.mxu0 0.0
  %5612 = vmatpush1.msra.mxu0 %v4657
  %5613 = vmatprep.subr.mxu0 0.0
  %5614 = vmatpush1.msra.mxu0 %v4666
  %5615 = vmatprep.subr.mxu0 0.0
  %5616 = vmatpush1.msra.mxu0 %v4675
  %5617 = vmatprep.subr.mxu0 0.0
  %5618 = vmatpush1.msra.mxu0 %v4684
  %5619 = vmatprep.subr.mxu0 0.0
  %5620 = vmatpush1.msra.mxu0 %v4693
  %5621 = vmatprep.subr.mxu0 0.0
  %5622 = vmatpush1.msra.mxu0 %v4702
  %5623 = vmatprep.subr.mxu0 0.0
  %5624 = vmatpush1.msra.mxu0 %v4711
  %5625 = vmatprep.subr.mxu0 0.0
  %5626 = vmatpush1.msra.mxu0 %v4720
  %5627 = vmatprep.subr.mxu0 0.0
  %5628 = vmatpush1.msra.mxu0 %v4729
  %5629 = vmatprep.subr.mxu0 0.0
  %5630 = vmatpush1.msra.mxu0 %v4738
  %5631 = vmatprep.subr.mxu0 0.0
  %5632 = vmatpush1.msra.mxu0 0.0
  %5633 = vmatprep.subr.mxu0 0.0
  %5634 = vmatpush1.msra.mxu0 0.0
  %5635 = vmatprep.subr.mxu0 0.0
  %5636 = vmatpush1.msra.mxu0 0.0
  %5637 = vmatprep.subr.mxu0 0.0
  %5638 = vmatpush1.msra.mxu0 0.0
  %5639 = vmatprep.subr.mxu0 0.0
  %5640 = vmatpush1.msra.mxu0 0.0
  %5641 = vmatprep.subr.mxu0 0.0
  %5642 = vmatpush1.msra.mxu0 0.0
  %5643 = vmatprep.subr.mxu0 0.0
  %5644 = vmatpush1.msra.mxu0 0.0
  %5645 = vmatprep.subr.mxu0 0.0
  %5646 = vmatpush1.msra.mxu0 0.0
  %5647 = vmatprep.subr.mxu0 0.0
  %5648 = vmatpush1.msra.mxu0 0.0
  %5649 = vmatprep.subr.mxu0 0.0
  %5650 = vmatpush1.msra.mxu0 0.0
  %5651 = vmatprep.subr.mxu0 0.0
  %5652 = vmatpush1.msra.mxu0 0.0
  %5653 = vmatprep.subr.mxu0 0.0
  %5654 = vmatpush1.msra.mxu0 0.0
  %5655 = vmatprep.subr.mxu0 0.0
  %5656 = vmatpush1.msra.mxu0 0.0
  %5657 = vmatprep.subr.mxu0 0.0
  %5658 = vmatpush1.msra.mxu0 0.0
  %5659 = vmatprep.subr.mxu0 0.0
  %5660 = vmatpush1.msra.mxu0 0.0
  %5661 = vmatprep.subr.mxu0 0.0
  %5662 = vmatpush1.msra.mxu0 0.0
  %5663 = vmatprep.mubr.f32.mxu0 0.0
  %5664 = vmatmul.mubr.f32.gmra.mrb[0].mxu0 %v4570
  %v5665 = vpop.f32.mrb[0].mxu0
  %v5666 = vadd.f32 0.0, %v5665
  %v5667 = vpop.f32.mrb[0].mxu0
  %5668 = vmatprep.mubr.f32.mxu0 0.0
  %5669 = vmatmul.mubr.f32.gmra.mrb[0].mxu0 %v4571
  %v5670 = vpop.f32.mrb[0].mxu0
  %v5671 = vadd.f32 0.0, %v5670
  %v5672 = vpop.f32.mrb[0].mxu0
  %5673 = vmatprep.mubr.f32.mxu0 0.0
  %5674 = vmatmul.mubr.f32.gmra.mrb[0].mxu0 %v4572
  %v5675 = vpop.f32.mrb[0].mxu0
  %v5676 = vadd.f32 0.0, %v5675
  %v5677 = vpop.f32.mrb[0].mxu0
  %5678 = vmatprep.mubr.f32.mxu0 0.0
  %5679 = vmatmul.mubr.f32.gmra.mrb[0].mxu0 %v4573
  %v5680 = vpop.f32.mrb[0].mxu0
  %v5681 = vadd.f32 0.0, %v5680
  %v5682 = vpop.f32.mrb[0].mxu0
  %5683 = vmatprep.mubr.f32.mxu0 0.0
  %5684 = vmatmul.mubr.f32.gmra.mrb[0].mxu0 %v4574
  %v5685 = vpop.f32.mrb[0].mxu0
  %v5686 = vadd.f32 0.0, %v5685
  %v5687 = vpop.f32.mrb[0].mxu0
  %5688 = vmatprep.mubr.f32.mxu0 0.0
  %5689 = vmatmul.mubr.f32.gmra.mrb[0].mxu0 %v4575
  %v5690 = vpop.f32.mrb[0].mxu0
  %v5691 = vadd.f32 0.0, %v5690
  %v5692 = vpop.f32.mrb[0].mxu0
  %5693 = vmatprep.mubr.f32.mxu0 0.0
  %5694 = vmatmul.mubr.f32.gmra.mrb[0].mxu0 %v4576
  %v5695 = vpop.f32.mrb[0].mxu0
  %v5696 = vadd.f32 0.0, %v5695
  %v5697 = vpop.f32.mrb[0].mxu0
  %5698 = vmatprep.mubr.f32.mxu0 0.0
  %5699 = vmatmul.mubr.f32.gmra.mrb[0].mxu0 %v4577
  %v5700 = vpop.f32.mrb[0].mxu0
  %v5701 = vadd.f32 0.0, %v5700
  %v5702 = vpop.f32.mrb[0].mxu0
  %5703 = vmatprep.mubr.f32.mxu0 0.0
  %5704 = vmatmul.mubr.f32.gmra.mrb[0].mxu0 %v4578
  %v5705 = vpop.f32.mrb[0].mxu0
  %v5706 = vadd.f32 0.0, %v5705
  %v5707 = vpop.f32.mrb[0].mxu0
  %5708 = vmatprep.mubr.f32.mxu0 0.0
  %5709 = vmatmul.mubr.f32.gmra.mrb[0].mxu0 %v4579
  %v5710 = vpop.f32.mrb[0].mxu0
  %v5711 = vadd.f32 0.0, %v5710
  %v5712 = vpop.f32.mrb[0].mxu0
  %5713 = vmatprep.mubr.f32.mxu0 0.0
  %5714 = vmatmul.mubr.f32.gmra.mrb[0].mxu0 %v4580
  %v5715 = vpop.f32.mrb[0].mxu0
  %v5716 = vadd.f32 0.0, %v5715
  %v5717 = vpop.f32.mrb[0].mxu0
  %5718 = vmatprep.mubr.f32.mxu0 0.0
  %5719 = vmatmul.mubr.f32.gmra.mrb[0].mxu0 %v4581
  %v5720 = vpop.f32.mrb[0].mxu0
  %v5721 = vadd.f32 0.0, %v5720
  %v5722 = vpop.f32.mrb[0].mxu0
  %5723 = vmatprep.mubr.f32.mxu0 0.0
  %5724 = vmatmul.mubr.f32.gmra.mrb[0].mxu0 %v4582
  %v5725 = vpop.f32.mrb[0].mxu0
  %v5726 = vadd.f32 0.0, %v5725
  %v5727 = vpop.f32.mrb[0].mxu0
  %5728 = vmatprep.mubr.f32.mxu0 0.0
  %5729 = vmatmul.mubr.f32.gmra.mrb[0].mxu0 %v4583
  %v5730 = vpop.f32.mrb[0].mxu0
  %v5731 = vadd.f32 0.0, %v5730
  %v5732 = vpop.f32.mrb[0].mxu0
  %5733 = vmatprep.mubr.f32.mxu0 0.0
  %5734 = vmatmul.mubr.f32.gmra.mrb[0].mxu0 %v4584
  %v5735 = vpop.f32.mrb[0].mxu0
  %v5736 = vadd.f32 0.0, %v5735
  %v5737 = vpop.f32.mrb[0].mxu0
  %5738 = vmatprep.mubr.f32.mxu0 0.0
  %5739 = vmatmul.mubr.f32.gmra.mrb[0].mxu0 %v4585
  %v5740 = vpop.f32.mrb[0].mxu0
  %v5741 = vadd.f32 0.0, %v5740
  %v5742 = vpop.f32.mrb[0].mxu0
  %5743 = vmatprep.mubr.f32.mxu0 0.0
  %5744 = vmatmul.mubr.f32.gmra.mrb[0].mxu0 %v4586
  %v5745 = vpop.f32.mrb[0].mxu0
  %v5746 = vadd.f32 0.0, %v5745
  %v5747 = vpop.f32.mrb[0].mxu0
  %5748 = vmatprep.mubr.f32.mxu0 0.0
  %5749 = vmatmul.mubr.f32.gmra.mrb[0].mxu0 %v4587
  %v5750 = vpop.f32.mrb[0].mxu0
  %v5751 = vadd.f32 0.0, %v5750
  %v5752 = vpop.f32.mrb[0].mxu0
  %5753 = vmatprep.mubr.f32.mxu0 0.0
  %5754 = vmatmul.mubr.f32.gmra.mrb[0].mxu0 %v4588
  %v5755 = vpop.f32.mrb[0].mxu0
  %v5756 = vadd.f32 0.0, %v5755
  %v5757 = vpop.f32.mrb[0].mxu0
  %5758 = vmatprep.mubr.f32.mxu0 0.0
  %5759 = vmatmul.mubr.f32.gmra.mrb[0].mxu0 %v4589
  %v5760 = vpop.f32.mrb[0].mxu0
  %v5761 = vadd.f32 0.0, %v5760
  %v5762 = vpop.f32.mrb[0].mxu0
  %5763 = vmatprep.mubr.f32.mxu0 0.0
  %5764 = vmatmul.mubr.f32.gmra.mrb[0].mxu0 %v4590
  %v5765 = vpop.f32.mrb[0].mxu0
  %v5766 = vadd.f32 0.0, %v5765
  %v5767 = vpop.f32.mrb[0].mxu0
  %5768 = vmatprep.mubr.f32.mxu0 0.0
  %5769 = vmatmul.mubr.f32.gmra.mrb[0].mxu0 %v4591
  %v5770 = vpop.f32.mrb[0].mxu0
  %v5771 = vadd.f32 0.0, %v5770
  %v5772 = vpop.f32.mrb[0].mxu0
  %5773 = vmatprep.mubr.f32.mxu0 0.0
  %5774 = vmatmul.mubr.f32.gmra.mrb[0].mxu0 %v4592
  %v5775 = vpop.f32.mrb[0].mxu0
  %v5776 = vadd.f32 0.0, %v5775
  %v5777 = vpop.f32.mrb[0].mxu0
  %5778 = vmatprep.mubr.f32.mxu0 0.0
  %5779 = vmatmul.mubr.f32.gmra.mrb[0].mxu0 %v4593
  %v5780 = vpop.f32.mrb[0].mxu0
  %v5781 = vadd.f32 0.0, %v5780
  %v5782 = vpop.f32.mrb[0].mxu0
  %5783 = vmatprep.mubr.f32.mxu0 0.0
  %5784 = vmatmul.mubr.f32.gmra.mrb[0].mxu0 %v4594
  %v5785 = vpop.f32.mrb[0].mxu0
  %v5786 = vadd.f32 0.0, %v5785
  %v5787 = vpop.f32.mrb[0].mxu0
  %5788 = vdwg.mxu0
  %5789 = vst [vmem:[#allocation4] sm:$0xff] %v4806
  %5790 = vst [vmem:[#allocation4 + $0x8] sm:$0xff] %v4808
  %5791 = vst [vmem:[#allocation4 + $0x10] sm:$0xff] %v5021
  %5792 = vst [vmem:[#allocation4 + $0x18] sm:$0xff] %v5023
  %5793 = vst [vmem:[#allocation4 + $0x20] sm:$0xff] %v5236
  %5794 = vst [vmem:[#allocation4 + $0x28] sm:$0xff] %v5238
  %5795 = vst [vmem:[#allocation4 + $0x30] sm:$0xff] %v5451
  %5796 = vst [vmem:[#allocation4 + $0x38] sm:$0xff] %v5453
  %5797 = vst [vmem:[#allocation4 + $0x40] sm:$0xff] %v5666
  %5798 = vst [vmem:[#allocation4 + $0x48] sm:$0xff] %v4812
  %5799 = vst [vmem:[#allocation4 + $0x50] sm:$0xff] %v4814
  %5800 = vst [vmem:[#allocation4 + $0x58] sm:$0xff] %v5027
  %5801 = vst [vmem:[#allocation4 + $0x60] sm:$0xff] %v5029
  %5802 = vst [vmem:[#allocation4 + $0x68] sm:$0xff] %v5242
  %5803 = vst [vmem:[#allocation4 + $0x70] sm:$0xff] %v5244
  %5804 = vst [vmem:[#allocation4 + $0x78] sm:$0xff] %v5457
  %5805 = vst [vmem:[#allocation4 + $0x80] sm:$0xff] %v5459
  %5806 = vst [vmem:[#allocation4 + $0x88] sm:$0xff] %v5671
  %5807 = vst [vmem:[#allocation4 + $0x90] sm:$0xff] %v4818
  %5808 = vst [vmem:[#allocation4 + $0x98] sm:$0xff] %v4820
  %5809 = vst [vmem:[#allocation4 + $0xa0] sm:$0xff] %v5033
  %5810 = vst [vmem:[#allocation4 + $0xa8] sm:$0xff] %v5035
  %5811 = vst [vmem:[#allocation4 + $0xb0] sm:$0xff] %v5248
  %5812 = vst [vmem:[#allocation4 + $0xb8] sm:$0xff] %v5250
  %5813 = vst [vmem:[#allocation4 + $0xc0] sm:$0xff] %v5463
  %5814 = vst [vmem:[#allocation4 + $0xc8] sm:$0xff] %v5465
  %5815 = vst [vmem:[#allocation4 + $0xd0] sm:$0xff] %v5676
  %5816 = vst [vmem:[#allocation4 + $0xd8] sm:$0xff] %v4824
  %5817 = vst [vmem:[#allocation4 + $0xe0] sm:$0xff] %v4826
  %5818 = vst [vmem:[#allocation4 + $0xe8] sm:$0xff] %v5039
  %5819 = vst [vmem:[#allocation4 + $0xf0] sm:$0xff] %v5041
  %5820 = vst [vmem:[#allocation4 + $0xf8] sm:$0xff] %v5254
  %5821 = vst [vmem:[#allocation4 + $0x100] sm:$0xff] %v5256
  %5822 = vst [vmem:[#allocation4 + $0x108] sm:$0xff] %v5469
  %5823 = vst [vmem:[#allocation4 + $0x110] sm:$0xff] %v5471
  %5824 = vst [vmem:[#allocation4 + $0x118] sm:$0xff] %v5681
  %5825 = vst [vmem:[#allocation4 + $0x120] sm:$0xff] %v4830
  %5826 = vst [vmem:[#allocation4 + $0x128] sm:$0xff] %v4832
  %5827 = vst [vmem:[#allocation4 + $0x130] sm:$0xff] %v5045
  %5828 = vst [vmem:[#allocation4 + $0x138] sm:$0xff] %v5047
  %5829 = vst [vmem:[#allocation4 + $0x140] sm:$0xff] %v5260
  %5830 = vst [vmem:[#allocation4 + $0x148] sm:$0xff] %v5262
  %5831 = vst [vmem:[#allocation4 + $0x150] sm:$0xff] %v5475
  %5832 = vst [vmem:[#allocation4 + $0x158] sm:$0xff] %v5477
  %5833 = vst [vmem:[#allocation4 + $0x160] sm:$0xff] %v5686
  %5834 = vst [vmem:[#allocation4 + $0x168] sm:$0xff] %v4836
  %5835 = vst [vmem:[#allocation4 + $0x170] sm:$0xff] %v4838
  %5836 = vst [vmem:[#allocation4 + $0x178] sm:$0xff] %v5051
  %5837 = vst [vmem:[#allocation4 + $0x180] sm:$0xff] %v5053
  %5838 = vst [vmem:[#allocation4 + $0x188] sm:$0xff] %v5266
  %5839 = vst [vmem:[#allocation4 + $0x190] sm:$0xff] %v5268
  %5840 = vst [vmem:[#allocation4 + $0x198] sm:$0xff] %v5481
  %5841 = vst [vmem:[#allocation4 + $0x1a0] sm:$0xff] %v5483
  %5842 = vst [vmem:[#allocation4 + $0x1a8] sm:$0xff] %v5691
  %5843 = vst [vmem:[#allocation4 + $0x1b0] sm:$0xff] %v4842
  %5844 = vst [vmem:[#allocation4 + $0x1b8] sm:$0xff] %v4844
  %5845 = vst [vmem:[#allocation4 + $0x1c0] sm:$0xff] %v5057
  %5846 = vst [vmem:[#allocation4 + $0x1c8] sm:$0xff] %v5059
  %5847 = vst [vmem:[#allocation4 + $0x1d0] sm:$0xff] %v5272
  %5848 = vst [vmem:[#allocation4 + $0x1d8] sm:$0xff] %v5274
  %5849 = vst [vmem:[#allocation4 + $0x1e0] sm:$0xff] %v5487
  %5850 = vst [vmem:[#allocation4 + $0x1e8] sm:$0xff] %v5489
  %5851 = vst [vmem:[#allocation4 + $0x1f0] sm:$0xff] %v5696
  %5852 = vst [vmem:[#allocation4 + $0x1f8] sm:$0xff] %v4848
  %5853 = vst [vmem:[#allocation4 + $0x200] sm:$0xff] %v4850
  %5854 = vst [vmem:[#allocation4 + $0x208] sm:$0xff] %v5063
  %5855 = vst [vmem:[#allocation4 + $0x210] sm:$0xff] %v5065
  %5856 = vst [vmem:[#allocation4 + $0x218] sm:$0xff] %v5278
  %5857 = vst [vmem:[#allocation4 + $0x220] sm:$0xff] %v5280
  %5858 = vst [vmem:[#allocation4 + $0x228] sm:$0xff] %v5493
  %5859 = vst [vmem:[#allocation4 + $0x230] sm:$0xff] %v5495
  %5860 = vst [vmem:[#allocation4 + $0x238] sm:$0xff] %v5701
  %5861 = vst [vmem:[#allocation4 + $0x240] sm:$0xff] %v4854
  %5862 = vst [vmem:[#allocation4 + $0x248] sm:$0xff] %v4856
  %5863 = vst [vmem:[#allocation4 + $0x250] sm:$0xff] %v5069
  %5864 = vst [vmem:[#allocation4 + $0x258] sm:$0xff] %v5071
  %5865 = vst [vmem:[#allocation4 + $0x260] sm:$0xff] %v5284
  %5866 = vst [vmem:[#allocation4 + $0x268] sm:$0xff] %v5286
  %5867 = vst [vmem:[#allocation4 + $0x270] sm:$0xff] %v5499
  %5868 = vst [vmem:[#allocation4 + $0x278] sm:$0xff] %v5501
  %5869 = vst [vmem:[#allocation4 + $0x280] sm:$0xff] %v5706
  %5870 = vst [vmem:[#allocation4 + $0x288] sm:$0xff] %v4860
  %5871 = vst [vmem:[#allocation4 + $0x290] sm:$0xff] %v4862
  %5872 = vst [vmem:[#allocation4 + $0x298] sm:$0xff] %v5075
  %5873 = vst [vmem:[#allocation4 + $0x2a0] sm:$0xff] %v5077
  %5874 = vst [vmem:[#allocation4 + $0x2a8] sm:$0xff] %v5290
  %5875 = vst [vmem:[#allocation4 + $0x2b0] sm:$0xff] %v5292
  %5876 = vst [vmem:[#allocation4 + $0x2b8] sm:$0xff] %v5505
  %5877 = vst [vmem:[#allocation4 + $0x2c0] sm:$0xff] %v5507
  %5878 = vst [vmem:[#allocation4 + $0x2c8] sm:$0xff] %v5711
  %5879 = vst [vmem:[#allocation4 + $0x2d0] sm:$0xff] %v4866
  %5880 = vst [vmem:[#allocation4 + $0x2d8] sm:$0xff] %v4868
  %5881 = vst [vmem:[#allocation4 + $0x2e0] sm:$0xff] %v5081
  %5882 = vst [vmem:[#allocation4 + $0x2e8] sm:$0xff] %v5083
  %5883 = vst [vmem:[#allocation4 + $0x2f0] sm:$0xff] %v5296
  %5884 = vst [vmem:[#allocation4 + $0x2f8] sm:$0xff] %v5298
  %5885 = vst [vmem:[#allocation4 + $0x300] sm:$0xff] %v5511
  %5886 = vst [vmem:[#allocation4 + $0x308] sm:$0xff] %v5513
  %5887 = vst [vmem:[#allocation4 + $0x310] sm:$0xff] %v5716
  %5888 = vst [vmem:[#allocation4 + $0x318] sm:$0xff] %v4872
  %5889 = vst [vmem:[#allocation4 + $0x320] sm:$0xff] %v4874
  %5890 = vst [vmem:[#allocation4 + $0x328] sm:$0xff] %v5087
  %5891 = vst [vmem:[#allocation4 + $0x330] sm:$0xff] %v5089
  %5892 = vst [vmem:[#allocation4 + $0x338] sm:$0xff] %v5302
  %5893 = vst [vmem:[#allocation4 + $0x340] sm:$0xff] %v5304
  %5894 = vst [vmem:[#allocation4 + $0x348] sm:$0xff] %v5517
  %5895 = vst [vmem:[#allocation4 + $0x350] sm:$0xff] %v5519
  %5896 = vst [vmem:[#allocation4 + $0x358] sm:$0xff] %v5721
  %5897 = vst [vmem:[#allocation4 + $0x360] sm:$0xff] %v4878
  %5898 = vst [vmem:[#allocation4 + $0x368] sm:$0xff] %v4880
  %5899 = vst [vmem:[#allocation4 + $0x370] sm:$0xff] %v5093
  %5900 = vst [vmem:[#allocation4 + $0x378] sm:$0xff] %v5095
  %5901 = vst [vmem:[#allocation4 + $0x380] sm:$0xff] %v5308
  %5902 = vst [vmem:[#allocation4 + $0x388] sm:$0xff] %v5310
  %5903 = vst [vmem:[#allocation4 + $0x390] sm:$0xff] %v5523
  %5904 = vst [vmem:[#allocation4 + $0x398] sm:$0xff] %v5525
  %5905 = vst [vmem:[#allocation4 + $0x3a0] sm:$0xff] %v5726
  %5906 = vst [vmem:[#allocation4 + $0x3a8] sm:$0xff] %v4884
  %5907 = vst [vmem:[#allocation4 + $0x3b0] sm:$0xff] %v4886
  %5908 = vst [vmem:[#allocation4 + $0x3b8] sm:$0xff] %v5099
  %5909 = vst [vmem:[#allocation4 + $0x3c0] sm:$0xff] %v5101
  %5910 = vst [vmem:[#allocation4 + $0x3c8] sm:$0xff] %v5314
  %5911 = vst [vmem:[#allocation4 + $0x3d0] sm:$0xff] %v5316
  %5912 = vst [vmem:[#allocation4 + $0x3d8] sm:$0xff] %v5529
  %5913 = vst [vmem:[#allocation4 + $0x3e0] sm:$0xff] %v5531
  %5914 = vst [vmem:[#allocation4 + $0x3e8] sm:$0xff] %v5731
  %5915 = vst [vmem:[#allocation4 + $0x3f0] sm:$0xff] %v4890
  %5916 = vst [vmem:[#allocation4 + $0x3f8] sm:$0xff] %v4892
  %5917 = vst [vmem:[#allocation4 + $0x400] sm:$0xff] %v5105
  %5918 = vst [vmem:[#allocation4 + $0x408] sm:$0xff] %v5107
  %5919 = vst [vmem:[#allocation4 + $0x410] sm:$0xff] %v5320
  %5920 = vst [vmem:[#allocation4 + $0x418] sm:$0xff] %v5322
  %5921 = vst [vmem:[#allocation4 + $0x420] sm:$0xff] %v5535
  %5922 = vst [vmem:[#allocation4 + $0x428] sm:$0xff] %v5537
  %5923 = vst [vmem:[#allocation4 + $0x430] sm:$0xff] %v5736
  %5924 = vst [vmem:[#allocation4 + $0x438] sm:$0xff] %v4896
  %5925 = vst [vmem:[#allocation4 + $0x440] sm:$0xff] %v4898
  %5926 = vst [vmem:[#allocation4 + $0x448] sm:$0xff] %v5111
  %5927 = vst [vmem:[#allocation4 + $0x450] sm:$0xff] %v5113
  %5928 = vst [vmem:[#allocation4 + $0x458] sm:$0xff] %v5326
  %5929 = vst [vmem:[#allocation4 + $0x460] sm:$0xff] %v5328
  %5930 = vst [vmem:[#allocation4 + $0x468] sm:$0xff] %v5541
  %5931 = vst [vmem:[#allocation4 + $0x470] sm:$0xff] %v5543
  %5932 = vst [vmem:[#allocation4 + $0x478] sm:$0xff] %v5741
  %5933 = vst [vmem:[#allocation4 + $0x480] sm:$0xff] %v4902
  %5934 = vst [vmem:[#allocation4 + $0x488] sm:$0xff] %v4904
  %5935 = vst [vmem:[#allocation4 + $0x490] sm:$0xff] %v5117
  %5936 = vst [vmem:[#allocation4 + $0x498] sm:$0xff] %v5119
  %5937 = vst [vmem:[#allocation4 + $0x4a0] sm:$0xff] %v5332
  %5938 = vst [vmem:[#allocation4 + $0x4a8] sm:$0xff] %v5334
  %5939 = vst [vmem:[#allocation4 + $0x4b0] sm:$0xff] %v5547
  %5940 = vst [vmem:[#allocation4 + $0x4b8] sm:$0xff] %v5549
  %5941 = vst [vmem:[#allocation4 + $0x4c0] sm:$0xff] %v5746
  %5942 = vst [vmem:[#allocation4 + $0x4c8] sm:$0xff] %v4908
  %5943 = vst [vmem:[#allocation4 + $0x4d0] sm:$0xff] %v4910
  %5944 = vst [vmem:[#allocation4 + $0x4d8] sm:$0xff] %v5123
  %5945 = vst [vmem:[#allocation4 + $0x4e0] sm:$0xff] %v5125
  %5946 = vst [vmem:[#allocation4 + $0x4e8] sm:$0xff] %v5338
  %5947 = vst [vmem:[#allocation4 + $0x4f0] sm:$0xff] %v5340
  %5948 = vst [vmem:[#allocation4 + $0x4f8] sm:$0xff] %v5553
  %5949 = vst [vmem:[#allocation4 + $0x500] sm:$0xff] %v5555
  %5950 = vst [vmem:[#allocation4 + $0x508] sm:$0xff] %v5751
  %5951 = vst [vmem:[#allocation4 + $0x510] sm:$0xff] %v4914
  %5952 = vst [vmem:[#allocation4 + $0x518] sm:$0xff] %v4916
  %5953 = vst [vmem:[#allocation4 + $0x520] sm:$0xff] %v5129
  %5954 = vst [vmem:[#allocation4 + $0x528] sm:$0xff] %v5131
  %5955 = vst [vmem:[#allocation4 + $0x530] sm:$0xff] %v5344
  %5956 = vst [vmem:[#allocation4 + $0x538] sm:$0xff] %v5346
  %5957 = vst [vmem:[#allocation4 + $0x540] sm:$0xff] %v5559
  %5958 = vst [vmem:[#allocation4 + $0x548] sm:$0xff] %v5561
  %5959 = vst [vmem:[#allocation4 + $0x550] sm:$0xff] %v5756
  %5960 = vst [vmem:[#allocation4 + $0x558] sm:$0xff] %v4920
  %5961 = vst [vmem:[#allocation4 + $0x560] sm:$0xff] %v4922
  %5962 = vst [vmem:[#allocation4 + $0x568] sm:$0xff] %v5135
  %5963 = vst [vmem:[#allocation4 + $0x570] sm:$0xff] %v5137
  %5964 = vst [vmem:[#allocation4 + $0x578] sm:$0xff] %v5350
  %5965 = vst [vmem:[#allocation4 + $0x580] sm:$0xff] %v5352
  %5966 = vst [vmem:[#allocation4 + $0x588] sm:$0xff] %v5565
  %5967 = vst [vmem:[#allocation4 + $0x590] sm:$0xff] %v5567
  %5968 = vst [vmem:[#allocation4 + $0x598] sm:$0xff] %v5761
  %5969 = vst [vmem:[#allocation4 + $0x5a0] sm:$0xff] %v4926
  %5970 = vst [vmem:[#allocation4 + $0x5a8] sm:$0xff] %v4928
  %5971 = vst [vmem:[#allocation4 + $0x5b0] sm:$0xff] %v5141
  %5972 = vst [vmem:[#allocation4 + $0x5b8] sm:$0xff] %v5143
  %5973 = vst [vmem:[#allocation4 + $0x5c0] sm:$0xff] %v5356
  %5974 = vst [vmem:[#allocation4 + $0x5c8] sm:$0xff] %v5358
  %5975 = vst [vmem:[#allocation4 + $0x5d0] sm:$0xff] %v5571
  %5976 = vst [vmem:[#allocation4 + $0x5d8] sm:$0xff] %v5573
  %5977 = vst [vmem:[#allocation4 + $0x5e0] sm:$0xff] %v5766
  %5978 = vst [vmem:[#allocation4 + $0x5e8] sm:$0xff] %v4932
  %5979 = vst [vmem:[#allocation4 + $0x5f0] sm:$0xff] %v4934
  %5980 = vst [vmem:[#allocation4 + $0x5f8] sm:$0xff] %v5147
  %5981 = vst [vmem:[#allocation4 + $0x600] sm:$0xff] %v5149
  %5982 = vst [vmem:[#allocation4 + $0x608] sm:$0xff] %v5362
  %5983 = vst [vmem:[#allocation4 + $0x610] sm:$0xff] %v5364
  %5984 = vst [vmem:[#allocation4 + $0x618] sm:$0xff] %v5577
  %5985 = vst [vmem:[#allocation4 + $0x620] sm:$0xff] %v5579
  %5986 = vst [vmem:[#allocation4 + $0x628] sm:$0xff] %v5771
  %5987 = vst [vmem:[#allocation4 + $0x630] sm:$0xff] %v4938
  %5988 = vst [vmem:[#allocation4 + $0x638] sm:$0xff] %v4940
  %5989 = vst [vmem:[#allocation4 + $0x640] sm:$0xff] %v5153
  %5990 = vst [vmem:[#allocation4 + $0x648] sm:$0xff] %v5155
  %5991 = vst [vmem:[#allocation4 + $0x650] sm:$0xff] %v5368
  %5992 = vst [vmem:[#allocation4 + $0x658] sm:$0xff] %v5370
  %5993 = vst [vmem:[#allocation4 + $0x660] sm:$0xff] %v5583
  %5994 = vst [vmem:[#allocation4 + $0x668] sm:$0xff] %v5585
  %5995 = vst [vmem:[#allocation4 + $0x670] sm:$0xff] %v5776
  %5996 = vst [vmem:[#allocation4 + $0x678] sm:$0xff] %v4944
  %5997 = vst [vmem:[#allocation4 + $0x680] sm:$0xff] %v4946
  %5998 = vst [vmem:[#allocation4 + $0x688] sm:$0xff] %v5159
  %5999 = vst [vmem:[#allocation4 + $0x690] sm:$0xff] %v5161
  %6000 = vst [vmem:[#allocation4 + $0x698] sm:$0xff] %v5374
  %6001 = vst [vmem:[#allocation4 + $0x6a0] sm:$0xff] %v5376
  %6002 = vst [vmem:[#allocation4 + $0x6a8] sm:$0xff] %v5589
  %6003 = vst [vmem:[#allocation4 + $0x6b0] sm:$0xff] %v5591
  %6004 = vst [vmem:[#allocation4 + $0x6b8] sm:$0xff] %v5781
  %6005 = vst [vmem:[#allocation4 + $0x6c0] sm:$0xff] %v4950
  %6006 = vst [vmem:[#allocation4 + $0x6c8] sm:$0xff] %v4952
  %6007 = vst [vmem:[#allocation4 + $0x6d0] sm:$0xff] %v5165
  %6008 = vst [vmem:[#allocation4 + $0x6d8] sm:$0xff] %v5167
  %6009 = vst [vmem:[#allocation4 + $0x6e0] sm:$0xff] %v5380
  %6010 = vst [vmem:[#allocation4 + $0x6e8] sm:$0xff] %v5382
  %6011 = vst [vmem:[#allocation4 + $0x6f0] sm:$0xff] %v5595
  %6012 = vst [vmem:[#allocation4 + $0x6f8] sm:$0xff] %v5597
  %6013 = vst [vmem:[#allocation4 + $0x700] sm:$0xff] %v5786
  %v6014 = vld [vmem:[%s5] sm:$0xff]
  %6016 = vset.pattern.permute.xlu0 0
  %6017 = vperm.xlu0 %6016, %v6014
  %v6018 = vpop.permute.xlu0 %6017
  %v6020 = vadd.f32 %v6018, 0.0
  %v6021 = vld [vmem:[#allocation4] sm:$0xff]
  %v6022 = vld [vmem:[#allocation4 + $0x8] sm:$0xff]
  %v6023 = vld [vmem:[#allocation4 + $0x10] sm:$0xff]
  %v6024 = vld [vmem:[#allocation4 + $0x18] sm:$0xff]
  %v6025 = vld [vmem:[#allocation4 + $0x20] sm:$0xff]
  %v6026 = vld [vmem:[#allocation4 + $0x28] sm:$0xff]
  %v6027 = vld [vmem:[#allocation4 + $0x30] sm:$0xff]
  %v6028 = vld [vmem:[#allocation4 + $0x38] sm:$0xff]
  %v6029 = vadd.f32 %v6020, %v6021
  %v6030 = vadd.f32 %v6020, %v6022
  %v6031 = vadd.f32 %v6020, %v6023
  %v6032 = vadd.f32 %v6020, %v6024
  %v6033 = vadd.f32 %v6020, %v6025
  %v6034 = vadd.f32 %v6020, %v6026
  %v6035 = vadd.f32 %v6020, %v6027
  %v6036 = vadd.f32 %v6020, %v6028
  %v6037 = vld [vmem:[#allocation4 + $0x48] sm:$0xff]
  %v6038 = vld [vmem:[#allocation4 + $0x50] sm:$0xff]
  %v6039 = vld [vmem:[#allocation4 + $0x58] sm:$0xff]
  %v6040 = vld [vmem:[#allocation4 + $0x60] sm:$0xff]
  %v6041 = vld [vmem:[#allocation4 + $0x68] sm:$0xff]
  %v6042 = vld [vmem:[#allocation4 + $0x70] sm:$0xff]
  %v6043 = vld [vmem:[#allocation4 + $0x78] sm:$0xff]
  %v6044 = vld [vmem:[#allocation4 + $0x80] sm:$0xff]
  %v6045 = vld [vmem:[#allocation4 + $0x88] sm:$0xff]
  %6055 = vrot.lane.b32.xlu0 %v6037, 127
  %v6056 = vpop.permute.xlu0 %6055
  %6057 = vrot.lane.b32.xlu0 %v6038, 127
  %v6058 = vpop.permute.xlu0 %6057
  %6059 = vrot.lane.b32.xlu0 %v6039, 127
  %v6060 = vpop.permute.xlu0 %6059
  %6061 = vrot.lane.b32.xlu0 %v6040, 127
  %v6062 = vpop.permute.xlu0 %6061
  %6063 = vrot.lane.b32.xlu0 %v6041, 127
  %v6064 = vpop.permute.xlu0 %6063
  %6065 = vrot.lane.b32.xlu0 %v6042, 127
  %v6066 = vpop.permute.xlu0 %6065
  %6067 = vrot.lane.b32.xlu0 %v6043, 127
  %v6068 = vpop.permute.xlu0 %6067
  %6069 = vrot.lane.b32.xlu0 %v6044, 127
  %v6070 = vpop.permute.xlu0 %6069
  %6071 = vrot.lane.b32.xlu0 %v6045, 127
  %v6072 = vpop.permute.xlu0 %6071
  %v6073 = vsel %vm87, %v6056, %v6058
  %v6074 = vsel %vm87, %v6058, %v6060
  %v6075 = vsel %vm87, %v6060, %v6062
  %v6076 = vsel %vm87, %v6062, %v6064
  %v6077 = vsel %vm87, %v6064, %v6066
  %v6078 = vsel %vm87, %v6066, %v6068
  %v6079 = vsel %vm87, %v6068, %v6070
  %v6080 = vsel %vm87, %v6070, %v6072
  %v6089 = vadd.f32 %v6029, %v6073
  %v6090 = vadd.f32 %v6030, %v6074
  %v6091 = vadd.f32 %v6031, %v6075
  %v6092 = vadd.f32 %v6032, %v6076
  %v6093 = vadd.f32 %v6033, %v6077
  %v6094 = vadd.f32 %v6034, %v6078
  %v6095 = vadd.f32 %v6035, %v6079
  %v6096 = vadd.f32 %v6036, %v6080
  %v6097 = vld [vmem:[#allocation4 + $0x90] sm:$0xff]
  %v6098 = vld [vmem:[#allocation4 + $0x98] sm:$0xff]
  %v6099 = vld [vmem:[#allocation4 + $0xa0] sm:$0xff]
  %v6100 = vld [vmem:[#allocation4 + $0xa8] sm:$0xff]
  %v6101 = vld [vmem:[#allocation4 + $0xb0] sm:$0xff]
  %v6102 = vld [vmem:[#allocation4 + $0xb8] sm:$0xff]
  %v6103 = vld [vmem:[#allocation4 + $0xc0] sm:$0xff]
  %v6104 = vld [vmem:[#allocation4 + $0xc8] sm:$0xff]
  %v6105 = vld [vmem:[#allocation4 + $0xd0] sm:$0xff]
  %6115 = vrot.lane.b32.xlu0 %v6097, 126
  %v6116 = vpop.permute.xlu0 %6115
  %6117 = vrot.lane.b32.xlu0 %v6098, 126
  %v6118 = vpop.permute.xlu0 %6117
  %6119 = vrot.lane.b32.xlu0 %v6099, 126
  %v6120 = vpop.permute.xlu0 %6119
  %6121 = vrot.lane.b32.xlu0 %v6100, 126
  %v6122 = vpop.permute.xlu0 %6121
  %6123 = vrot.lane.b32.xlu0 %v6101, 126
  %v6124 = vpop.permute.xlu0 %6123
  %6125 = vrot.lane.b32.xlu0 %v6102, 126
  %v6126 = vpop.permute.xlu0 %6125
  %6127 = vrot.lane.b32.xlu0 %v6103, 126
  %v6128 = vpop.permute.xlu0 %6127
  %6129 = vrot.lane.b32.xlu0 %v6104, 126
  %v6130 = vpop.permute.xlu0 %6129
  %6131 = vrot.lane.b32.xlu0 %v6105, 126
  %v6132 = vpop.permute.xlu0 %6131
  %v6133 = vsel %vm150, %v6116, %v6118
  %v6134 = vsel %vm150, %v6118, %v6120
  %v6135 = vsel %vm150, %v6120, %v6122
  %v6136 = vsel %vm150, %v6122, %v6124
  %v6137 = vsel %vm150, %v6124, %v6126
  %v6138 = vsel %vm150, %v6126, %v6128
  %v6139 = vsel %vm150, %v6128, %v6130
  %v6140 = vsel %vm150, %v6130, %v6132
  %v6149 = vadd.f32 %v6089, %v6133
  %v6150 = vadd.f32 %v6090, %v6134
  %v6151 = vadd.f32 %v6091, %v6135
  %v6152 = vadd.f32 %v6092, %v6136
  %v6153 = vadd.f32 %v6093, %v6137
  %v6154 = vadd.f32 %v6094, %v6138
  %v6155 = vadd.f32 %v6095, %v6139
  %v6156 = vadd.f32 %v6096, %v6140
  %v6157 = vld [vmem:[#allocation4 + $0xd8] sm:$0xff]
  %v6158 = vld [vmem:[#allocation4 + $0xe0] sm:$0xff]
  %v6159 = vld [vmem:[#allocation4 + $0xe8] sm:$0xff]
  %v6160 = vld [vmem:[#allocation4 + $0xf0] sm:$0xff]
  %v6161 = vld [vmem:[#allocation4 + $0xf8] sm:$0xff]
  %v6162 = vld [vmem:[#allocation4 + $0x100] sm:$0xff]
  %v6163 = vld [vmem:[#allocation4 + $0x108] sm:$0xff]
  %v6164 = vld [vmem:[#allocation4 + $0x110] sm:$0xff]
  %v6165 = vld [vmem:[#allocation4 + $0x118] sm:$0xff]
  %6175 = vrot.lane.b32.xlu0 %v6157, 125
  %v6176 = vpop.permute.xlu0 %6175
  %6177 = vrot.lane.b32.xlu0 %v6158, 125
  %v6178 = vpop.permute.xlu0 %6177
  %6179 = vrot.lane.b32.xlu0 %v6159, 125
  %v6180 = vpop.permute.xlu0 %6179
  %6181 = vrot.lane.b32.xlu0 %v6160, 125
  %v6182 = vpop.permute.xlu0 %6181
  %6183 = vrot.lane.b32.xlu0 %v6161, 125
  %v6184 = vpop.permute.xlu0 %6183
  %6185 = vrot.lane.b32.xlu0 %v6162, 125
  %v6186 = vpop.permute.xlu0 %6185
  %6187 = vrot.lane.b32.xlu0 %v6163, 125
  %v6188 = vpop.permute.xlu0 %6187
  %6189 = vrot.lane.b32.xlu0 %v6164, 125
  %v6190 = vpop.permute.xlu0 %6189
  %6191 = vrot.lane.b32.xlu0 %v6165, 125
  %v6192 = vpop.permute.xlu0 %6191
  %v6193 = vsel %vm213, %v6176, %v6178
  %v6194 = vsel %vm213, %v6178, %v6180
  %v6195 = vsel %vm213, %v6180, %v6182
  %v6196 = vsel %vm213, %v6182, %v6184
  %v6197 = vsel %vm213, %v6184, %v6186
  %v6198 = vsel %vm213, %v6186, %v6188
  %v6199 = vsel %vm213, %v6188, %v6190
  %v6200 = vsel %vm213, %v6190, %v6192
  %v6209 = vadd.f32 %v6149, %v6193
  %v6210 = vadd.f32 %v6150, %v6194
  %v6211 = vadd.f32 %v6151, %v6195
  %v6212 = vadd.f32 %v6152, %v6196
  %v6213 = vadd.f32 %v6153, %v6197
  %v6214 = vadd.f32 %v6154, %v6198
  %v6215 = vadd.f32 %v6155, %v6199
  %v6216 = vadd.f32 %v6156, %v6200
  %v6217 = vld [vmem:[#allocation4 + $0x120] sm:$0xff]
  %v6218 = vld [vmem:[#allocation4 + $0x128] sm:$0xff]
  %v6219 = vld [vmem:[#allocation4 + $0x130] sm:$0xff]
  %v6220 = vld [vmem:[#allocation4 + $0x138] sm:$0xff]
  %v6221 = vld [vmem:[#allocation4 + $0x140] sm:$0xff]
  %v6222 = vld [vmem:[#allocation4 + $0x148] sm:$0xff]
  %v6223 = vld [vmem:[#allocation4 + $0x150] sm:$0xff]
  %v6224 = vld [vmem:[#allocation4 + $0x158] sm:$0xff]
  %v6225 = vld [vmem:[#allocation4 + $0x160] sm:$0xff]
  %6235 = vrot.lane.b32.xlu0 %v6217, 124
  %v6236 = vpop.permute.xlu0 %6235
  %6237 = vrot.lane.b32.xlu0 %v6218, 124
  %v6238 = vpop.permute.xlu0 %6237
  %6239 = vrot.lane.b32.xlu0 %v6219, 124
  %v6240 = vpop.permute.xlu0 %6239
  %6241 = vrot.lane.b32.xlu0 %v6220, 124
  %v6242 = vpop.permute.xlu0 %6241
  %6243 = vrot.lane.b32.xlu0 %v6221, 124
  %v6244 = vpop.permute.xlu0 %6243
  %6245 = vrot.lane.b32.xlu0 %v6222, 124
  %v6246 = vpop.permute.xlu0 %6245
  %6247 = vrot.lane.b32.xlu0 %v6223, 124
  %v6248 = vpop.permute.xlu0 %6247
  %6249 = vrot.lane.b32.xlu0 %v6224, 124
  %v6250 = vpop.permute.xlu0 %6249
  %6251 = vrot.lane.b32.xlu0 %v6225, 124
  %v6252 = vpop.permute.xlu0 %6251
  %v6253 = vsel %vm276, %v6236, %v6238
  %v6254 = vsel %vm276, %v6238, %v6240
  %v6255 = vsel %vm276, %v6240, %v6242
  %v6256 = vsel %vm276, %v6242, %v6244
  %v6257 = vsel %vm276, %v6244, %v6246
  %v6258 = vsel %vm276, %v6246, %v6248
  %v6259 = vsel %vm276, %v6248, %v6250
  %v6260 = vsel %vm276, %v6250, %v6252
  %v6269 = vadd.f32 %v6209, %v6253
  %v6270 = vadd.f32 %v6210, %v6254
  %v6271 = vadd.f32 %v6211, %v6255
  %v6272 = vadd.f32 %v6212, %v6256
  %v6273 = vadd.f32 %v6213, %v6257
  %v6274 = vadd.f32 %v6214, %v6258
  %v6275 = vadd.f32 %v6215, %v6259
  %v6276 = vadd.f32 %v6216, %v6260
  %v6277 = vld [vmem:[#allocation4 + $0x168] sm:$0xff]
  %v6278 = vld [vmem:[#allocation4 + $0x170] sm:$0xff]
  %v6279 = vld [vmem:[#allocation4 + $0x178] sm:$0xff]
  %v6280 = vld [vmem:[#allocation4 + $0x180] sm:$0xff]
  %v6281 = vld [vmem:[#allocation4 + $0x188] sm:$0xff]
  %v6282 = vld [vmem:[#allocation4 + $0x190] sm:$0xff]
  %v6283 = vld [vmem:[#allocation4 + $0x198] sm:$0xff]
  %v6284 = vld [vmem:[#allocation4 + $0x1a0] sm:$0xff]
  %v6285 = vld [vmem:[#allocation4 + $0x1a8] sm:$0xff]
  %6295 = vrot.lane.b32.xlu0 %v6277, 104
  %v6296 = vpop.permute.xlu0 %6295
  %6297 = vrot.lane.b32.xlu0 %v6278, 104
  %v6298 = vpop.permute.xlu0 %6297
  %6299 = vrot.lane.b32.xlu0 %v6279, 104
  %v6300 = vpop.permute.xlu0 %6299
  %6301 = vrot.lane.b32.xlu0 %v6280, 104
  %v6302 = vpop.permute.xlu0 %6301
  %6303 = vrot.lane.b32.xlu0 %v6281, 104
  %v6304 = vpop.permute.xlu0 %6303
  %6305 = vrot.lane.b32.xlu0 %v6282, 104
  %v6306 = vpop.permute.xlu0 %6305
  %6307 = vrot.lane.b32.xlu0 %v6283, 104
  %v6308 = vpop.permute.xlu0 %6307
  %6309 = vrot.lane.b32.xlu0 %v6284, 104
  %v6310 = vpop.permute.xlu0 %6309
  %6311 = vrot.lane.b32.xlu0 %v6285, 104
  %v6312 = vpop.permute.xlu0 %6311
  %v6313 = vsel %vm339, %v6296, %v6298
  %v6314 = vsel %vm339, %v6298, %v6300
  %v6315 = vsel %vm339, %v6300, %v6302
  %v6316 = vsel %vm339, %v6302, %v6304
  %v6317 = vsel %vm339, %v6304, %v6306
  %v6318 = vsel %vm339, %v6306, %v6308
  %v6319 = vsel %vm339, %v6308, %v6310
  %v6320 = vsel %vm339, %v6310, %v6312
  %v6329 = vadd.f32 %v6269, %v6313
  %v6330 = vadd.f32 %v6270, %v6314
  %v6331 = vadd.f32 %v6271, %v6315
  %v6332 = vadd.f32 %v6272, %v6316
  %v6333 = vadd.f32 %v6273, %v6317
  %v6334 = vadd.f32 %v6274, %v6318
  %v6335 = vadd.f32 %v6275, %v6319
  %v6336 = vadd.f32 %v6276, %v6320
  %v6337 = vld [vmem:[#allocation4 + $0x1b0] sm:$0xff]
  %v6338 = vld [vmem:[#allocation4 + $0x1b8] sm:$0xff]
  %v6339 = vld [vmem:[#allocation4 + $0x1c0] sm:$0xff]
  %v6340 = vld [vmem:[#allocation4 + $0x1c8] sm:$0xff]
  %v6341 = vld [vmem:[#allocation4 + $0x1d0] sm:$0xff]
  %v6342 = vld [vmem:[#allocation4 + $0x1d8] sm:$0xff]
  %v6343 = vld [vmem:[#allocation4 + $0x1e0] sm:$0xff]
  %v6344 = vld [vmem:[#allocation4 + $0x1e8] sm:$0xff]
  %v6345 = vld [vmem:[#allocation4 + $0x1f0] sm:$0xff]
  %6355 = vrot.lane.b32.xlu0 %v6337, 103
  %v6356 = vpop.permute.xlu0 %6355
  %6357 = vrot.lane.b32.xlu0 %v6338, 103
  %v6358 = vpop.permute.xlu0 %6357
  %6359 = vrot.lane.b32.xlu0 %v6339, 103
  %v6360 = vpop.permute.xlu0 %6359
  %6361 = vrot.lane.b32.xlu0 %v6340, 103
  %v6362 = vpop.permute.xlu0 %6361
  %6363 = vrot.lane.b32.xlu0 %v6341, 103
  %v6364 = vpop.permute.xlu0 %6363
  %6365 = vrot.lane.b32.xlu0 %v6342, 103
  %v6366 = vpop.permute.xlu0 %6365
  %6367 = vrot.lane.b32.xlu0 %v6343, 103
  %v6368 = vpop.permute.xlu0 %6367
  %6369 = vrot.lane.b32.xlu0 %v6344, 103
  %v6370 = vpop.permute.xlu0 %6369
  %6371 = vrot.lane.b32.xlu0 %v6345, 103
  %v6372 = vpop.permute.xlu0 %6371
  %v6373 = vsel %vm402, %v6356, %v6358
  %v6374 = vsel %vm402, %v6358, %v6360
  %v6375 = vsel %vm402, %v6360, %v6362
  %v6376 = vsel %vm402, %v6362, %v6364
  %v6377 = vsel %vm402, %v6364, %v6366
  %v6378 = vsel %vm402, %v6366, %v6368
  %v6379 = vsel %vm402, %v6368, %v6370
  %v6380 = vsel %vm402, %v6370, %v6372
  %v6389 = vadd.f32 %v6329, %v6373
  %v6390 = vadd.f32 %v6330, %v6374
  %v6391 = vadd.f32 %v6331, %v6375
  %v6392 = vadd.f32 %v6332, %v6376
  %v6393 = vadd.f32 %v6333, %v6377
  %v6394 = vadd.f32 %v6334, %v6378
  %v6395 = vadd.f32 %v6335, %v6379
  %v6396 = vadd.f32 %v6336, %v6380
  %v6397 = vld [vmem:[#allocation4 + $0x1f8] sm:$0xff]
  %v6398 = vld [vmem:[#allocation4 + $0x200] sm:$0xff]
  %v6399 = vld [vmem:[#allocation4 + $0x208] sm:$0xff]
  %v6400 = vld [vmem:[#allocation4 + $0x210] sm:$0xff]
  %v6401 = vld [vmem:[#allocation4 + $0x218] sm:$0xff]
  %v6402 = vld [vmem:[#allocation4 + $0x220] sm:$0xff]
  %v6403 = vld [vmem:[#allocation4 + $0x228] sm:$0xff]
  %v6404 = vld [vmem:[#allocation4 + $0x230] sm:$0xff]
  %v6405 = vld [vmem:[#allocation4 + $0x238] sm:$0xff]
  %6415 = vrot.lane.b32.xlu0 %v6397, 102
  %v6416 = vpop.permute.xlu0 %6415
  %6417 = vrot.lane.b32.xlu0 %v6398, 102
  %v6418 = vpop.permute.xlu0 %6417
  %6419 = vrot.lane.b32.xlu0 %v6399, 102
  %v6420 = vpop.permute.xlu0 %6419
  %6421 = vrot.lane.b32.xlu0 %v6400, 102
  %v6422 = vpop.permute.xlu0 %6421
  %6423 = vrot.lane.b32.xlu0 %v6401, 102
  %v6424 = vpop.permute.xlu0 %6423
  %6425 = vrot.lane.b32.xlu0 %v6402, 102
  %v6426 = vpop.permute.xlu0 %6425
  %6427 = vrot.lane.b32.xlu0 %v6403, 102
  %v6428 = vpop.permute.xlu0 %6427
  %6429 = vrot.lane.b32.xlu0 %v6404, 102
  %v6430 = vpop.permute.xlu0 %6429
  %6431 = vrot.lane.b32.xlu0 %v6405, 102
  %v6432 = vpop.permute.xlu0 %6431
  %v6433 = vsel %vm465, %v6416, %v6418
  %v6434 = vsel %vm465, %v6418, %v6420
  %v6435 = vsel %vm465, %v6420, %v6422
  %v6436 = vsel %vm465, %v6422, %v6424
  %v6437 = vsel %vm465, %v6424, %v6426
  %v6438 = vsel %vm465, %v6426, %v6428
  %v6439 = vsel %vm465, %v6428, %v6430
  %v6440 = vsel %vm465, %v6430, %v6432
  %v6449 = vadd.f32 %v6389, %v6433
  %v6450 = vadd.f32 %v6390, %v6434
  %v6451 = vadd.f32 %v6391, %v6435
  %v6452 = vadd.f32 %v6392, %v6436
  %v6453 = vadd.f32 %v6393, %v6437
  %v6454 = vadd.f32 %v6394, %v6438
  %v6455 = vadd.f32 %v6395, %v6439
  %v6456 = vadd.f32 %v6396, %v6440
  %v6457 = vld [vmem:[#allocation4 + $0x240] sm:$0xff]
  %v6458 = vld [vmem:[#allocation4 + $0x248] sm:$0xff]
  %v6459 = vld [vmem:[#allocation4 + $0x250] sm:$0xff]
  %v6460 = vld [vmem:[#allocation4 + $0x258] sm:$0xff]
  %v6461 = vld [vmem:[#allocation4 + $0x260] sm:$0xff]
  %v6462 = vld [vmem:[#allocation4 + $0x268] sm:$0xff]
  %v6463 = vld [vmem:[#allocation4 + $0x270] sm:$0xff]
  %v6464 = vld [vmem:[#allocation4 + $0x278] sm:$0xff]
  %v6465 = vld [vmem:[#allocation4 + $0x280] sm:$0xff]
  %6475 = vrot.lane.b32.xlu0 %v6457, 101
  %v6476 = vpop.permute.xlu0 %6475
  %6477 = vrot.lane.b32.xlu0 %v6458, 101
  %v6478 = vpop.permute.xlu0 %6477
  %6479 = vrot.lane.b32.xlu0 %v6459, 101
  %v6480 = vpop.permute.xlu0 %6479
  %6481 = vrot.lane.b32.xlu0 %v6460, 101
  %v6482 = vpop.permute.xlu0 %6481
  %6483 = vrot.lane.b32.xlu0 %v6461, 101
  %v6484 = vpop.permute.xlu0 %6483
  %6485 = vrot.lane.b32.xlu0 %v6462, 101
  %v6486 = vpop.permute.xlu0 %6485
  %6487 = vrot.lane.b32.xlu0 %v6463, 101
  %v6488 = vpop.permute.xlu0 %6487
  %6489 = vrot.lane.b32.xlu0 %v6464, 101
  %v6490 = vpop.permute.xlu0 %6489
  %6491 = vrot.lane.b32.xlu0 %v6465, 101
  %v6492 = vpop.permute.xlu0 %6491
  %v6493 = vsel %vm528, %v6476, %v6478
  %v6494 = vsel %vm528, %v6478, %v6480
  %v6495 = vsel %vm528, %v6480, %v6482
  %v6496 = vsel %vm528, %v6482, %v6484
  %v6497 = vsel %vm528, %v6484, %v6486
  %v6498 = vsel %vm528, %v6486, %v6488
  %v6499 = vsel %vm528, %v6488, %v6490
  %v6500 = vsel %vm528, %v6490, %v6492
  %v6509 = vadd.f32 %v6449, %v6493
  %v6510 = vadd.f32 %v6450, %v6494
  %v6511 = vadd.f32 %v6451, %v6495
  %v6512 = vadd.f32 %v6452, %v6496
  %v6513 = vadd.f32 %v6453, %v6497
  %v6514 = vadd.f32 %v6454, %v6498
  %v6515 = vadd.f32 %v6455, %v6499
  %v6516 = vadd.f32 %v6456, %v6500
  %v6517 = vld [vmem:[#allocation4 + $0x288] sm:$0xff]
  %v6518 = vld [vmem:[#allocation4 + $0x290] sm:$0xff]
  %v6519 = vld [vmem:[#allocation4 + $0x298] sm:$0xff]
  %v6520 = vld [vmem:[#allocation4 + $0x2a0] sm:$0xff]
  %v6521 = vld [vmem:[#allocation4 + $0x2a8] sm:$0xff]
  %v6522 = vld [vmem:[#allocation4 + $0x2b0] sm:$0xff]
  %v6523 = vld [vmem:[#allocation4 + $0x2b8] sm:$0xff]
  %v6524 = vld [vmem:[#allocation4 + $0x2c0] sm:$0xff]
  %v6525 = vld [vmem:[#allocation4 + $0x2c8] sm:$0xff]
  %6535 = vrot.lane.b32.xlu0 %v6517, 100
  %v6536 = vpop.permute.xlu0 %6535
  %6537 = vrot.lane.b32.xlu0 %v6518, 100
  %v6538 = vpop.permute.xlu0 %6537
  %6539 = vrot.lane.b32.xlu0 %v6519, 100
  %v6540 = vpop.permute.xlu0 %6539
  %6541 = vrot.lane.b32.xlu0 %v6520, 100
  %v6542 = vpop.permute.xlu0 %6541
  %6543 = vrot.lane.b32.xlu0 %v6521, 100
  %v6544 = vpop.permute.xlu0 %6543
  %6545 = vrot.lane.b32.xlu0 %v6522, 100
  %v6546 = vpop.permute.xlu0 %6545
  %6547 = vrot.lane.b32.xlu0 %v6523, 100
  %v6548 = vpop.permute.xlu0 %6547
  %6549 = vrot.lane.b32.xlu0 %v6524, 100
  %v6550 = vpop.permute.xlu0 %6549
  %6551 = vrot.lane.b32.xlu0 %v6525, 100
  %v6552 = vpop.permute.xlu0 %6551
  %v6553 = vsel %vm591, %v6536, %v6538
  %v6554 = vsel %vm591, %v6538, %v6540
  %v6555 = vsel %vm591, %v6540, %v6542
  %v6556 = vsel %vm591, %v6542, %v6544
  %v6557 = vsel %vm591, %v6544, %v6546
  %v6558 = vsel %vm591, %v6546, %v6548
  %v6559 = vsel %vm591, %v6548, %v6550
  %v6560 = vsel %vm591, %v6550, %v6552
  %v6569 = vadd.f32 %v6509, %v6553
  %v6570 = vadd.f32 %v6510, %v6554
  %v6571 = vadd.f32 %v6511, %v6555
  %v6572 = vadd.f32 %v6512, %v6556
  %v6573 = vadd.f32 %v6513, %v6557
  %v6574 = vadd.f32 %v6514, %v6558
  %v6575 = vadd.f32 %v6515, %v6559
  %v6576 = vadd.f32 %v6516, %v6560
  %v6577 = vld [vmem:[#allocation4 + $0x2d0] sm:$0xff]
  %v6578 = vld [vmem:[#allocation4 + $0x2d8] sm:$0xff]
  %v6579 = vld [vmem:[#allocation4 + $0x2e0] sm:$0xff]
  %v6580 = vld [vmem:[#allocation4 + $0x2e8] sm:$0xff]
  %v6581 = vld [vmem:[#allocation4 + $0x2f0] sm:$0xff]
  %v6582 = vld [vmem:[#allocation4 + $0x2f8] sm:$0xff]
  %v6583 = vld [vmem:[#allocation4 + $0x300] sm:$0xff]
  %v6584 = vld [vmem:[#allocation4 + $0x308] sm:$0xff]
  %v6585 = vld [vmem:[#allocation4 + $0x310] sm:$0xff]
  %6595 = vrot.lane.b32.xlu0 %v6577, 80
  %v6596 = vpop.permute.xlu0 %6595
  %6597 = vrot.lane.b32.xlu0 %v6578, 80
  %v6598 = vpop.permute.xlu0 %6597
  %6599 = vrot.lane.b32.xlu0 %v6579, 80
  %v6600 = vpop.permute.xlu0 %6599
  %6601 = vrot.lane.b32.xlu0 %v6580, 80
  %v6602 = vpop.permute.xlu0 %6601
  %6603 = vrot.lane.b32.xlu0 %v6581, 80
  %v6604 = vpop.permute.xlu0 %6603
  %6605 = vrot.lane.b32.xlu0 %v6582, 80
  %v6606 = vpop.permute.xlu0 %6605
  %6607 = vrot.lane.b32.xlu0 %v6583, 80
  %v6608 = vpop.permute.xlu0 %6607
  %6609 = vrot.lane.b32.xlu0 %v6584, 80
  %v6610 = vpop.permute.xlu0 %6609
  %6611 = vrot.lane.b32.xlu0 %v6585, 80
  %v6612 = vpop.permute.xlu0 %6611
  %v6613 = vsel %vm654, %v6596, %v6598
  %v6614 = vsel %vm654, %v6598, %v6600
  %v6615 = vsel %vm654, %v6600, %v6602
  %v6616 = vsel %vm654, %v6602, %v6604
  %v6617 = vsel %vm654, %v6604, %v6606
  %v6618 = vsel %vm654, %v6606, %v6608
  %v6619 = vsel %vm654, %v6608, %v6610
  %v6620 = vsel %vm654, %v6610, %v6612
  %v6629 = vadd.f32 %v6569, %v6613
  %v6630 = vadd.f32 %v6570, %v6614
  %v6631 = vadd.f32 %v6571, %v6615
  %v6632 = vadd.f32 %v6572, %v6616
  %v6633 = vadd.f32 %v6573, %v6617
  %v6634 = vadd.f32 %v6574, %v6618
  %v6635 = vadd.f32 %v6575, %v6619
  %v6636 = vadd.f32 %v6576, %v6620
  %v6637 = vld [vmem:[#allocation4 + $0x318] sm:$0xff]
  %v6638 = vld [vmem:[#allocation4 + $0x320] sm:$0xff]
  %v6639 = vld [vmem:[#allocation4 + $0x328] sm:$0xff]
  %v6640 = vld [vmem:[#allocation4 + $0x330] sm:$0xff]
  %v6641 = vld [vmem:[#allocation4 + $0x338] sm:$0xff]
  %v6642 = vld [vmem:[#allocation4 + $0x340] sm:$0xff]
  %v6643 = vld [vmem:[#allocation4 + $0x348] sm:$0xff]
  %v6644 = vld [vmem:[#allocation4 + $0x350] sm:$0xff]
  %v6645 = vld [vmem:[#allocation4 + $0x358] sm:$0xff]
  %6655 = vrot.lane.b32.xlu0 %v6637, 79
  %v6656 = vpop.permute.xlu0 %6655
  %6657 = vrot.lane.b32.xlu0 %v6638, 79
  %v6658 = vpop.permute.xlu0 %6657
  %6659 = vrot.lane.b32.xlu0 %v6639, 79
  %v6660 = vpop.permute.xlu0 %6659
  %6661 = vrot.lane.b32.xlu0 %v6640, 79
  %v6662 = vpop.permute.xlu0 %6661
  %6663 = vrot.lane.b32.xlu0 %v6641, 79
  %v6664 = vpop.permute.xlu0 %6663
  %6665 = vrot.lane.b32.xlu0 %v6642, 79
  %v6666 = vpop.permute.xlu0 %6665
  %6667 = vrot.lane.b32.xlu0 %v6643, 79
  %v6668 = vpop.permute.xlu0 %6667
  %6669 = vrot.lane.b32.xlu0 %v6644, 79
  %v6670 = vpop.permute.xlu0 %6669
  %6671 = vrot.lane.b32.xlu0 %v6645, 79
  %v6672 = vpop.permute.xlu0 %6671
  %v6673 = vsel %vm717, %v6656, %v6658
  %v6674 = vsel %vm717, %v6658, %v6660
  %v6675 = vsel %vm717, %v6660, %v6662
  %v6676 = vsel %vm717, %v6662, %v6664
  %v6677 = vsel %vm717, %v6664, %v6666
  %v6678 = vsel %vm717, %v6666, %v6668
  %v6679 = vsel %vm717, %v6668, %v6670
  %v6680 = vsel %vm717, %v6670, %v6672
  %v6689 = vadd.f32 %v6629, %v6673
  %v6690 = vadd.f32 %v6630, %v6674
  %v6691 = vadd.f32 %v6631, %v6675
  %v6692 = vadd.f32 %v6632, %v6676
  %v6693 = vadd.f32 %v6633, %v6677
  %v6694 = vadd.f32 %v6634, %v6678
  %v6695 = vadd.f32 %v6635, %v6679
  %v6696 = vadd.f32 %v6636, %v6680
  %v6697 = vld [vmem:[#allocation4 + $0x360] sm:$0xff]
  %v6698 = vld [vmem:[#allocation4 + $0x368] sm:$0xff]
  %v6699 = vld [vmem:[#allocation4 + $0x370] sm:$0xff]
  %v6700 = vld [vmem:[#allocation4 + $0x378] sm:$0xff]
  %v6701 = vld [vmem:[#allocation4 + $0x380] sm:$0xff]
  %v6702 = vld [vmem:[#allocation4 + $0x388] sm:$0xff]
  %v6703 = vld [vmem:[#allocation4 + $0x390] sm:$0xff]
  %v6704 = vld [vmem:[#allocation4 + $0x398] sm:$0xff]
  %v6705 = vld [vmem:[#allocation4 + $0x3a0] sm:$0xff]
  %6715 = vrot.lane.b32.xlu0 %v6697, 78
  %v6716 = vpop.permute.xlu0 %6715
  %6717 = vrot.lane.b32.xlu0 %v6698, 78
  %v6718 = vpop.permute.xlu0 %6717
  %6719 = vrot.lane.b32.xlu0 %v6699, 78
  %v6720 = vpop.permute.xlu0 %6719
  %6721 = vrot.lane.b32.xlu0 %v6700, 78
  %v6722 = vpop.permute.xlu0 %6721
  %6723 = vrot.lane.b32.xlu0 %v6701, 78
  %v6724 = vpop.permute.xlu0 %6723
  %6725 = vrot.lane.b32.xlu0 %v6702, 78
  %v6726 = vpop.permute.xlu0 %6725
  %6727 = vrot.lane.b32.xlu0 %v6703, 78
  %v6728 = vpop.permute.xlu0 %6727
  %6729 = vrot.lane.b32.xlu0 %v6704, 78
  %v6730 = vpop.permute.xlu0 %6729
  %6731 = vrot.lane.b32.xlu0 %v6705, 78
  %v6732 = vpop.permute.xlu0 %6731
  %v6733 = vsel %vm780, %v6716, %v6718
  %v6734 = vsel %vm780, %v6718, %v6720
  %v6735 = vsel %vm780, %v6720, %v6722
  %v6736 = vsel %vm780, %v6722, %v6724
  %v6737 = vsel %vm780, %v6724, %v6726
  %v6738 = vsel %vm780, %v6726, %v6728
  %v6739 = vsel %vm780, %v6728, %v6730
  %v6740 = vsel %vm780, %v6730, %v6732
  %v6749 = vadd.f32 %v6689, %v6733
  %v6750 = vadd.f32 %v6690, %v6734
  %v6751 = vadd.f32 %v6691, %v6735
  %v6752 = vadd.f32 %v6692, %v6736
  %v6753 = vadd.f32 %v6693, %v6737
  %v6754 = vadd.f32 %v6694, %v6738
  %v6755 = vadd.f32 %v6695, %v6739
  %v6756 = vadd.f32 %v6696, %v6740
  %v6757 = vld [vmem:[#allocation4 + $0x3a8] sm:$0xff]
  %v6758 = vld [vmem:[#allocation4 + $0x3b0] sm:$0xff]
  %v6759 = vld [vmem:[#allocation4 + $0x3b8] sm:$0xff]
  %v6760 = vld [vmem:[#allocation4 + $0x3c0] sm:$0xff]
  %v6761 = vld [vmem:[#allocation4 + $0x3c8] sm:$0xff]
  %v6762 = vld [vmem:[#allocation4 + $0x3d0] sm:$0xff]
  %v6763 = vld [vmem:[#allocation4 + $0x3d8] sm:$0xff]
  %v6764 = vld [vmem:[#allocation4 + $0x3e0] sm:$0xff]
  %v6765 = vld [vmem:[#allocation4 + $0x3e8] sm:$0xff]
  %6775 = vrot.lane.b32.xlu0 %v6757, 77
  %v6776 = vpop.permute.xlu0 %6775
  %6777 = vrot.lane.b32.xlu0 %v6758, 77
  %v6778 = vpop.permute.xlu0 %6777
  %6779 = vrot.lane.b32.xlu0 %v6759, 77
  %v6780 = vpop.permute.xlu0 %6779
  %6781 = vrot.lane.b32.xlu0 %v6760, 77
  %v6782 = vpop.permute.xlu0 %6781
  %6783 = vrot.lane.b32.xlu0 %v6761, 77
  %v6784 = vpop.permute.xlu0 %6783
  %6785 = vrot.lane.b32.xlu0 %v6762, 77
  %v6786 = vpop.permute.xlu0 %6785
  %6787 = vrot.lane.b32.xlu0 %v6763, 77
  %v6788 = vpop.permute.xlu0 %6787
  %6789 = vrot.lane.b32.xlu0 %v6764, 77
  %v6790 = vpop.permute.xlu0 %6789
  %6791 = vrot.lane.b32.xlu0 %v6765, 77
  %v6792 = vpop.permute.xlu0 %6791
  %v6793 = vsel %vm843, %v6776, %v6778
  %v6794 = vsel %vm843, %v6778, %v6780
  %v6795 = vsel %vm843, %v6780, %v6782
  %v6796 = vsel %vm843, %v6782, %v6784
  %v6797 = vsel %vm843, %v6784, %v6786
  %v6798 = vsel %vm843, %v6786, %v6788
  %v6799 = vsel %vm843, %v6788, %v6790
  %v6800 = vsel %vm843, %v6790, %v6792
  %v6809 = vadd.f32 %v6749, %v6793
  %v6810 = vadd.f32 %v6750, %v6794
  %v6811 = vadd.f32 %v6751, %v6795
  %v6812 = vadd.f32 %v6752, %v6796
  %v6813 = vadd.f32 %v6753, %v6797
  %v6814 = vadd.f32 %v6754, %v6798
  %v6815 = vadd.f32 %v6755, %v6799
  %v6816 = vadd.f32 %v6756, %v6800
  %v6817 = vld [vmem:[#allocation4 + $0x3f0] sm:$0xff]
  %v6818 = vld [vmem:[#allocation4 + $0x3f8] sm:$0xff]
  %v6819 = vld [vmem:[#allocation4 + $0x400] sm:$0xff]
  %v6820 = vld [vmem:[#allocation4 + $0x408] sm:$0xff]
  %v6821 = vld [vmem:[#allocation4 + $0x410] sm:$0xff]
  %v6822 = vld [vmem:[#allocation4 + $0x418] sm:$0xff]
  %v6823 = vld [vmem:[#allocation4 + $0x420] sm:$0xff]
  %v6824 = vld [vmem:[#allocation4 + $0x428] sm:$0xff]
  %v6825 = vld [vmem:[#allocation4 + $0x430] sm:$0xff]
  %6835 = vrot.lane.b32.xlu0 %v6817, 76
  %v6836 = vpop.permute.xlu0 %6835
  %6837 = vrot.lane.b32.xlu0 %v6818, 76
  %v6838 = vpop.permute.xlu0 %6837
  %6839 = vrot.lane.b32.xlu0 %v6819, 76
  %v6840 = vpop.permute.xlu0 %6839
  %6841 = vrot.lane.b32.xlu0 %v6820, 76
  %v6842 = vpop.permute.xlu0 %6841
  %6843 = vrot.lane.b32.xlu0 %v6821, 76
  %v6844 = vpop.permute.xlu0 %6843
  %6845 = vrot.lane.b32.xlu0 %v6822, 76
  %v6846 = vpop.permute.xlu0 %6845
  %6847 = vrot.lane.b32.xlu0 %v6823, 76
  %v6848 = vpop.permute.xlu0 %6847
  %6849 = vrot.lane.b32.xlu0 %v6824, 76
  %v6850 = vpop.permute.xlu0 %6849
  %6851 = vrot.lane.b32.xlu0 %v6825, 76
  %v6852 = vpop.permute.xlu0 %6851
  %v6853 = vsel %vm906, %v6836, %v6838
  %v6854 = vsel %vm906, %v6838, %v6840
  %v6855 = vsel %vm906, %v6840, %v6842
  %v6856 = vsel %vm906, %v6842, %v6844
  %v6857 = vsel %vm906, %v6844, %v6846
  %v6858 = vsel %vm906, %v6846, %v6848
  %v6859 = vsel %vm906, %v6848, %v6850
  %v6860 = vsel %vm906, %v6850, %v6852
  %v6869 = vadd.f32 %v6809, %v6853
  %v6870 = vadd.f32 %v6810, %v6854
  %v6871 = vadd.f32 %v6811, %v6855
  %v6872 = vadd.f32 %v6812, %v6856
  %v6873 = vadd.f32 %v6813, %v6857
  %v6874 = vadd.f32 %v6814, %v6858
  %v6875 = vadd.f32 %v6815, %v6859
  %v6876 = vadd.f32 %v6816, %v6860
  %v6877 = vld [vmem:[#allocation4 + $0x438] sm:$0xff]
  %v6878 = vld [vmem:[#allocation4 + $0x440] sm:$0xff]
  %v6879 = vld [vmem:[#allocation4 + $0x448] sm:$0xff]
  %v6880 = vld [vmem:[#allocation4 + $0x450] sm:$0xff]
  %v6881 = vld [vmem:[#allocation4 + $0x458] sm:$0xff]
  %v6882 = vld [vmem:[#allocation4 + $0x460] sm:$0xff]
  %v6883 = vld [vmem:[#allocation4 + $0x468] sm:$0xff]
  %v6884 = vld [vmem:[#allocation4 + $0x470] sm:$0xff]
  %v6885 = vld [vmem:[#allocation4 + $0x478] sm:$0xff]
  %6895 = vrot.lane.b32.xlu0 %v6877, 56
  %v6896 = vpop.permute.xlu0 %6895
  %6897 = vrot.lane.b32.xlu0 %v6878, 56
  %v6898 = vpop.permute.xlu0 %6897
  %6899 = vrot.lane.b32.xlu0 %v6879, 56
  %v6900 = vpop.permute.xlu0 %6899
  %6901 = vrot.lane.b32.xlu0 %v6880, 56
  %v6902 = vpop.permute.xlu0 %6901
  %6903 = vrot.lane.b32.xlu0 %v6881, 56
  %v6904 = vpop.permute.xlu0 %6903
  %6905 = vrot.lane.b32.xlu0 %v6882, 56
  %v6906 = vpop.permute.xlu0 %6905
  %6907 = vrot.lane.b32.xlu0 %v6883, 56
  %v6908 = vpop.permute.xlu0 %6907
  %6909 = vrot.lane.b32.xlu0 %v6884, 56
  %v6910 = vpop.permute.xlu0 %6909
  %6911 = vrot.lane.b32.xlu0 %v6885, 56
  %v6912 = vpop.permute.xlu0 %6911
  %v6913 = vsel %vm969, %v6896, %v6898
  %v6914 = vsel %vm969, %v6898, %v6900
  %v6915 = vsel %vm969, %v6900, %v6902
  %v6916 = vsel %vm969, %v6902, %v6904
  %v6917 = vsel %vm969, %v6904, %v6906
  %v6918 = vsel %vm969, %v6906, %v6908
  %v6919 = vsel %vm969, %v6908, %v6910
  %v6920 = vsel %vm969, %v6910, %v6912
  %v6929 = vadd.f32 %v6869, %v6913
  %v6930 = vadd.f32 %v6870, %v6914
  %v6931 = vadd.f32 %v6871, %v6915
  %v6932 = vadd.f32 %v6872, %v6916
  %v6933 = vadd.f32 %v6873, %v6917
  %v6934 = vadd.f32 %v6874, %v6918
  %v6935 = vadd.f32 %v6875, %v6919
  %v6936 = vadd.f32 %v6876, %v6920
  %v6937 = vld [vmem:[#allocation4 + $0x480] sm:$0xff]
  %v6938 = vld [vmem:[#allocation4 + $0x488] sm:$0xff]
  %v6939 = vld [vmem:[#allocation4 + $0x490] sm:$0xff]
  %v6940 = vld [vmem:[#allocation4 + $0x498] sm:$0xff]
  %v6941 = vld [vmem:[#allocation4 + $0x4a0] sm:$0xff]
  %v6942 = vld [vmem:[#allocation4 + $0x4a8] sm:$0xff]
  %v6943 = vld [vmem:[#allocation4 + $0x4b0] sm:$0xff]
  %v6944 = vld [vmem:[#allocation4 + $0x4b8] sm:$0xff]
  %v6945 = vld [vmem:[#allocation4 + $0x4c0] sm:$0xff]
  %6955 = vrot.lane.b32.xlu0 %v6937, 55
  %v6956 = vpop.permute.xlu0 %6955
  %6957 = vrot.lane.b32.xlu0 %v6938, 55
  %v6958 = vpop.permute.xlu0 %6957
  %6959 = vrot.lane.b32.xlu0 %v6939, 55
  %v6960 = vpop.permute.xlu0 %6959
  %6961 = vrot.lane.b32.xlu0 %v6940, 55
  %v6962 = vpop.permute.xlu0 %6961
  %6963 = vrot.lane.b32.xlu0 %v6941, 55
  %v6964 = vpop.permute.xlu0 %6963
  %6965 = vrot.lane.b32.xlu0 %v6942, 55
  %v6966 = vpop.permute.xlu0 %6965
  %6967 = vrot.lane.b32.xlu0 %v6943, 55
  %v6968 = vpop.permute.xlu0 %6967
  %6969 = vrot.lane.b32.xlu0 %v6944, 55
  %v6970 = vpop.permute.xlu0 %6969
  %6971 = vrot.lane.b32.xlu0 %v6945, 55
  %v6972 = vpop.permute.xlu0 %6971
  %v6973 = vsel %vm1032, %v6956, %v6958
  %v6974 = vsel %vm1032, %v6958, %v6960
  %v6975 = vsel %vm1032, %v6960, %v6962
  %v6976 = vsel %vm1032, %v6962, %v6964
  %v6977 = vsel %vm1032, %v6964, %v6966
  %v6978 = vsel %vm1032, %v6966, %v6968
  %v6979 = vsel %vm1032, %v6968, %v6970
  %v6980 = vsel %vm1032, %v6970, %v6972
  %v6989 = vadd.f32 %v6929, %v6973
  %v6990 = vadd.f32 %v6930, %v6974
  %v6991 = vadd.f32 %v6931, %v6975
  %v6992 = vadd.f32 %v6932, %v6976
  %v6993 = vadd.f32 %v6933, %v6977
  %v6994 = vadd.f32 %v6934, %v6978
  %v6995 = vadd.f32 %v6935, %v6979
  %v6996 = vadd.f32 %v6936, %v6980
  %v6997 = vld [vmem:[#allocation4 + $0x4c8] sm:$0xff]
  %v6998 = vld [vmem:[#allocation4 + $0x4d0] sm:$0xff]
  %v6999 = vld [vmem:[#allocation4 + $0x4d8] sm:$0xff]
  %v7000 = vld [vmem:[#allocation4 + $0x4e0] sm:$0xff]
  %v7001 = vld [vmem:[#allocation4 + $0x4e8] sm:$0xff]
  %v7002 = vld [vmem:[#allocation4 + $0x4f0] sm:$0xff]
  %v7003 = vld [vmem:[#allocation4 + $0x4f8] sm:$0xff]
  %v7004 = vld [vmem:[#allocation4 + $0x500] sm:$0xff]
  %v7005 = vld [vmem:[#allocation4 + $0x508] sm:$0xff]
  %7015 = vrot.lane.b32.xlu0 %v6997, 54
  %v7016 = vpop.permute.xlu0 %7015
  %7017 = vrot.lane.b32.xlu0 %v6998, 54
  %v7018 = vpop.permute.xlu0 %7017
  %7019 = vrot.lane.b32.xlu0 %v6999, 54
  %v7020 = vpop.permute.xlu0 %7019
  %7021 = vrot.lane.b32.xlu0 %v7000, 54
  %v7022 = vpop.permute.xlu0 %7021
  %7023 = vrot.lane.b32.xlu0 %v7001, 54
  %v7024 = vpop.permute.xlu0 %7023
  %7025 = vrot.lane.b32.xlu0 %v7002, 54
  %v7026 = vpop.permute.xlu0 %7025
  %7027 = vrot.lane.b32.xlu0 %v7003, 54
  %v7028 = vpop.permute.xlu0 %7027
  %7029 = vrot.lane.b32.xlu0 %v7004, 54
  %v7030 = vpop.permute.xlu0 %7029
  %7031 = vrot.lane.b32.xlu0 %v7005, 54
  %v7032 = vpop.permute.xlu0 %7031
  %v7033 = vsel %vm1095, %v7016, %v7018
  %v7034 = vsel %vm1095, %v7018, %v7020
  %v7035 = vsel %vm1095, %v7020, %v7022
  %v7036 = vsel %vm1095, %v7022, %v7024
  %v7037 = vsel %vm1095, %v7024, %v7026
  %v7038 = vsel %vm1095, %v7026, %v7028
  %v7039 = vsel %vm1095, %v7028, %v7030
  %v7040 = vsel %vm1095, %v7030, %v7032
  %v7049 = vadd.f32 %v6989, %v7033
  %v7050 = vadd.f32 %v6990, %v7034
  %v7051 = vadd.f32 %v6991, %v7035
  %v7052 = vadd.f32 %v6992, %v7036
  %v7053 = vadd.f32 %v6993, %v7037
  %v7054 = vadd.f32 %v6994, %v7038
  %v7055 = vadd.f32 %v6995, %v7039
  %v7056 = vadd.f32 %v6996, %v7040
  %v7057 = vld [vmem:[#allocation4 + $0x510] sm:$0xff]
  %v7058 = vld [vmem:[#allocation4 + $0x518] sm:$0xff]
  %v7059 = vld [vmem:[#allocation4 + $0x520] sm:$0xff]
  %v7060 = vld [vmem:[#allocation4 + $0x528] sm:$0xff]
  %v7061 = vld [vmem:[#allocation4 + $0x530] sm:$0xff]
  %v7062 = vld [vmem:[#allocation4 + $0x538] sm:$0xff]
  %v7063 = vld [vmem:[#allocation4 + $0x540] sm:$0xff]
  %v7064 = vld [vmem:[#allocation4 + $0x548] sm:$0xff]
  %v7065 = vld [vmem:[#allocation4 + $0x550] sm:$0xff]
  %7075 = vrot.lane.b32.xlu0 %v7057, 53
  %v7076 = vpop.permute.xlu0 %7075
  %7077 = vrot.lane.b32.xlu0 %v7058, 53
  %v7078 = vpop.permute.xlu0 %7077
  %7079 = vrot.lane.b32.xlu0 %v7059, 53
  %v7080 = vpop.permute.xlu0 %7079
  %7081 = vrot.lane.b32.xlu0 %v7060, 53
  %v7082 = vpop.permute.xlu0 %7081
  %7083 = vrot.lane.b32.xlu0 %v7061, 53
  %v7084 = vpop.permute.xlu0 %7083
  %7085 = vrot.lane.b32.xlu0 %v7062, 53
  %v7086 = vpop.permute.xlu0 %7085
  %7087 = vrot.lane.b32.xlu0 %v7063, 53
  %v7088 = vpop.permute.xlu0 %7087
  %7089 = vrot.lane.b32.xlu0 %v7064, 53
  %v7090 = vpop.permute.xlu0 %7089
  %7091 = vrot.lane.b32.xlu0 %v7065, 53
  %v7092 = vpop.permute.xlu0 %7091
  %v7093 = vsel %vm1158, %v7076, %v7078
  %v7094 = vsel %vm1158, %v7078, %v7080
  %v7095 = vsel %vm1158, %v7080, %v7082
  %v7096 = vsel %vm1158, %v7082, %v7084
  %v7097 = vsel %vm1158, %v7084, %v7086
  %v7098 = vsel %vm1158, %v7086, %v7088
  %v7099 = vsel %vm1158, %v7088, %v7090
  %v7100 = vsel %vm1158, %v7090, %v7092
  %v7109 = vadd.f32 %v7049, %v7093
  %v7110 = vadd.f32 %v7050, %v7094
  %v7111 = vadd.f32 %v7051, %v7095
  %v7112 = vadd.f32 %v7052, %v7096
  %v7113 = vadd.f32 %v7053, %v7097
  %v7114 = vadd.f32 %v7054, %v7098
  %v7115 = vadd.f32 %v7055, %v7099
  %v7116 = vadd.f32 %v7056, %v7100
  %v7117 = vld [vmem:[#allocation4 + $0x558] sm:$0xff]
  %v7118 = vld [vmem:[#allocation4 + $0x560] sm:$0xff]
  %v7119 = vld [vmem:[#allocation4 + $0x568] sm:$0xff]
  %v7120 = vld [vmem:[#allocation4 + $0x570] sm:$0xff]
  %v7121 = vld [vmem:[#allocation4 + $0x578] sm:$0xff]
  %v7122 = vld [vmem:[#allocation4 + $0x580] sm:$0xff]
  %v7123 = vld [vmem:[#allocation4 + $0x588] sm:$0xff]
  %v7124 = vld [vmem:[#allocation4 + $0x590] sm:$0xff]
  %v7125 = vld [vmem:[#allocation4 + $0x598] sm:$0xff]
  %7135 = vrot.lane.b32.xlu0 %v7117, 52
  %v7136 = vpop.permute.xlu0 %7135
  %7137 = vrot.lane.b32.xlu0 %v7118, 52
  %v7138 = vpop.permute.xlu0 %7137
  %7139 = vrot.lane.b32.xlu0 %v7119, 52
  %v7140 = vpop.permute.xlu0 %7139
  %7141 = vrot.lane.b32.xlu0 %v7120, 52
  %v7142 = vpop.permute.xlu0 %7141
  %7143 = vrot.lane.b32.xlu0 %v7121, 52
  %v7144 = vpop.permute.xlu0 %7143
  %7145 = vrot.lane.b32.xlu0 %v7122, 52
  %v7146 = vpop.permute.xlu0 %7145
  %7147 = vrot.lane.b32.xlu0 %v7123, 52
  %v7148 = vpop.permute.xlu0 %7147
  %7149 = vrot.lane.b32.xlu0 %v7124, 52
  %v7150 = vpop.permute.xlu0 %7149
  %7151 = vrot.lane.b32.xlu0 %v7125, 52
  %v7152 = vpop.permute.xlu0 %7151
  %v7153 = vsel %vm1221, %v7136, %v7138
  %v7154 = vsel %vm1221, %v7138, %v7140
  %v7155 = vsel %vm1221, %v7140, %v7142
  %v7156 = vsel %vm1221, %v7142, %v7144
  %v7157 = vsel %vm1221, %v7144, %v7146
  %v7158 = vsel %vm1221, %v7146, %v7148
  %v7159 = vsel %vm1221, %v7148, %v7150
  %v7160 = vsel %vm1221, %v7150, %v7152
  %v7169 = vadd.f32 %v7109, %v7153
  %v7170 = vadd.f32 %v7110, %v7154
  %v7171 = vadd.f32 %v7111, %v7155
  %v7172 = vadd.f32 %v7112, %v7156
  %v7173 = vadd.f32 %v7113, %v7157
  %v7174 = vadd.f32 %v7114, %v7158
  %v7175 = vadd.f32 %v7115, %v7159
  %v7176 = vadd.f32 %v7116, %v7160
  %v7177 = vld [vmem:[#allocation4 + $0x5a0] sm:$0xff]
  %v7178 = vld [vmem:[#allocation4 + $0x5a8] sm:$0xff]
  %v7179 = vld [vmem:[#allocation4 + $0x5b0] sm:$0xff]
  %v7180 = vld [vmem:[#allocation4 + $0x5b8] sm:$0xff]
  %v7181 = vld [vmem:[#allocation4 + $0x5c0] sm:$0xff]
  %v7182 = vld [vmem:[#allocation4 + $0x5c8] sm:$0xff]
  %v7183 = vld [vmem:[#allocation4 + $0x5d0] sm:$0xff]
  %v7184 = vld [vmem:[#allocation4 + $0x5d8] sm:$0xff]
  %v7185 = vld [vmem:[#allocation4 + $0x5e0] sm:$0xff]
  %7195 = vrot.lane.b32.xlu0 %v7177, 32
  %v7196 = vpop.permute.xlu0 %7195
  %7197 = vrot.lane.b32.xlu0 %v7178, 32
  %v7198 = vpop.permute.xlu0 %7197
  %7199 = vrot.lane.b32.xlu0 %v7179, 32
  %v7200 = vpop.permute.xlu0 %7199
  %7201 = vrot.lane.b32.xlu0 %v7180, 32
  %v7202 = vpop.permute.xlu0 %7201
  %7203 = vrot.lane.b32.xlu0 %v7181, 32
  %v7204 = vpop.permute.xlu0 %7203
  %7205 = vrot.lane.b32.xlu0 %v7182, 32
  %v7206 = vpop.permute.xlu0 %7205
  %7207 = vrot.lane.b32.xlu0 %v7183, 32
  %v7208 = vpop.permute.xlu0 %7207
  %7209 = vrot.lane.b32.xlu0 %v7184, 32
  %v7210 = vpop.permute.xlu0 %7209
  %7211 = vrot.lane.b32.xlu0 %v7185, 32
  %v7212 = vpop.permute.xlu0 %7211
  %v7213 = vsel %vm1284, %v7196, %v7198
  %v7214 = vsel %vm1284, %v7198, %v7200
  %v7215 = vsel %vm1284, %v7200, %v7202
  %v7216 = vsel %vm1284, %v7202, %v7204
  %v7217 = vsel %vm1284, %v7204, %v7206
  %v7218 = vsel %vm1284, %v7206, %v7208
  %v7219 = vsel %vm1284, %v7208, %v7210
  %v7220 = vsel %vm1284, %v7210, %v7212
  %v7229 = vadd.f32 %v7169, %v7213
  %v7230 = vadd.f32 %v7170, %v7214
  %v7231 = vadd.f32 %v7171, %v7215
  %v7232 = vadd.f32 %v7172, %v7216
  %v7233 = vadd.f32 %v7173, %v7217
  %v7234 = vadd.f32 %v7174, %v7218
  %v7235 = vadd.f32 %v7175, %v7219
  %v7236 = vadd.f32 %v7176, %v7220
  %v7237 = vld [vmem:[#allocation4 + $0x5e8] sm:$0xff]
  %v7238 = vld [vmem:[#allocation4 + $0x5f0] sm:$0xff]
  %v7239 = vld [vmem:[#allocation4 + $0x5f8] sm:$0xff]
  %v7240 = vld [vmem:[#allocation4 + $0x600] sm:$0xff]
  %v7241 = vld [vmem:[#allocation4 + $0x608] sm:$0xff]
  %v7242 = vld [vmem:[#allocation4 + $0x610] sm:$0xff]
  %v7243 = vld [vmem:[#allocation4 + $0x618] sm:$0xff]
  %v7244 = vld [vmem:[#allocation4 + $0x620] sm:$0xff]
  %v7245 = vld [vmem:[#allocation4 + $0x628] sm:$0xff]
  %7255 = vrot.lane.b32.xlu0 %v7237, 31
  %v7256 = vpop.permute.xlu0 %7255
  %7257 = vrot.lane.b32.xlu0 %v7238, 31
  %v7258 = vpop.permute.xlu0 %7257
  %7259 = vrot.lane.b32.xlu0 %v7239, 31
  %v7260 = vpop.permute.xlu0 %7259
  %7261 = vrot.lane.b32.xlu0 %v7240, 31
  %v7262 = vpop.permute.xlu0 %7261
  %7263 = vrot.lane.b32.xlu0 %v7241, 31
  %v7264 = vpop.permute.xlu0 %7263
  %7265 = vrot.lane.b32.xlu0 %v7242, 31
  %v7266 = vpop.permute.xlu0 %7265
  %7267 = vrot.lane.b32.xlu0 %v7243, 31
  %v7268 = vpop.permute.xlu0 %7267
  %7269 = vrot.lane.b32.xlu0 %v7244, 31
  %v7270 = vpop.permute.xlu0 %7269
  %7271 = vrot.lane.b32.xlu0 %v7245, 31
  %v7272 = vpop.permute.xlu0 %7271
  %v7273 = vsel %vm1347, %v7256, %v7258
  %v7274 = vsel %vm1347, %v7258, %v7260
  %v7275 = vsel %vm1347, %v7260, %v7262
  %v7276 = vsel %vm1347, %v7262, %v7264
  %v7277 = vsel %vm1347, %v7264, %v7266
  %v7278 = vsel %vm1347, %v7266, %v7268
  %v7279 = vsel %vm1347, %v7268, %v7270
  %v7280 = vsel %vm1347, %v7270, %v7272
  %v7289 = vadd.f32 %v7229, %v7273
  %v7290 = vadd.f32 %v7230, %v7274
  %v7291 = vadd.f32 %v7231, %v7275
  %v7292 = vadd.f32 %v7232, %v7276
  %v7293 = vadd.f32 %v7233, %v7277
  %v7294 = vadd.f32 %v7234, %v7278
  %v7295 = vadd.f32 %v7235, %v7279
  %v7296 = vadd.f32 %v7236, %v7280
  %v7297 = vld [vmem:[#allocation4 + $0x630] sm:$0xff]
  %v7298 = vld [vmem:[#allocation4 + $0x638] sm:$0xff]
  %v7299 = vld [vmem:[#allocation4 + $0x640] sm:$0xff]
  %v7300 = vld [vmem:[#allocation4 + $0x648] sm:$0xff]
  %v7301 = vld [vmem:[#allocation4 + $0x650] sm:$0xff]
  %v7302 = vld [vmem:[#allocation4 + $0x658] sm:$0xff]
  %v7303 = vld [vmem:[#allocation4 + $0x660] sm:$0xff]
  %v7304 = vld [vmem:[#allocation4 + $0x668] sm:$0xff]
  %v7305 = vld [vmem:[#allocation4 + $0x670] sm:$0xff]
  %7315 = vrot.lane.b32.xlu0 %v7297, 30
  %v7316 = vpop.permute.xlu0 %7315
  %7317 = vrot.lane.b32.xlu0 %v7298, 30
  %v7318 = vpop.permute.xlu0 %7317
  %7319 = vrot.lane.b32.xlu0 %v7299, 30
  %v7320 = vpop.permute.xlu0 %7319
  %7321 = vrot.lane.b32.xlu0 %v7300, 30
  %v7322 = vpop.permute.xlu0 %7321
  %7323 = vrot.lane.b32.xlu0 %v7301, 30
  %v7324 = vpop.permute.xlu0 %7323
  %7325 = vrot.lane.b32.xlu0 %v7302, 30
  %v7326 = vpop.permute.xlu0 %7325
  %7327 = vrot.lane.b32.xlu0 %v7303, 30
  %v7328 = vpop.permute.xlu0 %7327
  %7329 = vrot.lane.b32.xlu0 %v7304, 30
  %v7330 = vpop.permute.xlu0 %7329
  %7331 = vrot.lane.b32.xlu0 %v7305, 30
  %v7332 = vpop.permute.xlu0 %7331
  %v7333 = vsel %vm1410, %v7316, %v7318
  %v7334 = vsel %vm1410, %v7318, %v7320
  %v7335 = vsel %vm1410, %v7320, %v7322
  %v7336 = vsel %vm1410, %v7322, %v7324
  %v7337 = vsel %vm1410, %v7324, %v7326
  %v7338 = vsel %vm1410, %v7326, %v7328
  %v7339 = vsel %vm1410, %v7328, %v7330
  %v7340 = vsel %vm1410, %v7330, %v7332
  %v7349 = vadd.f32 %v7289, %v7333
  %v7350 = vadd.f32 %v7290, %v7334
  %v7351 = vadd.f32 %v7291, %v7335
  %v7352 = vadd.f32 %v7292, %v7336
  %v7353 = vadd.f32 %v7293, %v7337
  %v7354 = vadd.f32 %v7294, %v7338
  %v7355 = vadd.f32 %v7295, %v7339
  %v7356 = vadd.f32 %v7296, %v7340
  %v7357 = vld [vmem:[#allocation4 + $0x678] sm:$0xff]
  %v7358 = vld [vmem:[#allocation4 + $0x680] sm:$0xff]
  %v7359 = vld [vmem:[#allocation4 + $0x688] sm:$0xff]
  %v7360 = vld [vmem:[#allocation4 + $0x690] sm:$0xff]
  %v7361 = vld [vmem:[#allocation4 + $0x698] sm:$0xff]
  %v7362 = vld [vmem:[#allocation4 + $0x6a0] sm:$0xff]
  %v7363 = vld [vmem:[#allocation4 + $0x6a8] sm:$0xff]
  %v7364 = vld [vmem:[#allocation4 + $0x6b0] sm:$0xff]
  %v7365 = vld [vmem:[#allocation4 + $0x6b8] sm:$0xff]
  %7375 = vrot.lane.b32.xlu0 %v7357, 29
  %v7376 = vpop.permute.xlu0 %7375
  %7377 = vrot.lane.b32.xlu0 %v7358, 29
  %v7378 = vpop.permute.xlu0 %7377
  %7379 = vrot.lane.b32.xlu0 %v7359, 29
  %v7380 = vpop.permute.xlu0 %7379
  %7381 = vrot.lane.b32.xlu0 %v7360, 29
  %v7382 = vpop.permute.xlu0 %7381
  %7383 = vrot.lane.b32.xlu0 %v7361, 29
  %v7384 = vpop.permute.xlu0 %7383
  %7385 = vrot.lane.b32.xlu0 %v7362, 29
  %v7386 = vpop.permute.xlu0 %7385
  %7387 = vrot.lane.b32.xlu0 %v7363, 29
  %v7388 = vpop.permute.xlu0 %7387
  %7389 = vrot.lane.b32.xlu0 %v7364, 29
  %v7390 = vpop.permute.xlu0 %7389
  %7391 = vrot.lane.b32.xlu0 %v7365, 29
  %v7392 = vpop.permute.xlu0 %7391
  %v7393 = vsel %vm1473, %v7376, %v7378
  %v7394 = vsel %vm1473, %v7378, %v7380
  %v7395 = vsel %vm1473, %v7380, %v7382
  %v7396 = vsel %vm1473, %v7382, %v7384
  %v7397 = vsel %vm1473, %v7384, %v7386
  %v7398 = vsel %vm1473, %v7386, %v7388
  %v7399 = vsel %vm1473, %v7388, %v7390
  %v7400 = vsel %vm1473, %v7390, %v7392
  %v7409 = vadd.f32 %v7349, %v7393
  %v7410 = vadd.f32 %v7350, %v7394
  %v7411 = vadd.f32 %v7351, %v7395
  %v7412 = vadd.f32 %v7352, %v7396
  %v7413 = vadd.f32 %v7353, %v7397
  %v7414 = vadd.f32 %v7354, %v7398
  %v7415 = vadd.f32 %v7355, %v7399
  %v7416 = vadd.f32 %v7356, %v7400
  %v7417 = vld [vmem:[#allocation4 + $0x6c0] sm:$0xff]
  %v7418 = vld [vmem:[#allocation4 + $0x6c8] sm:$0xff]
  %v7419 = vld [vmem:[#allocation4 + $0x6d0] sm:$0xff]
  %v7420 = vld [vmem:[#allocation4 + $0x6d8] sm:$0xff]
  %v7421 = vld [vmem:[#allocation4 + $0x6e0] sm:$0xff]
  %v7422 = vld [vmem:[#allocation4 + $0x6e8] sm:$0xff]
  %v7423 = vld [vmem:[#allocation4 + $0x6f0] sm:$0xff]
  %v7424 = vld [vmem:[#allocation4 + $0x6f8] sm:$0xff]
  %v7425 = vld [vmem:[#allocation4 + $0x700] sm:$0xff]
  %7435 = vrot.lane.b32.xlu0 %v7417, 28
  %v7436 = vpop.permute.xlu0 %7435
  %7437 = vrot.lane.b32.xlu0 %v7418, 28
  %v7438 = vpop.permute.xlu0 %7437
  %7439 = vrot.lane.b32.xlu0 %v7419, 28
  %v7440 = vpop.permute.xlu0 %7439
  %7441 = vrot.lane.b32.xlu0 %v7420, 28
  %v7442 = vpop.permute.xlu0 %7441
  %7443 = vrot.lane.b32.xlu0 %v7421, 28
  %v7444 = vpop.permute.xlu0 %7443
  %7445 = vrot.lane.b32.xlu0 %v7422, 28
  %v7446 = vpop.permute.xlu0 %7445
  %7447 = vrot.lane.b32.xlu0 %v7423, 28
  %v7448 = vpop.permute.xlu0 %7447
  %7449 = vrot.lane.b32.xlu0 %v7424, 28
  %v7450 = vpop.permute.xlu0 %7449
  %7451 = vrot.lane.b32.xlu0 %v7425, 28
  %v7452 = vpop.permute.xlu0 %7451
  %v7453 = vsel %vm1536, %v7436, %v7438
  %v7454 = vsel %vm1536, %v7438, %v7440
  %v7455 = vsel %vm1536, %v7440, %v7442
  %v7456 = vsel %vm1536, %v7442, %v7444
  %v7457 = vsel %vm1536, %v7444, %v7446
  %v7458 = vsel %vm1536, %v7446, %v7448
  %v7459 = vsel %vm1536, %v7448, %v7450
  %v7460 = vsel %vm1536, %v7450, %v7452
  %v7469 = vadd.f32 %v7409, %v7453
  %v7470 = vadd.f32 %v7410, %v7454
  %v7471 = vadd.f32 %v7411, %v7455
  %v7472 = vadd.f32 %v7412, %v7456
  %v7473 = vadd.f32 %v7413, %v7457
  %v7474 = vadd.f32 %v7414, %v7458
  %v7475 = vadd.f32 %v7415, %v7459
  %v7476 = vadd.f32 %v7416, %v7460
  %v7477 = vxor.u32 %v7469, 2147483648
  %v7478 = vxor.u32 %v7470, 2147483648
  %v7479 = vxor.u32 %v7471, 2147483648
  %v7480 = vxor.u32 %v7472, 2147483648
  %v7481 = vxor.u32 %v7473, 2147483648
  %v7482 = vxor.u32 %v7474, 2147483648
  %v7483 = vxor.u32 %v7475, 2147483648
  %v7484 = vxor.u32 %v7476, 2147483648
  %v7485 = vmul.f32 %v7477, 1.442695
  %v7486 = vpow.pop %v7485
  %v7487 = vmul.f32 %v7478, 1.442695
  %v7488 = vpow.pop %v7487
  %v7489 = vmul.f32 %v7479, 1.442695
  %v7490 = vpow.pop %v7489
  %v7491 = vmul.f32 %v7480, 1.442695
  %v7492 = vpow.pop %v7491
  %v7493 = vmul.f32 %v7481, 1.442695
  %v7494 = vpow.pop %v7493
  %v7495 = vmul.f32 %v7482, 1.442695
  %v7496 = vpow.pop %v7495
  %v7497 = vmul.f32 %v7483, 1.442695
  %v7498 = vpow.pop %v7497
  %v7499 = vmul.f32 %v7484, 1.442695
  %v7500 = vpow.pop %v7499
  %v7501 = vadd.f32 %v7486, 1.0
  %v7502 = vadd.f32 %v7488, 1.0
  %v7503 = vadd.f32 %v7490, 1.0
  %v7504 = vadd.f32 %v7492, 1.0
  %v7505 = vadd.f32 %v7494, 1.0
  %v7506 = vadd.f32 %v7496, 1.0
  %v7507 = vadd.f32 %v7498, 1.0
  %v7508 = vadd.f32 %v7500, 1.0
  %v7509 = vrcp.pop %v7501
  %v7510 = vmul.f32 1.0, %v7509
  %v7511 = vrcp.pop %v7502
  %v7512 = vmul.f32 1.0, %v7511
  %v7513 = vrcp.pop %v7503
  %v7514 = vmul.f32 1.0, %v7513
  %v7515 = vrcp.pop %v7504
  %v7516 = vmul.f32 1.0, %v7515
  %v7517 = vrcp.pop %v7505
  %v7518 = vmul.f32 1.0, %v7517
  %v7519 = vrcp.pop %v7506
  %v7520 = vmul.f32 1.0, %v7519
  %v7521 = vrcp.pop %v7507
  %v7522 = vmul.f32 1.0, %v7521
  %v7523 = vrcp.pop %v7508
  %v7524 = vmul.f32 1.0, %v7523
  %v7525 = vtanh.pop %v7469
  %v7526 = vtanh.pop %v7470
  %v7527 = vtanh.pop %v7471
  %v7528 = vtanh.pop %v7472
  %v7529 = vtanh.pop %v7473
  %v7530 = vtanh.pop %v7474
  %v7531 = vtanh.pop %v7475
  %v7532 = vtanh.pop %v7476
  %v7533 = vld [vmem:[%s0] sm:$0xff]
  %v7534 = vld [vmem:[%s0 + $0x8] sm:$0xff]
  %v7535 = vld [vmem:[%s0 + $0x10] sm:$0xff]
  %v7536 = vld [vmem:[%s0 + $0x18] sm:$0xff]
  %v7537 = vld [vmem:[%s0 + $0x20] sm:$0xf]
  %v7543 = vcombine.high %v7533, %v7533
  %v7544 = vcombine.high %v7534, %v7534
  %v7545 = vcombine.high %v7535, %v7535
  %v7546 = vcombine.high %v7536, %v7536
  %7547 = vrot.lane.b32.xlu0 %v7533, 28
  %v7548 = vpop.permute.xlu0 %7547
  %7549 = vrot.lane.b32.xlu0 %v7543, 28
  %v7550 = vpop.permute.xlu0 %7549
  %7551 = vrot.lane.b32.xlu0 %v7534, 28
  %v7552 = vpop.permute.xlu0 %7551
  %7553 = vrot.lane.b32.xlu0 %v7544, 28
  %v7554 = vpop.permute.xlu0 %7553
  %7555 = vrot.lane.b32.xlu0 %v7535, 28
  %v7556 = vpop.permute.xlu0 %7555
  %7557 = vrot.lane.b32.xlu0 %v7545, 28
  %v7558 = vpop.permute.xlu0 %7557
  %7559 = vrot.lane.b32.xlu0 %v7536, 28
  %v7560 = vpop.permute.xlu0 %7559
  %7561 = vrot.lane.b32.xlu0 %v7546, 28
  %v7562 = vpop.permute.xlu0 %7561
  %7563 = vrot.lane.b32.xlu0 %v7537, 28
  %v7564 = vpop.permute.xlu0 %7563
  %v7565 = vsel %vm1536, %v7548, %v7550
  %v7566 = vsel %vm1536, %v7550, %v7552
  %v7567 = vsel %vm1536, %v7552, %v7554
  %v7568 = vsel %vm1536, %v7554, %v7556
  %v7569 = vsel %vm1536, %v7556, %v7558
  %v7570 = vsel %vm1536, %v7558, %v7560
  %v7571 = vsel %vm1536, %v7560, %v7562
  %v7572 = vsel %vm1536, %v7562, %v7564
  %v7581 = vmul.f32 %v7510, %v7565
  %v7582 = vmul.f32 %v7512, %v7566
  %v7583 = vmul.f32 %v7514, %v7567
  %v7584 = vmul.f32 %v7516, %v7568
  %v7585 = vmul.f32 %v7518, %v7569
  %v7586 = vmul.f32 %v7520, %v7570
  %v7587 = vmul.f32 %v7522, %v7571
  %v7588 = vmul.f32 %v7524, %v7572
  %v7589 = vsub.f32 1.0, %v7510
  %v7590 = vsub.f32 1.0, %v7512
  %v7591 = vsub.f32 1.0, %v7514
  %v7592 = vsub.f32 1.0, %v7516
  %v7593 = vsub.f32 1.0, %v7518
  %v7594 = vsub.f32 1.0, %v7520
  %v7595 = vsub.f32 1.0, %v7522
  %v7596 = vsub.f32 1.0, %v7524
  %v7605 = vrot.slane %v7525, 4
  %v7606 = vrot.slane %v7526, 4
  %v7607 = vrot.slane %v7527, 4
  %v7608 = vrot.slane %v7528, 4
  %v7609 = vrot.slane %v7529, 4
  %v7610 = vrot.slane %v7530, 4
  %v7611 = vrot.slane %v7531, 4
  %v7612 = vrot.slane %v7532, 4
  %v7621 = vmul.f32 %v7589, %v7605
  %v7622 = vmul.f32 %v7590, %v7606
  %v7623 = vmul.f32 %v7591, %v7607
  %v7624 = vmul.f32 %v7592, %v7608
  %v7625 = vmul.f32 %v7593, %v7609
  %v7626 = vmul.f32 %v7594, %v7610
  %v7627 = vmul.f32 %v7595, %v7611
  %v7628 = vmul.f32 %v7596, %v7612
  %v7629 = vadd.f32 %v7581, %v7621
  %v7630 = vadd.f32 %v7582, %v7622
  %v7631 = vadd.f32 %v7583, %v7623
  %v7632 = vadd.f32 %v7584, %v7624
  %v7633 = vadd.f32 %v7585, %v7625
  %v7634 = vadd.f32 %v7586, %v7626
  %v7635 = vadd.f32 %v7587, %v7627
  %v7636 = vadd.f32 %v7588, %v7628
  %7637 = vst [vmem:[%s7] sm:$0xf] %v7629
  %7638 = vst [vmem:[%s7 + $0x8] sm:$0xf] %v7630
  %7639 = vst [vmem:[%s7 + $0x10] sm:$0xf] %v7631
  %7640 = vst [vmem:[%s7 + $0x18] sm:$0xf] %v7632
  %7641 = vst [vmem:[%s7 + $0x20] sm:$0xf] %v7633
  %7642 = vst [vmem:[%s7 + $0x28] sm:$0xf] %v7634
  %7643 = vst [vmem:[%s7 + $0x30] sm:$0xf] %v7635
  %7644 = vst [vmem:[%s7 + $0x38] sm:$0xf] %v7636
  %v7653 = vrot.slane %v7510, 4
  %v7654 = vrot.slane %v7512, 4
  %v7655 = vrot.slane %v7514, 4
  %v7656 = vrot.slane %v7516, 4
  %v7657 = vrot.slane %v7518, 4
  %v7658 = vrot.slane %v7520, 4
  %v7659 = vrot.slane %v7522, 4
  %v7660 = vrot.slane %v7524, 4
  %7669 = vst [vmem:[%s7] sm:$0xf0] %v7653
  %7670 = vst [vmem:[%s7 + $0x8] sm:$0xf0] %v7654
  %7671 = vst [vmem:[%s7 + $0x10] sm:$0xf0] %v7655
  %7672 = vst [vmem:[%s7 + $0x18] sm:$0xf0] %v7656
  %7673 = vst [vmem:[%s7 + $0x20] sm:$0xf0] %v7657
  %7674 = vst [vmem:[%s7 + $0x28] sm:$0xf0] %v7658
  %7675 = vst [vmem:[%s7 + $0x30] sm:$0xf0] %v7659
  %7676 = vst [vmem:[%s7 + $0x38] sm:$0xf0] %v7660
  %7677 = vst [vmem:[%s7 + $0x40] sm:$0xf] %v7581
  %7678 = vst [vmem:[%s7 + $0x48] sm:$0xf] %v7582
  %7679 = vst [vmem:[%s7 + $0x50] sm:$0xf] %v7583
  %7680 = vst [vmem:[%s7 + $0x58] sm:$0xf] %v7584
  %7681 = vst [vmem:[%s7 + $0x60] sm:$0xf] %v7585
  %7682 = vst [vmem:[%s7 + $0x68] sm:$0xf] %v7586
  %7683 = vst [vmem:[%s7 + $0x70] sm:$0xf] %v7587
  %7684 = vst [vmem:[%s7 + $0x78] sm:$0xf] %v7588
  %7685 = vst [vmem:[%s7 + $0x40] sm:$0xf0] %v7525
  %7686 = vst [vmem:[%s7 + $0x48] sm:$0xf0] %v7526
  %7687 = vst [vmem:[%s7 + $0x50] sm:$0xf0] %v7527
  %7688 = vst [vmem:[%s7 + $0x58] sm:$0xf0] %v7528
  %7689 = vst [vmem:[%s7 + $0x60] sm:$0xf0] %v7529
  %7690 = vst [vmem:[%s7 + $0x68] sm:$0xf0] %v7530
  %7691 = vst [vmem:[%s7 + $0x70] sm:$0xf0] %v7531
  %7692 = vst [vmem:[%s7 + $0x78] sm:$0xf0] %v7532
  %7693 = vst [vmem:[%s7 + $0x80] sm:$0xf] %v7621
  %7694 = vst [vmem:[%s7 + $0x88] sm:$0xf] %v7622
  %7695 = vst [vmem:[%s7 + $0x90] sm:$0xf] %v7623
  %7696 = vst [vmem:[%s7 + $0x98] sm:$0xf] %v7624
  %7697 = vst [vmem:[%s7 + $0xa0] sm:$0xf] %v7625
  %7698 = vst [vmem:[%s7 + $0xa8] sm:$0xf] %v7626
  %7699 = vst [vmem:[%s7 + $0xb0] sm:$0xf] %v7627
  %7700 = vst [vmem:[%s7 + $0xb8] sm:$0xf] %v7628
  // Predicated region
  $region30: #{generator_forward.1} parent=0 // pred_check
    _
  $region31: #{generator_forward.1} parent=0 // pred_check_branch
    %7702 = sbr.rel (0) target = $region33
  $region32: #{generator_forward.1} parent=0 // pred_region
    _
  $region33: #{generator_forward.1} parent=0 // pred_fallthru
    _
  // Predicated region
  $region34: #{generator_forward.1} parent=0 // pred_check
    _
  $region35: #{generator_forward.1} parent=0 // pred_check_branch
    %7704 = sbr.rel (0) target = $region37
  $region36: #{generator_forward.1} parent=0 // pred_region
    _
  $region37: #{generator_forward.1} parent=0 // pred_fallthru
    _

</llo_original>
